<compile_context>
chip_gen: v7x
topology: tpu7x:2x2x1
jax: 0.10.0
libtpu: 0.0.40
codegen_flags: <defaults>
</compile_context>

<pallas_src>
import jax
import jax.numpy as jnp
from jax.experimental import pallas as pl
from jax.experimental.pallas import tpu as pltpu

EPS = 1e-6
KS = 7
PAD = 3


# ----------------------------- Pallas kernel ------------------------------- #

def convnext_kernel(xpad_ref, wdw_ref, vec_ref, w1_ref, b1_ref, w2_ref, o_ref):
    # o_ref block is [1, H, W, C]; xpad_ref block is [1, H+6, W+6, C].
    _, H, W, C = o_ref.shape
    P = H * W

    vecs = vec_ref[...]          # [5, C] : dw_bias, ln_w, ln_b, pw2_bias, gamma
    wdw = wdw_ref[...]           # [49, C]

    # ---- depthwise 7x7 conv (channels-last, VPU) --------------------------- #
    # Accumulator starts at the (broadcast) depthwise bias: saves one add pass.
    acc = jnp.broadcast_to(vecs[0:1, :], (H, W, C)).astype(jnp.float32)
    for ki in range(KS):
        for kj in range(KS):
            tap = xpad_ref[0, pl.ds(ki, H), pl.ds(kj, W), :]        # [H, W, C]
            acc = acc + tap * wdw[ki * KS + kj:ki * KS + kj + 1, :]

    # ---- LayerNorm over channels (two-pass, f32) --------------------------- #
    mean = jnp.mean(acc, axis=-1, keepdims=True)
    xc = acc - mean
    var = jnp.mean(xc * xc, axis=-1, keepdims=True)
    hn = xc * jax.lax.rsqrt(var + EPS) * vecs[1:2, :] + vecs[2:3, :]

    # ---- pwconv1 -> GELU -> pwconv2 (MXU, bf16 in / f32 accumulate) -------- #
    a = hn.reshape(P, C).astype(jnp.bfloat16)
    h1 = jnp.dot(a, w1_ref[...], preferred_element_type=jnp.float32) + b1_ref[...]
    g = jax.nn.gelu(h1, approximate=True)
    h2 = jnp.dot(g.astype(jnp.bfloat16), w2_ref[...],
                 preferred_element_type=jnp.float32)
    h2 = h2 + vecs[3:4, :]                                          # pwconv2 bias

    branch = h2 * vecs[4:5, :]                                      # layer scale

    # ---- residual add (original, unpadded input is the padded-block centre) #
    x_center = xpad_ref[0, pl.ds(PAD, H), pl.ds(PAD, W), :]
    out = x_center.reshape(P, C) + branch
    o_ref[0] = out.reshape(H, W, C).astype(o_ref.dtype)


# ------------------------------ JAX wrapper -------------------------------- #

def convnext_block_pallas(x_nhwc, params):
    """x_nhwc: [B, H, W, C] float32 channels-last.  Returns [B, H, W, C]."""
    B, H, W, C = x_nhwc.shape
    C4 = params["w1"].shape[1]

    # Zero padding for the 7x7 depthwise conv (padding=3).
    xpad = jnp.pad(x_nhwc, ((0, 0), (PAD, PAD), (PAD, PAD), (0, 0)))
    Hp, Wp = H + 2 * PAD, W + 2 * PAD

    # Consolidated per-channel vectors -> one [5, C] input.
    vecs = jnp.stack(
        [params["b_dw"], params["ln_w"], params["ln_b"],
         params["b2"], params["gamma"]], axis=0).astype(jnp.float32)
    wdw = params["w_dw"].astype(jnp.float32)                # [49, C]
    w1 = params["w1"].astype(jnp.bfloat16)                  # [C, 4C]
    b1 = params["b1"].reshape(1, C4).astype(jnp.float32)    # [1, 4C]
    w2 = params["w2"].astype(jnp.bfloat16)                  # [4C, C]

    in_specs = [
        pl.BlockSpec((1, Hp, Wp, C), lambda b: (b, 0, 0, 0)),
        pl.BlockSpec(wdw.shape, lambda b: (0, 0)),   # constant idx -> stays resident
        pl.BlockSpec(vecs.shape, lambda b: (0, 0)),
        pl.BlockSpec(w1.shape, lambda b: (0, 0)),
        pl.BlockSpec(b1.shape, lambda b: (0, 0)),
        pl.BlockSpec(w2.shape, lambda b: (0, 0)),
    ]

    return pl.pallas_call(
        convnext_kernel,
        out_shape=jax.ShapeDtypeStruct((B, H, W, C), x_nhwc.dtype),
        grid=(B,),
        in_specs=in_specs,
        out_specs=pl.BlockSpec((1, H, W, C), lambda b: (b, 0, 0, 0)),
        compiler_params=pltpu.CompilerParams(
            dimension_semantics=("parallel",),     # megacore: batch across TCs
            vmem_limit_bytes=32 * 1024 * 1024,     # explicit; fits all chips
        ),
    )(xpad, wdw, vecs, w1, b1, w2)


def convnext_block_forward(x_nchw, params):
    """Mirrors ConvNeXtBlock.forward.  x: [B, C, H, W] -> [B, C, H, W]."""
    x = jnp.transpose(x_nchw, (0, 2, 3, 1))
    out = convnext_block_pallas(x, params)
    return jnp.transpose(out, (0, 3, 1, 2))


# --------------------------- params & reference ---------------------------- #

def init_params(key, dim, layer_scale_init_value=1e-6):
    ks = jax.random.split(key, 6)
    w_dw = 0.05 * jax.random.normal(ks[0], (dim, KS, KS), dtype=jnp.float32)
    return dict(
        # depthwise weight stored channels-last: [49, dim]
        w_dw=w_dw.reshape(dim, KS * KS).T,
        b_dw=0.01 * jax.random.normal(ks[1], (dim,), dtype=jnp.float32),
        ln_w=jnp.ones((dim,), jnp.float32),
        ln_b=jnp.zeros((dim,), jnp.float32),
        # Linear weights stored pre-transposed [in, out]
        w1=0.05 * jax.random.normal(ks[2], (dim, 4 * dim), dtype=jnp.float32),
        b1=0.01 * jax.random.normal(ks[3], (4 * dim,), dtype=jnp.float32),
        w2=0.05 * jax.random.normal(ks[4], (4 * dim, dim), dtype=jnp.float32),
        b2=0.01 * jax.random.normal(ks[5], (dim,), dtype=jnp.float32),
        gamma=layer_scale_init_value * jnp.ones((dim,), jnp.float32),
    )


def convnext_block_ref(x_nchw, params):
    """Pure-JAX reference with the same precision choices (for validation)."""
    B, C, H, W = x_nchw.shape
    x = jnp.transpose(x_nchw, (0, 2, 3, 1))
    xpad = jnp.pad(x, ((0, 0), (PAD, PAD), (PAD, PAD), (0, 0)))

    acc = jnp.zeros((B, H, W, C), jnp.float32) + params["b_dw"]
    for ki in range(KS):
        for kj in range(KS):
            acc = acc + xpad[:, ki:ki + H, kj:kj + W, :] * params["w_dw"][ki * KS + kj]

    mean = jnp.mean(acc, axis=-1, keepdims=True)
    xc = acc - mean
    var = jnp.mean(xc * xc, axis=-1, keepdims=True)
    hn = xc * jax.lax.rsqrt(var + EPS) * params["ln_w"] + params["ln_b"]

    a = hn.reshape(B * H * W, C).astype(jnp.bfloat16)
    h1 = jnp.dot(a, params["w1"].astype(jnp.bfloat16),
                 preferred_element_type=jnp.float32) + params["b1"]
    g = jax.nn.gelu(h1, approximate=True)
    h2 = jnp.dot(g.astype(jnp.bfloat16), params["w2"].astype(jnp.bfloat16),
                 preferred_element_type=jnp.float32) + params["b2"]
    branch = (h2 * params["gamma"]).reshape(B, H, W, C)
    out = x + branch
    return jnp.transpose(out, (0, 3, 1, 2))


# ---------------------------------- main ------------------------------------ #

if __name__ == "__main__":
    key = jax.random.PRNGKey(0)
    kx, kp, kg = jax.random.split(key, 3)

    # dim=128 keeps the channel dim lane-dense; 16x16 spatial, batch 2.
    B, C, H, W = 2, 128, 16, 16
    x = jax.random.normal(kx, (B, C, H, W), dtype=jnp.float32)
    params = init_params(kp, C)

    # Correctness check with a NON-trivial layer-scale gamma (the faithful
    # 1e-6 init would hide branch errors under the residual).
    test_params = dict(params)
    test_params["gamma"] = 0.5 + jax.random.uniform(kg, (C,), dtype=jnp.float32)
    got = convnext_block_forward(x, test_params)
    want = convnext_block_ref(x, test_params)
    assert got.shape == want.shape
    err = float(jnp.max(jnp.abs(got - want)))
    assert err < 1e-2, err

    # Faithful forward with the module-default layer-scale init (1e-6).
    out = jax.block_until_ready(convnext_block_forward(x, params))
    assert out.shape == (B, C, H, W)
    assert bool(jnp.all(jnp.isfinite(out)))

    print("KERNEL_OK")
</pallas_src>

<mosaic_0001>
module attributes {stable_mosaic.version = 11 : i64} {
  func.func @convnext_kernel(%arg0: i32, %arg1: memref<1x22x22x128xf32, #tpu.memory_space<vmem>>, %arg2: memref<49x128xf32, #tpu.memory_space<vmem>>, %arg3: memref<5x128xf32, #tpu.memory_space<vmem>>, %arg4: memref<128x512xbf16, #tpu.memory_space<vmem>>, %arg5: memref<1x512xf32, #tpu.memory_space<vmem>>, %arg6: memref<512x128xbf16, #tpu.memory_space<vmem>>, %arg7: memref<1x16x16x128xf32, #tpu.memory_space<vmem>>) attributes {dimension_semantics = [#tpu.dimension_semantics<parallel>], iteration_bounds = array<i64: 2>, scalar_prefetch = 0 : i64, scratch_operands = 0 : i64, tpu.core_type = #tpu.core_type<tc>, window_params = [{transform_indices = @transform_0, window_bounds = array<i64: 1, 22, 22, 128>}, {pipeline_mode = #tpu.pipeline_mode<synchronous>, transform_indices = @transform_1, window_bounds = array<i64: 49, 128>}, {pipeline_mode = #tpu.pipeline_mode<synchronous>, transform_indices = @transform_2, window_bounds = array<i64: 5, 128>}, {pipeline_mode = #tpu.pipeline_mode<synchronous>, transform_indices = @transform_3, window_bounds = array<i64: 128, 512>}, {pipeline_mode = #tpu.pipeline_mode<synchronous>, transform_indices = @transform_4, window_bounds = array<i64: 1, 512>}, {pipeline_mode = #tpu.pipeline_mode<synchronous>, transform_indices = @transform_5, window_bounds = array<i64: 512, 128>}, {transform_indices = @transform_6, window_bounds = array<i64: 1, 16, 16, 128>}]} {
    %c0 = arith.constant 0 : index
    %c0_0 = arith.constant 0 : index
    %0 = vector.load %arg3[%c0, %c0_0] : memref<5x128xf32, #tpu.memory_space<vmem>>, vector<5x128xf32>
    %c0_1 = arith.constant 0 : index
    %c0_2 = arith.constant 0 : index
    %1 = vector.load %arg2[%c0_1, %c0_2] : memref<49x128xf32, #tpu.memory_space<vmem>>, vector<49x128xf32>
    %2 = vector.extract_strided_slice %0 {offsets = [0, 0], sizes = [1, 128], strides = [1, 1]} : vector<5x128xf32> to vector<1x128xf32>
    %3 = vector.shape_cast %2 : vector<1x128xf32> to vector<1x1x128xf32>
    %4 = vector.broadcast %3 : vector<1x1x128xf32> to vector<16x16x128xf32>
    %c0_3 = arith.constant 0 : index
    %c0_4 = arith.constant 0 : index
    %c0_5 = arith.constant 0 : index
    %c0_6 = arith.constant 0 : index
    %5 = vector.load %arg1[%c0_3, %c0_4, %c0_5, %c0_6] : memref<1x22x22x128xf32, #tpu.memory_space<vmem>>, vector<1x16x16x128xf32>
    %6 = vector.shape_cast %5 : vector<1x16x16x128xf32> to vector<16x16x128xf32>
    %7 = vector.extract_strided_slice %1 {offsets = [0, 0], sizes = [1, 128], strides = [1, 1]} : vector<49x128xf32> to vector<1x128xf32>
    %8 = vector.shape_cast %7 : vector<1x128xf32> to vector<1x1x128xf32>
    %9 = vector.broadcast %8 : vector<1x1x128xf32> to vector<16x16x128xf32>
    %10 = arith.mulf %6, %9 : vector<16x16x128xf32>
    %11 = arith.addf %4, %10 : vector<16x16x128xf32>
    %c0_7 = arith.constant 0 : index
    %c0_8 = arith.constant 0 : index
    %c1 = arith.constant 1 : index
    %c0_9 = arith.constant 0 : index
    %12 = vector.load %arg1[%c0_7, %c0_8, %c1, %c0_9] : memref<1x22x22x128xf32, #tpu.memory_space<vmem>>, vector<1x16x16x128xf32>
    %13 = vector.shape_cast %12 : vector<1x16x16x128xf32> to vector<16x16x128xf32>
    %14 = vector.extract_strided_slice %1 {offsets = [1, 0], sizes = [1, 128], strides = [1, 1]} : vector<49x128xf32> to vector<1x128xf32>
    %15 = vector.shape_cast %14 : vector<1x128xf32> to vector<1x1x128xf32>
    %16 = vector.broadcast %15 : vector<1x1x128xf32> to vector<16x16x128xf32>
    %17 = arith.mulf %13, %16 : vector<16x16x128xf32>
    %18 = arith.addf %11, %17 : vector<16x16x128xf32>
    %c0_10 = arith.constant 0 : index
    %c0_11 = arith.constant 0 : index
    %c2 = arith.constant 2 : index
    %c0_12 = arith.constant 0 : index
    %19 = vector.load %arg1[%c0_10, %c0_11, %c2, %c0_12] : memref<1x22x22x128xf32, #tpu.memory_space<vmem>>, vector<1x16x16x128xf32>
    %20 = vector.shape_cast %19 : vector<1x16x16x128xf32> to vector<16x16x128xf32>
    %21 = vector.extract_strided_slice %1 {offsets = [2, 0], sizes = [1, 128], strides = [1, 1]} : vector<49x128xf32> to vector<1x128xf32>
    %22 = vector.shape_cast %21 : vector<1x128xf32> to vector<1x1x128xf32>
    %23 = vector.broadcast %22 : vector<1x1x128xf32> to vector<16x16x128xf32>
    %24 = arith.mulf %20, %23 : vector<16x16x128xf32>
    %25 = arith.addf %18, %24 : vector<16x16x128xf32>
    %c0_13 = arith.constant 0 : index
    %c0_14 = arith.constant 0 : index
    %c3 = arith.constant 3 : index
    %c0_15 = arith.constant 0 : index
    %26 = vector.load %arg1[%c0_13, %c0_14, %c3, %c0_15] : memref<1x22x22x128xf32, #tpu.memory_space<vmem>>, vector<1x16x16x128xf32>
    %27 = vector.shape_cast %26 : vector<1x16x16x128xf32> to vector<16x16x128xf32>
    %28 = vector.extract_strided_slice %1 {offsets = [3, 0], sizes = [1, 128], strides = [1, 1]} : vector<49x128xf32> to vector<1x128xf32>
    %29 = vector.shape_cast %28 : vector<1x128xf32> to vector<1x1x128xf32>
    %30 = vector.broadcast %29 : vector<1x1x128xf32> to vector<16x16x128xf32>
    %31 = arith.mulf %27, %30 : vector<16x16x128xf32>
    %32 = arith.addf %25, %31 : vector<16x16x128xf32>
    %c0_16 = arith.constant 0 : index
    %c0_17 = arith.constant 0 : index
    %c4 = arith.constant 4 : index
    %c0_18 = arith.constant 0 : index
    %33 = vector.load %arg1[%c0_16, %c0_17, %c4, %c0_18] : memref<1x22x22x128xf32, #tpu.memory_space<vmem>>, vector<1x16x16x128xf32>
    %34 = vector.shape_cast %33 : vector<1x16x16x128xf32> to vector<16x16x128xf32>
    %35 = vector.extract_strided_slice %1 {offsets = [4, 0], sizes = [1, 128], strides = [1, 1]} : vector<49x128xf32> to vector<1x128xf32>
    %36 = vector.shape_cast %35 : vector<1x128xf32> to vector<1x1x128xf32>
    %37 = vector.broadcast %36 : vector<1x1x128xf32> to vector<16x16x128xf32>
    %38 = arith.mulf %34, %37 : vector<16x16x128xf32>
    %39 = arith.addf %32, %38 : vector<16x16x128xf32>
    %c0_19 = arith.constant 0 : index
    %c0_20 = arith.constant 0 : index
    %c5 = arith.constant 5 : index
    %c0_21 = arith.constant 0 : index
    %40 = vector.load %arg1[%c0_19, %c0_20, %c5, %c0_21] : memref<1x22x22x128xf32, #tpu.memory_space<vmem>>, vector<1x16x16x128xf32>
    %41 = vector.shape_cast %40 : vector<1x16x16x128xf32> to vector<16x16x128xf32>
    %42 = vector.extract_strided_slice %1 {offsets = [5, 0], sizes = [1, 128], strides = [1, 1]} : vector<49x128xf32> to vector<1x128xf32>
    %43 = vector.shape_cast %42 : vector<1x128xf32> to vector<1x1x128xf32>
    %44 = vector.broadcast %43 : vector<1x1x128xf32> to vector<16x16x128xf32>
    %45 = arith.mulf %41, %44 : vector<16x16x128xf32>
    %46 = arith.addf %39, %45 : vector<16x16x128xf32>
    %c0_22 = arith.constant 0 : index
    %c0_23 = arith.constant 0 : index
    %c6 = arith.constant 6 : index
    %c0_24 = arith.constant 0 : index
    %47 = vector.load %arg1[%c0_22, %c0_23, %c6, %c0_24] : memref<1x22x22x128xf32, #tpu.memory_space<vmem>>, vector<1x16x16x128xf32>
    %48 = vector.shape_cast %47 : vector<1x16x16x128xf32> to vector<16x16x128xf32>
    %49 = vector.extract_strided_slice %1 {offsets = [6, 0], sizes = [1, 128], strides = [1, 1]} : vector<49x128xf32> to vector<1x128xf32>
    %50 = vector.shape_cast %49 : vector<1x128xf32> to vector<1x1x128xf32>
    %51 = vector.broadcast %50 : vector<1x1x128xf32> to vector<16x16x128xf32>
    %52 = arith.mulf %48, %51 : vector<16x16x128xf32>
    %53 = arith.addf %46, %52 : vector<16x16x128xf32>
    %c0_25 = arith.constant 0 : index
    %c1_26 = arith.constant 1 : index
    %c0_27 = arith.constant 0 : index
    %c0_28 = arith.constant 0 : index
    %54 = vector.load %arg1[%c0_25, %c1_26, %c0_27, %c0_28] : memref<1x22x22x128xf32, #tpu.memory_space<vmem>>, vector<1x16x16x128xf32>
    %55 = vector.shape_cast %54 : vector<1x16x16x128xf32> to vector<16x16x128xf32>
    %56 = vector.extract_strided_slice %1 {offsets = [7, 0], sizes = [1, 128], strides = [1, 1]} : vector<49x128xf32> to vector<1x128xf32>
    %57 = vector.shape_cast %56 : vector<1x128xf32> to vector<1x1x128xf32>
    %58 = vector.broadcast %57 : vector<1x1x128xf32> to vector<16x16x128xf32>
    %59 = arith.mulf %55, %58 : vector<16x16x128xf32>
    %60 = arith.addf %53, %59 : vector<16x16x128xf32>
    %c0_29 = arith.constant 0 : index
    %c1_30 = arith.constant 1 : index
    %c1_31 = arith.constant 1 : index
    %c0_32 = arith.constant 0 : index
    %61 = vector.load %arg1[%c0_29, %c1_30, %c1_31, %c0_32] : memref<1x22x22x128xf32, #tpu.memory_space<vmem>>, vector<1x16x16x128xf32>
    %62 = vector.shape_cast %61 : vector<1x16x16x128xf32> to vector<16x16x128xf32>
    %63 = vector.extract_strided_slice %1 {offsets = [8, 0], sizes = [1, 128], strides = [1, 1]} : vector<49x128xf32> to vector<1x128xf32>
    %64 = vector.shape_cast %63 : vector<1x128xf32> to vector<1x1x128xf32>
    %65 = vector.broadcast %64 : vector<1x1x128xf32> to vector<16x16x128xf32>
    %66 = arith.mulf %62, %65 : vector<16x16x128xf32>
    %67 = arith.addf %60, %66 : vector<16x16x128xf32>
    %c0_33 = arith.constant 0 : index
    %c1_34 = arith.constant 1 : index
    %c2_35 = arith.constant 2 : index
    %c0_36 = arith.constant 0 : index
    %68 = vector.load %arg1[%c0_33, %c1_34, %c2_35, %c0_36] : memref<1x22x22x128xf32, #tpu.memory_space<vmem>>, vector<1x16x16x128xf32>
    %69 = vector.shape_cast %68 : vector<1x16x16x128xf32> to vector<16x16x128xf32>
    %70 = vector.extract_strided_slice %1 {offsets = [9, 0], sizes = [1, 128], strides = [1, 1]} : vector<49x128xf32> to vector<1x128xf32>
    %71 = vector.shape_cast %70 : vector<1x128xf32> to vector<1x1x128xf32>
    %72 = vector.broadcast %71 : vector<1x1x128xf32> to vector<16x16x128xf32>
    %73 = arith.mulf %69, %72 : vector<16x16x128xf32>
    %74 = arith.addf %67, %73 : vector<16x16x128xf32>
    %c0_37 = arith.constant 0 : index
    %c1_38 = arith.constant 1 : index
    %c3_39 = arith.constant 3 : index
    %c0_40 = arith.constant 0 : index
    %75 = vector.load %arg1[%c0_37, %c1_38, %c3_39, %c0_40] : memref<1x22x22x128xf32, #tpu.memory_space<vmem>>, vector<1x16x16x128xf32>
    %76 = vector.shape_cast %75 : vector<1x16x16x128xf32> to vector<16x16x128xf32>
    %77 = vector.extract_strided_slice %1 {offsets = [10, 0], sizes = [1, 128], strides = [1, 1]} : vector<49x128xf32> to vector<1x128xf32>
    %78 = vector.shape_cast %77 : vector<1x128xf32> to vector<1x1x128xf32>
    %79 = vector.broadcast %78 : vector<1x1x128xf32> to vector<16x16x128xf32>
    %80 = arith.mulf %76, %79 : vector<16x16x128xf32>
    %81 = arith.addf %74, %80 : vector<16x16x128xf32>
    %c0_41 = arith.constant 0 : index
    %c1_42 = arith.constant 1 : index
    %c4_43 = arith.constant 4 : index
    %c0_44 = arith.constant 0 : index
    %82 = vector.load %arg1[%c0_41, %c1_42, %c4_43, %c0_44] : memref<1x22x22x128xf32, #tpu.memory_space<vmem>>, vector<1x16x16x128xf32>
    %83 = vector.shape_cast %82 : vector<1x16x16x128xf32> to vector<16x16x128xf32>
    %84 = vector.extract_strided_slice %1 {offsets = [11, 0], sizes = [1, 128], strides = [1, 1]} : vector<49x128xf32> to vector<1x128xf32>
    %85 = vector.shape_cast %84 : vector<1x128xf32> to vector<1x1x128xf32>
    %86 = vector.broadcast %85 : vector<1x1x128xf32> to vector<16x16x128xf32>
    %87 = arith.mulf %83, %86 : vector<16x16x128xf32>
    %88 = arith.addf %81, %87 : vector<16x16x128xf32>
    %c0_45 = arith.constant 0 : index
    %c1_46 = arith.constant 1 : index
    %c5_47 = arith.constant 5 : index
    %c0_48 = arith.constant 0 : index
    %89 = vector.load %arg1[%c0_45, %c1_46, %c5_47, %c0_48] : memref<1x22x22x128xf32, #tpu.memory_space<vmem>>, vector<1x16x16x128xf32>
    %90 = vector.shape_cast %89 : vector<1x16x16x128xf32> to vector<16x16x128xf32>
    %91 = vector.extract_strided_slice %1 {offsets = [12, 0], sizes = [1, 128], strides = [1, 1]} : vector<49x128xf32> to vector<1x128xf32>
    %92 = vector.shape_cast %91 : vector<1x128xf32> to vector<1x1x128xf32>
    %93 = vector.broadcast %92 : vector<1x1x128xf32> to vector<16x16x128xf32>
    %94 = arith.mulf %90, %93 : vector<16x16x128xf32>
    %95 = arith.addf %88, %94 : vector<16x16x128xf32>
    %c0_49 = arith.constant 0 : index
    %c1_50 = arith.constant 1 : index
    %c6_51 = arith.constant 6 : index
    %c0_52 = arith.constant 0 : index
    %96 = vector.load %arg1[%c0_49, %c1_50, %c6_51, %c0_52] : memref<1x22x22x128xf32, #tpu.memory_space<vmem>>, vector<1x16x16x128xf32>
    %97 = vector.shape_cast %96 : vector<1x16x16x128xf32> to vector<16x16x128xf32>
    %98 = vector.extract_strided_slice %1 {offsets = [13, 0], sizes = [1, 128], strides = [1, 1]} : vector<49x128xf32> to vector<1x128xf32>
    %99 = vector.shape_cast %98 : vector<1x128xf32> to vector<1x1x128xf32>
    %100 = vector.broadcast %99 : vector<1x1x128xf32> to vector<16x16x128xf32>
    %101 = arith.mulf %97, %100 : vector<16x16x128xf32>
    %102 = arith.addf %95, %101 : vector<16x16x128xf32>
    %c0_53 = arith.constant 0 : index
    %c2_54 = arith.constant 2 : index
    %c0_55 = arith.constant 0 : index
    %c0_56 = arith.constant 0 : index
    %103 = vector.load %arg1[%c0_53, %c2_54, %c0_55, %c0_56] : memref<1x22x22x128xf32, #tpu.memory_space<vmem>>, vector<1x16x16x128xf32>
    %104 = vector.shape_cast %103 : vector<1x16x16x128xf32> to vector<16x16x128xf32>
    %105 = vector.extract_strided_slice %1 {offsets = [14, 0], sizes = [1, 128], strides = [1, 1]} : vector<49x128xf32> to vector<1x128xf32>
    %106 = vector.shape_cast %105 : vector<1x128xf32> to vector<1x1x128xf32>
    %107 = vector.broadcast %106 : vector<1x1x128xf32> to vector<16x16x128xf32>
    %108 = arith.mulf %104, %107 : vector<16x16x128xf32>
    %109 = arith.addf %102, %108 : vector<16x16x128xf32>
    %c0_57 = arith.constant 0 : index
    %c2_58 = arith.constant 2 : index
    %c1_59 = arith.constant 1 : index
    %c0_60 = arith.constant 0 : index
    %110 = vector.load %arg1[%c0_57, %c2_58, %c1_59, %c0_60] : memref<1x22x22x128xf32, #tpu.memory_space<vmem>>, vector<1x16x16x128xf32>
    %111 = vector.shape_cast %110 : vector<1x16x16x128xf32> to vector<16x16x128xf32>
    %112 = vector.extract_strided_slice %1 {offsets = [15, 0], sizes = [1, 128], strides = [1, 1]} : vector<49x128xf32> to vector<1x128xf32>
    %113 = vector.shape_cast %112 : vector<1x128xf32> to vector<1x1x128xf32>
    %114 = vector.broadcast %113 : vector<1x1x128xf32> to vector<16x16x128xf32>
    %115 = arith.mulf %111, %114 : vector<16x16x128xf32>
    %116 = arith.addf %109, %115 : vector<16x16x128xf32>
    %c0_61 = arith.constant 0 : index
    %c2_62 = arith.constant 2 : index
    %c2_63 = arith.constant 2 : index
    %c0_64 = arith.constant 0 : index
    %117 = vector.load %arg1[%c0_61, %c2_62, %c2_63, %c0_64] : memref<1x22x22x128xf32, #tpu.memory_space<vmem>>, vector<1x16x16x128xf32>
    %118 = vector.shape_cast %117 : vector<1x16x16x128xf32> to vector<16x16x128xf32>
    %119 = vector.extract_strided_slice %1 {offsets = [16, 0], sizes = [1, 128], strides = [1, 1]} : vector<49x128xf32> to vector<1x128xf32>
    %120 = vector.shape_cast %119 : vector<1x128xf32> to vector<1x1x128xf32>
    %121 = vector.broadcast %120 : vector<1x1x128xf32> to vector<16x16x128xf32>
    %122 = arith.mulf %118, %121 : vector<16x16x128xf32>
    %123 = arith.addf %116, %122 : vector<16x16x128xf32>
    %c0_65 = arith.constant 0 : index
    %c2_66 = arith.constant 2 : index
    %c3_67 = arith.constant 3 : index
    %c0_68 = arith.constant 0 : index
    %124 = vector.load %arg1[%c0_65, %c2_66, %c3_67, %c0_68] : memref<1x22x22x128xf32, #tpu.memory_space<vmem>>, vector<1x16x16x128xf32>
    %125 = vector.shape_cast %124 : vector<1x16x16x128xf32> to vector<16x16x128xf32>
    %126 = vector.extract_strided_slice %1 {offsets = [17, 0], sizes = [1, 128], strides = [1, 1]} : vector<49x128xf32> to vector<1x128xf32>
    %127 = vector.shape_cast %126 : vector<1x128xf32> to vector<1x1x128xf32>
    %128 = vector.broadcast %127 : vector<1x1x128xf32> to vector<16x16x128xf32>
    %129 = arith.mulf %125, %128 : vector<16x16x128xf32>
    %130 = arith.addf %123, %129 : vector<16x16x128xf32>
    %c0_69 = arith.constant 0 : index
    %c2_70 = arith.constant 2 : index
    %c4_71 = arith.constant 4 : index
    %c0_72 = arith.constant 0 : index
    %131 = vector.load %arg1[%c0_69, %c2_70, %c4_71, %c0_72] : memref<1x22x22x128xf32, #tpu.memory_space<vmem>>, vector<1x16x16x128xf32>
    %132 = vector.shape_cast %131 : vector<1x16x16x128xf32> to vector<16x16x128xf32>
    %133 = vector.extract_strided_slice %1 {offsets = [18, 0], sizes = [1, 128], strides = [1, 1]} : vector<49x128xf32> to vector<1x128xf32>
    %134 = vector.shape_cast %133 : vector<1x128xf32> to vector<1x1x128xf32>
    %135 = vector.broadcast %134 : vector<1x1x128xf32> to vector<16x16x128xf32>
    %136 = arith.mulf %132, %135 : vector<16x16x128xf32>
    %137 = arith.addf %130, %136 : vector<16x16x128xf32>
    %c0_73 = arith.constant 0 : index
    %c2_74 = arith.constant 2 : index
    %c5_75 = arith.constant 5 : index
    %c0_76 = arith.constant 0 : index
    %138 = vector.load %arg1[%c0_73, %c2_74, %c5_75, %c0_76] : memref<1x22x22x128xf32, #tpu.memory_space<vmem>>, vector<1x16x16x128xf32>
    %139 = vector.shape_cast %138 : vector<1x16x16x128xf32> to vector<16x16x128xf32>
    %140 = vector.extract_strided_slice %1 {offsets = [19, 0], sizes = [1, 128], strides = [1, 1]} : vector<49x128xf32> to vector<1x128xf32>
    %141 = vector.shape_cast %140 : vector<1x128xf32> to vector<1x1x128xf32>
    %142 = vector.broadcast %141 : vector<1x1x128xf32> to vector<16x16x128xf32>
    %143 = arith.mulf %139, %142 : vector<16x16x128xf32>
    %144 = arith.addf %137, %143 : vector<16x16x128xf32>
    %c0_77 = arith.constant 0 : index
    %c2_78 = arith.constant 2 : index
    %c6_79 = arith.constant 6 : index
    %c0_80 = arith.constant 0 : index
    %145 = vector.load %arg1[%c0_77, %c2_78, %c6_79, %c0_80] : memref<1x22x22x128xf32, #tpu.memory_space<vmem>>, vector<1x16x16x128xf32>
    %146 = vector.shape_cast %145 : vector<1x16x16x128xf32> to vector<16x16x128xf32>
    %147 = vector.extract_strided_slice %1 {offsets = [20, 0], sizes = [1, 128], strides = [1, 1]} : vector<49x128xf32> to vector<1x128xf32>
    %148 = vector.shape_cast %147 : vector<1x128xf32> to vector<1x1x128xf32>
    %149 = vector.broadcast %148 : vector<1x1x128xf32> to vector<16x16x128xf32>
    %150 = arith.mulf %146, %149 : vector<16x16x128xf32>
    %151 = arith.addf %144, %150 : vector<16x16x128xf32>
    %c0_81 = arith.constant 0 : index
    %c3_82 = arith.constant 3 : index
    %c0_83 = arith.constant 0 : index
    %c0_84 = arith.constant 0 : index
    %152 = vector.load %arg1[%c0_81, %c3_82, %c0_83, %c0_84] : memref<1x22x22x128xf32, #tpu.memory_space<vmem>>, vector<1x16x16x128xf32>
    %153 = vector.shape_cast %152 : vector<1x16x16x128xf32> to vector<16x16x128xf32>
    %154 = vector.extract_strided_slice %1 {offsets = [21, 0], sizes = [1, 128], strides = [1, 1]} : vector<49x128xf32> to vector<1x128xf32>
    %155 = vector.shape_cast %154 : vector<1x128xf32> to vector<1x1x128xf32>
    %156 = vector.broadcast %155 : vector<1x1x128xf32> to vector<16x16x128xf32>
    %157 = arith.mulf %153, %156 : vector<16x16x128xf32>
    %158 = arith.addf %151, %157 : vector<16x16x128xf32>
    %c0_85 = arith.constant 0 : index
    %c3_86 = arith.constant 3 : index
    %c1_87 = arith.constant 1 : index
    %c0_88 = arith.constant 0 : index
    %159 = vector.load %arg1[%c0_85, %c3_86, %c1_87, %c0_88] : memref<1x22x22x128xf32, #tpu.memory_space<vmem>>, vector<1x16x16x128xf32>
    %160 = vector.shape_cast %159 : vector<1x16x16x128xf32> to vector<16x16x128xf32>
    %161 = vector.extract_strided_slice %1 {offsets = [22, 0], sizes = [1, 128], strides = [1, 1]} : vector<49x128xf32> to vector<1x128xf32>
    %162 = vector.shape_cast %161 : vector<1x128xf32> to vector<1x1x128xf32>
    %163 = vector.broadcast %162 : vector<1x1x128xf32> to vector<16x16x128xf32>
    %164 = arith.mulf %160, %163 : vector<16x16x128xf32>
    %165 = arith.addf %158, %164 : vector<16x16x128xf32>
    %c0_89 = arith.constant 0 : index
    %c3_90 = arith.constant 3 : index
    %c2_91 = arith.constant 2 : index
    %c0_92 = arith.constant 0 : index
    %166 = vector.load %arg1[%c0_89, %c3_90, %c2_91, %c0_92] : memref<1x22x22x128xf32, #tpu.memory_space<vmem>>, vector<1x16x16x128xf32>
    %167 = vector.shape_cast %166 : vector<1x16x16x128xf32> to vector<16x16x128xf32>
    %168 = vector.extract_strided_slice %1 {offsets = [23, 0], sizes = [1, 128], strides = [1, 1]} : vector<49x128xf32> to vector<1x128xf32>
    %169 = vector.shape_cast %168 : vector<1x128xf32> to vector<1x1x128xf32>
    %170 = vector.broadcast %169 : vector<1x1x128xf32> to vector<16x16x128xf32>
    %171 = arith.mulf %167, %170 : vector<16x16x128xf32>
    %172 = arith.addf %165, %171 : vector<16x16x128xf32>
    %c0_93 = arith.constant 0 : index
    %c3_94 = arith.constant 3 : index
    %c3_95 = arith.constant 3 : index
    %c0_96 = arith.constant 0 : index
    %173 = vector.load %arg1[%c0_93, %c3_94, %c3_95, %c0_96] : memref<1x22x22x128xf32, #tpu.memory_space<vmem>>, vector<1x16x16x128xf32>
    %174 = vector.shape_cast %173 : vector<1x16x16x128xf32> to vector<16x16x128xf32>
    %175 = vector.extract_strided_slice %1 {offsets = [24, 0], sizes = [1, 128], strides = [1, 1]} : vector<49x128xf32> to vector<1x128xf32>
    %176 = vector.shape_cast %175 : vector<1x128xf32> to vector<1x1x128xf32>
    %177 = vector.broadcast %176 : vector<1x1x128xf32> to vector<16x16x128xf32>
    %178 = arith.mulf %174, %177 : vector<16x16x128xf32>
    %179 = arith.addf %172, %178 : vector<16x16x128xf32>
    %c0_97 = arith.constant 0 : index
    %c3_98 = arith.constant 3 : index
    %c4_99 = arith.constant 4 : index
    %c0_100 = arith.constant 0 : index
    %180 = vector.load %arg1[%c0_97, %c3_98, %c4_99, %c0_100] : memref<1x22x22x128xf32, #tpu.memory_space<vmem>>, vector<1x16x16x128xf32>
    %181 = vector.shape_cast %180 : vector<1x16x16x128xf32> to vector<16x16x128xf32>
    %182 = vector.extract_strided_slice %1 {offsets = [25, 0], sizes = [1, 128], strides = [1, 1]} : vector<49x128xf32> to vector<1x128xf32>
    %183 = vector.shape_cast %182 : vector<1x128xf32> to vector<1x1x128xf32>
    %184 = vector.broadcast %183 : vector<1x1x128xf32> to vector<16x16x128xf32>
    %185 = arith.mulf %181, %184 : vector<16x16x128xf32>
    %186 = arith.addf %179, %185 : vector<16x16x128xf32>
    %c0_101 = arith.constant 0 : index
    %c3_102 = arith.constant 3 : index
    %c5_103 = arith.constant 5 : index
    %c0_104 = arith.constant 0 : index
    %187 = vector.load %arg1[%c0_101, %c3_102, %c5_103, %c0_104] : memref<1x22x22x128xf32, #tpu.memory_space<vmem>>, vector<1x16x16x128xf32>
    %188 = vector.shape_cast %187 : vector<1x16x16x128xf32> to vector<16x16x128xf32>
    %189 = vector.extract_strided_slice %1 {offsets = [26, 0], sizes = [1, 128], strides = [1, 1]} : vector<49x128xf32> to vector<1x128xf32>
    %190 = vector.shape_cast %189 : vector<1x128xf32> to vector<1x1x128xf32>
    %191 = vector.broadcast %190 : vector<1x1x128xf32> to vector<16x16x128xf32>
    %192 = arith.mulf %188, %191 : vector<16x16x128xf32>
    %193 = arith.addf %186, %192 : vector<16x16x128xf32>
    %c0_105 = arith.constant 0 : index
    %c3_106 = arith.constant 3 : index
    %c6_107 = arith.constant 6 : index
    %c0_108 = arith.constant 0 : index
    %194 = vector.load %arg1[%c0_105, %c3_106, %c6_107, %c0_108] : memref<1x22x22x128xf32, #tpu.memory_space<vmem>>, vector<1x16x16x128xf32>
    %195 = vector.shape_cast %194 : vector<1x16x16x128xf32> to vector<16x16x128xf32>
    %196 = vector.extract_strided_slice %1 {offsets = [27, 0], sizes = [1, 128], strides = [1, 1]} : vector<49x128xf32> to vector<1x128xf32>
    %197 = vector.shape_cast %196 : vector<1x128xf32> to vector<1x1x128xf32>
    %198 = vector.broadcast %197 : vector<1x1x128xf32> to vector<16x16x128xf32>
    %199 = arith.mulf %195, %198 : vector<16x16x128xf32>
    %200 = arith.addf %193, %199 : vector<16x16x128xf32>
    %c0_109 = arith.constant 0 : index
    %c4_110 = arith.constant 4 : index
    %c0_111 = arith.constant 0 : index
    %c0_112 = arith.constant 0 : index
    %201 = vector.load %arg1[%c0_109, %c4_110, %c0_111, %c0_112] : memref<1x22x22x128xf32, #tpu.memory_space<vmem>>, vector<1x16x16x128xf32>
    %202 = vector.shape_cast %201 : vector<1x16x16x128xf32> to vector<16x16x128xf32>
    %203 = vector.extract_strided_slice %1 {offsets = [28, 0], sizes = [1, 128], strides = [1, 1]} : vector<49x128xf32> to vector<1x128xf32>
    %204 = vector.shape_cast %203 : vector<1x128xf32> to vector<1x1x128xf32>
    %205 = vector.broadcast %204 : vector<1x1x128xf32> to vector<16x16x128xf32>
    %206 = arith.mulf %202, %205 : vector<16x16x128xf32>
    %207 = arith.addf %200, %206 : vector<16x16x128xf32>
    %c0_113 = arith.constant 0 : index
    %c4_114 = arith.constant 4 : index
    %c1_115 = arith.constant 1 : index
    %c0_116 = arith.constant 0 : index
    %208 = vector.load %arg1[%c0_113, %c4_114, %c1_115, %c0_116] : memref<1x22x22x128xf32, #tpu.memory_space<vmem>>, vector<1x16x16x128xf32>
    %209 = vector.shape_cast %208 : vector<1x16x16x128xf32> to vector<16x16x128xf32>
    %210 = vector.extract_strided_slice %1 {offsets = [29, 0], sizes = [1, 128], strides = [1, 1]} : vector<49x128xf32> to vector<1x128xf32>
    %211 = vector.shape_cast %210 : vector<1x128xf32> to vector<1x1x128xf32>
    %212 = vector.broadcast %211 : vector<1x1x128xf32> to vector<16x16x128xf32>
    %213 = arith.mulf %209, %212 : vector<16x16x128xf32>
    %214 = arith.addf %207, %213 : vector<16x16x128xf32>
    %c0_117 = arith.constant 0 : index
    %c4_118 = arith.constant 4 : index
    %c2_119 = arith.constant 2 : index
    %c0_120 = arith.constant 0 : index
    %215 = vector.load %arg1[%c0_117, %c4_118, %c2_119, %c0_120] : memref<1x22x22x128xf32, #tpu.memory_space<vmem>>, vector<1x16x16x128xf32>
    %216 = vector.shape_cast %215 : vector<1x16x16x128xf32> to vector<16x16x128xf32>
    %217 = vector.extract_strided_slice %1 {offsets = [30, 0], sizes = [1, 128], strides = [1, 1]} : vector<49x128xf32> to vector<1x128xf32>
    %218 = vector.shape_cast %217 : vector<1x128xf32> to vector<1x1x128xf32>
    %219 = vector.broadcast %218 : vector<1x1x128xf32> to vector<16x16x128xf32>
    %220 = arith.mulf %216, %219 : vector<16x16x128xf32>
    %221 = arith.addf %214, %220 : vector<16x16x128xf32>
    %c0_121 = arith.constant 0 : index
    %c4_122 = arith.constant 4 : index
    %c3_123 = arith.constant 3 : index
    %c0_124 = arith.constant 0 : index
    %222 = vector.load %arg1[%c0_121, %c4_122, %c3_123, %c0_124] : memref<1x22x22x128xf32, #tpu.memory_space<vmem>>, vector<1x16x16x128xf32>
    %223 = vector.shape_cast %222 : vector<1x16x16x128xf32> to vector<16x16x128xf32>
    %224 = vector.extract_strided_slice %1 {offsets = [31, 0], sizes = [1, 128], strides = [1, 1]} : vector<49x128xf32> to vector<1x128xf32>
    %225 = vector.shape_cast %224 : vector<1x128xf32> to vector<1x1x128xf32>
    %226 = vector.broadcast %225 : vector<1x1x128xf32> to vector<16x16x128xf32>
    %227 = arith.mulf %223, %226 : vector<16x16x128xf32>
    %228 = arith.addf %221, %227 : vector<16x16x128xf32>
    %c0_125 = arith.constant 0 : index
    %c4_126 = arith.constant 4 : index
    %c4_127 = arith.constant 4 : index
    %c0_128 = arith.constant 0 : index
    %229 = vector.load %arg1[%c0_125, %c4_126, %c4_127, %c0_128] : memref<1x22x22x128xf32, #tpu.memory_space<vmem>>, vector<1x16x16x128xf32>
    %230 = vector.shape_cast %229 : vector<1x16x16x128xf32> to vector<16x16x128xf32>
    %231 = vector.extract_strided_slice %1 {offsets = [32, 0], sizes = [1, 128], strides = [1, 1]} : vector<49x128xf32> to vector<1x128xf32>
    %232 = vector.shape_cast %231 : vector<1x128xf32> to vector<1x1x128xf32>
    %233 = vector.broadcast %232 : vector<1x1x128xf32> to vector<16x16x128xf32>
    %234 = arith.mulf %230, %233 : vector<16x16x128xf32>
    %235 = arith.addf %228, %234 : vector<16x16x128xf32>
    %c0_129 = arith.constant 0 : index
    %c4_130 = arith.constant 4 : index
    %c5_131 = arith.constant 5 : index
    %c0_132 = arith.constant 0 : index
    %236 = vector.load %arg1[%c0_129, %c4_130, %c5_131, %c0_132] : memref<1x22x22x128xf32, #tpu.memory_space<vmem>>, vector<1x16x16x128xf32>
    %237 = vector.shape_cast %236 : vector<1x16x16x128xf32> to vector<16x16x128xf32>
    %238 = vector.extract_strided_slice %1 {offsets = [33, 0], sizes = [1, 128], strides = [1, 1]} : vector<49x128xf32> to vector<1x128xf32>
    %239 = vector.shape_cast %238 : vector<1x128xf32> to vector<1x1x128xf32>
    %240 = vector.broadcast %239 : vector<1x1x128xf32> to vector<16x16x128xf32>
    %241 = arith.mulf %237, %240 : vector<16x16x128xf32>
    %242 = arith.addf %235, %241 : vector<16x16x128xf32>
    %c0_133 = arith.constant 0 : index
    %c4_134 = arith.constant 4 : index
    %c6_135 = arith.constant 6 : index
    %c0_136 = arith.constant 0 : index
    %243 = vector.load %arg1[%c0_133, %c4_134, %c6_135, %c0_136] : memref<1x22x22x128xf32, #tpu.memory_space<vmem>>, vector<1x16x16x128xf32>
    %244 = vector.shape_cast %243 : vector<1x16x16x128xf32> to vector<16x16x128xf32>
    %245 = vector.extract_strided_slice %1 {offsets = [34, 0], sizes = [1, 128], strides = [1, 1]} : vector<49x128xf32> to vector<1x128xf32>
    %246 = vector.shape_cast %245 : vector<1x128xf32> to vector<1x1x128xf32>
    %247 = vector.broadcast %246 : vector<1x1x128xf32> to vector<16x16x128xf32>
    %248 = arith.mulf %244, %247 : vector<16x16x128xf32>
    %249 = arith.addf %242, %248 : vector<16x16x128xf32>
    %c0_137 = arith.constant 0 : index
    %c5_138 = arith.constant 5 : index
    %c0_139 = arith.constant 0 : index
    %c0_140 = arith.constant 0 : index
    %250 = vector.load %arg1[%c0_137, %c5_138, %c0_139, %c0_140] : memref<1x22x22x128xf32, #tpu.memory_space<vmem>>, vector<1x16x16x128xf32>
    %251 = vector.shape_cast %250 : vector<1x16x16x128xf32> to vector<16x16x128xf32>
    %252 = vector.extract_strided_slice %1 {offsets = [35, 0], sizes = [1, 128], strides = [1, 1]} : vector<49x128xf32> to vector<1x128xf32>
    %253 = vector.shape_cast %252 : vector<1x128xf32> to vector<1x1x128xf32>
    %254 = vector.broadcast %253 : vector<1x1x128xf32> to vector<16x16x128xf32>
    %255 = arith.mulf %251, %254 : vector<16x16x128xf32>
    %256 = arith.addf %249, %255 : vector<16x16x128xf32>
    %c0_141 = arith.constant 0 : index
    %c5_142 = arith.constant 5 : index
    %c1_143 = arith.constant 1 : index
    %c0_144 = arith.constant 0 : index
    %257 = vector.load %arg1[%c0_141, %c5_142, %c1_143, %c0_144] : memref<1x22x22x128xf32, #tpu.memory_space<vmem>>, vector<1x16x16x128xf32>
    %258 = vector.shape_cast %257 : vector<1x16x16x128xf32> to vector<16x16x128xf32>
    %259 = vector.extract_strided_slice %1 {offsets = [36, 0], sizes = [1, 128], strides = [1, 1]} : vector<49x128xf32> to vector<1x128xf32>
    %260 = vector.shape_cast %259 : vector<1x128xf32> to vector<1x1x128xf32>
    %261 = vector.broadcast %260 : vector<1x1x128xf32> to vector<16x16x128xf32>
    %262 = arith.mulf %258, %261 : vector<16x16x128xf32>
    %263 = arith.addf %256, %262 : vector<16x16x128xf32>
    %c0_145 = arith.constant 0 : index
    %c5_146 = arith.constant 5 : index
    %c2_147 = arith.constant 2 : index
    %c0_148 = arith.constant 0 : index
    %264 = vector.load %arg1[%c0_145, %c5_146, %c2_147, %c0_148] : memref<1x22x22x128xf32, #tpu.memory_space<vmem>>, vector<1x16x16x128xf32>
    %265 = vector.shape_cast %264 : vector<1x16x16x128xf32> to vector<16x16x128xf32>
    %266 = vector.extract_strided_slice %1 {offsets = [37, 0], sizes = [1, 128], strides = [1, 1]} : vector<49x128xf32> to vector<1x128xf32>
    %267 = vector.shape_cast %266 : vector<1x128xf32> to vector<1x1x128xf32>
    %268 = vector.broadcast %267 : vector<1x1x128xf32> to vector<16x16x128xf32>
    %269 = arith.mulf %265, %268 : vector<16x16x128xf32>
    %270 = arith.addf %263, %269 : vector<16x16x128xf32>
    %c0_149 = arith.constant 0 : index
    %c5_150 = arith.constant 5 : index
    %c3_151 = arith.constant 3 : index
    %c0_152 = arith.constant 0 : index
    %271 = vector.load %arg1[%c0_149, %c5_150, %c3_151, %c0_152] : memref<1x22x22x128xf32, #tpu.memory_space<vmem>>, vector<1x16x16x128xf32>
    %272 = vector.shape_cast %271 : vector<1x16x16x128xf32> to vector<16x16x128xf32>
    %273 = vector.extract_strided_slice %1 {offsets = [38, 0], sizes = [1, 128], strides = [1, 1]} : vector<49x128xf32> to vector<1x128xf32>
    %274 = vector.shape_cast %273 : vector<1x128xf32> to vector<1x1x128xf32>
    %275 = vector.broadcast %274 : vector<1x1x128xf32> to vector<16x16x128xf32>
    %276 = arith.mulf %272, %275 : vector<16x16x128xf32>
    %277 = arith.addf %270, %276 : vector<16x16x128xf32>
    %c0_153 = arith.constant 0 : index
    %c5_154 = arith.constant 5 : index
    %c4_155 = arith.constant 4 : index
    %c0_156 = arith.constant 0 : index
    %278 = vector.load %arg1[%c0_153, %c5_154, %c4_155, %c0_156] : memref<1x22x22x128xf32, #tpu.memory_space<vmem>>, vector<1x16x16x128xf32>
    %279 = vector.shape_cast %278 : vector<1x16x16x128xf32> to vector<16x16x128xf32>
    %280 = vector.extract_strided_slice %1 {offsets = [39, 0], sizes = [1, 128], strides = [1, 1]} : vector<49x128xf32> to vector<1x128xf32>
    %281 = vector.shape_cast %280 : vector<1x128xf32> to vector<1x1x128xf32>
    %282 = vector.broadcast %281 : vector<1x1x128xf32> to vector<16x16x128xf32>
    %283 = arith.mulf %279, %282 : vector<16x16x128xf32>
    %284 = arith.addf %277, %283 : vector<16x16x128xf32>
    %c0_157 = arith.constant 0 : index
    %c5_158 = arith.constant 5 : index
    %c5_159 = arith.constant 5 : index
    %c0_160 = arith.constant 0 : index
    %285 = vector.load %arg1[%c0_157, %c5_158, %c5_159, %c0_160] : memref<1x22x22x128xf32, #tpu.memory_space<vmem>>, vector<1x16x16x128xf32>
    %286 = vector.shape_cast %285 : vector<1x16x16x128xf32> to vector<16x16x128xf32>
    %287 = vector.extract_strided_slice %1 {offsets = [40, 0], sizes = [1, 128], strides = [1, 1]} : vector<49x128xf32> to vector<1x128xf32>
    %288 = vector.shape_cast %287 : vector<1x128xf32> to vector<1x1x128xf32>
    %289 = vector.broadcast %288 : vector<1x1x128xf32> to vector<16x16x128xf32>
    %290 = arith.mulf %286, %289 : vector<16x16x128xf32>
    %291 = arith.addf %284, %290 : vector<16x16x128xf32>
    %c0_161 = arith.constant 0 : index
    %c5_162 = arith.constant 5 : index
    %c6_163 = arith.constant 6 : index
    %c0_164 = arith.constant 0 : index
    %292 = vector.load %arg1[%c0_161, %c5_162, %c6_163, %c0_164] : memref<1x22x22x128xf32, #tpu.memory_space<vmem>>, vector<1x16x16x128xf32>
    %293 = vector.shape_cast %292 : vector<1x16x16x128xf32> to vector<16x16x128xf32>
    %294 = vector.extract_strided_slice %1 {offsets = [41, 0], sizes = [1, 128], strides = [1, 1]} : vector<49x128xf32> to vector<1x128xf32>
    %295 = vector.shape_cast %294 : vector<1x128xf32> to vector<1x1x128xf32>
    %296 = vector.broadcast %295 : vector<1x1x128xf32> to vector<16x16x128xf32>
    %297 = arith.mulf %293, %296 : vector<16x16x128xf32>
    %298 = arith.addf %291, %297 : vector<16x16x128xf32>
    %c0_165 = arith.constant 0 : index
    %c6_166 = arith.constant 6 : index
    %c0_167 = arith.constant 0 : index
    %c0_168 = arith.constant 0 : index
    %299 = vector.load %arg1[%c0_165, %c6_166, %c0_167, %c0_168] : memref<1x22x22x128xf32, #tpu.memory_space<vmem>>, vector<1x16x16x128xf32>
    %300 = vector.shape_cast %299 : vector<1x16x16x128xf32> to vector<16x16x128xf32>
    %301 = vector.extract_strided_slice %1 {offsets = [42, 0], sizes = [1, 128], strides = [1, 1]} : vector<49x128xf32> to vector<1x128xf32>
    %302 = vector.shape_cast %301 : vector<1x128xf32> to vector<1x1x128xf32>
    %303 = vector.broadcast %302 : vector<1x1x128xf32> to vector<16x16x128xf32>
    %304 = arith.mulf %300, %303 : vector<16x16x128xf32>
    %305 = arith.addf %298, %304 : vector<16x16x128xf32>
    %c0_169 = arith.constant 0 : index
    %c6_170 = arith.constant 6 : index
    %c1_171 = arith.constant 1 : index
    %c0_172 = arith.constant 0 : index
    %306 = vector.load %arg1[%c0_169, %c6_170, %c1_171, %c0_172] : memref<1x22x22x128xf32, #tpu.memory_space<vmem>>, vector<1x16x16x128xf32>
    %307 = vector.shape_cast %306 : vector<1x16x16x128xf32> to vector<16x16x128xf32>
    %308 = vector.extract_strided_slice %1 {offsets = [43, 0], sizes = [1, 128], strides = [1, 1]} : vector<49x128xf32> to vector<1x128xf32>
    %309 = vector.shape_cast %308 : vector<1x128xf32> to vector<1x1x128xf32>
    %310 = vector.broadcast %309 : vector<1x1x128xf32> to vector<16x16x128xf32>
    %311 = arith.mulf %307, %310 : vector<16x16x128xf32>
    %312 = arith.addf %305, %311 : vector<16x16x128xf32>
    %c0_173 = arith.constant 0 : index
    %c6_174 = arith.constant 6 : index
    %c2_175 = arith.constant 2 : index
    %c0_176 = arith.constant 0 : index
    %313 = vector.load %arg1[%c0_173, %c6_174, %c2_175, %c0_176] : memref<1x22x22x128xf32, #tpu.memory_space<vmem>>, vector<1x16x16x128xf32>
    %314 = vector.shape_cast %313 : vector<1x16x16x128xf32> to vector<16x16x128xf32>
    %315 = vector.extract_strided_slice %1 {offsets = [44, 0], sizes = [1, 128], strides = [1, 1]} : vector<49x128xf32> to vector<1x128xf32>
    %316 = vector.shape_cast %315 : vector<1x128xf32> to vector<1x1x128xf32>
    %317 = vector.broadcast %316 : vector<1x1x128xf32> to vector<16x16x128xf32>
    %318 = arith.mulf %314, %317 : vector<16x16x128xf32>
    %319 = arith.addf %312, %318 : vector<16x16x128xf32>
    %c0_177 = arith.constant 0 : index
    %c6_178 = arith.constant 6 : index
    %c3_179 = arith.constant 3 : index
    %c0_180 = arith.constant 0 : index
    %320 = vector.load %arg1[%c0_177, %c6_178, %c3_179, %c0_180] : memref<1x22x22x128xf32, #tpu.memory_space<vmem>>, vector<1x16x16x128xf32>
    %321 = vector.shape_cast %320 : vector<1x16x16x128xf32> to vector<16x16x128xf32>
    %322 = vector.extract_strided_slice %1 {offsets = [45, 0], sizes = [1, 128], strides = [1, 1]} : vector<49x128xf32> to vector<1x128xf32>
    %323 = vector.shape_cast %322 : vector<1x128xf32> to vector<1x1x128xf32>
    %324 = vector.broadcast %323 : vector<1x1x128xf32> to vector<16x16x128xf32>
    %325 = arith.mulf %321, %324 : vector<16x16x128xf32>
    %326 = arith.addf %319, %325 : vector<16x16x128xf32>
    %c0_181 = arith.constant 0 : index
    %c6_182 = arith.constant 6 : index
    %c4_183 = arith.constant 4 : index
    %c0_184 = arith.constant 0 : index
    %327 = vector.load %arg1[%c0_181, %c6_182, %c4_183, %c0_184] : memref<1x22x22x128xf32, #tpu.memory_space<vmem>>, vector<1x16x16x128xf32>
    %328 = vector.shape_cast %327 : vector<1x16x16x128xf32> to vector<16x16x128xf32>
    %329 = vector.extract_strided_slice %1 {offsets = [46, 0], sizes = [1, 128], strides = [1, 1]} : vector<49x128xf32> to vector<1x128xf32>
    %330 = vector.shape_cast %329 : vector<1x128xf32> to vector<1x1x128xf32>
    %331 = vector.broadcast %330 : vector<1x1x128xf32> to vector<16x16x128xf32>
    %332 = arith.mulf %328, %331 : vector<16x16x128xf32>
    %333 = arith.addf %326, %332 : vector<16x16x128xf32>
    %c0_185 = arith.constant 0 : index
    %c6_186 = arith.constant 6 : index
    %c5_187 = arith.constant 5 : index
    %c0_188 = arith.constant 0 : index
    %334 = vector.load %arg1[%c0_185, %c6_186, %c5_187, %c0_188] : memref<1x22x22x128xf32, #tpu.memory_space<vmem>>, vector<1x16x16x128xf32>
    %335 = vector.shape_cast %334 : vector<1x16x16x128xf32> to vector<16x16x128xf32>
    %336 = vector.extract_strided_slice %1 {offsets = [47, 0], sizes = [1, 128], strides = [1, 1]} : vector<49x128xf32> to vector<1x128xf32>
    %337 = vector.shape_cast %336 : vector<1x128xf32> to vector<1x1x128xf32>
    %338 = vector.broadcast %337 : vector<1x1x128xf32> to vector<16x16x128xf32>
    %339 = arith.mulf %335, %338 : vector<16x16x128xf32>
    %340 = arith.addf %333, %339 : vector<16x16x128xf32>
    %c0_189 = arith.constant 0 : index
    %c6_190 = arith.constant 6 : index
    %c6_191 = arith.constant 6 : index
    %c0_192 = arith.constant 0 : index
    %341 = vector.load %arg1[%c0_189, %c6_190, %c6_191, %c0_192] : memref<1x22x22x128xf32, #tpu.memory_space<vmem>>, vector<1x16x16x128xf32>
    %342 = vector.shape_cast %341 : vector<1x16x16x128xf32> to vector<16x16x128xf32>
    %343 = vector.extract_strided_slice %1 {offsets = [48, 0], sizes = [1, 128], strides = [1, 1]} : vector<49x128xf32> to vector<1x128xf32>
    %344 = vector.shape_cast %343 : vector<1x128xf32> to vector<1x1x128xf32>
    %345 = vector.broadcast %344 : vector<1x1x128xf32> to vector<16x16x128xf32>
    %346 = arith.mulf %342, %345 : vector<16x16x128xf32>
    %347 = arith.addf %340, %346 : vector<16x16x128xf32>
    %cst = arith.constant dense<0.000000e+00> : vector<16x16xf32>
    %348 = vector.multi_reduction <add>, %347, %cst [2] : vector<16x16x128xf32> to vector<16x16xf32>
    %349 = vector.shape_cast %348 : vector<16x16xf32> to vector<16x16x1xf32>
    %cst_193 = arith.constant 1.280000e+02 : f32
    %350 = vector.broadcast %cst_193 : f32 to vector<16x16x1xf32>
    %351 = arith.divf %349, %350 : vector<16x16x1xf32>
    %352 = vector.broadcast %351 : vector<16x16x1xf32> to vector<16x16x128xf32>
    %353 = arith.subf %347, %352 : vector<16x16x128xf32>
    %354 = arith.mulf %353, %353 : vector<16x16x128xf32>
    %cst_194 = arith.constant dense<0.000000e+00> : vector<16x16xf32>
    %355 = vector.multi_reduction <add>, %354, %cst_194 [2] : vector<16x16x128xf32> to vector<16x16xf32>
    %356 = vector.shape_cast %355 : vector<16x16xf32> to vector<16x16x1xf32>
    %cst_195 = arith.constant 1.280000e+02 : f32
    %357 = vector.broadcast %cst_195 : f32 to vector<16x16x1xf32>
    %358 = arith.divf %356, %357 : vector<16x16x1xf32>
    %cst_196 = arith.constant 9.99999997E-7 : f32
    %359 = vector.broadcast %cst_196 : f32 to vector<16x16x1xf32>
    %360 = arith.addf %358, %359 : vector<16x16x1xf32>
    %361 = math.rsqrt %360 : vector<16x16x1xf32>
    %362 = vector.broadcast %361 : vector<16x16x1xf32> to vector<16x16x128xf32>
    %363 = arith.mulf %353, %362 : vector<16x16x128xf32>
    %364 = vector.extract_strided_slice %0 {offsets = [1, 0], sizes = [1, 128], strides = [1, 1]} : vector<5x128xf32> to vector<1x128xf32>
    %365 = vector.shape_cast %364 : vector<1x128xf32> to vector<1x1x128xf32>
    %366 = vector.broadcast %365 : vector<1x1x128xf32> to vector<16x16x128xf32>
    %367 = arith.mulf %363, %366 : vector<16x16x128xf32>
    %368 = vector.extract_strided_slice %0 {offsets = [2, 0], sizes = [1, 128], strides = [1, 1]} : vector<5x128xf32> to vector<1x128xf32>
    %369 = vector.shape_cast %368 : vector<1x128xf32> to vector<1x1x128xf32>
    %370 = vector.broadcast %369 : vector<1x1x128xf32> to vector<16x16x128xf32>
    %371 = arith.addf %367, %370 : vector<16x16x128xf32>
    %372 = vector.shape_cast %371 : vector<16x16x128xf32> to vector<256x128xf32>
    %373 = arith.truncf %372 : vector<256x128xf32> to vector<256x128xbf16>
    %c0_197 = arith.constant 0 : index
    %c0_198 = arith.constant 0 : index
    %374 = vector.load %arg4[%c0_197, %c0_198] : memref<128x512xbf16, #tpu.memory_space<vmem>>, vector<128x512xbf16>
    %cst_199 = arith.constant dense<0.000000e+00> : vector<256x512xf32>
    %375 = tpu.matmul %373, %374, %cst_199 {dimension_numbers = #tpu.dot_dimension_numbers<[1], [0], [0], [1], [0, 0, 1, 1], [], []>} : vector<256x128xbf16>, vector<128x512xbf16>, vector<256x512xf32> -> vector<256x512xf32>
    %c0_200 = arith.constant 0 : index
    %c0_201 = arith.constant 0 : index
    %376 = vector.load %arg5[%c0_200, %c0_201] : memref<1x512xf32, #tpu.memory_space<vmem>>, vector<1x512xf32>
    %377 = vector.broadcast %376 : vector<1x512xf32> to vector<256x512xf32>
    %378 = arith.addf %375, %377 : vector<256x512xf32>
    %379 = arith.mulf %378, %378 : vector<256x512xf32>
    %380 = arith.mulf %378, %379 : vector<256x512xf32>
    %cst_202 = arith.constant 4.471500e-02 : f32
    %381 = vector.broadcast %cst_202 : f32 to vector<256x512xf32>
    %382 = arith.mulf %381, %380 : vector<256x512xf32>
    %383 = arith.addf %378, %382 : vector<256x512xf32>
    %cst_203 = arith.constant 0.797884583 : f32
    %384 = vector.broadcast %cst_203 : f32 to vector<256x512xf32>
    %385 = arith.mulf %384, %383 : vector<256x512xf32>
    %386 = math.tanh %385 : vector<256x512xf32>
    %cst_204 = arith.constant 1.000000e+00 : f32
    %387 = vector.broadcast %cst_204 : f32 to vector<256x512xf32>
    %388 = arith.addf %387, %386 : vector<256x512xf32>
    %cst_205 = arith.constant 5.000000e-01 : f32
    %389 = vector.broadcast %cst_205 : f32 to vector<256x512xf32>
    %390 = arith.mulf %389, %388 : vector<256x512xf32>
    %391 = arith.mulf %378, %390 : vector<256x512xf32>
    %392 = arith.truncf %391 : vector<256x512xf32> to vector<256x512xbf16>
    %c0_206 = arith.constant 0 : index
    %c0_207 = arith.constant 0 : index
    %393 = vector.load %arg6[%c0_206, %c0_207] : memref<512x128xbf16, #tpu.memory_space<vmem>>, vector<512x128xbf16>
    %cst_208 = arith.constant dense<0.000000e+00> : vector<256x128xf32>
    %394 = tpu.matmul %392, %393, %cst_208 {dimension_numbers = #tpu.dot_dimension_numbers<[1], [0], [0], [1], [0, 0, 1, 1], [], []>} : vector<256x512xbf16>, vector<512x128xbf16>, vector<256x128xf32> -> vector<256x128xf32>
    %395 = vector.extract_strided_slice %0 {offsets = [3, 0], sizes = [1, 128], strides = [1, 1]} : vector<5x128xf32> to vector<1x128xf32>
    %396 = vector.broadcast %395 : vector<1x128xf32> to vector<256x128xf32>
    %397 = arith.addf %394, %396 : vector<256x128xf32>
    %398 = vector.extract_strided_slice %0 {offsets = [4, 0], sizes = [1, 128], strides = [1, 1]} : vector<5x128xf32> to vector<1x128xf32>
    %399 = vector.broadcast %398 : vector<1x128xf32> to vector<256x128xf32>
    %400 = arith.mulf %397, %399 : vector<256x128xf32>
    %c0_209 = arith.constant 0 : index
    %c3_210 = arith.constant 3 : index
    %c3_211 = arith.constant 3 : index
    %c0_212 = arith.constant 0 : index
    %401 = vector.load %arg1[%c0_209, %c3_210, %c3_211, %c0_212] : memref<1x22x22x128xf32, #tpu.memory_space<vmem>>, vector<1x16x16x128xf32>
    %402 = vector.shape_cast %401 : vector<1x16x16x128xf32> to vector<16x16x128xf32>
    %403 = vector.shape_cast %402 : vector<16x16x128xf32> to vector<256x128xf32>
    %404 = arith.addf %403, %400 : vector<256x128xf32>
    %405 = vector.shape_cast %404 : vector<256x128xf32> to vector<16x16x128xf32>
    %c0_213 = arith.constant 0 : index
    %c0_214 = arith.constant 0 : index
    %c0_215 = arith.constant 0 : index
    %c0_216 = arith.constant 0 : index
    %406 = vector.load %arg7[%c0_213, %c0_214, %c0_215, %c0_216] : memref<1x16x16x128xf32, #tpu.memory_space<vmem>>, vector<1x16x16x128xf32>
    %407 = vector.shape_cast %406 : vector<1x16x16x128xf32> to vector<16x16x128xf32>
    %408 = vector.shape_cast %405 : vector<16x16x128xf32> to vector<1x16x16x128xf32>
    tpu.vector_store %arg7[%c0_213, %c0_214, %c0_215, %c0_216], %408 {strides = array<i32>} : memref<1x16x16x128xf32, #tpu.memory_space<vmem>>, vector<1x16x16x128xf32>,
    return
  }
  func.func @transform_0(%arg0: i32) -> (i32, i32, i32, i32) {
    %c0_i32 = arith.constant 0 : i32
    %c0_i32_0 = arith.constant 0 : i32
    %c0_i32_1 = arith.constant 0 : i32
    %c0_i32_2 = arith.constant 0 : i32
    return %arg0, %c0_i32, %c0_i32_0, %c0_i32_1 : i32, i32, i32, i32
  }
  func.func @transform_1(%arg0: i32) -> (i32, i32) {
    %c0_i32 = arith.constant 0 : i32
    %c0_i32_0 = arith.constant 0 : i32
    %c0_i32_1 = arith.constant 0 : i32
    return %c0_i32, %c0_i32_0 : i32, i32
  }
  func.func @transform_2(%arg0: i32) -> (i32, i32) {
    %c0_i32 = arith.constant 0 : i32
    %c0_i32_0 = arith.constant 0 : i32
    %c0_i32_1 = arith.constant 0 : i32
    return %c0_i32, %c0_i32_0 : i32, i32
  }
  func.func @transform_3(%arg0: i32) -> (i32, i32) {
    %c0_i32 = arith.constant 0 : i32
    %c0_i32_0 = arith.constant 0 : i32
    %c0_i32_1 = arith.constant 0 : i32
    return %c0_i32, %c0_i32_0 : i32, i32
  }
  func.func @transform_4(%arg0: i32) -> (i32, i32) {
    %c0_i32 = arith.constant 0 : i32
    %c0_i32_0 = arith.constant 0 : i32
    %c0_i32_1 = arith.constant 0 : i32
    return %c0_i32, %c0_i32_0 : i32, i32
  }
  func.func @transform_5(%arg0: i32) -> (i32, i32) {
    %c0_i32 = arith.constant 0 : i32
    %c0_i32_0 = arith.constant 0 : i32
    %c0_i32_1 = arith.constant 0 : i32
    return %c0_i32, %c0_i32_0 : i32, i32
  }
  func.func @transform_6(%arg0: i32) -> (i32, i32, i32, i32) {
    %c0_i32 = arith.constant 0 : i32
    %c0_i32_0 = arith.constant 0 : i32
    %c0_i32_1 = arith.constant 0 : i32
    %c0_i32_2 = arith.constant 0 : i32
    return %arg0, %c0_i32, %c0_i32_0, %c0_i32_1 : i32, i32, i32, i32
  }
}

</mosaic_0001>

<llo_original>
// kernel: tpu_custom_call.1
$region0: #{tpu_custom_call.1}
  #allocation0 [shape = 'u32[]', space=smem, size = 0x4, offset = 0x4, fixed_abs, tag = 'smem constant byte address 0x4 - core index']
  #allocation1 [shape = 'u32[144,128]{1,0:T(1,128)}', space=vmem, size = 0x12000, scoped, tag = 'internal scratch']
  %s0 = inlined_call_operand.vmem [shape: f32[2,22,22,128], index: 0, kind: input, shape index: {}]
  %s1 = inlined_call_operand.vmem [shape: f32[49,128], index: 1, kind: input, shape index: {}]
  %s2 = inlined_call_operand.vmem [shape: f32[5,128], index: 2, kind: input, shape index: {}]
  %s3 = inlined_call_operand.vmem [shape: bf16[128,512], index: 3, kind: input, shape index: {}]
  %s4 = inlined_call_operand.vmem [shape: f32[1,512], index: 4, kind: input, shape index: {}]
  %s5 = inlined_call_operand.vmem [shape: bf16[512,128], index: 5, kind: input, shape index: {}]
  %s6 = inlined_call_operand.hbm [shape: f32[2,16,16,128], index: 6, kind: output, shape index: {}]
  %s7 = sld [smem:[#allocation0]]
  $region57: #{tpu_custom_call.1} parent=0
    _
  %s9 = ssub.s32 1, %s7
  %s10 = scalar_select 0, %s9, %s7
  $region1: #{tpu_custom_call.1} parent=0
    #allocation2 [shape = 'u8[262144]{0}', space=vmem, size = 0x40000, scoped, tag = 'output window, operand 0']
    #allocation3 [shape = 's32[2]{0}', space=sflag, size = 0x8, scoped, tag = 'scoped memory for tpu_custom_call.1']
    %11 = vsyncpa [#allocation3], 0
    %s12 = scalar_lea.sflag [#allocation3], 1
    %13 = vsyncpa %s12, 0
    loop: start=0, step=1, limit=4
    $region2: #{tpu_custom_call.1} parent=1 // loop_pre_header
      _
    $region3: #{tpu_custom_call.1} parent=1 // loop_header
      %s15 = sphi 0, %s19
      %p16 = scmp.ge.s32.totalorder %s15, 4
      %s25 = sphi 0, %s27
      %s28 = sphi 0, %s25
      %s29 = sphi 0, %s28
      %s45 = sphi 0, %s29
      %s49 = sphi 0, %s49
      %s51 = sphi 0, %s49
      %s52 = sphi 0, %s51
      %s66 = sphi 0, %s52
      %s70 = sphi 0, %s70
      %s72 = sphi 0, %s70
      %s73 = sphi 0, %s72
      %s87 = sphi 0, %s73
      %s91 = sphi 0, %s91
      %s93 = sphi 0, %s91
      %s94 = sphi 0, %s93
      %s108 = sphi 0, %s94
      %s112 = sphi 0, %s112
      %s114 = sphi 0, %s112
      %s115 = sphi 0, %s114
      %s129 = sphi 0, %s115
      %s133 = sphi 0, %s133
      %s135 = sphi 0, %s133
      %s136 = sphi 0, %s135
      %s150 = sphi 0, %s136
      %s156 = sphi 0, %s158
      %s159 = sphi 0, %s156
      %s160 = sphi 0, %s159
      %s176 = sphi 0, %s160
    $region4: #{tpu_custom_call.1} parent=1 // loop_header_branch
      %18 = sbr.rel (%p16) target = $region8
    $region5: #{tpu_custom_call.1} parent=1 // loop_body
      %s20 = ssub.s32 %s15, 1
      %s21 = ssub.s32 %s15, 2
      %s22 = sadd.s32 %s15, 1
      %s23 = ssub.s32 %s15, %s22
      %p24 = scmp.eq.s32.totalorder %s23, 0
      %s26 = sadd.s32 %s25, 1
      %s27 = scalar_select %p24, %s25, %s26
      %p30 = pneg %p24
      %p31 = scmp.eq.s32.totalorder %s15, 1
      %p32 = por %p30, %p31
      %p33 = scmp.ne.s32.totalorder %s25, %s28
      %p34 = scmp.eq.s32.totalorder %s15, 0
      %p35 = por %p33, %p34
      %p36 = scmp.ne.s32.totalorder %s25, %s28
      %p37 = scmp.eq.s32.totalorder %s20, 1
      %p38 = por %p36, %p37
      %p39 = scmp.ne.s32.totalorder %s28, %s29
      %p40 = scmp.eq.s32.totalorder %s20, 0
      %p41 = por %p39, %p40
      %p42 = scmp.ne.s32.totalorder %s28, %s29
      %p43 = scmp.eq.s32.totalorder %s21, 1
      %p44 = por %p42, %p43
      %p46 = scmp.ne.s32.totalorder %s29, %s45
      %p47 = scmp.eq.s32.totalorder %s21, 0
      %p48 = por %p46, %p47
      %s50 = sadd.s32 %s49, 1
      %p53 = scmp.eq.s32.totalorder %s15, 1
      %p54 = scmp.ne.s32.totalorder %s49, %s51
      %p55 = scmp.eq.s32.totalorder %s15, 0
      %p56 = por %p54, %p55
      %p57 = scmp.ne.s32.totalorder %s49, %s51
      %p58 = scmp.eq.s32.totalorder %s20, 1
      %p59 = por %p57, %p58
      %p60 = scmp.ne.s32.totalorder %s51, %s52
      %p61 = scmp.eq.s32.totalorder %s20, 0
      %p62 = por %p60, %p61
      %p63 = scmp.ne.s32.totalorder %s51, %s52
      %p64 = scmp.eq.s32.totalorder %s21, 1
      %p65 = por %p63, %p64
      %p67 = scmp.ne.s32.totalorder %s52, %s66
      %p68 = scmp.eq.s32.totalorder %s21, 0
      %p69 = por %p67, %p68
      %s71 = sadd.s32 %s70, 1
      %p74 = scmp.eq.s32.totalorder %s15, 1
      %p75 = scmp.ne.s32.totalorder %s70, %s72
      %p76 = scmp.eq.s32.totalorder %s15, 0
      %p77 = por %p75, %p76
      %p78 = scmp.ne.s32.totalorder %s70, %s72
      %p79 = scmp.eq.s32.totalorder %s20, 1
      %p80 = por %p78, %p79
      %p81 = scmp.ne.s32.totalorder %s72, %s73
      %p82 = scmp.eq.s32.totalorder %s20, 0
      %p83 = por %p81, %p82
      %p84 = scmp.ne.s32.totalorder %s72, %s73
      %p85 = scmp.eq.s32.totalorder %s21, 1
      %p86 = por %p84, %p85
      %p88 = scmp.ne.s32.totalorder %s73, %s87
      %p89 = scmp.eq.s32.totalorder %s21, 0
      %p90 = por %p88, %p89
      %s92 = sadd.s32 %s91, 1
      %p95 = scmp.eq.s32.totalorder %s15, 1
      %p96 = scmp.ne.s32.totalorder %s91, %s93
      %p97 = scmp.eq.s32.totalorder %s15, 0
      %p98 = por %p96, %p97
      %p99 = scmp.ne.s32.totalorder %s91, %s93
      %p100 = scmp.eq.s32.totalorder %s20, 1
      %p101 = por %p99, %p100
      %p102 = scmp.ne.s32.totalorder %s93, %s94
      %p103 = scmp.eq.s32.totalorder %s20, 0
      %p104 = por %p102, %p103
      %p105 = scmp.ne.s32.totalorder %s93, %s94
      %p106 = scmp.eq.s32.totalorder %s21, 1
      %p107 = por %p105, %p106
      %p109 = scmp.ne.s32.totalorder %s94, %s108
      %p110 = scmp.eq.s32.totalorder %s21, 0
      %p111 = por %p109, %p110
      %s113 = sadd.s32 %s112, 1
      %p116 = scmp.eq.s32.totalorder %s15, 1
      %p117 = scmp.ne.s32.totalorder %s112, %s114
      %p118 = scmp.eq.s32.totalorder %s15, 0
      %p119 = por %p117, %p118
      %p120 = scmp.ne.s32.totalorder %s112, %s114
      %p121 = scmp.eq.s32.totalorder %s20, 1
      %p122 = por %p120, %p121
      %p123 = scmp.ne.s32.totalorder %s114, %s115
      %p124 = scmp.eq.s32.totalorder %s20, 0
      %p125 = por %p123, %p124
      %p126 = scmp.ne.s32.totalorder %s114, %s115
      %p127 = scmp.eq.s32.totalorder %s21, 1
      %p128 = por %p126, %p127
      %p130 = scmp.ne.s32.totalorder %s115, %s129
      %p131 = scmp.eq.s32.totalorder %s21, 0
      %p132 = por %p130, %p131
      %s134 = sadd.s32 %s133, 1
      %p137 = scmp.eq.s32.totalorder %s15, 1
      %p138 = scmp.ne.s32.totalorder %s133, %s135
      %p139 = scmp.eq.s32.totalorder %s15, 0
      %p140 = por %p138, %p139
      %p141 = scmp.ne.s32.totalorder %s133, %s135
      %p142 = scmp.eq.s32.totalorder %s20, 1
      %p143 = por %p141, %p142
      %p144 = scmp.ne.s32.totalorder %s135, %s136
      %p145 = scmp.eq.s32.totalorder %s20, 0
      %p146 = por %p144, %p145
      %p147 = scmp.ne.s32.totalorder %s135, %s136
      %p148 = scmp.eq.s32.totalorder %s21, 1
      %p149 = por %p147, %p148
      %p151 = scmp.ne.s32.totalorder %s136, %s150
      %p152 = scmp.eq.s32.totalorder %s21, 0
      %p153 = por %p151, %p152
      %s154 = ssub.s32 %s15, %s22
      %p155 = scmp.eq.s32.totalorder %s154, 0
      %s157 = sadd.s32 %s156, 1
      %s158 = scalar_select %p155, %s156, %s157
      %p161 = pneg %p155
      %p162 = scmp.eq.s32.totalorder %s15, 1
      %p163 = por %p161, %p162
      %p164 = scmp.ne.s32.totalorder %s156, %s159
      %p165 = scmp.eq.s32.totalorder %s15, 0
      %p166 = por %p164, %p165
      %p167 = scmp.ne.s32.totalorder %s156, %s159
      %p168 = scmp.eq.s32.totalorder %s20, 1
      %p169 = por %p167, %p168
      %p170 = scmp.ne.s32.totalorder %s159, %s160
      %p171 = scmp.eq.s32.totalorder %s20, 0
      %p172 = por %p170, %p171
      %p173 = scmp.ne.s32.totalorder %s159, %s160
      %p174 = scmp.eq.s32.totalorder %s21, 1
      %p175 = por %p173, %p174
      %p177 = scmp.ne.s32.totalorder %s160, %s176
      %p178 = scmp.eq.s32.totalorder %s21, 0
      %p179 = por %p177, %p178
      %p180 = scmp.le.s32.totalorder 1, %s15
      %p181 = scmp.lt.s32.totalorder %s15, 3
      %p182 = pnand %p180, %p181
      %p183 = pneg %p182
      // Predicated region
      $region9: #{tpu_custom_call.1} parent=5 // pred_check
        _
      $region10: #{tpu_custom_call.1} parent=5 // pred_check_branch
        %185 = sbr.rel (%p182) target = $region12
      $region11: #{tpu_custom_call.1} parent=5 // pred_region
        %s186 = ssub.s32 %s15, 1
        // Predicated region
        $region13: #{tpu_custom_call.1} parent=11 // pred_check
          %p187 = pneg %p62
        $region14: #{tpu_custom_call.1} parent=11 // pred_check_branch
          %189 = sbr.rel (%p187) target = $region16
        $region15: #{tpu_custom_call.1} parent=11 // pred_region
          _
        $region16: #{tpu_custom_call.1} parent=11 // pred_fallthru
          _
        // Predicated region
        $region17: #{tpu_custom_call.1} parent=11 // pred_check
          %p190 = pneg %p83
        $region18: #{tpu_custom_call.1} parent=11 // pred_check_branch
          %192 = sbr.rel (%p190) target = $region20
        $region19: #{tpu_custom_call.1} parent=11 // pred_region
          _
        $region20: #{tpu_custom_call.1} parent=11 // pred_fallthru
          _
        // Predicated region
        $region21: #{tpu_custom_call.1} parent=11 // pred_check
          %p193 = pneg %p104
        $region22: #{tpu_custom_call.1} parent=11 // pred_check_branch
          %195 = sbr.rel (%p193) target = $region24
        $region23: #{tpu_custom_call.1} parent=11 // pred_region
          _
        $region24: #{tpu_custom_call.1} parent=11 // pred_fallthru
          _
        // Predicated region
        $region25: #{tpu_custom_call.1} parent=11 // pred_check
          %p196 = pneg %p125
        $region26: #{tpu_custom_call.1} parent=11 // pred_check_branch
          %198 = sbr.rel (%p196) target = $region28
        $region27: #{tpu_custom_call.1} parent=11 // pred_region
          _
        $region28: #{tpu_custom_call.1} parent=11 // pred_fallthru
          _
        // Predicated region
        $region29: #{tpu_custom_call.1} parent=11 // pred_check
          %p199 = pneg %p146
        $region30: #{tpu_custom_call.1} parent=11 // pred_check_branch
          %201 = sbr.rel (%p199) target = $region32
        $region31: #{tpu_custom_call.1} parent=11 // pred_region
          _
        $region32: #{tpu_custom_call.1} parent=11 // pred_fallthru
          _
      $region12: #{tpu_custom_call.1} parent=5 // pred_fallthru
        _
      %p202 = scmp.lt.s32.totalorder %s15, 2
      // Predicated region
      $region33: #{tpu_custom_call.1} parent=5 // pred_check
        %p203 = pneg %p202
      $region34: #{tpu_custom_call.1} parent=5 // pred_check_branch
        %205 = sbr.rel (%p203) target = $region36
      $region35: #{tpu_custom_call.1} parent=5 // pred_region
        // Predicated region
        $region37: #{tpu_custom_call.1} parent=35 // pred_check
          %p206 = pneg %p35
        $region38: #{tpu_custom_call.1} parent=35 // pred_check_branch
          %208 = sbr.rel (%p206) target = $region40
        $region39: #{tpu_custom_call.1} parent=35 // pred_region
          %p209 = scmp.lt.s32.totalorder %s15, 1
          %s210 = scalar_select %p209, %s15, 1
          %s211 = smul.addr %s210, 66
          %s212 = smul.addr %s211, 8
          %s213 = scalar_lea.vmem %s0, %s212
        $region40: #{tpu_custom_call.1} parent=35 // pred_fallthru
          _
      $region36: #{tpu_custom_call.1} parent=5 // pred_fallthru
        _
      %p214 = scmp.le.s32.totalorder 1, %s15
      %p215 = scmp.lt.s32.totalorder %s15, 3
      %p216 = pnand %p214, %p215
      %p217 = pneg %p216
      // Predicated region
      $region41: #{tpu_custom_call.1} parent=5 // pred_check
        _
      $region42: #{tpu_custom_call.1} parent=5 // pred_check_branch
        %219 = sbr.rel (%p216) target = $region44
      $region43: #{tpu_custom_call.1} parent=5 // pred_region
        %s220 = ssub.s32 %s15, 1
        %p221 = scmp.lt.s32.totalorder %s20, 1
        %s222 = scalar_select %p221, %s20, 1
        %s223 = smul.addr %s222, 66
        %s224 = smul.addr %s223, 8
        %s225 = scalar_lea.vmem %s0, %s224
        %p226 = pneg %p41
        %p227 = pneg %p38
        %p228 = pneg %p62
        %p229 = pneg %p59
        %p230 = pneg %p83
        %p231 = pneg %p80
        %p232 = pneg %p104
        %p233 = pneg %p101
        %p234 = pneg %p125
        %p235 = pneg %p122
        %p236 = pneg %p146
        %p237 = pneg %p143
        %p238 = pneg %p172
        %p239 = pneg %p169
        %s240 = sand.u32 %s159, 1
        %s241 = scalar_lea.sflag [#allocation3], %s240
        %s242 = sand.u32 %s159, 1
        %s243 = smul.addr %s242, 256
        %s244 = scalar_lea.vmem [#allocation2], %s243
        %p245 = scmp.lt.s32.totalorder %s20, 1
        %s246 = scalar_select %p245, %s20, 1
        %s247 = smul.addr %s246, 66
        %s248 = smul.addr %s247, 8
        %s249 = scalar_lea.vmem %s0, %s248
        %v251 = vld [vmem:[%s2] sm:$0x1f]
        %v252 = vld [vmem:[%s1] sm:$0xff]
        %v253 = vld [vmem:[%s1 + $0x8] sm:$0xff]
        %v254 = vld [vmem:[%s1 + $0x10] sm:$0xff]
        %v255 = vld [vmem:[%s1 + $0x18] sm:$0xff]
        %v256 = vld [vmem:[%s1 + $0x20] sm:$0xff]
        %v257 = vld [vmem:[%s1 + $0x28] sm:$0xff]
        %v258 = vld [vmem:[%s1 + $0x30] sm:$0x1]
        %v259 = vlaneseq
        %v260 = vshrl.u32 %v259, 7
        %v261 = vsub.s32 0, %v260
        %v262 = vrot.slane %v251, %v261
        %v263 = vld [vmem:[%s249] sm:$0xff]
        %v264 = vld [vmem:[%s249 + $0x8] sm:$0xff]
        %v265 = vld [vmem:[%s249 + $0x18] sm:$0xff]
        %v266 = vld [vmem:[%s249 + $0x20] sm:$0xff]
        %v267 = vld [vmem:[%s249 + $0x30] sm:$0xff]
        %v268 = vld [vmem:[%s249 + $0x38] sm:$0xff]
        %v269 = vld [vmem:[%s249 + $0x48] sm:$0xff]
        %v270 = vld [vmem:[%s249 + $0x50] sm:$0xff]
        %v271 = vld [vmem:[%s249 + $0x60] sm:$0xff]
        %v272 = vld [vmem:[%s249 + $0x68] sm:$0xff]
        %v273 = vld [vmem:[%s249 + $0x78] sm:$0xff]
        %v274 = vld [vmem:[%s249 + $0x80] sm:$0xff]
        %v275 = vld [vmem:[%s249 + $0x90] sm:$0xff]
        %v276 = vld [vmem:[%s249 + $0x98] sm:$0xff]
        %v277 = vld [vmem:[%s249 + $0xa8] sm:$0xff]
        %v278 = vld [vmem:[%s249 + $0xb0] sm:$0xff]
        %v279 = vld [vmem:[%s249 + $0xc0] sm:$0xff]
        %v280 = vld [vmem:[%s249 + $0xc8] sm:$0xff]
        %v281 = vld [vmem:[%s249 + $0xd8] sm:$0xff]
        %v282 = vld [vmem:[%s249 + $0xe0] sm:$0xff]
        %v283 = vld [vmem:[%s249 + $0xf0] sm:$0xff]
        %v284 = vld [vmem:[%s249 + $0xf8] sm:$0xff]
        %v285 = vld [vmem:[%s249 + $0x108] sm:$0xff]
        %v286 = vld [vmem:[%s249 + $0x110] sm:$0xff]
        %v287 = vld [vmem:[%s249 + $0x120] sm:$0xff]
        %v288 = vld [vmem:[%s249 + $0x128] sm:$0xff]
        %v289 = vld [vmem:[%s249 + $0x138] sm:$0xff]
        %v290 = vld [vmem:[%s249 + $0x140] sm:$0xff]
        %v291 = vld [vmem:[%s249 + $0x150] sm:$0xff]
        %v292 = vld [vmem:[%s249 + $0x158] sm:$0xff]
        %v293 = vld [vmem:[%s249 + $0x168] sm:$0xff]
        %v294 = vld [vmem:[%s249 + $0x170] sm:$0xff]
        %v295 = vlaneseq
        %v296 = vshrl.u32 %v295, 7
        %v297 = vsub.s32 0, %v296
        %v298 = vrot.slane %v252, %v297
        %v299 = vmul.f32 %v263, %v298
        %v300 = vmul.f32 %v264, %v298
        %v301 = vmul.f32 %v265, %v298
        %v302 = vmul.f32 %v266, %v298
        %v303 = vmul.f32 %v267, %v298
        %v304 = vmul.f32 %v268, %v298
        %v305 = vmul.f32 %v269, %v298
        %v306 = vmul.f32 %v270, %v298
        %v307 = vmul.f32 %v271, %v298
        %v308 = vmul.f32 %v272, %v298
        %v309 = vmul.f32 %v273, %v298
        %v310 = vmul.f32 %v274, %v298
        %v311 = vmul.f32 %v275, %v298
        %v312 = vmul.f32 %v276, %v298
        %v313 = vmul.f32 %v277, %v298
        %v314 = vmul.f32 %v278, %v298
        %v315 = vmul.f32 %v279, %v298
        %v316 = vmul.f32 %v280, %v298
        %v317 = vmul.f32 %v281, %v298
        %v318 = vmul.f32 %v282, %v298
        %v319 = vmul.f32 %v283, %v298
        %v320 = vmul.f32 %v284, %v298
        %v321 = vmul.f32 %v285, %v298
        %v322 = vmul.f32 %v286, %v298
        %v323 = vmul.f32 %v287, %v298
        %v324 = vmul.f32 %v288, %v298
        %v325 = vmul.f32 %v289, %v298
        %v326 = vmul.f32 %v290, %v298
        %v327 = vmul.f32 %v291, %v298
        %v328 = vmul.f32 %v292, %v298
        %v329 = vmul.f32 %v293, %v298
        %v330 = vmul.f32 %v294, %v298
        %v331 = vadd.f32 %v262, %v299
        %v332 = vadd.f32 %v262, %v300
        %v333 = vadd.f32 %v262, %v301
        %v334 = vadd.f32 %v262, %v302
        %v335 = vadd.f32 %v262, %v303
        %v336 = vadd.f32 %v262, %v304
        %v337 = vadd.f32 %v262, %v305
        %v338 = vadd.f32 %v262, %v306
        %v339 = vadd.f32 %v262, %v307
        %v340 = vadd.f32 %v262, %v308
        %v341 = vadd.f32 %v262, %v309
        %v342 = vadd.f32 %v262, %v310
        %v343 = vadd.f32 %v262, %v311
        %v344 = vadd.f32 %v262, %v312
        %v345 = vadd.f32 %v262, %v313
        %v346 = vadd.f32 %v262, %v314
        %v347 = vadd.f32 %v262, %v315
        %v348 = vadd.f32 %v262, %v316
        %v349 = vadd.f32 %v262, %v317
        %v350 = vadd.f32 %v262, %v318
        %v351 = vadd.f32 %v262, %v319
        %v352 = vadd.f32 %v262, %v320
        %v353 = vadd.f32 %v262, %v321
        %v354 = vadd.f32 %v262, %v322
        %v355 = vadd.f32 %v262, %v323
        %v356 = vadd.f32 %v262, %v324
        %v357 = vadd.f32 %v262, %v325
        %v358 = vadd.f32 %v262, %v326
        %v359 = vadd.f32 %v262, %v327
        %v360 = vadd.f32 %v262, %v328
        %v361 = vadd.f32 %v262, %v329
        %v362 = vadd.f32 %v262, %v330
        %v363 = vld [vmem:[%s249 + $0x1] sm:$0xff]
        %v364 = vld [vmem:[%s249 + $0x9] sm:$0xff]
        %v365 = vld [vmem:[%s249 + $0x19] sm:$0xff]
        %v366 = vld [vmem:[%s249 + $0x21] sm:$0xff]
        %v367 = vld [vmem:[%s249 + $0x31] sm:$0xff]
        %v368 = vld [vmem:[%s249 + $0x39] sm:$0xff]
        %v369 = vld [vmem:[%s249 + $0x49] sm:$0xff]
        %v370 = vld [vmem:[%s249 + $0x51] sm:$0xff]
        %v371 = vld [vmem:[%s249 + $0x61] sm:$0xff]
        %v372 = vld [vmem:[%s249 + $0x69] sm:$0xff]
        %v373 = vld [vmem:[%s249 + $0x79] sm:$0xff]
        %v374 = vld [vmem:[%s249 + $0x81] sm:$0xff]
        %v375 = vld [vmem:[%s249 + $0x91] sm:$0xff]
        %v376 = vld [vmem:[%s249 + $0x99] sm:$0xff]
        %v377 = vld [vmem:[%s249 + $0xa9] sm:$0xff]
        %v378 = vld [vmem:[%s249 + $0xb1] sm:$0xff]
        %v379 = vld [vmem:[%s249 + $0xc1] sm:$0xff]
        %v380 = vld [vmem:[%s249 + $0xc9] sm:$0xff]
        %v381 = vld [vmem:[%s249 + $0xd9] sm:$0xff]
        %v382 = vld [vmem:[%s249 + $0xe1] sm:$0xff]
        %v383 = vld [vmem:[%s249 + $0xf1] sm:$0xff]
        %v384 = vld [vmem:[%s249 + $0xf9] sm:$0xff]
        %v385 = vld [vmem:[%s249 + $0x109] sm:$0xff]
        %v386 = vld [vmem:[%s249 + $0x111] sm:$0xff]
        %v387 = vld [vmem:[%s249 + $0x121] sm:$0xff]
        %v388 = vld [vmem:[%s249 + $0x129] sm:$0xff]
        %v389 = vld [vmem:[%s249 + $0x139] sm:$0xff]
        %v390 = vld [vmem:[%s249 + $0x141] sm:$0xff]
        %v391 = vld [vmem:[%s249 + $0x151] sm:$0xff]
        %v392 = vld [vmem:[%s249 + $0x159] sm:$0xff]
        %v393 = vld [vmem:[%s249 + $0x169] sm:$0xff]
        %v394 = vld [vmem:[%s249 + $0x171] sm:$0xff]
        %v395 = vlaneseq
        %v396 = vshrl.u32 %v395, 7
        %v397 = vsub.s32 1, %v396
        %v398 = vrot.slane %v252, %v397
        %v399 = vmul.f32 %v363, %v398
        %v400 = vmul.f32 %v364, %v398
        %v401 = vmul.f32 %v365, %v398
        %v402 = vmul.f32 %v366, %v398
        %v403 = vmul.f32 %v367, %v398
        %v404 = vmul.f32 %v368, %v398
        %v405 = vmul.f32 %v369, %v398
        %v406 = vmul.f32 %v370, %v398
        %v407 = vmul.f32 %v371, %v398
        %v408 = vmul.f32 %v372, %v398
        %v409 = vmul.f32 %v373, %v398
        %v410 = vmul.f32 %v374, %v398
        %v411 = vmul.f32 %v375, %v398
        %v412 = vmul.f32 %v376, %v398
        %v413 = vmul.f32 %v377, %v398
        %v414 = vmul.f32 %v378, %v398
        %v415 = vmul.f32 %v379, %v398
        %v416 = vmul.f32 %v380, %v398
        %v417 = vmul.f32 %v381, %v398
        %v418 = vmul.f32 %v382, %v398
        %v419 = vmul.f32 %v383, %v398
        %v420 = vmul.f32 %v384, %v398
        %v421 = vmul.f32 %v385, %v398
        %v422 = vmul.f32 %v386, %v398
        %v423 = vmul.f32 %v387, %v398
        %v424 = vmul.f32 %v388, %v398
        %v425 = vmul.f32 %v389, %v398
        %v426 = vmul.f32 %v390, %v398
        %v427 = vmul.f32 %v391, %v398
        %v428 = vmul.f32 %v392, %v398
        %v429 = vmul.f32 %v393, %v398
        %v430 = vmul.f32 %v394, %v398
        %v431 = vadd.f32 %v331, %v399
        %v432 = vadd.f32 %v332, %v400
        %v433 = vadd.f32 %v333, %v401
        %v434 = vadd.f32 %v334, %v402
        %v435 = vadd.f32 %v335, %v403
        %v436 = vadd.f32 %v336, %v404
        %v437 = vadd.f32 %v337, %v405
        %v438 = vadd.f32 %v338, %v406
        %v439 = vadd.f32 %v339, %v407
        %v440 = vadd.f32 %v340, %v408
        %v441 = vadd.f32 %v341, %v409
        %v442 = vadd.f32 %v342, %v410
        %v443 = vadd.f32 %v343, %v411
        %v444 = vadd.f32 %v344, %v412
        %v445 = vadd.f32 %v345, %v413
        %v446 = vadd.f32 %v346, %v414
        %v447 = vadd.f32 %v347, %v415
        %v448 = vadd.f32 %v348, %v416
        %v449 = vadd.f32 %v349, %v417
        %v450 = vadd.f32 %v350, %v418
        %v451 = vadd.f32 %v351, %v419
        %v452 = vadd.f32 %v352, %v420
        %v453 = vadd.f32 %v353, %v421
        %v454 = vadd.f32 %v354, %v422
        %v455 = vadd.f32 %v355, %v423
        %v456 = vadd.f32 %v356, %v424
        %v457 = vadd.f32 %v357, %v425
        %v458 = vadd.f32 %v358, %v426
        %v459 = vadd.f32 %v359, %v427
        %v460 = vadd.f32 %v360, %v428
        %v461 = vadd.f32 %v361, %v429
        %v462 = vadd.f32 %v362, %v430
        %v463 = vld [vmem:[%s249 + $0x2] sm:$0xff]
        %v464 = vld [vmem:[%s249 + $0xa] sm:$0xff]
        %v465 = vld [vmem:[%s249 + $0x1a] sm:$0xff]
        %v466 = vld [vmem:[%s249 + $0x22] sm:$0xff]
        %v467 = vld [vmem:[%s249 + $0x32] sm:$0xff]
        %v468 = vld [vmem:[%s249 + $0x3a] sm:$0xff]
        %v469 = vld [vmem:[%s249 + $0x4a] sm:$0xff]
        %v470 = vld [vmem:[%s249 + $0x52] sm:$0xff]
        %v471 = vld [vmem:[%s249 + $0x62] sm:$0xff]
        %v472 = vld [vmem:[%s249 + $0x6a] sm:$0xff]
        %v473 = vld [vmem:[%s249 + $0x7a] sm:$0xff]
        %v474 = vld [vmem:[%s249 + $0x82] sm:$0xff]
        %v475 = vld [vmem:[%s249 + $0x92] sm:$0xff]
        %v476 = vld [vmem:[%s249 + $0x9a] sm:$0xff]
        %v477 = vld [vmem:[%s249 + $0xaa] sm:$0xff]
        %v478 = vld [vmem:[%s249 + $0xb2] sm:$0xff]
        %v479 = vld [vmem:[%s249 + $0xc2] sm:$0xff]
        %v480 = vld [vmem:[%s249 + $0xca] sm:$0xff]
        %v481 = vld [vmem:[%s249 + $0xda] sm:$0xff]
        %v482 = vld [vmem:[%s249 + $0xe2] sm:$0xff]
        %v483 = vld [vmem:[%s249 + $0xf2] sm:$0xff]
        %v484 = vld [vmem:[%s249 + $0xfa] sm:$0xff]
        %v485 = vld [vmem:[%s249 + $0x10a] sm:$0xff]
        %v486 = vld [vmem:[%s249 + $0x112] sm:$0xff]
        %v487 = vld [vmem:[%s249 + $0x122] sm:$0xff]
        %v488 = vld [vmem:[%s249 + $0x12a] sm:$0xff]
        %v489 = vld [vmem:[%s249 + $0x13a] sm:$0xff]
        %v490 = vld [vmem:[%s249 + $0x142] sm:$0xff]
        %v491 = vld [vmem:[%s249 + $0x152] sm:$0xff]
        %v492 = vld [vmem:[%s249 + $0x15a] sm:$0xff]
        %v493 = vld [vmem:[%s249 + $0x16a] sm:$0xff]
        %v494 = vld [vmem:[%s249 + $0x172] sm:$0xff]
        %v495 = vlaneseq
        %v496 = vshrl.u32 %v495, 7
        %v497 = vsub.s32 2, %v496
        %v498 = vrot.slane %v252, %v497
        %v499 = vmul.f32 %v463, %v498
        %v500 = vmul.f32 %v464, %v498
        %v501 = vmul.f32 %v465, %v498
        %v502 = vmul.f32 %v466, %v498
        %v503 = vmul.f32 %v467, %v498
        %v504 = vmul.f32 %v468, %v498
        %v505 = vmul.f32 %v469, %v498
        %v506 = vmul.f32 %v470, %v498
        %v507 = vmul.f32 %v471, %v498
        %v508 = vmul.f32 %v472, %v498
        %v509 = vmul.f32 %v473, %v498
        %v510 = vmul.f32 %v474, %v498
        %v511 = vmul.f32 %v475, %v498
        %v512 = vmul.f32 %v476, %v498
        %v513 = vmul.f32 %v477, %v498
        %v514 = vmul.f32 %v478, %v498
        %v515 = vmul.f32 %v479, %v498
        %v516 = vmul.f32 %v480, %v498
        %v517 = vmul.f32 %v481, %v498
        %v518 = vmul.f32 %v482, %v498
        %v519 = vmul.f32 %v483, %v498
        %v520 = vmul.f32 %v484, %v498
        %v521 = vmul.f32 %v485, %v498
        %v522 = vmul.f32 %v486, %v498
        %v523 = vmul.f32 %v487, %v498
        %v524 = vmul.f32 %v488, %v498
        %v525 = vmul.f32 %v489, %v498
        %v526 = vmul.f32 %v490, %v498
        %v527 = vmul.f32 %v491, %v498
        %v528 = vmul.f32 %v492, %v498
        %v529 = vmul.f32 %v493, %v498
        %v530 = vmul.f32 %v494, %v498
        %v531 = vadd.f32 %v431, %v499
        %v532 = vadd.f32 %v432, %v500
        %v533 = vadd.f32 %v433, %v501
        %v534 = vadd.f32 %v434, %v502
        %v535 = vadd.f32 %v435, %v503
        %v536 = vadd.f32 %v436, %v504
        %v537 = vadd.f32 %v437, %v505
        %v538 = vadd.f32 %v438, %v506
        %v539 = vadd.f32 %v439, %v507
        %v540 = vadd.f32 %v440, %v508
        %v541 = vadd.f32 %v441, %v509
        %v542 = vadd.f32 %v442, %v510
        %v543 = vadd.f32 %v443, %v511
        %v544 = vadd.f32 %v444, %v512
        %v545 = vadd.f32 %v445, %v513
        %v546 = vadd.f32 %v446, %v514
        %v547 = vadd.f32 %v447, %v515
        %v548 = vadd.f32 %v448, %v516
        %v549 = vadd.f32 %v449, %v517
        %v550 = vadd.f32 %v450, %v518
        %v551 = vadd.f32 %v451, %v519
        %v552 = vadd.f32 %v452, %v520
        %v553 = vadd.f32 %v453, %v521
        %v554 = vadd.f32 %v454, %v522
        %v555 = vadd.f32 %v455, %v523
        %v556 = vadd.f32 %v456, %v524
        %v557 = vadd.f32 %v457, %v525
        %v558 = vadd.f32 %v458, %v526
        %v559 = vadd.f32 %v459, %v527
        %v560 = vadd.f32 %v460, %v528
        %v561 = vadd.f32 %v461, %v529
        %v562 = vadd.f32 %v462, %v530
        %v563 = vld [vmem:[%s249 + $0x3] sm:$0xff]
        %v564 = vld [vmem:[%s249 + $0xb] sm:$0xff]
        %v565 = vld [vmem:[%s249 + $0x1b] sm:$0xff]
        %v566 = vld [vmem:[%s249 + $0x23] sm:$0xff]
        %v567 = vld [vmem:[%s249 + $0x33] sm:$0xff]
        %v568 = vld [vmem:[%s249 + $0x3b] sm:$0xff]
        %v569 = vld [vmem:[%s249 + $0x4b] sm:$0xff]
        %v570 = vld [vmem:[%s249 + $0x53] sm:$0xff]
        %v571 = vld [vmem:[%s249 + $0x63] sm:$0xff]
        %v572 = vld [vmem:[%s249 + $0x6b] sm:$0xff]
        %v573 = vld [vmem:[%s249 + $0x7b] sm:$0xff]
        %v574 = vld [vmem:[%s249 + $0x83] sm:$0xff]
        %v575 = vld [vmem:[%s249 + $0x93] sm:$0xff]
        %v576 = vld [vmem:[%s249 + $0x9b] sm:$0xff]
        %v577 = vld [vmem:[%s249 + $0xab] sm:$0xff]
        %v578 = vld [vmem:[%s249 + $0xb3] sm:$0xff]
        %v579 = vld [vmem:[%s249 + $0xc3] sm:$0xff]
        %v580 = vld [vmem:[%s249 + $0xcb] sm:$0xff]
        %v581 = vld [vmem:[%s249 + $0xdb] sm:$0xff]
        %v582 = vld [vmem:[%s249 + $0xe3] sm:$0xff]
        %v583 = vld [vmem:[%s249 + $0xf3] sm:$0xff]
        %v584 = vld [vmem:[%s249 + $0xfb] sm:$0xff]
        %v585 = vld [vmem:[%s249 + $0x10b] sm:$0xff]
        %v586 = vld [vmem:[%s249 + $0x113] sm:$0xff]
        %v587 = vld [vmem:[%s249 + $0x123] sm:$0xff]
        %v588 = vld [vmem:[%s249 + $0x12b] sm:$0xff]
        %v589 = vld [vmem:[%s249 + $0x13b] sm:$0xff]
        %v590 = vld [vmem:[%s249 + $0x143] sm:$0xff]
        %v591 = vld [vmem:[%s249 + $0x153] sm:$0xff]
        %v592 = vld [vmem:[%s249 + $0x15b] sm:$0xff]
        %v593 = vld [vmem:[%s249 + $0x16b] sm:$0xff]
        %v594 = vld [vmem:[%s249 + $0x173] sm:$0xff]
        %v595 = vlaneseq
        %v596 = vshrl.u32 %v595, 7
        %v597 = vsub.s32 3, %v596
        %v598 = vrot.slane %v252, %v597
        %v599 = vmul.f32 %v563, %v598
        %v600 = vmul.f32 %v564, %v598
        %v601 = vmul.f32 %v565, %v598
        %v602 = vmul.f32 %v566, %v598
        %v603 = vmul.f32 %v567, %v598
        %v604 = vmul.f32 %v568, %v598
        %v605 = vmul.f32 %v569, %v598
        %v606 = vmul.f32 %v570, %v598
        %v607 = vmul.f32 %v571, %v598
        %v608 = vmul.f32 %v572, %v598
        %v609 = vmul.f32 %v573, %v598
        %v610 = vmul.f32 %v574, %v598
        %v611 = vmul.f32 %v575, %v598
        %v612 = vmul.f32 %v576, %v598
        %v613 = vmul.f32 %v577, %v598
        %v614 = vmul.f32 %v578, %v598
        %v615 = vmul.f32 %v579, %v598
        %v616 = vmul.f32 %v580, %v598
        %v617 = vmul.f32 %v581, %v598
        %v618 = vmul.f32 %v582, %v598
        %v619 = vmul.f32 %v583, %v598
        %v620 = vmul.f32 %v584, %v598
        %v621 = vmul.f32 %v585, %v598
        %v622 = vmul.f32 %v586, %v598
        %v623 = vmul.f32 %v587, %v598
        %v624 = vmul.f32 %v588, %v598
        %v625 = vmul.f32 %v589, %v598
        %v626 = vmul.f32 %v590, %v598
        %v627 = vmul.f32 %v591, %v598
        %v628 = vmul.f32 %v592, %v598
        %v629 = vmul.f32 %v593, %v598
        %v630 = vmul.f32 %v594, %v598
        %v631 = vadd.f32 %v531, %v599
        %v632 = vadd.f32 %v532, %v600
        %v633 = vadd.f32 %v533, %v601
        %v634 = vadd.f32 %v534, %v602
        %v635 = vadd.f32 %v535, %v603
        %v636 = vadd.f32 %v536, %v604
        %v637 = vadd.f32 %v537, %v605
        %v638 = vadd.f32 %v538, %v606
        %v639 = vadd.f32 %v539, %v607
        %v640 = vadd.f32 %v540, %v608
        %v641 = vadd.f32 %v541, %v609
        %v642 = vadd.f32 %v542, %v610
        %v643 = vadd.f32 %v543, %v611
        %v644 = vadd.f32 %v544, %v612
        %v645 = vadd.f32 %v545, %v613
        %v646 = vadd.f32 %v546, %v614
        %v647 = vadd.f32 %v547, %v615
        %v648 = vadd.f32 %v548, %v616
        %v649 = vadd.f32 %v549, %v617
        %v650 = vadd.f32 %v550, %v618
        %v651 = vadd.f32 %v551, %v619
        %v652 = vadd.f32 %v552, %v620
        %v653 = vadd.f32 %v553, %v621
        %v654 = vadd.f32 %v554, %v622
        %v655 = vadd.f32 %v555, %v623
        %v656 = vadd.f32 %v556, %v624
        %v657 = vadd.f32 %v557, %v625
        %v658 = vadd.f32 %v558, %v626
        %v659 = vadd.f32 %v559, %v627
        %v660 = vadd.f32 %v560, %v628
        %v661 = vadd.f32 %v561, %v629
        %v662 = vadd.f32 %v562, %v630
        %v663 = vld [vmem:[%s249 + $0x4] sm:$0xff]
        %v664 = vld [vmem:[%s249 + $0xc] sm:$0xff]
        %v665 = vld [vmem:[%s249 + $0x1c] sm:$0xff]
        %v666 = vld [vmem:[%s249 + $0x24] sm:$0xff]
        %v667 = vld [vmem:[%s249 + $0x34] sm:$0xff]
        %v668 = vld [vmem:[%s249 + $0x3c] sm:$0xff]
        %v669 = vld [vmem:[%s249 + $0x4c] sm:$0xff]
        %v670 = vld [vmem:[%s249 + $0x54] sm:$0xff]
        %v671 = vld [vmem:[%s249 + $0x64] sm:$0xff]
        %v672 = vld [vmem:[%s249 + $0x6c] sm:$0xff]
        %v673 = vld [vmem:[%s249 + $0x7c] sm:$0xff]
        %v674 = vld [vmem:[%s249 + $0x84] sm:$0xff]
        %v675 = vld [vmem:[%s249 + $0x94] sm:$0xff]
        %v676 = vld [vmem:[%s249 + $0x9c] sm:$0xff]
        %v677 = vld [vmem:[%s249 + $0xac] sm:$0xff]
        %v678 = vld [vmem:[%s249 + $0xb4] sm:$0xff]
        %v679 = vld [vmem:[%s249 + $0xc4] sm:$0xff]
        %v680 = vld [vmem:[%s249 + $0xcc] sm:$0xff]
        %v681 = vld [vmem:[%s249 + $0xdc] sm:$0xff]
        %v682 = vld [vmem:[%s249 + $0xe4] sm:$0xff]
        %v683 = vld [vmem:[%s249 + $0xf4] sm:$0xff]
        %v684 = vld [vmem:[%s249 + $0xfc] sm:$0xff]
        %v685 = vld [vmem:[%s249 + $0x10c] sm:$0xff]
        %v686 = vld [vmem:[%s249 + $0x114] sm:$0xff]
        %v687 = vld [vmem:[%s249 + $0x124] sm:$0xff]
        %v688 = vld [vmem:[%s249 + $0x12c] sm:$0xff]
        %v689 = vld [vmem:[%s249 + $0x13c] sm:$0xff]
        %v690 = vld [vmem:[%s249 + $0x144] sm:$0xff]
        %v691 = vld [vmem:[%s249 + $0x154] sm:$0xff]
        %v692 = vld [vmem:[%s249 + $0x15c] sm:$0xff]
        %v693 = vld [vmem:[%s249 + $0x16c] sm:$0xff]
        %v694 = vld [vmem:[%s249 + $0x174] sm:$0xff]
        %v695 = vlaneseq
        %v696 = vshrl.u32 %v695, 7
        %v697 = vsub.s32 4, %v696
        %v698 = vrot.slane %v252, %v697
        %v699 = vmul.f32 %v663, %v698
        %v700 = vmul.f32 %v664, %v698
        %v701 = vmul.f32 %v665, %v698
        %v702 = vmul.f32 %v666, %v698
        %v703 = vmul.f32 %v667, %v698
        %v704 = vmul.f32 %v668, %v698
        %v705 = vmul.f32 %v669, %v698
        %v706 = vmul.f32 %v670, %v698
        %v707 = vmul.f32 %v671, %v698
        %v708 = vmul.f32 %v672, %v698
        %v709 = vmul.f32 %v673, %v698
        %v710 = vmul.f32 %v674, %v698
        %v711 = vmul.f32 %v675, %v698
        %v712 = vmul.f32 %v676, %v698
        %v713 = vmul.f32 %v677, %v698
        %v714 = vmul.f32 %v678, %v698
        %v715 = vmul.f32 %v679, %v698
        %v716 = vmul.f32 %v680, %v698
        %v717 = vmul.f32 %v681, %v698
        %v718 = vmul.f32 %v682, %v698
        %v719 = vmul.f32 %v683, %v698
        %v720 = vmul.f32 %v684, %v698
        %v721 = vmul.f32 %v685, %v698
        %v722 = vmul.f32 %v686, %v698
        %v723 = vmul.f32 %v687, %v698
        %v724 = vmul.f32 %v688, %v698
        %v725 = vmul.f32 %v689, %v698
        %v726 = vmul.f32 %v690, %v698
        %v727 = vmul.f32 %v691, %v698
        %v728 = vmul.f32 %v692, %v698
        %v729 = vmul.f32 %v693, %v698
        %v730 = vmul.f32 %v694, %v698
        %v731 = vadd.f32 %v631, %v699
        %v732 = vadd.f32 %v632, %v700
        %v733 = vadd.f32 %v633, %v701
        %v734 = vadd.f32 %v634, %v702
        %v735 = vadd.f32 %v635, %v703
        %v736 = vadd.f32 %v636, %v704
        %v737 = vadd.f32 %v637, %v705
        %v738 = vadd.f32 %v638, %v706
        %v739 = vadd.f32 %v639, %v707
        %v740 = vadd.f32 %v640, %v708
        %v741 = vadd.f32 %v641, %v709
        %v742 = vadd.f32 %v642, %v710
        %v743 = vadd.f32 %v643, %v711
        %v744 = vadd.f32 %v644, %v712
        %v745 = vadd.f32 %v645, %v713
        %v746 = vadd.f32 %v646, %v714
        %v747 = vadd.f32 %v647, %v715
        %v748 = vadd.f32 %v648, %v716
        %v749 = vadd.f32 %v649, %v717
        %v750 = vadd.f32 %v650, %v718
        %v751 = vadd.f32 %v651, %v719
        %v752 = vadd.f32 %v652, %v720
        %v753 = vadd.f32 %v653, %v721
        %v754 = vadd.f32 %v654, %v722
        %v755 = vadd.f32 %v655, %v723
        %v756 = vadd.f32 %v656, %v724
        %v757 = vadd.f32 %v657, %v725
        %v758 = vadd.f32 %v658, %v726
        %v759 = vadd.f32 %v659, %v727
        %v760 = vadd.f32 %v660, %v728
        %v761 = vadd.f32 %v661, %v729
        %v762 = vadd.f32 %v662, %v730
        %v763 = vld [vmem:[%s249 + $0x5] sm:$0xff]
        %v764 = vld [vmem:[%s249 + $0xd] sm:$0xff]
        %v765 = vld [vmem:[%s249 + $0x1d] sm:$0xff]
        %v766 = vld [vmem:[%s249 + $0x25] sm:$0xff]
        %v767 = vld [vmem:[%s249 + $0x35] sm:$0xff]
        %v768 = vld [vmem:[%s249 + $0x3d] sm:$0xff]
        %v769 = vld [vmem:[%s249 + $0x4d] sm:$0xff]
        %v770 = vld [vmem:[%s249 + $0x55] sm:$0xff]
        %v771 = vld [vmem:[%s249 + $0x65] sm:$0xff]
        %v772 = vld [vmem:[%s249 + $0x6d] sm:$0xff]
        %v773 = vld [vmem:[%s249 + $0x7d] sm:$0xff]
        %v774 = vld [vmem:[%s249 + $0x85] sm:$0xff]
        %v775 = vld [vmem:[%s249 + $0x95] sm:$0xff]
        %v776 = vld [vmem:[%s249 + $0x9d] sm:$0xff]
        %v777 = vld [vmem:[%s249 + $0xad] sm:$0xff]
        %v778 = vld [vmem:[%s249 + $0xb5] sm:$0xff]
        %v779 = vld [vmem:[%s249 + $0xc5] sm:$0xff]
        %v780 = vld [vmem:[%s249 + $0xcd] sm:$0xff]
        %v781 = vld [vmem:[%s249 + $0xdd] sm:$0xff]
        %v782 = vld [vmem:[%s249 + $0xe5] sm:$0xff]
        %v783 = vld [vmem:[%s249 + $0xf5] sm:$0xff]
        %v784 = vld [vmem:[%s249 + $0xfd] sm:$0xff]
        %v785 = vld [vmem:[%s249 + $0x10d] sm:$0xff]
        %v786 = vld [vmem:[%s249 + $0x115] sm:$0xff]
        %v787 = vld [vmem:[%s249 + $0x125] sm:$0xff]
        %v788 = vld [vmem:[%s249 + $0x12d] sm:$0xff]
        %v789 = vld [vmem:[%s249 + $0x13d] sm:$0xff]
        %v790 = vld [vmem:[%s249 + $0x145] sm:$0xff]
        %v791 = vld [vmem:[%s249 + $0x155] sm:$0xff]
        %v792 = vld [vmem:[%s249 + $0x15d] sm:$0xff]
        %v793 = vld [vmem:[%s249 + $0x16d] sm:$0xff]
        %v794 = vld [vmem:[%s249 + $0x175] sm:$0xff]
        %v795 = vlaneseq
        %v796 = vshrl.u32 %v795, 7
        %v797 = vsub.s32 5, %v796
        %v798 = vrot.slane %v252, %v797
        %v799 = vmul.f32 %v763, %v798
        %v800 = vmul.f32 %v764, %v798
        %v801 = vmul.f32 %v765, %v798
        %v802 = vmul.f32 %v766, %v798
        %v803 = vmul.f32 %v767, %v798
        %v804 = vmul.f32 %v768, %v798
        %v805 = vmul.f32 %v769, %v798
        %v806 = vmul.f32 %v770, %v798
        %v807 = vmul.f32 %v771, %v798
        %v808 = vmul.f32 %v772, %v798
        %v809 = vmul.f32 %v773, %v798
        %v810 = vmul.f32 %v774, %v798
        %v811 = vmul.f32 %v775, %v798
        %v812 = vmul.f32 %v776, %v798
        %v813 = vmul.f32 %v777, %v798
        %v814 = vmul.f32 %v778, %v798
        %v815 = vmul.f32 %v779, %v798
        %v816 = vmul.f32 %v780, %v798
        %v817 = vmul.f32 %v781, %v798
        %v818 = vmul.f32 %v782, %v798
        %v819 = vmul.f32 %v783, %v798
        %v820 = vmul.f32 %v784, %v798
        %v821 = vmul.f32 %v785, %v798
        %v822 = vmul.f32 %v786, %v798
        %v823 = vmul.f32 %v787, %v798
        %v824 = vmul.f32 %v788, %v798
        %v825 = vmul.f32 %v789, %v798
        %v826 = vmul.f32 %v790, %v798
        %v827 = vmul.f32 %v791, %v798
        %v828 = vmul.f32 %v792, %v798
        %v829 = vmul.f32 %v793, %v798
        %v830 = vmul.f32 %v794, %v798
        %v831 = vadd.f32 %v731, %v799
        %v832 = vadd.f32 %v732, %v800
        %v833 = vadd.f32 %v733, %v801
        %v834 = vadd.f32 %v734, %v802
        %v835 = vadd.f32 %v735, %v803
        %v836 = vadd.f32 %v736, %v804
        %v837 = vadd.f32 %v737, %v805
        %v838 = vadd.f32 %v738, %v806
        %v839 = vadd.f32 %v739, %v807
        %v840 = vadd.f32 %v740, %v808
        %v841 = vadd.f32 %v741, %v809
        %v842 = vadd.f32 %v742, %v810
        %v843 = vadd.f32 %v743, %v811
        %v844 = vadd.f32 %v744, %v812
        %v845 = vadd.f32 %v745, %v813
        %v846 = vadd.f32 %v746, %v814
        %v847 = vadd.f32 %v747, %v815
        %v848 = vadd.f32 %v748, %v816
        %v849 = vadd.f32 %v749, %v817
        %v850 = vadd.f32 %v750, %v818
        %v851 = vadd.f32 %v751, %v819
        %v852 = vadd.f32 %v752, %v820
        %v853 = vadd.f32 %v753, %v821
        %v854 = vadd.f32 %v754, %v822
        %v855 = vadd.f32 %v755, %v823
        %v856 = vadd.f32 %v756, %v824
        %v857 = vadd.f32 %v757, %v825
        %v858 = vadd.f32 %v758, %v826
        %v859 = vadd.f32 %v759, %v827
        %v860 = vadd.f32 %v760, %v828
        %v861 = vadd.f32 %v761, %v829
        %v862 = vadd.f32 %v762, %v830
        %v863 = vld [vmem:[%s249 + $0x6] sm:$0xff]
        %v864 = vld [vmem:[%s249 + $0xe] sm:$0xff]
        %v865 = vld [vmem:[%s249 + $0x1e] sm:$0xff]
        %v866 = vld [vmem:[%s249 + $0x26] sm:$0xff]
        %v867 = vld [vmem:[%s249 + $0x36] sm:$0xff]
        %v868 = vld [vmem:[%s249 + $0x3e] sm:$0xff]
        %v869 = vld [vmem:[%s249 + $0x4e] sm:$0xff]
        %v870 = vld [vmem:[%s249 + $0x56] sm:$0xff]
        %v871 = vld [vmem:[%s249 + $0x66] sm:$0xff]
        %v872 = vld [vmem:[%s249 + $0x6e] sm:$0xff]
        %v873 = vld [vmem:[%s249 + $0x7e] sm:$0xff]
        %v874 = vld [vmem:[%s249 + $0x86] sm:$0xff]
        %v875 = vld [vmem:[%s249 + $0x96] sm:$0xff]
        %v876 = vld [vmem:[%s249 + $0x9e] sm:$0xff]
        %v877 = vld [vmem:[%s249 + $0xae] sm:$0xff]
        %v878 = vld [vmem:[%s249 + $0xb6] sm:$0xff]
        %v879 = vld [vmem:[%s249 + $0xc6] sm:$0xff]
        %v880 = vld [vmem:[%s249 + $0xce] sm:$0xff]
        %v881 = vld [vmem:[%s249 + $0xde] sm:$0xff]
        %v882 = vld [vmem:[%s249 + $0xe6] sm:$0xff]
        %v883 = vld [vmem:[%s249 + $0xf6] sm:$0xff]
        %v884 = vld [vmem:[%s249 + $0xfe] sm:$0xff]
        %v885 = vld [vmem:[%s249 + $0x10e] sm:$0xff]
        %v886 = vld [vmem:[%s249 + $0x116] sm:$0xff]
        %v887 = vld [vmem:[%s249 + $0x126] sm:$0xff]
        %v888 = vld [vmem:[%s249 + $0x12e] sm:$0xff]
        %v889 = vld [vmem:[%s249 + $0x13e] sm:$0xff]
        %v890 = vld [vmem:[%s249 + $0x146] sm:$0xff]
        %v891 = vld [vmem:[%s249 + $0x156] sm:$0xff]
        %v892 = vld [vmem:[%s249 + $0x15e] sm:$0xff]
        %v893 = vld [vmem:[%s249 + $0x16e] sm:$0xff]
        %v894 = vld [vmem:[%s249 + $0x176] sm:$0xff]
        %v895 = vlaneseq
        %v896 = vshrl.u32 %v895, 7
        %v897 = vsub.s32 6, %v896
        %v898 = vrot.slane %v252, %v897
        %v899 = vmul.f32 %v863, %v898
        %v900 = vmul.f32 %v864, %v898
        %v901 = vmul.f32 %v865, %v898
        %v902 = vmul.f32 %v866, %v898
        %v903 = vmul.f32 %v867, %v898
        %v904 = vmul.f32 %v868, %v898
        %v905 = vmul.f32 %v869, %v898
        %v906 = vmul.f32 %v870, %v898
        %v907 = vmul.f32 %v871, %v898
        %v908 = vmul.f32 %v872, %v898
        %v909 = vmul.f32 %v873, %v898
        %v910 = vmul.f32 %v874, %v898
        %v911 = vmul.f32 %v875, %v898
        %v912 = vmul.f32 %v876, %v898
        %v913 = vmul.f32 %v877, %v898
        %v914 = vmul.f32 %v878, %v898
        %v915 = vmul.f32 %v879, %v898
        %v916 = vmul.f32 %v880, %v898
        %v917 = vmul.f32 %v881, %v898
        %v918 = vmul.f32 %v882, %v898
        %v919 = vmul.f32 %v883, %v898
        %v920 = vmul.f32 %v884, %v898
        %v921 = vmul.f32 %v885, %v898
        %v922 = vmul.f32 %v886, %v898
        %v923 = vmul.f32 %v887, %v898
        %v924 = vmul.f32 %v888, %v898
        %v925 = vmul.f32 %v889, %v898
        %v926 = vmul.f32 %v890, %v898
        %v927 = vmul.f32 %v891, %v898
        %v928 = vmul.f32 %v892, %v898
        %v929 = vmul.f32 %v893, %v898
        %v930 = vmul.f32 %v894, %v898
        %v931 = vadd.f32 %v831, %v899
        %v932 = vadd.f32 %v832, %v900
        %v933 = vadd.f32 %v833, %v901
        %v934 = vadd.f32 %v834, %v902
        %v935 = vadd.f32 %v835, %v903
        %v936 = vadd.f32 %v836, %v904
        %v937 = vadd.f32 %v837, %v905
        %v938 = vadd.f32 %v838, %v906
        %v939 = vadd.f32 %v839, %v907
        %v940 = vadd.f32 %v840, %v908
        %v941 = vadd.f32 %v841, %v909
        %v942 = vadd.f32 %v842, %v910
        %v943 = vadd.f32 %v843, %v911
        %v944 = vadd.f32 %v844, %v912
        %v945 = vadd.f32 %v845, %v913
        %v946 = vadd.f32 %v846, %v914
        %v947 = vadd.f32 %v847, %v915
        %v948 = vadd.f32 %v848, %v916
        %v949 = vadd.f32 %v849, %v917
        %v950 = vadd.f32 %v850, %v918
        %v951 = vadd.f32 %v851, %v919
        %v952 = vadd.f32 %v852, %v920
        %v953 = vadd.f32 %v853, %v921
        %v954 = vadd.f32 %v854, %v922
        %v955 = vadd.f32 %v855, %v923
        %v956 = vadd.f32 %v856, %v924
        %v957 = vadd.f32 %v857, %v925
        %v958 = vadd.f32 %v858, %v926
        %v959 = vadd.f32 %v859, %v927
        %v960 = vadd.f32 %v860, %v928
        %v961 = vadd.f32 %v861, %v929
        %v962 = vadd.f32 %v862, %v930
        %s963 = scalar_lea.vmem %s249, 24
        %v964 = vld [vmem:[%s963] sm:$0xff]
        %v965 = vld [vmem:[%s963 + $0x8] sm:$0xff]
        %v966 = vld [vmem:[%s963 + $0x18] sm:$0xff]
        %v967 = vld [vmem:[%s963 + $0x20] sm:$0xff]
        %v968 = vld [vmem:[%s963 + $0x30] sm:$0xff]
        %v969 = vld [vmem:[%s963 + $0x38] sm:$0xff]
        %v970 = vld [vmem:[%s963 + $0x48] sm:$0xff]
        %v971 = vld [vmem:[%s963 + $0x50] sm:$0xff]
        %v972 = vld [vmem:[%s963 + $0x60] sm:$0xff]
        %v973 = vld [vmem:[%s963 + $0x68] sm:$0xff]
        %v974 = vld [vmem:[%s963 + $0x78] sm:$0xff]
        %v975 = vld [vmem:[%s963 + $0x80] sm:$0xff]
        %v976 = vld [vmem:[%s963 + $0x90] sm:$0xff]
        %v977 = vld [vmem:[%s963 + $0x98] sm:$0xff]
        %v978 = vld [vmem:[%s963 + $0xa8] sm:$0xff]
        %v979 = vld [vmem:[%s963 + $0xb0] sm:$0xff]
        %v980 = vld [vmem:[%s963 + $0xc0] sm:$0xff]
        %v981 = vld [vmem:[%s963 + $0xc8] sm:$0xff]
        %v982 = vld [vmem:[%s963 + $0xd8] sm:$0xff]
        %v983 = vld [vmem:[%s963 + $0xe0] sm:$0xff]
        %v984 = vld [vmem:[%s963 + $0xf0] sm:$0xff]
        %v985 = vld [vmem:[%s963 + $0xf8] sm:$0xff]
        %v986 = vld [vmem:[%s963 + $0x108] sm:$0xff]
        %v987 = vld [vmem:[%s963 + $0x110] sm:$0xff]
        %v988 = vld [vmem:[%s963 + $0x120] sm:$0xff]
        %v989 = vld [vmem:[%s963 + $0x128] sm:$0xff]
        %v990 = vld [vmem:[%s963 + $0x138] sm:$0xff]
        %v991 = vld [vmem:[%s963 + $0x140] sm:$0xff]
        %v992 = vld [vmem:[%s963 + $0x150] sm:$0xff]
        %v993 = vld [vmem:[%s963 + $0x158] sm:$0xff]
        %v994 = vld [vmem:[%s963 + $0x168] sm:$0xff]
        %v995 = vld [vmem:[%s963 + $0x170] sm:$0xff]
        %v996 = vlaneseq
        %v997 = vshrl.u32 %v996, 7
        %v998 = vsub.s32 7, %v997
        %v999 = vrot.slane %v252, %v998
        %v1000 = vmul.f32 %v964, %v999
        %v1001 = vmul.f32 %v965, %v999
        %v1002 = vmul.f32 %v966, %v999
        %v1003 = vmul.f32 %v967, %v999
        %v1004 = vmul.f32 %v968, %v999
        %v1005 = vmul.f32 %v969, %v999
        %v1006 = vmul.f32 %v970, %v999
        %v1007 = vmul.f32 %v971, %v999
        %v1008 = vmul.f32 %v972, %v999
        %v1009 = vmul.f32 %v973, %v999
        %v1010 = vmul.f32 %v974, %v999
        %v1011 = vmul.f32 %v975, %v999
        %v1012 = vmul.f32 %v976, %v999
        %v1013 = vmul.f32 %v977, %v999
        %v1014 = vmul.f32 %v978, %v999
        %v1015 = vmul.f32 %v979, %v999
        %v1016 = vmul.f32 %v980, %v999
        %v1017 = vmul.f32 %v981, %v999
        %v1018 = vmul.f32 %v982, %v999
        %v1019 = vmul.f32 %v983, %v999
        %v1020 = vmul.f32 %v984, %v999
        %v1021 = vmul.f32 %v985, %v999
        %v1022 = vmul.f32 %v986, %v999
        %v1023 = vmul.f32 %v987, %v999
        %v1024 = vmul.f32 %v988, %v999
        %v1025 = vmul.f32 %v989, %v999
        %v1026 = vmul.f32 %v990, %v999
        %v1027 = vmul.f32 %v991, %v999
        %v1028 = vmul.f32 %v992, %v999
        %v1029 = vmul.f32 %v993, %v999
        %v1030 = vmul.f32 %v994, %v999
        %v1031 = vmul.f32 %v995, %v999
        %v1032 = vadd.f32 %v931, %v1000
        %v1033 = vadd.f32 %v932, %v1001
        %v1034 = vadd.f32 %v933, %v1002
        %v1035 = vadd.f32 %v934, %v1003
        %v1036 = vadd.f32 %v935, %v1004
        %v1037 = vadd.f32 %v936, %v1005
        %v1038 = vadd.f32 %v937, %v1006
        %v1039 = vadd.f32 %v938, %v1007
        %v1040 = vadd.f32 %v939, %v1008
        %v1041 = vadd.f32 %v940, %v1009
        %v1042 = vadd.f32 %v941, %v1010
        %v1043 = vadd.f32 %v942, %v1011
        %v1044 = vadd.f32 %v943, %v1012
        %v1045 = vadd.f32 %v944, %v1013
        %v1046 = vadd.f32 %v945, %v1014
        %v1047 = vadd.f32 %v946, %v1015
        %v1048 = vadd.f32 %v947, %v1016
        %v1049 = vadd.f32 %v948, %v1017
        %v1050 = vadd.f32 %v949, %v1018
        %v1051 = vadd.f32 %v950, %v1019
        %v1052 = vadd.f32 %v951, %v1020
        %v1053 = vadd.f32 %v952, %v1021
        %v1054 = vadd.f32 %v953, %v1022
        %v1055 = vadd.f32 %v954, %v1023
        %v1056 = vadd.f32 %v955, %v1024
        %v1057 = vadd.f32 %v956, %v1025
        %v1058 = vadd.f32 %v957, %v1026
        %v1059 = vadd.f32 %v958, %v1027
        %v1060 = vadd.f32 %v959, %v1028
        %v1061 = vadd.f32 %v960, %v1029
        %v1062 = vadd.f32 %v961, %v1030
        %v1063 = vadd.f32 %v962, %v1031
        %v1064 = vld [vmem:[%s963 + $0x1] sm:$0xff]
        %v1065 = vld [vmem:[%s963 + $0x9] sm:$0xff]
        %v1066 = vld [vmem:[%s963 + $0x19] sm:$0xff]
        %v1067 = vld [vmem:[%s963 + $0x21] sm:$0xff]
        %v1068 = vld [vmem:[%s963 + $0x31] sm:$0xff]
        %v1069 = vld [vmem:[%s963 + $0x39] sm:$0xff]
        %v1070 = vld [vmem:[%s963 + $0x49] sm:$0xff]
        %v1071 = vld [vmem:[%s963 + $0x51] sm:$0xff]
        %v1072 = vld [vmem:[%s963 + $0x61] sm:$0xff]
        %v1073 = vld [vmem:[%s963 + $0x69] sm:$0xff]
        %v1074 = vld [vmem:[%s963 + $0x79] sm:$0xff]
        %v1075 = vld [vmem:[%s963 + $0x81] sm:$0xff]
        %v1076 = vld [vmem:[%s963 + $0x91] sm:$0xff]
        %v1077 = vld [vmem:[%s963 + $0x99] sm:$0xff]
        %v1078 = vld [vmem:[%s963 + $0xa9] sm:$0xff]
        %v1079 = vld [vmem:[%s963 + $0xb1] sm:$0xff]
        %v1080 = vld [vmem:[%s963 + $0xc1] sm:$0xff]
        %v1081 = vld [vmem:[%s963 + $0xc9] sm:$0xff]
        %v1082 = vld [vmem:[%s963 + $0xd9] sm:$0xff]
        %v1083 = vld [vmem:[%s963 + $0xe1] sm:$0xff]
        %v1084 = vld [vmem:[%s963 + $0xf1] sm:$0xff]
        %v1085 = vld [vmem:[%s963 + $0xf9] sm:$0xff]
        %v1086 = vld [vmem:[%s963 + $0x109] sm:$0xff]
        %v1087 = vld [vmem:[%s963 + $0x111] sm:$0xff]
        %v1088 = vld [vmem:[%s963 + $0x121] sm:$0xff]
        %v1089 = vld [vmem:[%s963 + $0x129] sm:$0xff]
        %v1090 = vld [vmem:[%s963 + $0x139] sm:$0xff]
        %v1091 = vld [vmem:[%s963 + $0x141] sm:$0xff]
        %v1092 = vld [vmem:[%s963 + $0x151] sm:$0xff]
        %v1093 = vld [vmem:[%s963 + $0x159] sm:$0xff]
        %v1094 = vld [vmem:[%s963 + $0x169] sm:$0xff]
        %v1095 = vld [vmem:[%s963 + $0x171] sm:$0xff]
        %v1096 = vlaneseq
        %v1097 = vshrl.u32 %v1096, 7
        %v1098 = vsub.s32 0, %v1097
        %v1099 = vrot.slane %v253, %v1098
        %v1100 = vmul.f32 %v1064, %v1099
        %v1101 = vmul.f32 %v1065, %v1099
        %v1102 = vmul.f32 %v1066, %v1099
        %v1103 = vmul.f32 %v1067, %v1099
        %v1104 = vmul.f32 %v1068, %v1099
        %v1105 = vmul.f32 %v1069, %v1099
        %v1106 = vmul.f32 %v1070, %v1099
        %v1107 = vmul.f32 %v1071, %v1099
        %v1108 = vmul.f32 %v1072, %v1099
        %v1109 = vmul.f32 %v1073, %v1099
        %v1110 = vmul.f32 %v1074, %v1099
        %v1111 = vmul.f32 %v1075, %v1099
        %v1112 = vmul.f32 %v1076, %v1099
        %v1113 = vmul.f32 %v1077, %v1099
        %v1114 = vmul.f32 %v1078, %v1099
        %v1115 = vmul.f32 %v1079, %v1099
        %v1116 = vmul.f32 %v1080, %v1099
        %v1117 = vmul.f32 %v1081, %v1099
        %v1118 = vmul.f32 %v1082, %v1099
        %v1119 = vmul.f32 %v1083, %v1099
        %v1120 = vmul.f32 %v1084, %v1099
        %v1121 = vmul.f32 %v1085, %v1099
        %v1122 = vmul.f32 %v1086, %v1099
        %v1123 = vmul.f32 %v1087, %v1099
        %v1124 = vmul.f32 %v1088, %v1099
        %v1125 = vmul.f32 %v1089, %v1099
        %v1126 = vmul.f32 %v1090, %v1099
        %v1127 = vmul.f32 %v1091, %v1099
        %v1128 = vmul.f32 %v1092, %v1099
        %v1129 = vmul.f32 %v1093, %v1099
        %v1130 = vmul.f32 %v1094, %v1099
        %v1131 = vmul.f32 %v1095, %v1099
        %v1132 = vadd.f32 %v1032, %v1100
        %v1133 = vadd.f32 %v1033, %v1101
        %v1134 = vadd.f32 %v1034, %v1102
        %v1135 = vadd.f32 %v1035, %v1103
        %v1136 = vadd.f32 %v1036, %v1104
        %v1137 = vadd.f32 %v1037, %v1105
        %v1138 = vadd.f32 %v1038, %v1106
        %v1139 = vadd.f32 %v1039, %v1107
        %v1140 = vadd.f32 %v1040, %v1108
        %v1141 = vadd.f32 %v1041, %v1109
        %v1142 = vadd.f32 %v1042, %v1110
        %v1143 = vadd.f32 %v1043, %v1111
        %v1144 = vadd.f32 %v1044, %v1112
        %v1145 = vadd.f32 %v1045, %v1113
        %v1146 = vadd.f32 %v1046, %v1114
        %v1147 = vadd.f32 %v1047, %v1115
        %v1148 = vadd.f32 %v1048, %v1116
        %v1149 = vadd.f32 %v1049, %v1117
        %v1150 = vadd.f32 %v1050, %v1118
        %v1151 = vadd.f32 %v1051, %v1119
        %v1152 = vadd.f32 %v1052, %v1120
        %v1153 = vadd.f32 %v1053, %v1121
        %v1154 = vadd.f32 %v1054, %v1122
        %v1155 = vadd.f32 %v1055, %v1123
        %v1156 = vadd.f32 %v1056, %v1124
        %v1157 = vadd.f32 %v1057, %v1125
        %v1158 = vadd.f32 %v1058, %v1126
        %v1159 = vadd.f32 %v1059, %v1127
        %v1160 = vadd.f32 %v1060, %v1128
        %v1161 = vadd.f32 %v1061, %v1129
        %v1162 = vadd.f32 %v1062, %v1130
        %v1163 = vadd.f32 %v1063, %v1131
        %v1164 = vld [vmem:[%s963 + $0x2] sm:$0xff]
        %v1165 = vld [vmem:[%s963 + $0xa] sm:$0xff]
        %v1166 = vld [vmem:[%s963 + $0x1a] sm:$0xff]
        %v1167 = vld [vmem:[%s963 + $0x22] sm:$0xff]
        %v1168 = vld [vmem:[%s963 + $0x32] sm:$0xff]
        %v1169 = vld [vmem:[%s963 + $0x3a] sm:$0xff]
        %v1170 = vld [vmem:[%s963 + $0x4a] sm:$0xff]
        %v1171 = vld [vmem:[%s963 + $0x52] sm:$0xff]
        %v1172 = vld [vmem:[%s963 + $0x62] sm:$0xff]
        %v1173 = vld [vmem:[%s963 + $0x6a] sm:$0xff]
        %v1174 = vld [vmem:[%s963 + $0x7a] sm:$0xff]
        %v1175 = vld [vmem:[%s963 + $0x82] sm:$0xff]
        %v1176 = vld [vmem:[%s963 + $0x92] sm:$0xff]
        %v1177 = vld [vmem:[%s963 + $0x9a] sm:$0xff]
        %v1178 = vld [vmem:[%s963 + $0xaa] sm:$0xff]
        %v1179 = vld [vmem:[%s963 + $0xb2] sm:$0xff]
        %v1180 = vld [vmem:[%s963 + $0xc2] sm:$0xff]
        %v1181 = vld [vmem:[%s963 + $0xca] sm:$0xff]
        %v1182 = vld [vmem:[%s963 + $0xda] sm:$0xff]
        %v1183 = vld [vmem:[%s963 + $0xe2] sm:$0xff]
        %v1184 = vld [vmem:[%s963 + $0xf2] sm:$0xff]
        %v1185 = vld [vmem:[%s963 + $0xfa] sm:$0xff]
        %v1186 = vld [vmem:[%s963 + $0x10a] sm:$0xff]
        %v1187 = vld [vmem:[%s963 + $0x112] sm:$0xff]
        %v1188 = vld [vmem:[%s963 + $0x122] sm:$0xff]
        %v1189 = vld [vmem:[%s963 + $0x12a] sm:$0xff]
        %v1190 = vld [vmem:[%s963 + $0x13a] sm:$0xff]
        %v1191 = vld [vmem:[%s963 + $0x142] sm:$0xff]
        %v1192 = vld [vmem:[%s963 + $0x152] sm:$0xff]
        %v1193 = vld [vmem:[%s963 + $0x15a] sm:$0xff]
        %v1194 = vld [vmem:[%s963 + $0x16a] sm:$0xff]
        %v1195 = vld [vmem:[%s963 + $0x172] sm:$0xff]
        %v1196 = vlaneseq
        %v1197 = vshrl.u32 %v1196, 7
        %v1198 = vsub.s32 1, %v1197
        %v1199 = vrot.slane %v253, %v1198
        %v1200 = vmul.f32 %v1164, %v1199
        %v1201 = vmul.f32 %v1165, %v1199
        %v1202 = vmul.f32 %v1166, %v1199
        %v1203 = vmul.f32 %v1167, %v1199
        %v1204 = vmul.f32 %v1168, %v1199
        %v1205 = vmul.f32 %v1169, %v1199
        %v1206 = vmul.f32 %v1170, %v1199
        %v1207 = vmul.f32 %v1171, %v1199
        %v1208 = vmul.f32 %v1172, %v1199
        %v1209 = vmul.f32 %v1173, %v1199
        %v1210 = vmul.f32 %v1174, %v1199
        %v1211 = vmul.f32 %v1175, %v1199
        %v1212 = vmul.f32 %v1176, %v1199
        %v1213 = vmul.f32 %v1177, %v1199
        %v1214 = vmul.f32 %v1178, %v1199
        %v1215 = vmul.f32 %v1179, %v1199
        %v1216 = vmul.f32 %v1180, %v1199
        %v1217 = vmul.f32 %v1181, %v1199
        %v1218 = vmul.f32 %v1182, %v1199
        %v1219 = vmul.f32 %v1183, %v1199
        %v1220 = vmul.f32 %v1184, %v1199
        %v1221 = vmul.f32 %v1185, %v1199
        %v1222 = vmul.f32 %v1186, %v1199
        %v1223 = vmul.f32 %v1187, %v1199
        %v1224 = vmul.f32 %v1188, %v1199
        %v1225 = vmul.f32 %v1189, %v1199
        %v1226 = vmul.f32 %v1190, %v1199
        %v1227 = vmul.f32 %v1191, %v1199
        %v1228 = vmul.f32 %v1192, %v1199
        %v1229 = vmul.f32 %v1193, %v1199
        %v1230 = vmul.f32 %v1194, %v1199
        %v1231 = vmul.f32 %v1195, %v1199
        %v1232 = vadd.f32 %v1132, %v1200
        %v1233 = vadd.f32 %v1133, %v1201
        %v1234 = vadd.f32 %v1134, %v1202
        %v1235 = vadd.f32 %v1135, %v1203
        %v1236 = vadd.f32 %v1136, %v1204
        %v1237 = vadd.f32 %v1137, %v1205
        %v1238 = vadd.f32 %v1138, %v1206
        %v1239 = vadd.f32 %v1139, %v1207
        %v1240 = vadd.f32 %v1140, %v1208
        %v1241 = vadd.f32 %v1141, %v1209
        %v1242 = vadd.f32 %v1142, %v1210
        %v1243 = vadd.f32 %v1143, %v1211
        %v1244 = vadd.f32 %v1144, %v1212
        %v1245 = vadd.f32 %v1145, %v1213
        %v1246 = vadd.f32 %v1146, %v1214
        %v1247 = vadd.f32 %v1147, %v1215
        %v1248 = vadd.f32 %v1148, %v1216
        %v1249 = vadd.f32 %v1149, %v1217
        %v1250 = vadd.f32 %v1150, %v1218
        %v1251 = vadd.f32 %v1151, %v1219
        %v1252 = vadd.f32 %v1152, %v1220
        %v1253 = vadd.f32 %v1153, %v1221
        %v1254 = vadd.f32 %v1154, %v1222
        %v1255 = vadd.f32 %v1155, %v1223
        %v1256 = vadd.f32 %v1156, %v1224
        %v1257 = vadd.f32 %v1157, %v1225
        %v1258 = vadd.f32 %v1158, %v1226
        %v1259 = vadd.f32 %v1159, %v1227
        %v1260 = vadd.f32 %v1160, %v1228
        %v1261 = vadd.f32 %v1161, %v1229
        %v1262 = vadd.f32 %v1162, %v1230
        %v1263 = vadd.f32 %v1163, %v1231
        %v1264 = vld [vmem:[%s963 + $0x3] sm:$0xff]
        %v1265 = vld [vmem:[%s963 + $0xb] sm:$0xff]
        %v1266 = vld [vmem:[%s963 + $0x1b] sm:$0xff]
        %v1267 = vld [vmem:[%s963 + $0x23] sm:$0xff]
        %v1268 = vld [vmem:[%s963 + $0x33] sm:$0xff]
        %v1269 = vld [vmem:[%s963 + $0x3b] sm:$0xff]
        %v1270 = vld [vmem:[%s963 + $0x4b] sm:$0xff]
        %v1271 = vld [vmem:[%s963 + $0x53] sm:$0xff]
        %v1272 = vld [vmem:[%s963 + $0x63] sm:$0xff]
        %v1273 = vld [vmem:[%s963 + $0x6b] sm:$0xff]
        %v1274 = vld [vmem:[%s963 + $0x7b] sm:$0xff]
        %v1275 = vld [vmem:[%s963 + $0x83] sm:$0xff]
        %v1276 = vld [vmem:[%s963 + $0x93] sm:$0xff]
        %v1277 = vld [vmem:[%s963 + $0x9b] sm:$0xff]
        %v1278 = vld [vmem:[%s963 + $0xab] sm:$0xff]
        %v1279 = vld [vmem:[%s963 + $0xb3] sm:$0xff]
        %v1280 = vld [vmem:[%s963 + $0xc3] sm:$0xff]
        %v1281 = vld [vmem:[%s963 + $0xcb] sm:$0xff]
        %v1282 = vld [vmem:[%s963 + $0xdb] sm:$0xff]
        %v1283 = vld [vmem:[%s963 + $0xe3] sm:$0xff]
        %v1284 = vld [vmem:[%s963 + $0xf3] sm:$0xff]
        %v1285 = vld [vmem:[%s963 + $0xfb] sm:$0xff]
        %v1286 = vld [vmem:[%s963 + $0x10b] sm:$0xff]
        %v1287 = vld [vmem:[%s963 + $0x113] sm:$0xff]
        %v1288 = vld [vmem:[%s963 + $0x123] sm:$0xff]
        %v1289 = vld [vmem:[%s963 + $0x12b] sm:$0xff]
        %v1290 = vld [vmem:[%s963 + $0x13b] sm:$0xff]
        %v1291 = vld [vmem:[%s963 + $0x143] sm:$0xff]
        %v1292 = vld [vmem:[%s963 + $0x153] sm:$0xff]
        %v1293 = vld [vmem:[%s963 + $0x15b] sm:$0xff]
        %v1294 = vld [vmem:[%s963 + $0x16b] sm:$0xff]
        %v1295 = vld [vmem:[%s963 + $0x173] sm:$0xff]
        %v1296 = vlaneseq
        %v1297 = vshrl.u32 %v1296, 7
        %v1298 = vsub.s32 2, %v1297
        %v1299 = vrot.slane %v253, %v1298
        %v1300 = vmul.f32 %v1264, %v1299
        %v1301 = vmul.f32 %v1265, %v1299
        %v1302 = vmul.f32 %v1266, %v1299
        %v1303 = vmul.f32 %v1267, %v1299
        %v1304 = vmul.f32 %v1268, %v1299
        %v1305 = vmul.f32 %v1269, %v1299
        %v1306 = vmul.f32 %v1270, %v1299
        %v1307 = vmul.f32 %v1271, %v1299
        %v1308 = vmul.f32 %v1272, %v1299
        %v1309 = vmul.f32 %v1273, %v1299
        %v1310 = vmul.f32 %v1274, %v1299
        %v1311 = vmul.f32 %v1275, %v1299
        %v1312 = vmul.f32 %v1276, %v1299
        %v1313 = vmul.f32 %v1277, %v1299
        %v1314 = vmul.f32 %v1278, %v1299
        %v1315 = vmul.f32 %v1279, %v1299
        %v1316 = vmul.f32 %v1280, %v1299
        %v1317 = vmul.f32 %v1281, %v1299
        %v1318 = vmul.f32 %v1282, %v1299
        %v1319 = vmul.f32 %v1283, %v1299
        %v1320 = vmul.f32 %v1284, %v1299
        %v1321 = vmul.f32 %v1285, %v1299
        %v1322 = vmul.f32 %v1286, %v1299
        %v1323 = vmul.f32 %v1287, %v1299
        %v1324 = vmul.f32 %v1288, %v1299
        %v1325 = vmul.f32 %v1289, %v1299
        %v1326 = vmul.f32 %v1290, %v1299
        %v1327 = vmul.f32 %v1291, %v1299
        %v1328 = vmul.f32 %v1292, %v1299
        %v1329 = vmul.f32 %v1293, %v1299
        %v1330 = vmul.f32 %v1294, %v1299
        %v1331 = vmul.f32 %v1295, %v1299
        %v1332 = vadd.f32 %v1232, %v1300
        %v1333 = vadd.f32 %v1233, %v1301
        %v1334 = vadd.f32 %v1234, %v1302
        %v1335 = vadd.f32 %v1235, %v1303
        %v1336 = vadd.f32 %v1236, %v1304
        %v1337 = vadd.f32 %v1237, %v1305
        %v1338 = vadd.f32 %v1238, %v1306
        %v1339 = vadd.f32 %v1239, %v1307
        %v1340 = vadd.f32 %v1240, %v1308
        %v1341 = vadd.f32 %v1241, %v1309
        %v1342 = vadd.f32 %v1242, %v1310
        %v1343 = vadd.f32 %v1243, %v1311
        %v1344 = vadd.f32 %v1244, %v1312
        %v1345 = vadd.f32 %v1245, %v1313
        %v1346 = vadd.f32 %v1246, %v1314
        %v1347 = vadd.f32 %v1247, %v1315
        %v1348 = vadd.f32 %v1248, %v1316
        %v1349 = vadd.f32 %v1249, %v1317
        %v1350 = vadd.f32 %v1250, %v1318
        %v1351 = vadd.f32 %v1251, %v1319
        %v1352 = vadd.f32 %v1252, %v1320
        %v1353 = vadd.f32 %v1253, %v1321
        %v1354 = vadd.f32 %v1254, %v1322
        %v1355 = vadd.f32 %v1255, %v1323
        %v1356 = vadd.f32 %v1256, %v1324
        %v1357 = vadd.f32 %v1257, %v1325
        %v1358 = vadd.f32 %v1258, %v1326
        %v1359 = vadd.f32 %v1259, %v1327
        %v1360 = vadd.f32 %v1260, %v1328
        %v1361 = vadd.f32 %v1261, %v1329
        %v1362 = vadd.f32 %v1262, %v1330
        %v1363 = vadd.f32 %v1263, %v1331
        %v1364 = vld [vmem:[%s963 + $0x4] sm:$0xff]
        %v1365 = vld [vmem:[%s963 + $0xc] sm:$0xff]
        %v1366 = vld [vmem:[%s963 + $0x1c] sm:$0xff]
        %v1367 = vld [vmem:[%s963 + $0x24] sm:$0xff]
        %v1368 = vld [vmem:[%s963 + $0x34] sm:$0xff]
        %v1369 = vld [vmem:[%s963 + $0x3c] sm:$0xff]
        %v1370 = vld [vmem:[%s963 + $0x4c] sm:$0xff]
        %v1371 = vld [vmem:[%s963 + $0x54] sm:$0xff]
        %v1372 = vld [vmem:[%s963 + $0x64] sm:$0xff]
        %v1373 = vld [vmem:[%s963 + $0x6c] sm:$0xff]
        %v1374 = vld [vmem:[%s963 + $0x7c] sm:$0xff]
        %v1375 = vld [vmem:[%s963 + $0x84] sm:$0xff]
        %v1376 = vld [vmem:[%s963 + $0x94] sm:$0xff]
        %v1377 = vld [vmem:[%s963 + $0x9c] sm:$0xff]
        %v1378 = vld [vmem:[%s963 + $0xac] sm:$0xff]
        %v1379 = vld [vmem:[%s963 + $0xb4] sm:$0xff]
        %v1380 = vld [vmem:[%s963 + $0xc4] sm:$0xff]
        %v1381 = vld [vmem:[%s963 + $0xcc] sm:$0xff]
        %v1382 = vld [vmem:[%s963 + $0xdc] sm:$0xff]
        %v1383 = vld [vmem:[%s963 + $0xe4] sm:$0xff]
        %v1384 = vld [vmem:[%s963 + $0xf4] sm:$0xff]
        %v1385 = vld [vmem:[%s963 + $0xfc] sm:$0xff]
        %v1386 = vld [vmem:[%s963 + $0x10c] sm:$0xff]
        %v1387 = vld [vmem:[%s963 + $0x114] sm:$0xff]
        %v1388 = vld [vmem:[%s963 + $0x124] sm:$0xff]
        %v1389 = vld [vmem:[%s963 + $0x12c] sm:$0xff]
        %v1390 = vld [vmem:[%s963 + $0x13c] sm:$0xff]
        %v1391 = vld [vmem:[%s963 + $0x144] sm:$0xff]
        %v1392 = vld [vmem:[%s963 + $0x154] sm:$0xff]
        %v1393 = vld [vmem:[%s963 + $0x15c] sm:$0xff]
        %v1394 = vld [vmem:[%s963 + $0x16c] sm:$0xff]
        %v1395 = vld [vmem:[%s963 + $0x174] sm:$0xff]
        %v1396 = vlaneseq
        %v1397 = vshrl.u32 %v1396, 7
        %v1398 = vsub.s32 3, %v1397
        %v1399 = vrot.slane %v253, %v1398
        %v1400 = vmul.f32 %v1364, %v1399
        %v1401 = vmul.f32 %v1365, %v1399
        %v1402 = vmul.f32 %v1366, %v1399
        %v1403 = vmul.f32 %v1367, %v1399
        %v1404 = vmul.f32 %v1368, %v1399
        %v1405 = vmul.f32 %v1369, %v1399
        %v1406 = vmul.f32 %v1370, %v1399
        %v1407 = vmul.f32 %v1371, %v1399
        %v1408 = vmul.f32 %v1372, %v1399
        %v1409 = vmul.f32 %v1373, %v1399
        %v1410 = vmul.f32 %v1374, %v1399
        %v1411 = vmul.f32 %v1375, %v1399
        %v1412 = vmul.f32 %v1376, %v1399
        %v1413 = vmul.f32 %v1377, %v1399
        %v1414 = vmul.f32 %v1378, %v1399
        %v1415 = vmul.f32 %v1379, %v1399
        %v1416 = vmul.f32 %v1380, %v1399
        %v1417 = vmul.f32 %v1381, %v1399
        %v1418 = vmul.f32 %v1382, %v1399
        %v1419 = vmul.f32 %v1383, %v1399
        %v1420 = vmul.f32 %v1384, %v1399
        %v1421 = vmul.f32 %v1385, %v1399
        %v1422 = vmul.f32 %v1386, %v1399
        %v1423 = vmul.f32 %v1387, %v1399
        %v1424 = vmul.f32 %v1388, %v1399
        %v1425 = vmul.f32 %v1389, %v1399
        %v1426 = vmul.f32 %v1390, %v1399
        %v1427 = vmul.f32 %v1391, %v1399
        %v1428 = vmul.f32 %v1392, %v1399
        %v1429 = vmul.f32 %v1393, %v1399
        %v1430 = vmul.f32 %v1394, %v1399
        %v1431 = vmul.f32 %v1395, %v1399
        %v1432 = vadd.f32 %v1332, %v1400
        %v1433 = vadd.f32 %v1333, %v1401
        %v1434 = vadd.f32 %v1334, %v1402
        %v1435 = vadd.f32 %v1335, %v1403
        %v1436 = vadd.f32 %v1336, %v1404
        %v1437 = vadd.f32 %v1337, %v1405
        %v1438 = vadd.f32 %v1338, %v1406
        %v1439 = vadd.f32 %v1339, %v1407
        %v1440 = vadd.f32 %v1340, %v1408
        %v1441 = vadd.f32 %v1341, %v1409
        %v1442 = vadd.f32 %v1342, %v1410
        %v1443 = vadd.f32 %v1343, %v1411
        %v1444 = vadd.f32 %v1344, %v1412
        %v1445 = vadd.f32 %v1345, %v1413
        %v1446 = vadd.f32 %v1346, %v1414
        %v1447 = vadd.f32 %v1347, %v1415
        %v1448 = vadd.f32 %v1348, %v1416
        %v1449 = vadd.f32 %v1349, %v1417
        %v1450 = vadd.f32 %v1350, %v1418
        %v1451 = vadd.f32 %v1351, %v1419
        %v1452 = vadd.f32 %v1352, %v1420
        %v1453 = vadd.f32 %v1353, %v1421
        %v1454 = vadd.f32 %v1354, %v1422
        %v1455 = vadd.f32 %v1355, %v1423
        %v1456 = vadd.f32 %v1356, %v1424
        %v1457 = vadd.f32 %v1357, %v1425
        %v1458 = vadd.f32 %v1358, %v1426
        %v1459 = vadd.f32 %v1359, %v1427
        %v1460 = vadd.f32 %v1360, %v1428
        %v1461 = vadd.f32 %v1361, %v1429
        %v1462 = vadd.f32 %v1362, %v1430
        %v1463 = vadd.f32 %v1363, %v1431
        %v1464 = vld [vmem:[%s963 + $0x5] sm:$0xff]
        %v1465 = vld [vmem:[%s963 + $0xd] sm:$0xff]
        %v1466 = vld [vmem:[%s963 + $0x1d] sm:$0xff]
        %v1467 = vld [vmem:[%s963 + $0x25] sm:$0xff]
        %v1468 = vld [vmem:[%s963 + $0x35] sm:$0xff]
        %v1469 = vld [vmem:[%s963 + $0x3d] sm:$0xff]
        %v1470 = vld [vmem:[%s963 + $0x4d] sm:$0xff]
        %v1471 = vld [vmem:[%s963 + $0x55] sm:$0xff]
        %v1472 = vld [vmem:[%s963 + $0x65] sm:$0xff]
        %v1473 = vld [vmem:[%s963 + $0x6d] sm:$0xff]
        %v1474 = vld [vmem:[%s963 + $0x7d] sm:$0xff]
        %v1475 = vld [vmem:[%s963 + $0x85] sm:$0xff]
        %v1476 = vld [vmem:[%s963 + $0x95] sm:$0xff]
        %v1477 = vld [vmem:[%s963 + $0x9d] sm:$0xff]
        %v1478 = vld [vmem:[%s963 + $0xad] sm:$0xff]
        %v1479 = vld [vmem:[%s963 + $0xb5] sm:$0xff]
        %v1480 = vld [vmem:[%s963 + $0xc5] sm:$0xff]
        %v1481 = vld [vmem:[%s963 + $0xcd] sm:$0xff]
        %v1482 = vld [vmem:[%s963 + $0xdd] sm:$0xff]
        %v1483 = vld [vmem:[%s963 + $0xe5] sm:$0xff]
        %v1484 = vld [vmem:[%s963 + $0xf5] sm:$0xff]
        %v1485 = vld [vmem:[%s963 + $0xfd] sm:$0xff]
        %v1486 = vld [vmem:[%s963 + $0x10d] sm:$0xff]
        %v1487 = vld [vmem:[%s963 + $0x115] sm:$0xff]
        %v1488 = vld [vmem:[%s963 + $0x125] sm:$0xff]
        %v1489 = vld [vmem:[%s963 + $0x12d] sm:$0xff]
        %v1490 = vld [vmem:[%s963 + $0x13d] sm:$0xff]
        %v1491 = vld [vmem:[%s963 + $0x145] sm:$0xff]
        %v1492 = vld [vmem:[%s963 + $0x155] sm:$0xff]
        %v1493 = vld [vmem:[%s963 + $0x15d] sm:$0xff]
        %v1494 = vld [vmem:[%s963 + $0x16d] sm:$0xff]
        %v1495 = vld [vmem:[%s963 + $0x175] sm:$0xff]
        %v1496 = vlaneseq
        %v1497 = vshrl.u32 %v1496, 7
        %v1498 = vsub.s32 4, %v1497
        %v1499 = vrot.slane %v253, %v1498
        %v1500 = vmul.f32 %v1464, %v1499
        %v1501 = vmul.f32 %v1465, %v1499
        %v1502 = vmul.f32 %v1466, %v1499
        %v1503 = vmul.f32 %v1467, %v1499
        %v1504 = vmul.f32 %v1468, %v1499
        %v1505 = vmul.f32 %v1469, %v1499
        %v1506 = vmul.f32 %v1470, %v1499
        %v1507 = vmul.f32 %v1471, %v1499
        %v1508 = vmul.f32 %v1472, %v1499
        %v1509 = vmul.f32 %v1473, %v1499
        %v1510 = vmul.f32 %v1474, %v1499
        %v1511 = vmul.f32 %v1475, %v1499
        %v1512 = vmul.f32 %v1476, %v1499
        %v1513 = vmul.f32 %v1477, %v1499
        %v1514 = vmul.f32 %v1478, %v1499
        %v1515 = vmul.f32 %v1479, %v1499
        %v1516 = vmul.f32 %v1480, %v1499
        %v1517 = vmul.f32 %v1481, %v1499
        %v1518 = vmul.f32 %v1482, %v1499
        %v1519 = vmul.f32 %v1483, %v1499
        %v1520 = vmul.f32 %v1484, %v1499
        %v1521 = vmul.f32 %v1485, %v1499
        %v1522 = vmul.f32 %v1486, %v1499
        %v1523 = vmul.f32 %v1487, %v1499
        %v1524 = vmul.f32 %v1488, %v1499
        %v1525 = vmul.f32 %v1489, %v1499
        %v1526 = vmul.f32 %v1490, %v1499
        %v1527 = vmul.f32 %v1491, %v1499
        %v1528 = vmul.f32 %v1492, %v1499
        %v1529 = vmul.f32 %v1493, %v1499
        %v1530 = vmul.f32 %v1494, %v1499
        %v1531 = vmul.f32 %v1495, %v1499
        %v1532 = vadd.f32 %v1432, %v1500
        %v1533 = vadd.f32 %v1433, %v1501
        %v1534 = vadd.f32 %v1434, %v1502
        %v1535 = vadd.f32 %v1435, %v1503
        %v1536 = vadd.f32 %v1436, %v1504
        %v1537 = vadd.f32 %v1437, %v1505
        %v1538 = vadd.f32 %v1438, %v1506
        %v1539 = vadd.f32 %v1439, %v1507
        %v1540 = vadd.f32 %v1440, %v1508
        %v1541 = vadd.f32 %v1441, %v1509
        %v1542 = vadd.f32 %v1442, %v1510
        %v1543 = vadd.f32 %v1443, %v1511
        %v1544 = vadd.f32 %v1444, %v1512
        %v1545 = vadd.f32 %v1445, %v1513
        %v1546 = vadd.f32 %v1446, %v1514
        %v1547 = vadd.f32 %v1447, %v1515
        %v1548 = vadd.f32 %v1448, %v1516
        %v1549 = vadd.f32 %v1449, %v1517
        %v1550 = vadd.f32 %v1450, %v1518
        %v1551 = vadd.f32 %v1451, %v1519
        %v1552 = vadd.f32 %v1452, %v1520
        %v1553 = vadd.f32 %v1453, %v1521
        %v1554 = vadd.f32 %v1454, %v1522
        %v1555 = vadd.f32 %v1455, %v1523
        %v1556 = vadd.f32 %v1456, %v1524
        %v1557 = vadd.f32 %v1457, %v1525
        %v1558 = vadd.f32 %v1458, %v1526
        %v1559 = vadd.f32 %v1459, %v1527
        %v1560 = vadd.f32 %v1460, %v1528
        %v1561 = vadd.f32 %v1461, %v1529
        %v1562 = vadd.f32 %v1462, %v1530
        %v1563 = vadd.f32 %v1463, %v1531
        %v1564 = vld [vmem:[%s963 + $0x6] sm:$0xff]
        %v1565 = vld [vmem:[%s963 + $0xe] sm:$0xff]
        %v1566 = vld [vmem:[%s963 + $0x1e] sm:$0xff]
        %v1567 = vld [vmem:[%s963 + $0x26] sm:$0xff]
        %v1568 = vld [vmem:[%s963 + $0x36] sm:$0xff]
        %v1569 = vld [vmem:[%s963 + $0x3e] sm:$0xff]
        %v1570 = vld [vmem:[%s963 + $0x4e] sm:$0xff]
        %v1571 = vld [vmem:[%s963 + $0x56] sm:$0xff]
        %v1572 = vld [vmem:[%s963 + $0x66] sm:$0xff]
        %v1573 = vld [vmem:[%s963 + $0x6e] sm:$0xff]
        %v1574 = vld [vmem:[%s963 + $0x7e] sm:$0xff]
        %v1575 = vld [vmem:[%s963 + $0x86] sm:$0xff]
        %v1576 = vld [vmem:[%s963 + $0x96] sm:$0xff]
        %v1577 = vld [vmem:[%s963 + $0x9e] sm:$0xff]
        %v1578 = vld [vmem:[%s963 + $0xae] sm:$0xff]
        %v1579 = vld [vmem:[%s963 + $0xb6] sm:$0xff]
        %v1580 = vld [vmem:[%s963 + $0xc6] sm:$0xff]
        %v1581 = vld [vmem:[%s963 + $0xce] sm:$0xff]
        %v1582 = vld [vmem:[%s963 + $0xde] sm:$0xff]
        %v1583 = vld [vmem:[%s963 + $0xe6] sm:$0xff]
        %v1584 = vld [vmem:[%s963 + $0xf6] sm:$0xff]
        %v1585 = vld [vmem:[%s963 + $0xfe] sm:$0xff]
        %v1586 = vld [vmem:[%s963 + $0x10e] sm:$0xff]
        %v1587 = vld [vmem:[%s963 + $0x116] sm:$0xff]
        %v1588 = vld [vmem:[%s963 + $0x126] sm:$0xff]
        %v1589 = vld [vmem:[%s963 + $0x12e] sm:$0xff]
        %v1590 = vld [vmem:[%s963 + $0x13e] sm:$0xff]
        %v1591 = vld [vmem:[%s963 + $0x146] sm:$0xff]
        %v1592 = vld [vmem:[%s963 + $0x156] sm:$0xff]
        %v1593 = vld [vmem:[%s963 + $0x15e] sm:$0xff]
        %v1594 = vld [vmem:[%s963 + $0x16e] sm:$0xff]
        %v1595 = vld [vmem:[%s963 + $0x176] sm:$0xff]
        %v1596 = vlaneseq
        %v1597 = vshrl.u32 %v1596, 7
        %v1598 = vsub.s32 5, %v1597
        %v1599 = vrot.slane %v253, %v1598
        %v1600 = vmul.f32 %v1564, %v1599
        %v1601 = vmul.f32 %v1565, %v1599
        %v1602 = vmul.f32 %v1566, %v1599
        %v1603 = vmul.f32 %v1567, %v1599
        %v1604 = vmul.f32 %v1568, %v1599
        %v1605 = vmul.f32 %v1569, %v1599
        %v1606 = vmul.f32 %v1570, %v1599
        %v1607 = vmul.f32 %v1571, %v1599
        %v1608 = vmul.f32 %v1572, %v1599
        %v1609 = vmul.f32 %v1573, %v1599
        %v1610 = vmul.f32 %v1574, %v1599
        %v1611 = vmul.f32 %v1575, %v1599
        %v1612 = vmul.f32 %v1576, %v1599
        %v1613 = vmul.f32 %v1577, %v1599
        %v1614 = vmul.f32 %v1578, %v1599
        %v1615 = vmul.f32 %v1579, %v1599
        %v1616 = vmul.f32 %v1580, %v1599
        %v1617 = vmul.f32 %v1581, %v1599
        %v1618 = vmul.f32 %v1582, %v1599
        %v1619 = vmul.f32 %v1583, %v1599
        %v1620 = vmul.f32 %v1584, %v1599
        %v1621 = vmul.f32 %v1585, %v1599
        %v1622 = vmul.f32 %v1586, %v1599
        %v1623 = vmul.f32 %v1587, %v1599
        %v1624 = vmul.f32 %v1588, %v1599
        %v1625 = vmul.f32 %v1589, %v1599
        %v1626 = vmul.f32 %v1590, %v1599
        %v1627 = vmul.f32 %v1591, %v1599
        %v1628 = vmul.f32 %v1592, %v1599
        %v1629 = vmul.f32 %v1593, %v1599
        %v1630 = vmul.f32 %v1594, %v1599
        %v1631 = vmul.f32 %v1595, %v1599
        %v1632 = vadd.f32 %v1532, %v1600
        %v1633 = vadd.f32 %v1533, %v1601
        %v1634 = vadd.f32 %v1534, %v1602
        %v1635 = vadd.f32 %v1535, %v1603
        %v1636 = vadd.f32 %v1536, %v1604
        %v1637 = vadd.f32 %v1537, %v1605
        %v1638 = vadd.f32 %v1538, %v1606
        %v1639 = vadd.f32 %v1539, %v1607
        %v1640 = vadd.f32 %v1540, %v1608
        %v1641 = vadd.f32 %v1541, %v1609
        %v1642 = vadd.f32 %v1542, %v1610
        %v1643 = vadd.f32 %v1543, %v1611
        %v1644 = vadd.f32 %v1544, %v1612
        %v1645 = vadd.f32 %v1545, %v1613
        %v1646 = vadd.f32 %v1546, %v1614
        %v1647 = vadd.f32 %v1547, %v1615
        %v1648 = vadd.f32 %v1548, %v1616
        %v1649 = vadd.f32 %v1549, %v1617
        %v1650 = vadd.f32 %v1550, %v1618
        %v1651 = vadd.f32 %v1551, %v1619
        %v1652 = vadd.f32 %v1552, %v1620
        %v1653 = vadd.f32 %v1553, %v1621
        %v1654 = vadd.f32 %v1554, %v1622
        %v1655 = vadd.f32 %v1555, %v1623
        %v1656 = vadd.f32 %v1556, %v1624
        %v1657 = vadd.f32 %v1557, %v1625
        %v1658 = vadd.f32 %v1558, %v1626
        %v1659 = vadd.f32 %v1559, %v1627
        %v1660 = vadd.f32 %v1560, %v1628
        %v1661 = vadd.f32 %v1561, %v1629
        %v1662 = vadd.f32 %v1562, %v1630
        %v1663 = vadd.f32 %v1563, %v1631
        %s1664 = scalar_lea.vmem %s249, 48
        %v1665 = vld [vmem:[%s1664] sm:$0xff]
        %v1666 = vld [vmem:[%s1664 + $0x8] sm:$0xff]
        %v1667 = vld [vmem:[%s1664 + $0x18] sm:$0xff]
        %v1668 = vld [vmem:[%s1664 + $0x20] sm:$0xff]
        %v1669 = vld [vmem:[%s1664 + $0x30] sm:$0xff]
        %v1670 = vld [vmem:[%s1664 + $0x38] sm:$0xff]
        %v1671 = vld [vmem:[%s1664 + $0x48] sm:$0xff]
        %v1672 = vld [vmem:[%s1664 + $0x50] sm:$0xff]
        %v1673 = vld [vmem:[%s1664 + $0x60] sm:$0xff]
        %v1674 = vld [vmem:[%s1664 + $0x68] sm:$0xff]
        %v1675 = vld [vmem:[%s1664 + $0x78] sm:$0xff]
        %v1676 = vld [vmem:[%s1664 + $0x80] sm:$0xff]
        %v1677 = vld [vmem:[%s1664 + $0x90] sm:$0xff]
        %v1678 = vld [vmem:[%s1664 + $0x98] sm:$0xff]
        %v1679 = vld [vmem:[%s1664 + $0xa8] sm:$0xff]
        %v1680 = vld [vmem:[%s1664 + $0xb0] sm:$0xff]
        %v1681 = vld [vmem:[%s1664 + $0xc0] sm:$0xff]
        %v1682 = vld [vmem:[%s1664 + $0xc8] sm:$0xff]
        %v1683 = vld [vmem:[%s1664 + $0xd8] sm:$0xff]
        %v1684 = vld [vmem:[%s1664 + $0xe0] sm:$0xff]
        %v1685 = vld [vmem:[%s1664 + $0xf0] sm:$0xff]
        %v1686 = vld [vmem:[%s1664 + $0xf8] sm:$0xff]
        %v1687 = vld [vmem:[%s1664 + $0x108] sm:$0xff]
        %v1688 = vld [vmem:[%s1664 + $0x110] sm:$0xff]
        %v1689 = vld [vmem:[%s1664 + $0x120] sm:$0xff]
        %v1690 = vld [vmem:[%s1664 + $0x128] sm:$0xff]
        %v1691 = vld [vmem:[%s1664 + $0x138] sm:$0xff]
        %v1692 = vld [vmem:[%s1664 + $0x140] sm:$0xff]
        %v1693 = vld [vmem:[%s1664 + $0x150] sm:$0xff]
        %v1694 = vld [vmem:[%s1664 + $0x158] sm:$0xff]
        %v1695 = vld [vmem:[%s1664 + $0x168] sm:$0xff]
        %v1696 = vld [vmem:[%s1664 + $0x170] sm:$0xff]
        %v1697 = vlaneseq
        %v1698 = vshrl.u32 %v1697, 7
        %v1699 = vsub.s32 6, %v1698
        %v1700 = vrot.slane %v253, %v1699
        %v1701 = vmul.f32 %v1665, %v1700
        %v1702 = vmul.f32 %v1666, %v1700
        %v1703 = vmul.f32 %v1667, %v1700
        %v1704 = vmul.f32 %v1668, %v1700
        %v1705 = vmul.f32 %v1669, %v1700
        %v1706 = vmul.f32 %v1670, %v1700
        %v1707 = vmul.f32 %v1671, %v1700
        %v1708 = vmul.f32 %v1672, %v1700
        %v1709 = vmul.f32 %v1673, %v1700
        %v1710 = vmul.f32 %v1674, %v1700
        %v1711 = vmul.f32 %v1675, %v1700
        %v1712 = vmul.f32 %v1676, %v1700
        %v1713 = vmul.f32 %v1677, %v1700
        %v1714 = vmul.f32 %v1678, %v1700
        %v1715 = vmul.f32 %v1679, %v1700
        %v1716 = vmul.f32 %v1680, %v1700
        %v1717 = vmul.f32 %v1681, %v1700
        %v1718 = vmul.f32 %v1682, %v1700
        %v1719 = vmul.f32 %v1683, %v1700
        %v1720 = vmul.f32 %v1684, %v1700
        %v1721 = vmul.f32 %v1685, %v1700
        %v1722 = vmul.f32 %v1686, %v1700
        %v1723 = vmul.f32 %v1687, %v1700
        %v1724 = vmul.f32 %v1688, %v1700
        %v1725 = vmul.f32 %v1689, %v1700
        %v1726 = vmul.f32 %v1690, %v1700
        %v1727 = vmul.f32 %v1691, %v1700
        %v1728 = vmul.f32 %v1692, %v1700
        %v1729 = vmul.f32 %v1693, %v1700
        %v1730 = vmul.f32 %v1694, %v1700
        %v1731 = vmul.f32 %v1695, %v1700
        %v1732 = vmul.f32 %v1696, %v1700
        %v1733 = vadd.f32 %v1632, %v1701
        %v1734 = vadd.f32 %v1633, %v1702
        %v1735 = vadd.f32 %v1634, %v1703
        %v1736 = vadd.f32 %v1635, %v1704
        %v1737 = vadd.f32 %v1636, %v1705
        %v1738 = vadd.f32 %v1637, %v1706
        %v1739 = vadd.f32 %v1638, %v1707
        %v1740 = vadd.f32 %v1639, %v1708
        %v1741 = vadd.f32 %v1640, %v1709
        %v1742 = vadd.f32 %v1641, %v1710
        %v1743 = vadd.f32 %v1642, %v1711
        %v1744 = vadd.f32 %v1643, %v1712
        %v1745 = vadd.f32 %v1644, %v1713
        %v1746 = vadd.f32 %v1645, %v1714
        %v1747 = vadd.f32 %v1646, %v1715
        %v1748 = vadd.f32 %v1647, %v1716
        %v1749 = vadd.f32 %v1648, %v1717
        %v1750 = vadd.f32 %v1649, %v1718
        %v1751 = vadd.f32 %v1650, %v1719
        %v1752 = vadd.f32 %v1651, %v1720
        %v1753 = vadd.f32 %v1652, %v1721
        %v1754 = vadd.f32 %v1653, %v1722
        %v1755 = vadd.f32 %v1654, %v1723
        %v1756 = vadd.f32 %v1655, %v1724
        %v1757 = vadd.f32 %v1656, %v1725
        %v1758 = vadd.f32 %v1657, %v1726
        %v1759 = vadd.f32 %v1658, %v1727
        %v1760 = vadd.f32 %v1659, %v1728
        %v1761 = vadd.f32 %v1660, %v1729
        %v1762 = vadd.f32 %v1661, %v1730
        %v1763 = vadd.f32 %v1662, %v1731
        %v1764 = vadd.f32 %v1663, %v1732
        %v1765 = vld [vmem:[%s1664 + $0x1] sm:$0xff]
        %v1766 = vld [vmem:[%s1664 + $0x9] sm:$0xff]
        %v1767 = vld [vmem:[%s1664 + $0x19] sm:$0xff]
        %v1768 = vld [vmem:[%s1664 + $0x21] sm:$0xff]
        %v1769 = vld [vmem:[%s1664 + $0x31] sm:$0xff]
        %v1770 = vld [vmem:[%s1664 + $0x39] sm:$0xff]
        %v1771 = vld [vmem:[%s1664 + $0x49] sm:$0xff]
        %v1772 = vld [vmem:[%s1664 + $0x51] sm:$0xff]
        %v1773 = vld [vmem:[%s1664 + $0x61] sm:$0xff]
        %v1774 = vld [vmem:[%s1664 + $0x69] sm:$0xff]
        %v1775 = vld [vmem:[%s1664 + $0x79] sm:$0xff]
        %v1776 = vld [vmem:[%s1664 + $0x81] sm:$0xff]
        %v1777 = vld [vmem:[%s1664 + $0x91] sm:$0xff]
        %v1778 = vld [vmem:[%s1664 + $0x99] sm:$0xff]
        %v1779 = vld [vmem:[%s1664 + $0xa9] sm:$0xff]
        %v1780 = vld [vmem:[%s1664 + $0xb1] sm:$0xff]
        %v1781 = vld [vmem:[%s1664 + $0xc1] sm:$0xff]
        %v1782 = vld [vmem:[%s1664 + $0xc9] sm:$0xff]
        %v1783 = vld [vmem:[%s1664 + $0xd9] sm:$0xff]
        %v1784 = vld [vmem:[%s1664 + $0xe1] sm:$0xff]
        %v1785 = vld [vmem:[%s1664 + $0xf1] sm:$0xff]
        %v1786 = vld [vmem:[%s1664 + $0xf9] sm:$0xff]
        %v1787 = vld [vmem:[%s1664 + $0x109] sm:$0xff]
        %v1788 = vld [vmem:[%s1664 + $0x111] sm:$0xff]
        %v1789 = vld [vmem:[%s1664 + $0x121] sm:$0xff]
        %v1790 = vld [vmem:[%s1664 + $0x129] sm:$0xff]
        %v1791 = vld [vmem:[%s1664 + $0x139] sm:$0xff]
        %v1792 = vld [vmem:[%s1664 + $0x141] sm:$0xff]
        %v1793 = vld [vmem:[%s1664 + $0x151] sm:$0xff]
        %v1794 = vld [vmem:[%s1664 + $0x159] sm:$0xff]
        %v1795 = vld [vmem:[%s1664 + $0x169] sm:$0xff]
        %v1796 = vld [vmem:[%s1664 + $0x171] sm:$0xff]
        %v1797 = vlaneseq
        %v1798 = vshrl.u32 %v1797, 7
        %v1799 = vsub.s32 7, %v1798
        %v1800 = vrot.slane %v253, %v1799
        %v1801 = vmul.f32 %v1765, %v1800
        %v1802 = vmul.f32 %v1766, %v1800
        %v1803 = vmul.f32 %v1767, %v1800
        %v1804 = vmul.f32 %v1768, %v1800
        %v1805 = vmul.f32 %v1769, %v1800
        %v1806 = vmul.f32 %v1770, %v1800
        %v1807 = vmul.f32 %v1771, %v1800
        %v1808 = vmul.f32 %v1772, %v1800
        %v1809 = vmul.f32 %v1773, %v1800
        %v1810 = vmul.f32 %v1774, %v1800
        %v1811 = vmul.f32 %v1775, %v1800
        %v1812 = vmul.f32 %v1776, %v1800
        %v1813 = vmul.f32 %v1777, %v1800
        %v1814 = vmul.f32 %v1778, %v1800
        %v1815 = vmul.f32 %v1779, %v1800
        %v1816 = vmul.f32 %v1780, %v1800
        %v1817 = vmul.f32 %v1781, %v1800
        %v1818 = vmul.f32 %v1782, %v1800
        %v1819 = vmul.f32 %v1783, %v1800
        %v1820 = vmul.f32 %v1784, %v1800
        %v1821 = vmul.f32 %v1785, %v1800
        %v1822 = vmul.f32 %v1786, %v1800
        %v1823 = vmul.f32 %v1787, %v1800
        %v1824 = vmul.f32 %v1788, %v1800
        %v1825 = vmul.f32 %v1789, %v1800
        %v1826 = vmul.f32 %v1790, %v1800
        %v1827 = vmul.f32 %v1791, %v1800
        %v1828 = vmul.f32 %v1792, %v1800
        %v1829 = vmul.f32 %v1793, %v1800
        %v1830 = vmul.f32 %v1794, %v1800
        %v1831 = vmul.f32 %v1795, %v1800
        %v1832 = vmul.f32 %v1796, %v1800
        %v1833 = vadd.f32 %v1733, %v1801
        %v1834 = vadd.f32 %v1734, %v1802
        %v1835 = vadd.f32 %v1735, %v1803
        %v1836 = vadd.f32 %v1736, %v1804
        %v1837 = vadd.f32 %v1737, %v1805
        %v1838 = vadd.f32 %v1738, %v1806
        %v1839 = vadd.f32 %v1739, %v1807
        %v1840 = vadd.f32 %v1740, %v1808
        %v1841 = vadd.f32 %v1741, %v1809
        %v1842 = vadd.f32 %v1742, %v1810
        %v1843 = vadd.f32 %v1743, %v1811
        %v1844 = vadd.f32 %v1744, %v1812
        %v1845 = vadd.f32 %v1745, %v1813
        %v1846 = vadd.f32 %v1746, %v1814
        %v1847 = vadd.f32 %v1747, %v1815
        %v1848 = vadd.f32 %v1748, %v1816
        %v1849 = vadd.f32 %v1749, %v1817
        %v1850 = vadd.f32 %v1750, %v1818
        %v1851 = vadd.f32 %v1751, %v1819
        %v1852 = vadd.f32 %v1752, %v1820
        %v1853 = vadd.f32 %v1753, %v1821
        %v1854 = vadd.f32 %v1754, %v1822
        %v1855 = vadd.f32 %v1755, %v1823
        %v1856 = vadd.f32 %v1756, %v1824
        %v1857 = vadd.f32 %v1757, %v1825
        %v1858 = vadd.f32 %v1758, %v1826
        %v1859 = vadd.f32 %v1759, %v1827
        %v1860 = vadd.f32 %v1760, %v1828
        %v1861 = vadd.f32 %v1761, %v1829
        %v1862 = vadd.f32 %v1762, %v1830
        %v1863 = vadd.f32 %v1763, %v1831
        %v1864 = vadd.f32 %v1764, %v1832
        %v1865 = vld [vmem:[%s1664 + $0x2] sm:$0xff]
        %v1866 = vld [vmem:[%s1664 + $0xa] sm:$0xff]
        %v1867 = vld [vmem:[%s1664 + $0x1a] sm:$0xff]
        %v1868 = vld [vmem:[%s1664 + $0x22] sm:$0xff]
        %v1869 = vld [vmem:[%s1664 + $0x32] sm:$0xff]
        %v1870 = vld [vmem:[%s1664 + $0x3a] sm:$0xff]
        %v1871 = vld [vmem:[%s1664 + $0x4a] sm:$0xff]
        %v1872 = vld [vmem:[%s1664 + $0x52] sm:$0xff]
        %v1873 = vld [vmem:[%s1664 + $0x62] sm:$0xff]
        %v1874 = vld [vmem:[%s1664 + $0x6a] sm:$0xff]
        %v1875 = vld [vmem:[%s1664 + $0x7a] sm:$0xff]
        %v1876 = vld [vmem:[%s1664 + $0x82] sm:$0xff]
        %v1877 = vld [vmem:[%s1664 + $0x92] sm:$0xff]
        %v1878 = vld [vmem:[%s1664 + $0x9a] sm:$0xff]
        %v1879 = vld [vmem:[%s1664 + $0xaa] sm:$0xff]
        %v1880 = vld [vmem:[%s1664 + $0xb2] sm:$0xff]
        %v1881 = vld [vmem:[%s1664 + $0xc2] sm:$0xff]
        %v1882 = vld [vmem:[%s1664 + $0xca] sm:$0xff]
        %v1883 = vld [vmem:[%s1664 + $0xda] sm:$0xff]
        %v1884 = vld [vmem:[%s1664 + $0xe2] sm:$0xff]
        %v1885 = vld [vmem:[%s1664 + $0xf2] sm:$0xff]
        %v1886 = vld [vmem:[%s1664 + $0xfa] sm:$0xff]
        %v1887 = vld [vmem:[%s1664 + $0x10a] sm:$0xff]
        %v1888 = vld [vmem:[%s1664 + $0x112] sm:$0xff]
        %v1889 = vld [vmem:[%s1664 + $0x122] sm:$0xff]
        %v1890 = vld [vmem:[%s1664 + $0x12a] sm:$0xff]
        %v1891 = vld [vmem:[%s1664 + $0x13a] sm:$0xff]
        %v1892 = vld [vmem:[%s1664 + $0x142] sm:$0xff]
        %v1893 = vld [vmem:[%s1664 + $0x152] sm:$0xff]
        %v1894 = vld [vmem:[%s1664 + $0x15a] sm:$0xff]
        %v1895 = vld [vmem:[%s1664 + $0x16a] sm:$0xff]
        %v1896 = vld [vmem:[%s1664 + $0x172] sm:$0xff]
        %v1897 = vlaneseq
        %v1898 = vshrl.u32 %v1897, 7
        %v1899 = vsub.s32 0, %v1898
        %v1900 = vrot.slane %v254, %v1899
        %v1901 = vmul.f32 %v1865, %v1900
        %v1902 = vmul.f32 %v1866, %v1900
        %v1903 = vmul.f32 %v1867, %v1900
        %v1904 = vmul.f32 %v1868, %v1900
        %v1905 = vmul.f32 %v1869, %v1900
        %v1906 = vmul.f32 %v1870, %v1900
        %v1907 = vmul.f32 %v1871, %v1900
        %v1908 = vmul.f32 %v1872, %v1900
        %v1909 = vmul.f32 %v1873, %v1900
        %v1910 = vmul.f32 %v1874, %v1900
        %v1911 = vmul.f32 %v1875, %v1900
        %v1912 = vmul.f32 %v1876, %v1900
        %v1913 = vmul.f32 %v1877, %v1900
        %v1914 = vmul.f32 %v1878, %v1900
        %v1915 = vmul.f32 %v1879, %v1900
        %v1916 = vmul.f32 %v1880, %v1900
        %v1917 = vmul.f32 %v1881, %v1900
        %v1918 = vmul.f32 %v1882, %v1900
        %v1919 = vmul.f32 %v1883, %v1900
        %v1920 = vmul.f32 %v1884, %v1900
        %v1921 = vmul.f32 %v1885, %v1900
        %v1922 = vmul.f32 %v1886, %v1900
        %v1923 = vmul.f32 %v1887, %v1900
        %v1924 = vmul.f32 %v1888, %v1900
        %v1925 = vmul.f32 %v1889, %v1900
        %v1926 = vmul.f32 %v1890, %v1900
        %v1927 = vmul.f32 %v1891, %v1900
        %v1928 = vmul.f32 %v1892, %v1900
        %v1929 = vmul.f32 %v1893, %v1900
        %v1930 = vmul.f32 %v1894, %v1900
        %v1931 = vmul.f32 %v1895, %v1900
        %v1932 = vmul.f32 %v1896, %v1900
        %v1933 = vadd.f32 %v1833, %v1901
        %v1934 = vadd.f32 %v1834, %v1902
        %v1935 = vadd.f32 %v1835, %v1903
        %v1936 = vadd.f32 %v1836, %v1904
        %v1937 = vadd.f32 %v1837, %v1905
        %v1938 = vadd.f32 %v1838, %v1906
        %v1939 = vadd.f32 %v1839, %v1907
        %v1940 = vadd.f32 %v1840, %v1908
        %v1941 = vadd.f32 %v1841, %v1909
        %v1942 = vadd.f32 %v1842, %v1910
        %v1943 = vadd.f32 %v1843, %v1911
        %v1944 = vadd.f32 %v1844, %v1912
        %v1945 = vadd.f32 %v1845, %v1913
        %v1946 = vadd.f32 %v1846, %v1914
        %v1947 = vadd.f32 %v1847, %v1915
        %v1948 = vadd.f32 %v1848, %v1916
        %v1949 = vadd.f32 %v1849, %v1917
        %v1950 = vadd.f32 %v1850, %v1918
        %v1951 = vadd.f32 %v1851, %v1919
        %v1952 = vadd.f32 %v1852, %v1920
        %v1953 = vadd.f32 %v1853, %v1921
        %v1954 = vadd.f32 %v1854, %v1922
        %v1955 = vadd.f32 %v1855, %v1923
        %v1956 = vadd.f32 %v1856, %v1924
        %v1957 = vadd.f32 %v1857, %v1925
        %v1958 = vadd.f32 %v1858, %v1926
        %v1959 = vadd.f32 %v1859, %v1927
        %v1960 = vadd.f32 %v1860, %v1928
        %v1961 = vadd.f32 %v1861, %v1929
        %v1962 = vadd.f32 %v1862, %v1930
        %v1963 = vadd.f32 %v1863, %v1931
        %v1964 = vadd.f32 %v1864, %v1932
        %v1965 = vld [vmem:[%s1664 + $0x3] sm:$0xff]
        %v1966 = vld [vmem:[%s1664 + $0xb] sm:$0xff]
        %v1967 = vld [vmem:[%s1664 + $0x1b] sm:$0xff]
        %v1968 = vld [vmem:[%s1664 + $0x23] sm:$0xff]
        %v1969 = vld [vmem:[%s1664 + $0x33] sm:$0xff]
        %v1970 = vld [vmem:[%s1664 + $0x3b] sm:$0xff]
        %v1971 = vld [vmem:[%s1664 + $0x4b] sm:$0xff]
        %v1972 = vld [vmem:[%s1664 + $0x53] sm:$0xff]
        %v1973 = vld [vmem:[%s1664 + $0x63] sm:$0xff]
        %v1974 = vld [vmem:[%s1664 + $0x6b] sm:$0xff]
        %v1975 = vld [vmem:[%s1664 + $0x7b] sm:$0xff]
        %v1976 = vld [vmem:[%s1664 + $0x83] sm:$0xff]
        %v1977 = vld [vmem:[%s1664 + $0x93] sm:$0xff]
        %v1978 = vld [vmem:[%s1664 + $0x9b] sm:$0xff]
        %v1979 = vld [vmem:[%s1664 + $0xab] sm:$0xff]
        %v1980 = vld [vmem:[%s1664 + $0xb3] sm:$0xff]
        %v1981 = vld [vmem:[%s1664 + $0xc3] sm:$0xff]
        %v1982 = vld [vmem:[%s1664 + $0xcb] sm:$0xff]
        %v1983 = vld [vmem:[%s1664 + $0xdb] sm:$0xff]
        %v1984 = vld [vmem:[%s1664 + $0xe3] sm:$0xff]
        %v1985 = vld [vmem:[%s1664 + $0xf3] sm:$0xff]
        %v1986 = vld [vmem:[%s1664 + $0xfb] sm:$0xff]
        %v1987 = vld [vmem:[%s1664 + $0x10b] sm:$0xff]
        %v1988 = vld [vmem:[%s1664 + $0x113] sm:$0xff]
        %v1989 = vld [vmem:[%s1664 + $0x123] sm:$0xff]
        %v1990 = vld [vmem:[%s1664 + $0x12b] sm:$0xff]
        %v1991 = vld [vmem:[%s1664 + $0x13b] sm:$0xff]
        %v1992 = vld [vmem:[%s1664 + $0x143] sm:$0xff]
        %v1993 = vld [vmem:[%s1664 + $0x153] sm:$0xff]
        %v1994 = vld [vmem:[%s1664 + $0x15b] sm:$0xff]
        %v1995 = vld [vmem:[%s1664 + $0x16b] sm:$0xff]
        %v1996 = vld [vmem:[%s1664 + $0x173] sm:$0xff]
        %v1997 = vlaneseq
        %v1998 = vshrl.u32 %v1997, 7
        %v1999 = vsub.s32 1, %v1998
        %v2000 = vrot.slane %v254, %v1999
        %v2001 = vmul.f32 %v1965, %v2000
        %v2002 = vmul.f32 %v1966, %v2000
        %v2003 = vmul.f32 %v1967, %v2000
        %v2004 = vmul.f32 %v1968, %v2000
        %v2005 = vmul.f32 %v1969, %v2000
        %v2006 = vmul.f32 %v1970, %v2000
        %v2007 = vmul.f32 %v1971, %v2000
        %v2008 = vmul.f32 %v1972, %v2000
        %v2009 = vmul.f32 %v1973, %v2000
        %v2010 = vmul.f32 %v1974, %v2000
        %v2011 = vmul.f32 %v1975, %v2000
        %v2012 = vmul.f32 %v1976, %v2000
        %v2013 = vmul.f32 %v1977, %v2000
        %v2014 = vmul.f32 %v1978, %v2000
        %v2015 = vmul.f32 %v1979, %v2000
        %v2016 = vmul.f32 %v1980, %v2000
        %v2017 = vmul.f32 %v1981, %v2000
        %v2018 = vmul.f32 %v1982, %v2000
        %v2019 = vmul.f32 %v1983, %v2000
        %v2020 = vmul.f32 %v1984, %v2000
        %v2021 = vmul.f32 %v1985, %v2000
        %v2022 = vmul.f32 %v1986, %v2000
        %v2023 = vmul.f32 %v1987, %v2000
        %v2024 = vmul.f32 %v1988, %v2000
        %v2025 = vmul.f32 %v1989, %v2000
        %v2026 = vmul.f32 %v1990, %v2000
        %v2027 = vmul.f32 %v1991, %v2000
        %v2028 = vmul.f32 %v1992, %v2000
        %v2029 = vmul.f32 %v1993, %v2000
        %v2030 = vmul.f32 %v1994, %v2000
        %v2031 = vmul.f32 %v1995, %v2000
        %v2032 = vmul.f32 %v1996, %v2000
        %v2033 = vadd.f32 %v1933, %v2001
        %v2034 = vadd.f32 %v1934, %v2002
        %v2035 = vadd.f32 %v1935, %v2003
        %v2036 = vadd.f32 %v1936, %v2004
        %v2037 = vadd.f32 %v1937, %v2005
        %v2038 = vadd.f32 %v1938, %v2006
        %v2039 = vadd.f32 %v1939, %v2007
        %v2040 = vadd.f32 %v1940, %v2008
        %v2041 = vadd.f32 %v1941, %v2009
        %v2042 = vadd.f32 %v1942, %v2010
        %v2043 = vadd.f32 %v1943, %v2011
        %v2044 = vadd.f32 %v1944, %v2012
        %v2045 = vadd.f32 %v1945, %v2013
        %v2046 = vadd.f32 %v1946, %v2014
        %v2047 = vadd.f32 %v1947, %v2015
        %v2048 = vadd.f32 %v1948, %v2016
        %v2049 = vadd.f32 %v1949, %v2017
        %v2050 = vadd.f32 %v1950, %v2018
        %v2051 = vadd.f32 %v1951, %v2019
        %v2052 = vadd.f32 %v1952, %v2020
        %v2053 = vadd.f32 %v1953, %v2021
        %v2054 = vadd.f32 %v1954, %v2022
        %v2055 = vadd.f32 %v1955, %v2023
        %v2056 = vadd.f32 %v1956, %v2024
        %v2057 = vadd.f32 %v1957, %v2025
        %v2058 = vadd.f32 %v1958, %v2026
        %v2059 = vadd.f32 %v1959, %v2027
        %v2060 = vadd.f32 %v1960, %v2028
        %v2061 = vadd.f32 %v1961, %v2029
        %v2062 = vadd.f32 %v1962, %v2030
        %v2063 = vadd.f32 %v1963, %v2031
        %v2064 = vadd.f32 %v1964, %v2032
        %v2065 = vld [vmem:[%s1664 + $0x4] sm:$0xff]
        %v2066 = vld [vmem:[%s1664 + $0xc] sm:$0xff]
        %v2067 = vld [vmem:[%s1664 + $0x1c] sm:$0xff]
        %v2068 = vld [vmem:[%s1664 + $0x24] sm:$0xff]
        %v2069 = vld [vmem:[%s1664 + $0x34] sm:$0xff]
        %v2070 = vld [vmem:[%s1664 + $0x3c] sm:$0xff]
        %v2071 = vld [vmem:[%s1664 + $0x4c] sm:$0xff]
        %v2072 = vld [vmem:[%s1664 + $0x54] sm:$0xff]
        %v2073 = vld [vmem:[%s1664 + $0x64] sm:$0xff]
        %v2074 = vld [vmem:[%s1664 + $0x6c] sm:$0xff]
        %v2075 = vld [vmem:[%s1664 + $0x7c] sm:$0xff]
        %v2076 = vld [vmem:[%s1664 + $0x84] sm:$0xff]
        %v2077 = vld [vmem:[%s1664 + $0x94] sm:$0xff]
        %v2078 = vld [vmem:[%s1664 + $0x9c] sm:$0xff]
        %v2079 = vld [vmem:[%s1664 + $0xac] sm:$0xff]
        %v2080 = vld [vmem:[%s1664 + $0xb4] sm:$0xff]
        %v2081 = vld [vmem:[%s1664 + $0xc4] sm:$0xff]
        %v2082 = vld [vmem:[%s1664 + $0xcc] sm:$0xff]
        %v2083 = vld [vmem:[%s1664 + $0xdc] sm:$0xff]
        %v2084 = vld [vmem:[%s1664 + $0xe4] sm:$0xff]
        %v2085 = vld [vmem:[%s1664 + $0xf4] sm:$0xff]
        %v2086 = vld [vmem:[%s1664 + $0xfc] sm:$0xff]
        %v2087 = vld [vmem:[%s1664 + $0x10c] sm:$0xff]
        %v2088 = vld [vmem:[%s1664 + $0x114] sm:$0xff]
        %v2089 = vld [vmem:[%s1664 + $0x124] sm:$0xff]
        %v2090 = vld [vmem:[%s1664 + $0x12c] sm:$0xff]
        %v2091 = vld [vmem:[%s1664 + $0x13c] sm:$0xff]
        %v2092 = vld [vmem:[%s1664 + $0x144] sm:$0xff]
        %v2093 = vld [vmem:[%s1664 + $0x154] sm:$0xff]
        %v2094 = vld [vmem:[%s1664 + $0x15c] sm:$0xff]
        %v2095 = vld [vmem:[%s1664 + $0x16c] sm:$0xff]
        %v2096 = vld [vmem:[%s1664 + $0x174] sm:$0xff]
        %v2097 = vlaneseq
        %v2098 = vshrl.u32 %v2097, 7
        %v2099 = vsub.s32 2, %v2098
        %v2100 = vrot.slane %v254, %v2099
        %v2101 = vmul.f32 %v2065, %v2100
        %v2102 = vmul.f32 %v2066, %v2100
        %v2103 = vmul.f32 %v2067, %v2100
        %v2104 = vmul.f32 %v2068, %v2100
        %v2105 = vmul.f32 %v2069, %v2100
        %v2106 = vmul.f32 %v2070, %v2100
        %v2107 = vmul.f32 %v2071, %v2100
        %v2108 = vmul.f32 %v2072, %v2100
        %v2109 = vmul.f32 %v2073, %v2100
        %v2110 = vmul.f32 %v2074, %v2100
        %v2111 = vmul.f32 %v2075, %v2100
        %v2112 = vmul.f32 %v2076, %v2100
        %v2113 = vmul.f32 %v2077, %v2100
        %v2114 = vmul.f32 %v2078, %v2100
        %v2115 = vmul.f32 %v2079, %v2100
        %v2116 = vmul.f32 %v2080, %v2100
        %v2117 = vmul.f32 %v2081, %v2100
        %v2118 = vmul.f32 %v2082, %v2100
        %v2119 = vmul.f32 %v2083, %v2100
        %v2120 = vmul.f32 %v2084, %v2100
        %v2121 = vmul.f32 %v2085, %v2100
        %v2122 = vmul.f32 %v2086, %v2100
        %v2123 = vmul.f32 %v2087, %v2100
        %v2124 = vmul.f32 %v2088, %v2100
        %v2125 = vmul.f32 %v2089, %v2100
        %v2126 = vmul.f32 %v2090, %v2100
        %v2127 = vmul.f32 %v2091, %v2100
        %v2128 = vmul.f32 %v2092, %v2100
        %v2129 = vmul.f32 %v2093, %v2100
        %v2130 = vmul.f32 %v2094, %v2100
        %v2131 = vmul.f32 %v2095, %v2100
        %v2132 = vmul.f32 %v2096, %v2100
        %v2133 = vadd.f32 %v2033, %v2101
        %v2134 = vadd.f32 %v2034, %v2102
        %v2135 = vadd.f32 %v2035, %v2103
        %v2136 = vadd.f32 %v2036, %v2104
        %v2137 = vadd.f32 %v2037, %v2105
        %v2138 = vadd.f32 %v2038, %v2106
        %v2139 = vadd.f32 %v2039, %v2107
        %v2140 = vadd.f32 %v2040, %v2108
        %v2141 = vadd.f32 %v2041, %v2109
        %v2142 = vadd.f32 %v2042, %v2110
        %v2143 = vadd.f32 %v2043, %v2111
        %v2144 = vadd.f32 %v2044, %v2112
        %v2145 = vadd.f32 %v2045, %v2113
        %v2146 = vadd.f32 %v2046, %v2114
        %v2147 = vadd.f32 %v2047, %v2115
        %v2148 = vadd.f32 %v2048, %v2116
        %v2149 = vadd.f32 %v2049, %v2117
        %v2150 = vadd.f32 %v2050, %v2118
        %v2151 = vadd.f32 %v2051, %v2119
        %v2152 = vadd.f32 %v2052, %v2120
        %v2153 = vadd.f32 %v2053, %v2121
        %v2154 = vadd.f32 %v2054, %v2122
        %v2155 = vadd.f32 %v2055, %v2123
        %v2156 = vadd.f32 %v2056, %v2124
        %v2157 = vadd.f32 %v2057, %v2125
        %v2158 = vadd.f32 %v2058, %v2126
        %v2159 = vadd.f32 %v2059, %v2127
        %v2160 = vadd.f32 %v2060, %v2128
        %v2161 = vadd.f32 %v2061, %v2129
        %v2162 = vadd.f32 %v2062, %v2130
        %v2163 = vadd.f32 %v2063, %v2131
        %v2164 = vadd.f32 %v2064, %v2132
        %v2165 = vld [vmem:[%s1664 + $0x5] sm:$0xff]
        %v2166 = vld [vmem:[%s1664 + $0xd] sm:$0xff]
        %v2167 = vld [vmem:[%s1664 + $0x1d] sm:$0xff]
        %v2168 = vld [vmem:[%s1664 + $0x25] sm:$0xff]
        %v2169 = vld [vmem:[%s1664 + $0x35] sm:$0xff]
        %v2170 = vld [vmem:[%s1664 + $0x3d] sm:$0xff]
        %v2171 = vld [vmem:[%s1664 + $0x4d] sm:$0xff]
        %v2172 = vld [vmem:[%s1664 + $0x55] sm:$0xff]
        %v2173 = vld [vmem:[%s1664 + $0x65] sm:$0xff]
        %v2174 = vld [vmem:[%s1664 + $0x6d] sm:$0xff]
        %v2175 = vld [vmem:[%s1664 + $0x7d] sm:$0xff]
        %v2176 = vld [vmem:[%s1664 + $0x85] sm:$0xff]
        %v2177 = vld [vmem:[%s1664 + $0x95] sm:$0xff]
        %v2178 = vld [vmem:[%s1664 + $0x9d] sm:$0xff]
        %v2179 = vld [vmem:[%s1664 + $0xad] sm:$0xff]
        %v2180 = vld [vmem:[%s1664 + $0xb5] sm:$0xff]
        %v2181 = vld [vmem:[%s1664 + $0xc5] sm:$0xff]
        %v2182 = vld [vmem:[%s1664 + $0xcd] sm:$0xff]
        %v2183 = vld [vmem:[%s1664 + $0xdd] sm:$0xff]
        %v2184 = vld [vmem:[%s1664 + $0xe5] sm:$0xff]
        %v2185 = vld [vmem:[%s1664 + $0xf5] sm:$0xff]
        %v2186 = vld [vmem:[%s1664 + $0xfd] sm:$0xff]
        %v2187 = vld [vmem:[%s1664 + $0x10d] sm:$0xff]
        %v2188 = vld [vmem:[%s1664 + $0x115] sm:$0xff]
        %v2189 = vld [vmem:[%s1664 + $0x125] sm:$0xff]
        %v2190 = vld [vmem:[%s1664 + $0x12d] sm:$0xff]
        %v2191 = vld [vmem:[%s1664 + $0x13d] sm:$0xff]
        %v2192 = vld [vmem:[%s1664 + $0x145] sm:$0xff]
        %v2193 = vld [vmem:[%s1664 + $0x155] sm:$0xff]
        %v2194 = vld [vmem:[%s1664 + $0x15d] sm:$0xff]
        %v2195 = vld [vmem:[%s1664 + $0x16d] sm:$0xff]
        %v2196 = vld [vmem:[%s1664 + $0x175] sm:$0xff]
        %v2197 = vlaneseq
        %v2198 = vshrl.u32 %v2197, 7
        %v2199 = vsub.s32 3, %v2198
        %v2200 = vrot.slane %v254, %v2199
        %v2201 = vmul.f32 %v2165, %v2200
        %v2202 = vmul.f32 %v2166, %v2200
        %v2203 = vmul.f32 %v2167, %v2200
        %v2204 = vmul.f32 %v2168, %v2200
        %v2205 = vmul.f32 %v2169, %v2200
        %v2206 = vmul.f32 %v2170, %v2200
        %v2207 = vmul.f32 %v2171, %v2200
        %v2208 = vmul.f32 %v2172, %v2200
        %v2209 = vmul.f32 %v2173, %v2200
        %v2210 = vmul.f32 %v2174, %v2200
        %v2211 = vmul.f32 %v2175, %v2200
        %v2212 = vmul.f32 %v2176, %v2200
        %v2213 = vmul.f32 %v2177, %v2200
        %v2214 = vmul.f32 %v2178, %v2200
        %v2215 = vmul.f32 %v2179, %v2200
        %v2216 = vmul.f32 %v2180, %v2200
        %v2217 = vmul.f32 %v2181, %v2200
        %v2218 = vmul.f32 %v2182, %v2200
        %v2219 = vmul.f32 %v2183, %v2200
        %v2220 = vmul.f32 %v2184, %v2200
        %v2221 = vmul.f32 %v2185, %v2200
        %v2222 = vmul.f32 %v2186, %v2200
        %v2223 = vmul.f32 %v2187, %v2200
        %v2224 = vmul.f32 %v2188, %v2200
        %v2225 = vmul.f32 %v2189, %v2200
        %v2226 = vmul.f32 %v2190, %v2200
        %v2227 = vmul.f32 %v2191, %v2200
        %v2228 = vmul.f32 %v2192, %v2200
        %v2229 = vmul.f32 %v2193, %v2200
        %v2230 = vmul.f32 %v2194, %v2200
        %v2231 = vmul.f32 %v2195, %v2200
        %v2232 = vmul.f32 %v2196, %v2200
        %v2233 = vadd.f32 %v2133, %v2201
        %v2234 = vadd.f32 %v2134, %v2202
        %v2235 = vadd.f32 %v2135, %v2203
        %v2236 = vadd.f32 %v2136, %v2204
        %v2237 = vadd.f32 %v2137, %v2205
        %v2238 = vadd.f32 %v2138, %v2206
        %v2239 = vadd.f32 %v2139, %v2207
        %v2240 = vadd.f32 %v2140, %v2208
        %v2241 = vadd.f32 %v2141, %v2209
        %v2242 = vadd.f32 %v2142, %v2210
        %v2243 = vadd.f32 %v2143, %v2211
        %v2244 = vadd.f32 %v2144, %v2212
        %v2245 = vadd.f32 %v2145, %v2213
        %v2246 = vadd.f32 %v2146, %v2214
        %v2247 = vadd.f32 %v2147, %v2215
        %v2248 = vadd.f32 %v2148, %v2216
        %v2249 = vadd.f32 %v2149, %v2217
        %v2250 = vadd.f32 %v2150, %v2218
        %v2251 = vadd.f32 %v2151, %v2219
        %v2252 = vadd.f32 %v2152, %v2220
        %v2253 = vadd.f32 %v2153, %v2221
        %v2254 = vadd.f32 %v2154, %v2222
        %v2255 = vadd.f32 %v2155, %v2223
        %v2256 = vadd.f32 %v2156, %v2224
        %v2257 = vadd.f32 %v2157, %v2225
        %v2258 = vadd.f32 %v2158, %v2226
        %v2259 = vadd.f32 %v2159, %v2227
        %v2260 = vadd.f32 %v2160, %v2228
        %v2261 = vadd.f32 %v2161, %v2229
        %v2262 = vadd.f32 %v2162, %v2230
        %v2263 = vadd.f32 %v2163, %v2231
        %v2264 = vadd.f32 %v2164, %v2232
        %v2265 = vld [vmem:[%s1664 + $0x6] sm:$0xff]
        %v2266 = vld [vmem:[%s1664 + $0xe] sm:$0xff]
        %v2267 = vld [vmem:[%s1664 + $0x1e] sm:$0xff]
        %v2268 = vld [vmem:[%s1664 + $0x26] sm:$0xff]
        %v2269 = vld [vmem:[%s1664 + $0x36] sm:$0xff]
        %v2270 = vld [vmem:[%s1664 + $0x3e] sm:$0xff]
        %v2271 = vld [vmem:[%s1664 + $0x4e] sm:$0xff]
        %v2272 = vld [vmem:[%s1664 + $0x56] sm:$0xff]
        %v2273 = vld [vmem:[%s1664 + $0x66] sm:$0xff]
        %v2274 = vld [vmem:[%s1664 + $0x6e] sm:$0xff]
        %v2275 = vld [vmem:[%s1664 + $0x7e] sm:$0xff]
        %v2276 = vld [vmem:[%s1664 + $0x86] sm:$0xff]
        %v2277 = vld [vmem:[%s1664 + $0x96] sm:$0xff]
        %v2278 = vld [vmem:[%s1664 + $0x9e] sm:$0xff]
        %v2279 = vld [vmem:[%s1664 + $0xae] sm:$0xff]
        %v2280 = vld [vmem:[%s1664 + $0xb6] sm:$0xff]
        %v2281 = vld [vmem:[%s1664 + $0xc6] sm:$0xff]
        %v2282 = vld [vmem:[%s1664 + $0xce] sm:$0xff]
        %v2283 = vld [vmem:[%s1664 + $0xde] sm:$0xff]
        %v2284 = vld [vmem:[%s1664 + $0xe6] sm:$0xff]
        %v2285 = vld [vmem:[%s1664 + $0xf6] sm:$0xff]
        %v2286 = vld [vmem:[%s1664 + $0xfe] sm:$0xff]
        %v2287 = vld [vmem:[%s1664 + $0x10e] sm:$0xff]
        %v2288 = vld [vmem:[%s1664 + $0x116] sm:$0xff]
        %v2289 = vld [vmem:[%s1664 + $0x126] sm:$0xff]
        %v2290 = vld [vmem:[%s1664 + $0x12e] sm:$0xff]
        %v2291 = vld [vmem:[%s1664 + $0x13e] sm:$0xff]
        %v2292 = vld [vmem:[%s1664 + $0x146] sm:$0xff]
        %v2293 = vld [vmem:[%s1664 + $0x156] sm:$0xff]
        %v2294 = vld [vmem:[%s1664 + $0x15e] sm:$0xff]
        %v2295 = vld [vmem:[%s1664 + $0x16e] sm:$0xff]
        %v2296 = vld [vmem:[%s1664 + $0x176] sm:$0xff]
        %v2297 = vlaneseq
        %v2298 = vshrl.u32 %v2297, 7
        %v2299 = vsub.s32 4, %v2298
        %v2300 = vrot.slane %v254, %v2299
        %v2301 = vmul.f32 %v2265, %v2300
        %v2302 = vmul.f32 %v2266, %v2300
        %v2303 = vmul.f32 %v2267, %v2300
        %v2304 = vmul.f32 %v2268, %v2300
        %v2305 = vmul.f32 %v2269, %v2300
        %v2306 = vmul.f32 %v2270, %v2300
        %v2307 = vmul.f32 %v2271, %v2300
        %v2308 = vmul.f32 %v2272, %v2300
        %v2309 = vmul.f32 %v2273, %v2300
        %v2310 = vmul.f32 %v2274, %v2300
        %v2311 = vmul.f32 %v2275, %v2300
        %v2312 = vmul.f32 %v2276, %v2300
        %v2313 = vmul.f32 %v2277, %v2300
        %v2314 = vmul.f32 %v2278, %v2300
        %v2315 = vmul.f32 %v2279, %v2300
        %v2316 = vmul.f32 %v2280, %v2300
        %v2317 = vmul.f32 %v2281, %v2300
        %v2318 = vmul.f32 %v2282, %v2300
        %v2319 = vmul.f32 %v2283, %v2300
        %v2320 = vmul.f32 %v2284, %v2300
        %v2321 = vmul.f32 %v2285, %v2300
        %v2322 = vmul.f32 %v2286, %v2300
        %v2323 = vmul.f32 %v2287, %v2300
        %v2324 = vmul.f32 %v2288, %v2300
        %v2325 = vmul.f32 %v2289, %v2300
        %v2326 = vmul.f32 %v2290, %v2300
        %v2327 = vmul.f32 %v2291, %v2300
        %v2328 = vmul.f32 %v2292, %v2300
        %v2329 = vmul.f32 %v2293, %v2300
        %v2330 = vmul.f32 %v2294, %v2300
        %v2331 = vmul.f32 %v2295, %v2300
        %v2332 = vmul.f32 %v2296, %v2300
        %v2333 = vadd.f32 %v2233, %v2301
        %v2334 = vadd.f32 %v2234, %v2302
        %v2335 = vadd.f32 %v2235, %v2303
        %v2336 = vadd.f32 %v2236, %v2304
        %v2337 = vadd.f32 %v2237, %v2305
        %v2338 = vadd.f32 %v2238, %v2306
        %v2339 = vadd.f32 %v2239, %v2307
        %v2340 = vadd.f32 %v2240, %v2308
        %v2341 = vadd.f32 %v2241, %v2309
        %v2342 = vadd.f32 %v2242, %v2310
        %v2343 = vadd.f32 %v2243, %v2311
        %v2344 = vadd.f32 %v2244, %v2312
        %v2345 = vadd.f32 %v2245, %v2313
        %v2346 = vadd.f32 %v2246, %v2314
        %v2347 = vadd.f32 %v2247, %v2315
        %v2348 = vadd.f32 %v2248, %v2316
        %v2349 = vadd.f32 %v2249, %v2317
        %v2350 = vadd.f32 %v2250, %v2318
        %v2351 = vadd.f32 %v2251, %v2319
        %v2352 = vadd.f32 %v2252, %v2320
        %v2353 = vadd.f32 %v2253, %v2321
        %v2354 = vadd.f32 %v2254, %v2322
        %v2355 = vadd.f32 %v2255, %v2323
        %v2356 = vadd.f32 %v2256, %v2324
        %v2357 = vadd.f32 %v2257, %v2325
        %v2358 = vadd.f32 %v2258, %v2326
        %v2359 = vadd.f32 %v2259, %v2327
        %v2360 = vadd.f32 %v2260, %v2328
        %v2361 = vadd.f32 %v2261, %v2329
        %v2362 = vadd.f32 %v2262, %v2330
        %v2363 = vadd.f32 %v2263, %v2331
        %v2364 = vadd.f32 %v2264, %v2332
        %s2365 = scalar_lea.vmem %s249, 72
        %v2366 = vld [vmem:[%s2365] sm:$0xff]
        %v2367 = vld [vmem:[%s2365 + $0x8] sm:$0xff]
        %v2368 = vld [vmem:[%s2365 + $0x18] sm:$0xff]
        %v2369 = vld [vmem:[%s2365 + $0x20] sm:$0xff]
        %v2370 = vld [vmem:[%s2365 + $0x30] sm:$0xff]
        %v2371 = vld [vmem:[%s2365 + $0x38] sm:$0xff]
        %v2372 = vld [vmem:[%s2365 + $0x48] sm:$0xff]
        %v2373 = vld [vmem:[%s2365 + $0x50] sm:$0xff]
        %v2374 = vld [vmem:[%s2365 + $0x60] sm:$0xff]
        %v2375 = vld [vmem:[%s2365 + $0x68] sm:$0xff]
        %v2376 = vld [vmem:[%s2365 + $0x78] sm:$0xff]
        %v2377 = vld [vmem:[%s2365 + $0x80] sm:$0xff]
        %v2378 = vld [vmem:[%s2365 + $0x90] sm:$0xff]
        %v2379 = vld [vmem:[%s2365 + $0x98] sm:$0xff]
        %v2380 = vld [vmem:[%s2365 + $0xa8] sm:$0xff]
        %v2381 = vld [vmem:[%s2365 + $0xb0] sm:$0xff]
        %v2382 = vld [vmem:[%s2365 + $0xc0] sm:$0xff]
        %v2383 = vld [vmem:[%s2365 + $0xc8] sm:$0xff]
        %v2384 = vld [vmem:[%s2365 + $0xd8] sm:$0xff]
        %v2385 = vld [vmem:[%s2365 + $0xe0] sm:$0xff]
        %v2386 = vld [vmem:[%s2365 + $0xf0] sm:$0xff]
        %v2387 = vld [vmem:[%s2365 + $0xf8] sm:$0xff]
        %v2388 = vld [vmem:[%s2365 + $0x108] sm:$0xff]
        %v2389 = vld [vmem:[%s2365 + $0x110] sm:$0xff]
        %v2390 = vld [vmem:[%s2365 + $0x120] sm:$0xff]
        %v2391 = vld [vmem:[%s2365 + $0x128] sm:$0xff]
        %v2392 = vld [vmem:[%s2365 + $0x138] sm:$0xff]
        %v2393 = vld [vmem:[%s2365 + $0x140] sm:$0xff]
        %v2394 = vld [vmem:[%s2365 + $0x150] sm:$0xff]
        %v2395 = vld [vmem:[%s2365 + $0x158] sm:$0xff]
        %v2396 = vld [vmem:[%s2365 + $0x168] sm:$0xff]
        %v2397 = vld [vmem:[%s2365 + $0x170] sm:$0xff]
        %v2398 = vlaneseq
        %v2399 = vshrl.u32 %v2398, 7
        %v2400 = vsub.s32 5, %v2399
        %v2401 = vrot.slane %v254, %v2400
        %v2402 = vmul.f32 %v2366, %v2401
        %v2403 = vmul.f32 %v2367, %v2401
        %v2404 = vmul.f32 %v2368, %v2401
        %v2405 = vmul.f32 %v2369, %v2401
        %v2406 = vmul.f32 %v2370, %v2401
        %v2407 = vmul.f32 %v2371, %v2401
        %v2408 = vmul.f32 %v2372, %v2401
        %v2409 = vmul.f32 %v2373, %v2401
        %v2410 = vmul.f32 %v2374, %v2401
        %v2411 = vmul.f32 %v2375, %v2401
        %v2412 = vmul.f32 %v2376, %v2401
        %v2413 = vmul.f32 %v2377, %v2401
        %v2414 = vmul.f32 %v2378, %v2401
        %v2415 = vmul.f32 %v2379, %v2401
        %v2416 = vmul.f32 %v2380, %v2401
        %v2417 = vmul.f32 %v2381, %v2401
        %v2418 = vmul.f32 %v2382, %v2401
        %v2419 = vmul.f32 %v2383, %v2401
        %v2420 = vmul.f32 %v2384, %v2401
        %v2421 = vmul.f32 %v2385, %v2401
        %v2422 = vmul.f32 %v2386, %v2401
        %v2423 = vmul.f32 %v2387, %v2401
        %v2424 = vmul.f32 %v2388, %v2401
        %v2425 = vmul.f32 %v2389, %v2401
        %v2426 = vmul.f32 %v2390, %v2401
        %v2427 = vmul.f32 %v2391, %v2401
        %v2428 = vmul.f32 %v2392, %v2401
        %v2429 = vmul.f32 %v2393, %v2401
        %v2430 = vmul.f32 %v2394, %v2401
        %v2431 = vmul.f32 %v2395, %v2401
        %v2432 = vmul.f32 %v2396, %v2401
        %v2433 = vmul.f32 %v2397, %v2401
        %v2434 = vadd.f32 %v2333, %v2402
        %v2435 = vadd.f32 %v2334, %v2403
        %v2436 = vadd.f32 %v2335, %v2404
        %v2437 = vadd.f32 %v2336, %v2405
        %v2438 = vadd.f32 %v2337, %v2406
        %v2439 = vadd.f32 %v2338, %v2407
        %v2440 = vadd.f32 %v2339, %v2408
        %v2441 = vadd.f32 %v2340, %v2409
        %v2442 = vadd.f32 %v2341, %v2410
        %v2443 = vadd.f32 %v2342, %v2411
        %v2444 = vadd.f32 %v2343, %v2412
        %v2445 = vadd.f32 %v2344, %v2413
        %v2446 = vadd.f32 %v2345, %v2414
        %v2447 = vadd.f32 %v2346, %v2415
        %v2448 = vadd.f32 %v2347, %v2416
        %v2449 = vadd.f32 %v2348, %v2417
        %v2450 = vadd.f32 %v2349, %v2418
        %v2451 = vadd.f32 %v2350, %v2419
        %v2452 = vadd.f32 %v2351, %v2420
        %v2453 = vadd.f32 %v2352, %v2421
        %v2454 = vadd.f32 %v2353, %v2422
        %v2455 = vadd.f32 %v2354, %v2423
        %v2456 = vadd.f32 %v2355, %v2424
        %v2457 = vadd.f32 %v2356, %v2425
        %v2458 = vadd.f32 %v2357, %v2426
        %v2459 = vadd.f32 %v2358, %v2427
        %v2460 = vadd.f32 %v2359, %v2428
        %v2461 = vadd.f32 %v2360, %v2429
        %v2462 = vadd.f32 %v2361, %v2430
        %v2463 = vadd.f32 %v2362, %v2431
        %v2464 = vadd.f32 %v2363, %v2432
        %v2465 = vadd.f32 %v2364, %v2433
        %v2466 = vld [vmem:[%s2365 + $0x1] sm:$0xff]
        %v2467 = vld [vmem:[%s2365 + $0x9] sm:$0xff]
        %v2468 = vld [vmem:[%s2365 + $0x19] sm:$0xff]
        %v2469 = vld [vmem:[%s2365 + $0x21] sm:$0xff]
        %v2470 = vld [vmem:[%s2365 + $0x31] sm:$0xff]
        %v2471 = vld [vmem:[%s2365 + $0x39] sm:$0xff]
        %v2472 = vld [vmem:[%s2365 + $0x49] sm:$0xff]
        %v2473 = vld [vmem:[%s2365 + $0x51] sm:$0xff]
        %v2474 = vld [vmem:[%s2365 + $0x61] sm:$0xff]
        %v2475 = vld [vmem:[%s2365 + $0x69] sm:$0xff]
        %v2476 = vld [vmem:[%s2365 + $0x79] sm:$0xff]
        %v2477 = vld [vmem:[%s2365 + $0x81] sm:$0xff]
        %v2478 = vld [vmem:[%s2365 + $0x91] sm:$0xff]
        %v2479 = vld [vmem:[%s2365 + $0x99] sm:$0xff]
        %v2480 = vld [vmem:[%s2365 + $0xa9] sm:$0xff]
        %v2481 = vld [vmem:[%s2365 + $0xb1] sm:$0xff]
        %v2482 = vld [vmem:[%s2365 + $0xc1] sm:$0xff]
        %v2483 = vld [vmem:[%s2365 + $0xc9] sm:$0xff]
        %v2484 = vld [vmem:[%s2365 + $0xd9] sm:$0xff]
        %v2485 = vld [vmem:[%s2365 + $0xe1] sm:$0xff]
        %v2486 = vld [vmem:[%s2365 + $0xf1] sm:$0xff]
        %v2487 = vld [vmem:[%s2365 + $0xf9] sm:$0xff]
        %v2488 = vld [vmem:[%s2365 + $0x109] sm:$0xff]
        %v2489 = vld [vmem:[%s2365 + $0x111] sm:$0xff]
        %v2490 = vld [vmem:[%s2365 + $0x121] sm:$0xff]
        %v2491 = vld [vmem:[%s2365 + $0x129] sm:$0xff]
        %v2492 = vld [vmem:[%s2365 + $0x139] sm:$0xff]
        %v2493 = vld [vmem:[%s2365 + $0x141] sm:$0xff]
        %v2494 = vld [vmem:[%s2365 + $0x151] sm:$0xff]
        %v2495 = vld [vmem:[%s2365 + $0x159] sm:$0xff]
        %v2496 = vld [vmem:[%s2365 + $0x169] sm:$0xff]
        %v2497 = vld [vmem:[%s2365 + $0x171] sm:$0xff]
        %v2498 = vlaneseq
        %v2499 = vshrl.u32 %v2498, 7
        %v2500 = vsub.s32 6, %v2499
        %v2501 = vrot.slane %v254, %v2500
        %v2502 = vmul.f32 %v2466, %v2501
        %v2503 = vmul.f32 %v2467, %v2501
        %v2504 = vmul.f32 %v2468, %v2501
        %v2505 = vmul.f32 %v2469, %v2501
        %v2506 = vmul.f32 %v2470, %v2501
        %v2507 = vmul.f32 %v2471, %v2501
        %v2508 = vmul.f32 %v2472, %v2501
        %v2509 = vmul.f32 %v2473, %v2501
        %v2510 = vmul.f32 %v2474, %v2501
        %v2511 = vmul.f32 %v2475, %v2501
        %v2512 = vmul.f32 %v2476, %v2501
        %v2513 = vmul.f32 %v2477, %v2501
        %v2514 = vmul.f32 %v2478, %v2501
        %v2515 = vmul.f32 %v2479, %v2501
        %v2516 = vmul.f32 %v2480, %v2501
        %v2517 = vmul.f32 %v2481, %v2501
        %v2518 = vmul.f32 %v2482, %v2501
        %v2519 = vmul.f32 %v2483, %v2501
        %v2520 = vmul.f32 %v2484, %v2501
        %v2521 = vmul.f32 %v2485, %v2501
        %v2522 = vmul.f32 %v2486, %v2501
        %v2523 = vmul.f32 %v2487, %v2501
        %v2524 = vmul.f32 %v2488, %v2501
        %v2525 = vmul.f32 %v2489, %v2501
        %v2526 = vmul.f32 %v2490, %v2501
        %v2527 = vmul.f32 %v2491, %v2501
        %v2528 = vmul.f32 %v2492, %v2501
        %v2529 = vmul.f32 %v2493, %v2501
        %v2530 = vmul.f32 %v2494, %v2501
        %v2531 = vmul.f32 %v2495, %v2501
        %v2532 = vmul.f32 %v2496, %v2501
        %v2533 = vmul.f32 %v2497, %v2501
        %v2534 = vadd.f32 %v2434, %v2502
        %v2535 = vadd.f32 %v2435, %v2503
        %v2536 = vadd.f32 %v2436, %v2504
        %v2537 = vadd.f32 %v2437, %v2505
        %v2538 = vadd.f32 %v2438, %v2506
        %v2539 = vadd.f32 %v2439, %v2507
        %v2540 = vadd.f32 %v2440, %v2508
        %v2541 = vadd.f32 %v2441, %v2509
        %v2542 = vadd.f32 %v2442, %v2510
        %v2543 = vadd.f32 %v2443, %v2511
        %v2544 = vadd.f32 %v2444, %v2512
        %v2545 = vadd.f32 %v2445, %v2513
        %v2546 = vadd.f32 %v2446, %v2514
        %v2547 = vadd.f32 %v2447, %v2515
        %v2548 = vadd.f32 %v2448, %v2516
        %v2549 = vadd.f32 %v2449, %v2517
        %v2550 = vadd.f32 %v2450, %v2518
        %v2551 = vadd.f32 %v2451, %v2519
        %v2552 = vadd.f32 %v2452, %v2520
        %v2553 = vadd.f32 %v2453, %v2521
        %v2554 = vadd.f32 %v2454, %v2522
        %v2555 = vadd.f32 %v2455, %v2523
        %v2556 = vadd.f32 %v2456, %v2524
        %v2557 = vadd.f32 %v2457, %v2525
        %v2558 = vadd.f32 %v2458, %v2526
        %v2559 = vadd.f32 %v2459, %v2527
        %v2560 = vadd.f32 %v2460, %v2528
        %v2561 = vadd.f32 %v2461, %v2529
        %v2562 = vadd.f32 %v2462, %v2530
        %v2563 = vadd.f32 %v2463, %v2531
        %v2564 = vadd.f32 %v2464, %v2532
        %v2565 = vadd.f32 %v2465, %v2533
        %v2566 = vld [vmem:[%s2365 + $0x2] sm:$0xff]
        %v2567 = vld [vmem:[%s2365 + $0xa] sm:$0xff]
        %v2568 = vld [vmem:[%s2365 + $0x1a] sm:$0xff]
        %v2569 = vld [vmem:[%s2365 + $0x22] sm:$0xff]
        %v2570 = vld [vmem:[%s2365 + $0x32] sm:$0xff]
        %v2571 = vld [vmem:[%s2365 + $0x3a] sm:$0xff]
        %v2572 = vld [vmem:[%s2365 + $0x4a] sm:$0xff]
        %v2573 = vld [vmem:[%s2365 + $0x52] sm:$0xff]
        %v2574 = vld [vmem:[%s2365 + $0x62] sm:$0xff]
        %v2575 = vld [vmem:[%s2365 + $0x6a] sm:$0xff]
        %v2576 = vld [vmem:[%s2365 + $0x7a] sm:$0xff]
        %v2577 = vld [vmem:[%s2365 + $0x82] sm:$0xff]
        %v2578 = vld [vmem:[%s2365 + $0x92] sm:$0xff]
        %v2579 = vld [vmem:[%s2365 + $0x9a] sm:$0xff]
        %v2580 = vld [vmem:[%s2365 + $0xaa] sm:$0xff]
        %v2581 = vld [vmem:[%s2365 + $0xb2] sm:$0xff]
        %v2582 = vld [vmem:[%s2365 + $0xc2] sm:$0xff]
        %v2583 = vld [vmem:[%s2365 + $0xca] sm:$0xff]
        %v2584 = vld [vmem:[%s2365 + $0xda] sm:$0xff]
        %v2585 = vld [vmem:[%s2365 + $0xe2] sm:$0xff]
        %v2586 = vld [vmem:[%s2365 + $0xf2] sm:$0xff]
        %v2587 = vld [vmem:[%s2365 + $0xfa] sm:$0xff]
        %v2588 = vld [vmem:[%s2365 + $0x10a] sm:$0xff]
        %v2589 = vld [vmem:[%s2365 + $0x112] sm:$0xff]
        %v2590 = vld [vmem:[%s2365 + $0x122] sm:$0xff]
        %v2591 = vld [vmem:[%s2365 + $0x12a] sm:$0xff]
        %v2592 = vld [vmem:[%s2365 + $0x13a] sm:$0xff]
        %v2593 = vld [vmem:[%s2365 + $0x142] sm:$0xff]
        %v2594 = vld [vmem:[%s2365 + $0x152] sm:$0xff]
        %v2595 = vld [vmem:[%s2365 + $0x15a] sm:$0xff]
        %v2596 = vld [vmem:[%s2365 + $0x16a] sm:$0xff]
        %v2597 = vld [vmem:[%s2365 + $0x172] sm:$0xff]
        %v2598 = vlaneseq
        %v2599 = vshrl.u32 %v2598, 7
        %v2600 = vsub.s32 7, %v2599
        %v2601 = vrot.slane %v254, %v2600
        %v2602 = vmul.f32 %v2566, %v2601
        %v2603 = vmul.f32 %v2567, %v2601
        %v2604 = vmul.f32 %v2568, %v2601
        %v2605 = vmul.f32 %v2569, %v2601
        %v2606 = vmul.f32 %v2570, %v2601
        %v2607 = vmul.f32 %v2571, %v2601
        %v2608 = vmul.f32 %v2572, %v2601
        %v2609 = vmul.f32 %v2573, %v2601
        %v2610 = vmul.f32 %v2574, %v2601
        %v2611 = vmul.f32 %v2575, %v2601
        %v2612 = vmul.f32 %v2576, %v2601
        %v2613 = vmul.f32 %v2577, %v2601
        %v2614 = vmul.f32 %v2578, %v2601
        %v2615 = vmul.f32 %v2579, %v2601
        %v2616 = vmul.f32 %v2580, %v2601
        %v2617 = vmul.f32 %v2581, %v2601
        %v2618 = vmul.f32 %v2582, %v2601
        %v2619 = vmul.f32 %v2583, %v2601
        %v2620 = vmul.f32 %v2584, %v2601
        %v2621 = vmul.f32 %v2585, %v2601
        %v2622 = vmul.f32 %v2586, %v2601
        %v2623 = vmul.f32 %v2587, %v2601
        %v2624 = vmul.f32 %v2588, %v2601
        %v2625 = vmul.f32 %v2589, %v2601
        %v2626 = vmul.f32 %v2590, %v2601
        %v2627 = vmul.f32 %v2591, %v2601
        %v2628 = vmul.f32 %v2592, %v2601
        %v2629 = vmul.f32 %v2593, %v2601
        %v2630 = vmul.f32 %v2594, %v2601
        %v2631 = vmul.f32 %v2595, %v2601
        %v2632 = vmul.f32 %v2596, %v2601
        %v2633 = vmul.f32 %v2597, %v2601
        %v2634 = vadd.f32 %v2534, %v2602
        %v2635 = vadd.f32 %v2535, %v2603
        %v2636 = vadd.f32 %v2536, %v2604
        %v2637 = vadd.f32 %v2537, %v2605
        %v2638 = vadd.f32 %v2538, %v2606
        %v2639 = vadd.f32 %v2539, %v2607
        %v2640 = vadd.f32 %v2540, %v2608
        %v2641 = vadd.f32 %v2541, %v2609
        %v2642 = vadd.f32 %v2542, %v2610
        %v2643 = vadd.f32 %v2543, %v2611
        %v2644 = vadd.f32 %v2544, %v2612
        %v2645 = vadd.f32 %v2545, %v2613
        %v2646 = vadd.f32 %v2546, %v2614
        %v2647 = vadd.f32 %v2547, %v2615
        %v2648 = vadd.f32 %v2548, %v2616
        %v2649 = vadd.f32 %v2549, %v2617
        %v2650 = vadd.f32 %v2550, %v2618
        %v2651 = vadd.f32 %v2551, %v2619
        %v2652 = vadd.f32 %v2552, %v2620
        %v2653 = vadd.f32 %v2553, %v2621
        %v2654 = vadd.f32 %v2554, %v2622
        %v2655 = vadd.f32 %v2555, %v2623
        %v2656 = vadd.f32 %v2556, %v2624
        %v2657 = vadd.f32 %v2557, %v2625
        %v2658 = vadd.f32 %v2558, %v2626
        %v2659 = vadd.f32 %v2559, %v2627
        %v2660 = vadd.f32 %v2560, %v2628
        %v2661 = vadd.f32 %v2561, %v2629
        %v2662 = vadd.f32 %v2562, %v2630
        %v2663 = vadd.f32 %v2563, %v2631
        %v2664 = vadd.f32 %v2564, %v2632
        %v2665 = vadd.f32 %v2565, %v2633
        %v2666 = vld [vmem:[%s2365 + $0x3] sm:$0xff]
        %v2667 = vld [vmem:[%s2365 + $0xb] sm:$0xff]
        %v2668 = vld [vmem:[%s2365 + $0x1b] sm:$0xff]
        %v2669 = vld [vmem:[%s2365 + $0x23] sm:$0xff]
        %v2670 = vld [vmem:[%s2365 + $0x33] sm:$0xff]
        %v2671 = vld [vmem:[%s2365 + $0x3b] sm:$0xff]
        %v2672 = vld [vmem:[%s2365 + $0x4b] sm:$0xff]
        %v2673 = vld [vmem:[%s2365 + $0x53] sm:$0xff]
        %v2674 = vld [vmem:[%s2365 + $0x63] sm:$0xff]
        %v2675 = vld [vmem:[%s2365 + $0x6b] sm:$0xff]
        %v2676 = vld [vmem:[%s2365 + $0x7b] sm:$0xff]
        %v2677 = vld [vmem:[%s2365 + $0x83] sm:$0xff]
        %v2678 = vld [vmem:[%s2365 + $0x93] sm:$0xff]
        %v2679 = vld [vmem:[%s2365 + $0x9b] sm:$0xff]
        %v2680 = vld [vmem:[%s2365 + $0xab] sm:$0xff]
        %v2681 = vld [vmem:[%s2365 + $0xb3] sm:$0xff]
        %v2682 = vld [vmem:[%s2365 + $0xc3] sm:$0xff]
        %v2683 = vld [vmem:[%s2365 + $0xcb] sm:$0xff]
        %v2684 = vld [vmem:[%s2365 + $0xdb] sm:$0xff]
        %v2685 = vld [vmem:[%s2365 + $0xe3] sm:$0xff]
        %v2686 = vld [vmem:[%s2365 + $0xf3] sm:$0xff]
        %v2687 = vld [vmem:[%s2365 + $0xfb] sm:$0xff]
        %v2688 = vld [vmem:[%s2365 + $0x10b] sm:$0xff]
        %v2689 = vld [vmem:[%s2365 + $0x113] sm:$0xff]
        %v2690 = vld [vmem:[%s2365 + $0x123] sm:$0xff]
        %v2691 = vld [vmem:[%s2365 + $0x12b] sm:$0xff]
        %v2692 = vld [vmem:[%s2365 + $0x13b] sm:$0xff]
        %v2693 = vld [vmem:[%s2365 + $0x143] sm:$0xff]
        %v2694 = vld [vmem:[%s2365 + $0x153] sm:$0xff]
        %v2695 = vld [vmem:[%s2365 + $0x15b] sm:$0xff]
        %v2696 = vld [vmem:[%s2365 + $0x16b] sm:$0xff]
        %v2697 = vld [vmem:[%s2365 + $0x173] sm:$0xff]
        %v2698 = vlaneseq
        %v2699 = vshrl.u32 %v2698, 7
        %v2700 = vsub.s32 0, %v2699
        %v2701 = vrot.slane %v255, %v2700
        %v2702 = vmul.f32 %v2666, %v2701
        %v2703 = vmul.f32 %v2667, %v2701
        %v2704 = vmul.f32 %v2668, %v2701
        %v2705 = vmul.f32 %v2669, %v2701
        %v2706 = vmul.f32 %v2670, %v2701
        %v2707 = vmul.f32 %v2671, %v2701
        %v2708 = vmul.f32 %v2672, %v2701
        %v2709 = vmul.f32 %v2673, %v2701
        %v2710 = vmul.f32 %v2674, %v2701
        %v2711 = vmul.f32 %v2675, %v2701
        %v2712 = vmul.f32 %v2676, %v2701
        %v2713 = vmul.f32 %v2677, %v2701
        %v2714 = vmul.f32 %v2678, %v2701
        %v2715 = vmul.f32 %v2679, %v2701
        %v2716 = vmul.f32 %v2680, %v2701
        %v2717 = vmul.f32 %v2681, %v2701
        %v2718 = vmul.f32 %v2682, %v2701
        %v2719 = vmul.f32 %v2683, %v2701
        %v2720 = vmul.f32 %v2684, %v2701
        %v2721 = vmul.f32 %v2685, %v2701
        %v2722 = vmul.f32 %v2686, %v2701
        %v2723 = vmul.f32 %v2687, %v2701
        %v2724 = vmul.f32 %v2688, %v2701
        %v2725 = vmul.f32 %v2689, %v2701
        %v2726 = vmul.f32 %v2690, %v2701
        %v2727 = vmul.f32 %v2691, %v2701
        %v2728 = vmul.f32 %v2692, %v2701
        %v2729 = vmul.f32 %v2693, %v2701
        %v2730 = vmul.f32 %v2694, %v2701
        %v2731 = vmul.f32 %v2695, %v2701
        %v2732 = vmul.f32 %v2696, %v2701
        %v2733 = vmul.f32 %v2697, %v2701
        %v2734 = vadd.f32 %v2634, %v2702
        %v2735 = vadd.f32 %v2635, %v2703
        %v2736 = vadd.f32 %v2636, %v2704
        %v2737 = vadd.f32 %v2637, %v2705
        %v2738 = vadd.f32 %v2638, %v2706
        %v2739 = vadd.f32 %v2639, %v2707
        %v2740 = vadd.f32 %v2640, %v2708
        %v2741 = vadd.f32 %v2641, %v2709
        %v2742 = vadd.f32 %v2642, %v2710
        %v2743 = vadd.f32 %v2643, %v2711
        %v2744 = vadd.f32 %v2644, %v2712
        %v2745 = vadd.f32 %v2645, %v2713
        %v2746 = vadd.f32 %v2646, %v2714
        %v2747 = vadd.f32 %v2647, %v2715
        %v2748 = vadd.f32 %v2648, %v2716
        %v2749 = vadd.f32 %v2649, %v2717
        %v2750 = vadd.f32 %v2650, %v2718
        %v2751 = vadd.f32 %v2651, %v2719
        %v2752 = vadd.f32 %v2652, %v2720
        %v2753 = vadd.f32 %v2653, %v2721
        %v2754 = vadd.f32 %v2654, %v2722
        %v2755 = vadd.f32 %v2655, %v2723
        %v2756 = vadd.f32 %v2656, %v2724
        %v2757 = vadd.f32 %v2657, %v2725
        %v2758 = vadd.f32 %v2658, %v2726
        %v2759 = vadd.f32 %v2659, %v2727
        %v2760 = vadd.f32 %v2660, %v2728
        %v2761 = vadd.f32 %v2661, %v2729
        %v2762 = vadd.f32 %v2662, %v2730
        %v2763 = vadd.f32 %v2663, %v2731
        %v2764 = vadd.f32 %v2664, %v2732
        %v2765 = vadd.f32 %v2665, %v2733
        %v2766 = vld [vmem:[%s2365 + $0x4] sm:$0xff]
        %v2767 = vld [vmem:[%s2365 + $0xc] sm:$0xff]
        %v2768 = vld [vmem:[%s2365 + $0x1c] sm:$0xff]
        %v2769 = vld [vmem:[%s2365 + $0x24] sm:$0xff]
        %v2770 = vld [vmem:[%s2365 + $0x34] sm:$0xff]
        %v2771 = vld [vmem:[%s2365 + $0x3c] sm:$0xff]
        %v2772 = vld [vmem:[%s2365 + $0x4c] sm:$0xff]
        %v2773 = vld [vmem:[%s2365 + $0x54] sm:$0xff]
        %v2774 = vld [vmem:[%s2365 + $0x64] sm:$0xff]
        %v2775 = vld [vmem:[%s2365 + $0x6c] sm:$0xff]
        %v2776 = vld [vmem:[%s2365 + $0x7c] sm:$0xff]
        %v2777 = vld [vmem:[%s2365 + $0x84] sm:$0xff]
        %v2778 = vld [vmem:[%s2365 + $0x94] sm:$0xff]
        %v2779 = vld [vmem:[%s2365 + $0x9c] sm:$0xff]
        %v2780 = vld [vmem:[%s2365 + $0xac] sm:$0xff]
        %v2781 = vld [vmem:[%s2365 + $0xb4] sm:$0xff]
        %v2782 = vld [vmem:[%s2365 + $0xc4] sm:$0xff]
        %v2783 = vld [vmem:[%s2365 + $0xcc] sm:$0xff]
        %v2784 = vld [vmem:[%s2365 + $0xdc] sm:$0xff]
        %v2785 = vld [vmem:[%s2365 + $0xe4] sm:$0xff]
        %v2786 = vld [vmem:[%s2365 + $0xf4] sm:$0xff]
        %v2787 = vld [vmem:[%s2365 + $0xfc] sm:$0xff]
        %v2788 = vld [vmem:[%s2365 + $0x10c] sm:$0xff]
        %v2789 = vld [vmem:[%s2365 + $0x114] sm:$0xff]
        %v2790 = vld [vmem:[%s2365 + $0x124] sm:$0xff]
        %v2791 = vld [vmem:[%s2365 + $0x12c] sm:$0xff]
        %v2792 = vld [vmem:[%s2365 + $0x13c] sm:$0xff]
        %v2793 = vld [vmem:[%s2365 + $0x144] sm:$0xff]
        %v2794 = vld [vmem:[%s2365 + $0x154] sm:$0xff]
        %v2795 = vld [vmem:[%s2365 + $0x15c] sm:$0xff]
        %v2796 = vld [vmem:[%s2365 + $0x16c] sm:$0xff]
        %v2797 = vld [vmem:[%s2365 + $0x174] sm:$0xff]
        %v2798 = vlaneseq
        %v2799 = vshrl.u32 %v2798, 7
        %v2800 = vsub.s32 1, %v2799
        %v2801 = vrot.slane %v255, %v2800
        %v2802 = vmul.f32 %v2766, %v2801
        %v2803 = vmul.f32 %v2767, %v2801
        %v2804 = vmul.f32 %v2768, %v2801
        %v2805 = vmul.f32 %v2769, %v2801
        %v2806 = vmul.f32 %v2770, %v2801
        %v2807 = vmul.f32 %v2771, %v2801
        %v2808 = vmul.f32 %v2772, %v2801
        %v2809 = vmul.f32 %v2773, %v2801
        %v2810 = vmul.f32 %v2774, %v2801
        %v2811 = vmul.f32 %v2775, %v2801
        %v2812 = vmul.f32 %v2776, %v2801
        %v2813 = vmul.f32 %v2777, %v2801
        %v2814 = vmul.f32 %v2778, %v2801
        %v2815 = vmul.f32 %v2779, %v2801
        %v2816 = vmul.f32 %v2780, %v2801
        %v2817 = vmul.f32 %v2781, %v2801
        %v2818 = vmul.f32 %v2782, %v2801
        %v2819 = vmul.f32 %v2783, %v2801
        %v2820 = vmul.f32 %v2784, %v2801
        %v2821 = vmul.f32 %v2785, %v2801
        %v2822 = vmul.f32 %v2786, %v2801
        %v2823 = vmul.f32 %v2787, %v2801
        %v2824 = vmul.f32 %v2788, %v2801
        %v2825 = vmul.f32 %v2789, %v2801
        %v2826 = vmul.f32 %v2790, %v2801
        %v2827 = vmul.f32 %v2791, %v2801
        %v2828 = vmul.f32 %v2792, %v2801
        %v2829 = vmul.f32 %v2793, %v2801
        %v2830 = vmul.f32 %v2794, %v2801
        %v2831 = vmul.f32 %v2795, %v2801
        %v2832 = vmul.f32 %v2796, %v2801
        %v2833 = vmul.f32 %v2797, %v2801
        %v2834 = vadd.f32 %v2734, %v2802
        %v2835 = vadd.f32 %v2735, %v2803
        %v2836 = vadd.f32 %v2736, %v2804
        %v2837 = vadd.f32 %v2737, %v2805
        %v2838 = vadd.f32 %v2738, %v2806
        %v2839 = vadd.f32 %v2739, %v2807
        %v2840 = vadd.f32 %v2740, %v2808
        %v2841 = vadd.f32 %v2741, %v2809
        %v2842 = vadd.f32 %v2742, %v2810
        %v2843 = vadd.f32 %v2743, %v2811
        %v2844 = vadd.f32 %v2744, %v2812
        %v2845 = vadd.f32 %v2745, %v2813
        %v2846 = vadd.f32 %v2746, %v2814
        %v2847 = vadd.f32 %v2747, %v2815
        %v2848 = vadd.f32 %v2748, %v2816
        %v2849 = vadd.f32 %v2749, %v2817
        %v2850 = vadd.f32 %v2750, %v2818
        %v2851 = vadd.f32 %v2751, %v2819
        %v2852 = vadd.f32 %v2752, %v2820
        %v2853 = vadd.f32 %v2753, %v2821
        %v2854 = vadd.f32 %v2754, %v2822
        %v2855 = vadd.f32 %v2755, %v2823
        %v2856 = vadd.f32 %v2756, %v2824
        %v2857 = vadd.f32 %v2757, %v2825
        %v2858 = vadd.f32 %v2758, %v2826
        %v2859 = vadd.f32 %v2759, %v2827
        %v2860 = vadd.f32 %v2760, %v2828
        %v2861 = vadd.f32 %v2761, %v2829
        %v2862 = vadd.f32 %v2762, %v2830
        %v2863 = vadd.f32 %v2763, %v2831
        %v2864 = vadd.f32 %v2764, %v2832
        %v2865 = vadd.f32 %v2765, %v2833
        %v2866 = vld [vmem:[%s2365 + $0x5] sm:$0xff]
        %v2867 = vld [vmem:[%s2365 + $0xd] sm:$0xff]
        %v2868 = vld [vmem:[%s2365 + $0x1d] sm:$0xff]
        %v2869 = vld [vmem:[%s2365 + $0x25] sm:$0xff]
        %v2870 = vld [vmem:[%s2365 + $0x35] sm:$0xff]
        %v2871 = vld [vmem:[%s2365 + $0x3d] sm:$0xff]
        %v2872 = vld [vmem:[%s2365 + $0x4d] sm:$0xff]
        %v2873 = vld [vmem:[%s2365 + $0x55] sm:$0xff]
        %v2874 = vld [vmem:[%s2365 + $0x65] sm:$0xff]
        %v2875 = vld [vmem:[%s2365 + $0x6d] sm:$0xff]
        %v2876 = vld [vmem:[%s2365 + $0x7d] sm:$0xff]
        %v2877 = vld [vmem:[%s2365 + $0x85] sm:$0xff]
        %v2878 = vld [vmem:[%s2365 + $0x95] sm:$0xff]
        %v2879 = vld [vmem:[%s2365 + $0x9d] sm:$0xff]
        %v2880 = vld [vmem:[%s2365 + $0xad] sm:$0xff]
        %v2881 = vld [vmem:[%s2365 + $0xb5] sm:$0xff]
        %v2882 = vld [vmem:[%s2365 + $0xc5] sm:$0xff]
        %v2883 = vld [vmem:[%s2365 + $0xcd] sm:$0xff]
        %v2884 = vld [vmem:[%s2365 + $0xdd] sm:$0xff]
        %v2885 = vld [vmem:[%s2365 + $0xe5] sm:$0xff]
        %v2886 = vld [vmem:[%s2365 + $0xf5] sm:$0xff]
        %v2887 = vld [vmem:[%s2365 + $0xfd] sm:$0xff]
        %v2888 = vld [vmem:[%s2365 + $0x10d] sm:$0xff]
        %v2889 = vld [vmem:[%s2365 + $0x115] sm:$0xff]
        %v2890 = vld [vmem:[%s2365 + $0x125] sm:$0xff]
        %v2891 = vld [vmem:[%s2365 + $0x12d] sm:$0xff]
        %v2892 = vld [vmem:[%s2365 + $0x13d] sm:$0xff]
        %v2893 = vld [vmem:[%s2365 + $0x145] sm:$0xff]
        %v2894 = vld [vmem:[%s2365 + $0x155] sm:$0xff]
        %v2895 = vld [vmem:[%s2365 + $0x15d] sm:$0xff]
        %v2896 = vld [vmem:[%s2365 + $0x16d] sm:$0xff]
        %v2897 = vld [vmem:[%s2365 + $0x175] sm:$0xff]
        %v2898 = vlaneseq
        %v2899 = vshrl.u32 %v2898, 7
        %v2900 = vsub.s32 2, %v2899
        %v2901 = vrot.slane %v255, %v2900
        %v2902 = vmul.f32 %v2866, %v2901
        %v2903 = vmul.f32 %v2867, %v2901
        %v2904 = vmul.f32 %v2868, %v2901
        %v2905 = vmul.f32 %v2869, %v2901
        %v2906 = vmul.f32 %v2870, %v2901
        %v2907 = vmul.f32 %v2871, %v2901
        %v2908 = vmul.f32 %v2872, %v2901
        %v2909 = vmul.f32 %v2873, %v2901
        %v2910 = vmul.f32 %v2874, %v2901
        %v2911 = vmul.f32 %v2875, %v2901
        %v2912 = vmul.f32 %v2876, %v2901
        %v2913 = vmul.f32 %v2877, %v2901
        %v2914 = vmul.f32 %v2878, %v2901
        %v2915 = vmul.f32 %v2879, %v2901
        %v2916 = vmul.f32 %v2880, %v2901
        %v2917 = vmul.f32 %v2881, %v2901
        %v2918 = vmul.f32 %v2882, %v2901
        %v2919 = vmul.f32 %v2883, %v2901
        %v2920 = vmul.f32 %v2884, %v2901
        %v2921 = vmul.f32 %v2885, %v2901
        %v2922 = vmul.f32 %v2886, %v2901
        %v2923 = vmul.f32 %v2887, %v2901
        %v2924 = vmul.f32 %v2888, %v2901
        %v2925 = vmul.f32 %v2889, %v2901
        %v2926 = vmul.f32 %v2890, %v2901
        %v2927 = vmul.f32 %v2891, %v2901
        %v2928 = vmul.f32 %v2892, %v2901
        %v2929 = vmul.f32 %v2893, %v2901
        %v2930 = vmul.f32 %v2894, %v2901
        %v2931 = vmul.f32 %v2895, %v2901
        %v2932 = vmul.f32 %v2896, %v2901
        %v2933 = vmul.f32 %v2897, %v2901
        %v2934 = vadd.f32 %v2834, %v2902
        %v2935 = vadd.f32 %v2835, %v2903
        %v2936 = vadd.f32 %v2836, %v2904
        %v2937 = vadd.f32 %v2837, %v2905
        %v2938 = vadd.f32 %v2838, %v2906
        %v2939 = vadd.f32 %v2839, %v2907
        %v2940 = vadd.f32 %v2840, %v2908
        %v2941 = vadd.f32 %v2841, %v2909
        %v2942 = vadd.f32 %v2842, %v2910
        %v2943 = vadd.f32 %v2843, %v2911
        %v2944 = vadd.f32 %v2844, %v2912
        %v2945 = vadd.f32 %v2845, %v2913
        %v2946 = vadd.f32 %v2846, %v2914
        %v2947 = vadd.f32 %v2847, %v2915
        %v2948 = vadd.f32 %v2848, %v2916
        %v2949 = vadd.f32 %v2849, %v2917
        %v2950 = vadd.f32 %v2850, %v2918
        %v2951 = vadd.f32 %v2851, %v2919
        %v2952 = vadd.f32 %v2852, %v2920
        %v2953 = vadd.f32 %v2853, %v2921
        %v2954 = vadd.f32 %v2854, %v2922
        %v2955 = vadd.f32 %v2855, %v2923
        %v2956 = vadd.f32 %v2856, %v2924
        %v2957 = vadd.f32 %v2857, %v2925
        %v2958 = vadd.f32 %v2858, %v2926
        %v2959 = vadd.f32 %v2859, %v2927
        %v2960 = vadd.f32 %v2860, %v2928
        %v2961 = vadd.f32 %v2861, %v2929
        %v2962 = vadd.f32 %v2862, %v2930
        %v2963 = vadd.f32 %v2863, %v2931
        %v2964 = vadd.f32 %v2864, %v2932
        %v2965 = vadd.f32 %v2865, %v2933
        %v2966 = vld [vmem:[%s2365 + $0x6] sm:$0xff]
        %v2967 = vld [vmem:[%s2365 + $0xe] sm:$0xff]
        %v2968 = vld [vmem:[%s2365 + $0x1e] sm:$0xff]
        %v2969 = vld [vmem:[%s2365 + $0x26] sm:$0xff]
        %v2970 = vld [vmem:[%s2365 + $0x36] sm:$0xff]
        %v2971 = vld [vmem:[%s2365 + $0x3e] sm:$0xff]
        %v2972 = vld [vmem:[%s2365 + $0x4e] sm:$0xff]
        %v2973 = vld [vmem:[%s2365 + $0x56] sm:$0xff]
        %v2974 = vld [vmem:[%s2365 + $0x66] sm:$0xff]
        %v2975 = vld [vmem:[%s2365 + $0x6e] sm:$0xff]
        %v2976 = vld [vmem:[%s2365 + $0x7e] sm:$0xff]
        %v2977 = vld [vmem:[%s2365 + $0x86] sm:$0xff]
        %v2978 = vld [vmem:[%s2365 + $0x96] sm:$0xff]
        %v2979 = vld [vmem:[%s2365 + $0x9e] sm:$0xff]
        %v2980 = vld [vmem:[%s2365 + $0xae] sm:$0xff]
        %v2981 = vld [vmem:[%s2365 + $0xb6] sm:$0xff]
        %v2982 = vld [vmem:[%s2365 + $0xc6] sm:$0xff]
        %v2983 = vld [vmem:[%s2365 + $0xce] sm:$0xff]
        %v2984 = vld [vmem:[%s2365 + $0xde] sm:$0xff]
        %v2985 = vld [vmem:[%s2365 + $0xe6] sm:$0xff]
        %v2986 = vld [vmem:[%s2365 + $0xf6] sm:$0xff]
        %v2987 = vld [vmem:[%s2365 + $0xfe] sm:$0xff]
        %v2988 = vld [vmem:[%s2365 + $0x10e] sm:$0xff]
        %v2989 = vld [vmem:[%s2365 + $0x116] sm:$0xff]
        %v2990 = vld [vmem:[%s2365 + $0x126] sm:$0xff]
        %v2991 = vld [vmem:[%s2365 + $0x12e] sm:$0xff]
        %v2992 = vld [vmem:[%s2365 + $0x13e] sm:$0xff]
        %v2993 = vld [vmem:[%s2365 + $0x146] sm:$0xff]
        %v2994 = vld [vmem:[%s2365 + $0x156] sm:$0xff]
        %v2995 = vld [vmem:[%s2365 + $0x15e] sm:$0xff]
        %v2996 = vld [vmem:[%s2365 + $0x16e] sm:$0xff]
        %v2997 = vld [vmem:[%s2365 + $0x176] sm:$0xff]
        %v2998 = vlaneseq
        %v2999 = vshrl.u32 %v2998, 7
        %v3000 = vsub.s32 3, %v2999
        %v3001 = vrot.slane %v255, %v3000
        %v3002 = vmul.f32 %v2966, %v3001
        %v3003 = vmul.f32 %v2967, %v3001
        %v3004 = vmul.f32 %v2968, %v3001
        %v3005 = vmul.f32 %v2969, %v3001
        %v3006 = vmul.f32 %v2970, %v3001
        %v3007 = vmul.f32 %v2971, %v3001
        %v3008 = vmul.f32 %v2972, %v3001
        %v3009 = vmul.f32 %v2973, %v3001
        %v3010 = vmul.f32 %v2974, %v3001
        %v3011 = vmul.f32 %v2975, %v3001
        %v3012 = vmul.f32 %v2976, %v3001
        %v3013 = vmul.f32 %v2977, %v3001
        %v3014 = vmul.f32 %v2978, %v3001
        %v3015 = vmul.f32 %v2979, %v3001
        %v3016 = vmul.f32 %v2980, %v3001
        %v3017 = vmul.f32 %v2981, %v3001
        %v3018 = vmul.f32 %v2982, %v3001
        %v3019 = vmul.f32 %v2983, %v3001
        %v3020 = vmul.f32 %v2984, %v3001
        %v3021 = vmul.f32 %v2985, %v3001
        %v3022 = vmul.f32 %v2986, %v3001
        %v3023 = vmul.f32 %v2987, %v3001
        %v3024 = vmul.f32 %v2988, %v3001
        %v3025 = vmul.f32 %v2989, %v3001
        %v3026 = vmul.f32 %v2990, %v3001
        %v3027 = vmul.f32 %v2991, %v3001
        %v3028 = vmul.f32 %v2992, %v3001
        %v3029 = vmul.f32 %v2993, %v3001
        %v3030 = vmul.f32 %v2994, %v3001
        %v3031 = vmul.f32 %v2995, %v3001
        %v3032 = vmul.f32 %v2996, %v3001
        %v3033 = vmul.f32 %v2997, %v3001
        %v3034 = vadd.f32 %v2934, %v3002
        %v3035 = vadd.f32 %v2935, %v3003
        %v3036 = vadd.f32 %v2936, %v3004
        %v3037 = vadd.f32 %v2937, %v3005
        %v3038 = vadd.f32 %v2938, %v3006
        %v3039 = vadd.f32 %v2939, %v3007
        %v3040 = vadd.f32 %v2940, %v3008
        %v3041 = vadd.f32 %v2941, %v3009
        %v3042 = vadd.f32 %v2942, %v3010
        %v3043 = vadd.f32 %v2943, %v3011
        %v3044 = vadd.f32 %v2944, %v3012
        %v3045 = vadd.f32 %v2945, %v3013
        %v3046 = vadd.f32 %v2946, %v3014
        %v3047 = vadd.f32 %v2947, %v3015
        %v3048 = vadd.f32 %v2948, %v3016
        %v3049 = vadd.f32 %v2949, %v3017
        %v3050 = vadd.f32 %v2950, %v3018
        %v3051 = vadd.f32 %v2951, %v3019
        %v3052 = vadd.f32 %v2952, %v3020
        %v3053 = vadd.f32 %v2953, %v3021
        %v3054 = vadd.f32 %v2954, %v3022
        %v3055 = vadd.f32 %v2955, %v3023
        %v3056 = vadd.f32 %v2956, %v3024
        %v3057 = vadd.f32 %v2957, %v3025
        %v3058 = vadd.f32 %v2958, %v3026
        %v3059 = vadd.f32 %v2959, %v3027
        %v3060 = vadd.f32 %v2960, %v3028
        %v3061 = vadd.f32 %v2961, %v3029
        %v3062 = vadd.f32 %v2962, %v3030
        %v3063 = vadd.f32 %v2963, %v3031
        %v3064 = vadd.f32 %v2964, %v3032
        %v3065 = vadd.f32 %v2965, %v3033
        %s3066 = scalar_lea.vmem %s249, 96
        %v3067 = vld [vmem:[%s3066] sm:$0xff]
        %v3068 = vld [vmem:[%s3066 + $0x8] sm:$0xff]
        %v3069 = vld [vmem:[%s3066 + $0x18] sm:$0xff]
        %v3070 = vld [vmem:[%s3066 + $0x20] sm:$0xff]
        %v3071 = vld [vmem:[%s3066 + $0x30] sm:$0xff]
        %v3072 = vld [vmem:[%s3066 + $0x38] sm:$0xff]
        %v3073 = vld [vmem:[%s3066 + $0x48] sm:$0xff]
        %v3074 = vld [vmem:[%s3066 + $0x50] sm:$0xff]
        %v3075 = vld [vmem:[%s3066 + $0x60] sm:$0xff]
        %v3076 = vld [vmem:[%s3066 + $0x68] sm:$0xff]
        %v3077 = vld [vmem:[%s3066 + $0x78] sm:$0xff]
        %v3078 = vld [vmem:[%s3066 + $0x80] sm:$0xff]
        %v3079 = vld [vmem:[%s3066 + $0x90] sm:$0xff]
        %v3080 = vld [vmem:[%s3066 + $0x98] sm:$0xff]
        %v3081 = vld [vmem:[%s3066 + $0xa8] sm:$0xff]
        %v3082 = vld [vmem:[%s3066 + $0xb0] sm:$0xff]
        %v3083 = vld [vmem:[%s3066 + $0xc0] sm:$0xff]
        %v3084 = vld [vmem:[%s3066 + $0xc8] sm:$0xff]
        %v3085 = vld [vmem:[%s3066 + $0xd8] sm:$0xff]
        %v3086 = vld [vmem:[%s3066 + $0xe0] sm:$0xff]
        %v3087 = vld [vmem:[%s3066 + $0xf0] sm:$0xff]
        %v3088 = vld [vmem:[%s3066 + $0xf8] sm:$0xff]
        %v3089 = vld [vmem:[%s3066 + $0x108] sm:$0xff]
        %v3090 = vld [vmem:[%s3066 + $0x110] sm:$0xff]
        %v3091 = vld [vmem:[%s3066 + $0x120] sm:$0xff]
        %v3092 = vld [vmem:[%s3066 + $0x128] sm:$0xff]
        %v3093 = vld [vmem:[%s3066 + $0x138] sm:$0xff]
        %v3094 = vld [vmem:[%s3066 + $0x140] sm:$0xff]
        %v3095 = vld [vmem:[%s3066 + $0x150] sm:$0xff]
        %v3096 = vld [vmem:[%s3066 + $0x158] sm:$0xff]
        %v3097 = vld [vmem:[%s3066 + $0x168] sm:$0xff]
        %v3098 = vld [vmem:[%s3066 + $0x170] sm:$0xff]
        %v3099 = vlaneseq
        %v3100 = vshrl.u32 %v3099, 7
        %v3101 = vsub.s32 4, %v3100
        %v3102 = vrot.slane %v255, %v3101
        %v3103 = vmul.f32 %v3067, %v3102
        %v3104 = vmul.f32 %v3068, %v3102
        %v3105 = vmul.f32 %v3069, %v3102
        %v3106 = vmul.f32 %v3070, %v3102
        %v3107 = vmul.f32 %v3071, %v3102
        %v3108 = vmul.f32 %v3072, %v3102
        %v3109 = vmul.f32 %v3073, %v3102
        %v3110 = vmul.f32 %v3074, %v3102
        %v3111 = vmul.f32 %v3075, %v3102
        %v3112 = vmul.f32 %v3076, %v3102
        %v3113 = vmul.f32 %v3077, %v3102
        %v3114 = vmul.f32 %v3078, %v3102
        %v3115 = vmul.f32 %v3079, %v3102
        %v3116 = vmul.f32 %v3080, %v3102
        %v3117 = vmul.f32 %v3081, %v3102
        %v3118 = vmul.f32 %v3082, %v3102
        %v3119 = vmul.f32 %v3083, %v3102
        %v3120 = vmul.f32 %v3084, %v3102
        %v3121 = vmul.f32 %v3085, %v3102
        %v3122 = vmul.f32 %v3086, %v3102
        %v3123 = vmul.f32 %v3087, %v3102
        %v3124 = vmul.f32 %v3088, %v3102
        %v3125 = vmul.f32 %v3089, %v3102
        %v3126 = vmul.f32 %v3090, %v3102
        %v3127 = vmul.f32 %v3091, %v3102
        %v3128 = vmul.f32 %v3092, %v3102
        %v3129 = vmul.f32 %v3093, %v3102
        %v3130 = vmul.f32 %v3094, %v3102
        %v3131 = vmul.f32 %v3095, %v3102
        %v3132 = vmul.f32 %v3096, %v3102
        %v3133 = vmul.f32 %v3097, %v3102
        %v3134 = vmul.f32 %v3098, %v3102
        %v3135 = vadd.f32 %v3034, %v3103
        %v3136 = vadd.f32 %v3035, %v3104
        %v3137 = vadd.f32 %v3036, %v3105
        %v3138 = vadd.f32 %v3037, %v3106
        %v3139 = vadd.f32 %v3038, %v3107
        %v3140 = vadd.f32 %v3039, %v3108
        %v3141 = vadd.f32 %v3040, %v3109
        %v3142 = vadd.f32 %v3041, %v3110
        %v3143 = vadd.f32 %v3042, %v3111
        %v3144 = vadd.f32 %v3043, %v3112
        %v3145 = vadd.f32 %v3044, %v3113
        %v3146 = vadd.f32 %v3045, %v3114
        %v3147 = vadd.f32 %v3046, %v3115
        %v3148 = vadd.f32 %v3047, %v3116
        %v3149 = vadd.f32 %v3048, %v3117
        %v3150 = vadd.f32 %v3049, %v3118
        %v3151 = vadd.f32 %v3050, %v3119
        %v3152 = vadd.f32 %v3051, %v3120
        %v3153 = vadd.f32 %v3052, %v3121
        %v3154 = vadd.f32 %v3053, %v3122
        %v3155 = vadd.f32 %v3054, %v3123
        %v3156 = vadd.f32 %v3055, %v3124
        %v3157 = vadd.f32 %v3056, %v3125
        %v3158 = vadd.f32 %v3057, %v3126
        %v3159 = vadd.f32 %v3058, %v3127
        %v3160 = vadd.f32 %v3059, %v3128
        %v3161 = vadd.f32 %v3060, %v3129
        %v3162 = vadd.f32 %v3061, %v3130
        %v3163 = vadd.f32 %v3062, %v3131
        %v3164 = vadd.f32 %v3063, %v3132
        %v3165 = vadd.f32 %v3064, %v3133
        %v3166 = vadd.f32 %v3065, %v3134
        %v3167 = vld [vmem:[%s3066 + $0x1] sm:$0xff]
        %v3168 = vld [vmem:[%s3066 + $0x9] sm:$0xff]
        %v3169 = vld [vmem:[%s3066 + $0x19] sm:$0xff]
        %v3170 = vld [vmem:[%s3066 + $0x21] sm:$0xff]
        %v3171 = vld [vmem:[%s3066 + $0x31] sm:$0xff]
        %v3172 = vld [vmem:[%s3066 + $0x39] sm:$0xff]
        %v3173 = vld [vmem:[%s3066 + $0x49] sm:$0xff]
        %v3174 = vld [vmem:[%s3066 + $0x51] sm:$0xff]
        %v3175 = vld [vmem:[%s3066 + $0x61] sm:$0xff]
        %v3176 = vld [vmem:[%s3066 + $0x69] sm:$0xff]
        %v3177 = vld [vmem:[%s3066 + $0x79] sm:$0xff]
        %v3178 = vld [vmem:[%s3066 + $0x81] sm:$0xff]
        %v3179 = vld [vmem:[%s3066 + $0x91] sm:$0xff]
        %v3180 = vld [vmem:[%s3066 + $0x99] sm:$0xff]
        %v3181 = vld [vmem:[%s3066 + $0xa9] sm:$0xff]
        %v3182 = vld [vmem:[%s3066 + $0xb1] sm:$0xff]
        %v3183 = vld [vmem:[%s3066 + $0xc1] sm:$0xff]
        %v3184 = vld [vmem:[%s3066 + $0xc9] sm:$0xff]
        %v3185 = vld [vmem:[%s3066 + $0xd9] sm:$0xff]
        %v3186 = vld [vmem:[%s3066 + $0xe1] sm:$0xff]
        %v3187 = vld [vmem:[%s3066 + $0xf1] sm:$0xff]
        %v3188 = vld [vmem:[%s3066 + $0xf9] sm:$0xff]
        %v3189 = vld [vmem:[%s3066 + $0x109] sm:$0xff]
        %v3190 = vld [vmem:[%s3066 + $0x111] sm:$0xff]
        %v3191 = vld [vmem:[%s3066 + $0x121] sm:$0xff]
        %v3192 = vld [vmem:[%s3066 + $0x129] sm:$0xff]
        %v3193 = vld [vmem:[%s3066 + $0x139] sm:$0xff]
        %v3194 = vld [vmem:[%s3066 + $0x141] sm:$0xff]
        %v3195 = vld [vmem:[%s3066 + $0x151] sm:$0xff]
        %v3196 = vld [vmem:[%s3066 + $0x159] sm:$0xff]
        %v3197 = vld [vmem:[%s3066 + $0x169] sm:$0xff]
        %v3198 = vld [vmem:[%s3066 + $0x171] sm:$0xff]
        %v3199 = vlaneseq
        %v3200 = vshrl.u32 %v3199, 7
        %v3201 = vsub.s32 5, %v3200
        %v3202 = vrot.slane %v255, %v3201
        %v3203 = vmul.f32 %v3167, %v3202
        %v3204 = vmul.f32 %v3168, %v3202
        %v3205 = vmul.f32 %v3169, %v3202
        %v3206 = vmul.f32 %v3170, %v3202
        %v3207 = vmul.f32 %v3171, %v3202
        %v3208 = vmul.f32 %v3172, %v3202
        %v3209 = vmul.f32 %v3173, %v3202
        %v3210 = vmul.f32 %v3174, %v3202
        %v3211 = vmul.f32 %v3175, %v3202
        %v3212 = vmul.f32 %v3176, %v3202
        %v3213 = vmul.f32 %v3177, %v3202
        %v3214 = vmul.f32 %v3178, %v3202
        %v3215 = vmul.f32 %v3179, %v3202
        %v3216 = vmul.f32 %v3180, %v3202
        %v3217 = vmul.f32 %v3181, %v3202
        %v3218 = vmul.f32 %v3182, %v3202
        %v3219 = vmul.f32 %v3183, %v3202
        %v3220 = vmul.f32 %v3184, %v3202
        %v3221 = vmul.f32 %v3185, %v3202
        %v3222 = vmul.f32 %v3186, %v3202
        %v3223 = vmul.f32 %v3187, %v3202
        %v3224 = vmul.f32 %v3188, %v3202
        %v3225 = vmul.f32 %v3189, %v3202
        %v3226 = vmul.f32 %v3190, %v3202
        %v3227 = vmul.f32 %v3191, %v3202
        %v3228 = vmul.f32 %v3192, %v3202
        %v3229 = vmul.f32 %v3193, %v3202
        %v3230 = vmul.f32 %v3194, %v3202
        %v3231 = vmul.f32 %v3195, %v3202
        %v3232 = vmul.f32 %v3196, %v3202
        %v3233 = vmul.f32 %v3197, %v3202
        %v3234 = vmul.f32 %v3198, %v3202
        %v3235 = vadd.f32 %v3135, %v3203
        %v3236 = vadd.f32 %v3136, %v3204
        %v3237 = vadd.f32 %v3137, %v3205
        %v3238 = vadd.f32 %v3138, %v3206
        %v3239 = vadd.f32 %v3139, %v3207
        %v3240 = vadd.f32 %v3140, %v3208
        %v3241 = vadd.f32 %v3141, %v3209
        %v3242 = vadd.f32 %v3142, %v3210
        %v3243 = vadd.f32 %v3143, %v3211
        %v3244 = vadd.f32 %v3144, %v3212
        %v3245 = vadd.f32 %v3145, %v3213
        %v3246 = vadd.f32 %v3146, %v3214
        %v3247 = vadd.f32 %v3147, %v3215
        %v3248 = vadd.f32 %v3148, %v3216
        %v3249 = vadd.f32 %v3149, %v3217
        %v3250 = vadd.f32 %v3150, %v3218
        %v3251 = vadd.f32 %v3151, %v3219
        %v3252 = vadd.f32 %v3152, %v3220
        %v3253 = vadd.f32 %v3153, %v3221
        %v3254 = vadd.f32 %v3154, %v3222
        %v3255 = vadd.f32 %v3155, %v3223
        %v3256 = vadd.f32 %v3156, %v3224
        %v3257 = vadd.f32 %v3157, %v3225
        %v3258 = vadd.f32 %v3158, %v3226
        %v3259 = vadd.f32 %v3159, %v3227
        %v3260 = vadd.f32 %v3160, %v3228
        %v3261 = vadd.f32 %v3161, %v3229
        %v3262 = vadd.f32 %v3162, %v3230
        %v3263 = vadd.f32 %v3163, %v3231
        %v3264 = vadd.f32 %v3164, %v3232
        %v3265 = vadd.f32 %v3165, %v3233
        %v3266 = vadd.f32 %v3166, %v3234
        %v3267 = vld [vmem:[%s3066 + $0x2] sm:$0xff]
        %v3268 = vld [vmem:[%s3066 + $0xa] sm:$0xff]
        %v3269 = vld [vmem:[%s3066 + $0x1a] sm:$0xff]
        %v3270 = vld [vmem:[%s3066 + $0x22] sm:$0xff]
        %v3271 = vld [vmem:[%s3066 + $0x32] sm:$0xff]
        %v3272 = vld [vmem:[%s3066 + $0x3a] sm:$0xff]
        %v3273 = vld [vmem:[%s3066 + $0x4a] sm:$0xff]
        %v3274 = vld [vmem:[%s3066 + $0x52] sm:$0xff]
        %v3275 = vld [vmem:[%s3066 + $0x62] sm:$0xff]
        %v3276 = vld [vmem:[%s3066 + $0x6a] sm:$0xff]
        %v3277 = vld [vmem:[%s3066 + $0x7a] sm:$0xff]
        %v3278 = vld [vmem:[%s3066 + $0x82] sm:$0xff]
        %v3279 = vld [vmem:[%s3066 + $0x92] sm:$0xff]
        %v3280 = vld [vmem:[%s3066 + $0x9a] sm:$0xff]
        %v3281 = vld [vmem:[%s3066 + $0xaa] sm:$0xff]
        %v3282 = vld [vmem:[%s3066 + $0xb2] sm:$0xff]
        %v3283 = vld [vmem:[%s3066 + $0xc2] sm:$0xff]
        %v3284 = vld [vmem:[%s3066 + $0xca] sm:$0xff]
        %v3285 = vld [vmem:[%s3066 + $0xda] sm:$0xff]
        %v3286 = vld [vmem:[%s3066 + $0xe2] sm:$0xff]
        %v3287 = vld [vmem:[%s3066 + $0xf2] sm:$0xff]
        %v3288 = vld [vmem:[%s3066 + $0xfa] sm:$0xff]
        %v3289 = vld [vmem:[%s3066 + $0x10a] sm:$0xff]
        %v3290 = vld [vmem:[%s3066 + $0x112] sm:$0xff]
        %v3291 = vld [vmem:[%s3066 + $0x122] sm:$0xff]
        %v3292 = vld [vmem:[%s3066 + $0x12a] sm:$0xff]
        %v3293 = vld [vmem:[%s3066 + $0x13a] sm:$0xff]
        %v3294 = vld [vmem:[%s3066 + $0x142] sm:$0xff]
        %v3295 = vld [vmem:[%s3066 + $0x152] sm:$0xff]
        %v3296 = vld [vmem:[%s3066 + $0x15a] sm:$0xff]
        %v3297 = vld [vmem:[%s3066 + $0x16a] sm:$0xff]
        %v3298 = vld [vmem:[%s3066 + $0x172] sm:$0xff]
        %v3299 = vlaneseq
        %v3300 = vshrl.u32 %v3299, 7
        %v3301 = vsub.s32 6, %v3300
        %v3302 = vrot.slane %v255, %v3301
        %v3303 = vmul.f32 %v3267, %v3302
        %v3304 = vmul.f32 %v3268, %v3302
        %v3305 = vmul.f32 %v3269, %v3302
        %v3306 = vmul.f32 %v3270, %v3302
        %v3307 = vmul.f32 %v3271, %v3302
        %v3308 = vmul.f32 %v3272, %v3302
        %v3309 = vmul.f32 %v3273, %v3302
        %v3310 = vmul.f32 %v3274, %v3302
        %v3311 = vmul.f32 %v3275, %v3302
        %v3312 = vmul.f32 %v3276, %v3302
        %v3313 = vmul.f32 %v3277, %v3302
        %v3314 = vmul.f32 %v3278, %v3302
        %v3315 = vmul.f32 %v3279, %v3302
        %v3316 = vmul.f32 %v3280, %v3302
        %v3317 = vmul.f32 %v3281, %v3302
        %v3318 = vmul.f32 %v3282, %v3302
        %v3319 = vmul.f32 %v3283, %v3302
        %v3320 = vmul.f32 %v3284, %v3302
        %v3321 = vmul.f32 %v3285, %v3302
        %v3322 = vmul.f32 %v3286, %v3302
        %v3323 = vmul.f32 %v3287, %v3302
        %v3324 = vmul.f32 %v3288, %v3302
        %v3325 = vmul.f32 %v3289, %v3302
        %v3326 = vmul.f32 %v3290, %v3302
        %v3327 = vmul.f32 %v3291, %v3302
        %v3328 = vmul.f32 %v3292, %v3302
        %v3329 = vmul.f32 %v3293, %v3302
        %v3330 = vmul.f32 %v3294, %v3302
        %v3331 = vmul.f32 %v3295, %v3302
        %v3332 = vmul.f32 %v3296, %v3302
        %v3333 = vmul.f32 %v3297, %v3302
        %v3334 = vmul.f32 %v3298, %v3302
        %v3335 = vadd.f32 %v3235, %v3303
        %v3336 = vadd.f32 %v3236, %v3304
        %v3337 = vadd.f32 %v3237, %v3305
        %v3338 = vadd.f32 %v3238, %v3306
        %v3339 = vadd.f32 %v3239, %v3307
        %v3340 = vadd.f32 %v3240, %v3308
        %v3341 = vadd.f32 %v3241, %v3309
        %v3342 = vadd.f32 %v3242, %v3310
        %v3343 = vadd.f32 %v3243, %v3311
        %v3344 = vadd.f32 %v3244, %v3312
        %v3345 = vadd.f32 %v3245, %v3313
        %v3346 = vadd.f32 %v3246, %v3314
        %v3347 = vadd.f32 %v3247, %v3315
        %v3348 = vadd.f32 %v3248, %v3316
        %v3349 = vadd.f32 %v3249, %v3317
        %v3350 = vadd.f32 %v3250, %v3318
        %v3351 = vadd.f32 %v3251, %v3319
        %v3352 = vadd.f32 %v3252, %v3320
        %v3353 = vadd.f32 %v3253, %v3321
        %v3354 = vadd.f32 %v3254, %v3322
        %v3355 = vadd.f32 %v3255, %v3323
        %v3356 = vadd.f32 %v3256, %v3324
        %v3357 = vadd.f32 %v3257, %v3325
        %v3358 = vadd.f32 %v3258, %v3326
        %v3359 = vadd.f32 %v3259, %v3327
        %v3360 = vadd.f32 %v3260, %v3328
        %v3361 = vadd.f32 %v3261, %v3329
        %v3362 = vadd.f32 %v3262, %v3330
        %v3363 = vadd.f32 %v3263, %v3331
        %v3364 = vadd.f32 %v3264, %v3332
        %v3365 = vadd.f32 %v3265, %v3333
        %v3366 = vadd.f32 %v3266, %v3334
        %v3367 = vld [vmem:[%s3066 + $0x3] sm:$0xff]
        %v3368 = vld [vmem:[%s3066 + $0xb] sm:$0xff]
        %v3369 = vld [vmem:[%s3066 + $0x1b] sm:$0xff]
        %v3370 = vld [vmem:[%s3066 + $0x23] sm:$0xff]
        %v3371 = vld [vmem:[%s3066 + $0x33] sm:$0xff]
        %v3372 = vld [vmem:[%s3066 + $0x3b] sm:$0xff]
        %v3373 = vld [vmem:[%s3066 + $0x4b] sm:$0xff]
        %v3374 = vld [vmem:[%s3066 + $0x53] sm:$0xff]
        %v3375 = vld [vmem:[%s3066 + $0x63] sm:$0xff]
        %v3376 = vld [vmem:[%s3066 + $0x6b] sm:$0xff]
        %v3377 = vld [vmem:[%s3066 + $0x7b] sm:$0xff]
        %v3378 = vld [vmem:[%s3066 + $0x83] sm:$0xff]
        %v3379 = vld [vmem:[%s3066 + $0x93] sm:$0xff]
        %v3380 = vld [vmem:[%s3066 + $0x9b] sm:$0xff]
        %v3381 = vld [vmem:[%s3066 + $0xab] sm:$0xff]
        %v3382 = vld [vmem:[%s3066 + $0xb3] sm:$0xff]
        %v3383 = vld [vmem:[%s3066 + $0xc3] sm:$0xff]
        %v3384 = vld [vmem:[%s3066 + $0xcb] sm:$0xff]
        %v3385 = vld [vmem:[%s3066 + $0xdb] sm:$0xff]
        %v3386 = vld [vmem:[%s3066 + $0xe3] sm:$0xff]
        %v3387 = vld [vmem:[%s3066 + $0xf3] sm:$0xff]
        %v3388 = vld [vmem:[%s3066 + $0xfb] sm:$0xff]
        %v3389 = vld [vmem:[%s3066 + $0x10b] sm:$0xff]
        %v3390 = vld [vmem:[%s3066 + $0x113] sm:$0xff]
        %v3391 = vld [vmem:[%s3066 + $0x123] sm:$0xff]
        %v3392 = vld [vmem:[%s3066 + $0x12b] sm:$0xff]
        %v3393 = vld [vmem:[%s3066 + $0x13b] sm:$0xff]
        %v3394 = vld [vmem:[%s3066 + $0x143] sm:$0xff]
        %v3395 = vld [vmem:[%s3066 + $0x153] sm:$0xff]
        %v3396 = vld [vmem:[%s3066 + $0x15b] sm:$0xff]
        %v3397 = vld [vmem:[%s3066 + $0x16b] sm:$0xff]
        %v3398 = vld [vmem:[%s3066 + $0x173] sm:$0xff]
        %v3399 = vlaneseq
        %v3400 = vshrl.u32 %v3399, 7
        %v3401 = vsub.s32 7, %v3400
        %v3402 = vrot.slane %v255, %v3401
        %v3403 = vmul.f32 %v3367, %v3402
        %v3404 = vmul.f32 %v3368, %v3402
        %v3405 = vmul.f32 %v3369, %v3402
        %v3406 = vmul.f32 %v3370, %v3402
        %v3407 = vmul.f32 %v3371, %v3402
        %v3408 = vmul.f32 %v3372, %v3402
        %v3409 = vmul.f32 %v3373, %v3402
        %v3410 = vmul.f32 %v3374, %v3402
        %v3411 = vmul.f32 %v3375, %v3402
        %v3412 = vmul.f32 %v3376, %v3402
        %v3413 = vmul.f32 %v3377, %v3402
        %v3414 = vmul.f32 %v3378, %v3402
        %v3415 = vmul.f32 %v3379, %v3402
        %v3416 = vmul.f32 %v3380, %v3402
        %v3417 = vmul.f32 %v3381, %v3402
        %v3418 = vmul.f32 %v3382, %v3402
        %v3419 = vmul.f32 %v3383, %v3402
        %v3420 = vmul.f32 %v3384, %v3402
        %v3421 = vmul.f32 %v3385, %v3402
        %v3422 = vmul.f32 %v3386, %v3402
        %v3423 = vmul.f32 %v3387, %v3402
        %v3424 = vmul.f32 %v3388, %v3402
        %v3425 = vmul.f32 %v3389, %v3402
        %v3426 = vmul.f32 %v3390, %v3402
        %v3427 = vmul.f32 %v3391, %v3402
        %v3428 = vmul.f32 %v3392, %v3402
        %v3429 = vmul.f32 %v3393, %v3402
        %v3430 = vmul.f32 %v3394, %v3402
        %v3431 = vmul.f32 %v3395, %v3402
        %v3432 = vmul.f32 %v3396, %v3402
        %v3433 = vmul.f32 %v3397, %v3402
        %v3434 = vmul.f32 %v3398, %v3402
        %v3435 = vadd.f32 %v3335, %v3403
        %v3436 = vadd.f32 %v3336, %v3404
        %v3437 = vadd.f32 %v3337, %v3405
        %v3438 = vadd.f32 %v3338, %v3406
        %v3439 = vadd.f32 %v3339, %v3407
        %v3440 = vadd.f32 %v3340, %v3408
        %v3441 = vadd.f32 %v3341, %v3409
        %v3442 = vadd.f32 %v3342, %v3410
        %v3443 = vadd.f32 %v3343, %v3411
        %v3444 = vadd.f32 %v3344, %v3412
        %v3445 = vadd.f32 %v3345, %v3413
        %v3446 = vadd.f32 %v3346, %v3414
        %v3447 = vadd.f32 %v3347, %v3415
        %v3448 = vadd.f32 %v3348, %v3416
        %v3449 = vadd.f32 %v3349, %v3417
        %v3450 = vadd.f32 %v3350, %v3418
        %v3451 = vadd.f32 %v3351, %v3419
        %v3452 = vadd.f32 %v3352, %v3420
        %v3453 = vadd.f32 %v3353, %v3421
        %v3454 = vadd.f32 %v3354, %v3422
        %v3455 = vadd.f32 %v3355, %v3423
        %v3456 = vadd.f32 %v3356, %v3424
        %v3457 = vadd.f32 %v3357, %v3425
        %v3458 = vadd.f32 %v3358, %v3426
        %v3459 = vadd.f32 %v3359, %v3427
        %v3460 = vadd.f32 %v3360, %v3428
        %v3461 = vadd.f32 %v3361, %v3429
        %v3462 = vadd.f32 %v3362, %v3430
        %v3463 = vadd.f32 %v3363, %v3431
        %v3464 = vadd.f32 %v3364, %v3432
        %v3465 = vadd.f32 %v3365, %v3433
        %v3466 = vadd.f32 %v3366, %v3434
        %v3467 = vld [vmem:[%s3066 + $0x4] sm:$0xff]
        %v3468 = vld [vmem:[%s3066 + $0xc] sm:$0xff]
        %v3469 = vld [vmem:[%s3066 + $0x1c] sm:$0xff]
        %v3470 = vld [vmem:[%s3066 + $0x24] sm:$0xff]
        %v3471 = vld [vmem:[%s3066 + $0x34] sm:$0xff]
        %v3472 = vld [vmem:[%s3066 + $0x3c] sm:$0xff]
        %v3473 = vld [vmem:[%s3066 + $0x4c] sm:$0xff]
        %v3474 = vld [vmem:[%s3066 + $0x54] sm:$0xff]
        %v3475 = vld [vmem:[%s3066 + $0x64] sm:$0xff]
        %v3476 = vld [vmem:[%s3066 + $0x6c] sm:$0xff]
        %v3477 = vld [vmem:[%s3066 + $0x7c] sm:$0xff]
        %v3478 = vld [vmem:[%s3066 + $0x84] sm:$0xff]
        %v3479 = vld [vmem:[%s3066 + $0x94] sm:$0xff]
        %v3480 = vld [vmem:[%s3066 + $0x9c] sm:$0xff]
        %v3481 = vld [vmem:[%s3066 + $0xac] sm:$0xff]
        %v3482 = vld [vmem:[%s3066 + $0xb4] sm:$0xff]
        %v3483 = vld [vmem:[%s3066 + $0xc4] sm:$0xff]
        %v3484 = vld [vmem:[%s3066 + $0xcc] sm:$0xff]
        %v3485 = vld [vmem:[%s3066 + $0xdc] sm:$0xff]
        %v3486 = vld [vmem:[%s3066 + $0xe4] sm:$0xff]
        %v3487 = vld [vmem:[%s3066 + $0xf4] sm:$0xff]
        %v3488 = vld [vmem:[%s3066 + $0xfc] sm:$0xff]
        %v3489 = vld [vmem:[%s3066 + $0x10c] sm:$0xff]
        %v3490 = vld [vmem:[%s3066 + $0x114] sm:$0xff]
        %v3491 = vld [vmem:[%s3066 + $0x124] sm:$0xff]
        %v3492 = vld [vmem:[%s3066 + $0x12c] sm:$0xff]
        %v3493 = vld [vmem:[%s3066 + $0x13c] sm:$0xff]
        %v3494 = vld [vmem:[%s3066 + $0x144] sm:$0xff]
        %v3495 = vld [vmem:[%s3066 + $0x154] sm:$0xff]
        %v3496 = vld [vmem:[%s3066 + $0x15c] sm:$0xff]
        %v3497 = vld [vmem:[%s3066 + $0x16c] sm:$0xff]
        %v3498 = vld [vmem:[%s3066 + $0x174] sm:$0xff]
        %v3499 = vlaneseq
        %v3500 = vshrl.u32 %v3499, 7
        %v3501 = vsub.s32 0, %v3500
        %v3502 = vrot.slane %v256, %v3501
        %v3503 = vmul.f32 %v3467, %v3502
        %v3504 = vmul.f32 %v3468, %v3502
        %v3505 = vmul.f32 %v3469, %v3502
        %v3506 = vmul.f32 %v3470, %v3502
        %v3507 = vmul.f32 %v3471, %v3502
        %v3508 = vmul.f32 %v3472, %v3502
        %v3509 = vmul.f32 %v3473, %v3502
        %v3510 = vmul.f32 %v3474, %v3502
        %v3511 = vmul.f32 %v3475, %v3502
        %v3512 = vmul.f32 %v3476, %v3502
        %v3513 = vmul.f32 %v3477, %v3502
        %v3514 = vmul.f32 %v3478, %v3502
        %v3515 = vmul.f32 %v3479, %v3502
        %v3516 = vmul.f32 %v3480, %v3502
        %v3517 = vmul.f32 %v3481, %v3502
        %v3518 = vmul.f32 %v3482, %v3502
        %v3519 = vmul.f32 %v3483, %v3502
        %v3520 = vmul.f32 %v3484, %v3502
        %v3521 = vmul.f32 %v3485, %v3502
        %v3522 = vmul.f32 %v3486, %v3502
        %v3523 = vmul.f32 %v3487, %v3502
        %v3524 = vmul.f32 %v3488, %v3502
        %v3525 = vmul.f32 %v3489, %v3502
        %v3526 = vmul.f32 %v3490, %v3502
        %v3527 = vmul.f32 %v3491, %v3502
        %v3528 = vmul.f32 %v3492, %v3502
        %v3529 = vmul.f32 %v3493, %v3502
        %v3530 = vmul.f32 %v3494, %v3502
        %v3531 = vmul.f32 %v3495, %v3502
        %v3532 = vmul.f32 %v3496, %v3502
        %v3533 = vmul.f32 %v3497, %v3502
        %v3534 = vmul.f32 %v3498, %v3502
        %v3535 = vadd.f32 %v3435, %v3503
        %v3536 = vadd.f32 %v3436, %v3504
        %v3537 = vadd.f32 %v3437, %v3505
        %v3538 = vadd.f32 %v3438, %v3506
        %v3539 = vadd.f32 %v3439, %v3507
        %v3540 = vadd.f32 %v3440, %v3508
        %v3541 = vadd.f32 %v3441, %v3509
        %v3542 = vadd.f32 %v3442, %v3510
        %v3543 = vadd.f32 %v3443, %v3511
        %v3544 = vadd.f32 %v3444, %v3512
        %v3545 = vadd.f32 %v3445, %v3513
        %v3546 = vadd.f32 %v3446, %v3514
        %v3547 = vadd.f32 %v3447, %v3515
        %v3548 = vadd.f32 %v3448, %v3516
        %v3549 = vadd.f32 %v3449, %v3517
        %v3550 = vadd.f32 %v3450, %v3518
        %v3551 = vadd.f32 %v3451, %v3519
        %v3552 = vadd.f32 %v3452, %v3520
        %v3553 = vadd.f32 %v3453, %v3521
        %v3554 = vadd.f32 %v3454, %v3522
        %v3555 = vadd.f32 %v3455, %v3523
        %v3556 = vadd.f32 %v3456, %v3524
        %v3557 = vadd.f32 %v3457, %v3525
        %v3558 = vadd.f32 %v3458, %v3526
        %v3559 = vadd.f32 %v3459, %v3527
        %v3560 = vadd.f32 %v3460, %v3528
        %v3561 = vadd.f32 %v3461, %v3529
        %v3562 = vadd.f32 %v3462, %v3530
        %v3563 = vadd.f32 %v3463, %v3531
        %v3564 = vadd.f32 %v3464, %v3532
        %v3565 = vadd.f32 %v3465, %v3533
        %v3566 = vadd.f32 %v3466, %v3534
        %v3567 = vld [vmem:[%s3066 + $0x5] sm:$0xff]
        %v3568 = vld [vmem:[%s3066 + $0xd] sm:$0xff]
        %v3569 = vld [vmem:[%s3066 + $0x1d] sm:$0xff]
        %v3570 = vld [vmem:[%s3066 + $0x25] sm:$0xff]
        %v3571 = vld [vmem:[%s3066 + $0x35] sm:$0xff]
        %v3572 = vld [vmem:[%s3066 + $0x3d] sm:$0xff]
        %v3573 = vld [vmem:[%s3066 + $0x4d] sm:$0xff]
        %v3574 = vld [vmem:[%s3066 + $0x55] sm:$0xff]
        %v3575 = vld [vmem:[%s3066 + $0x65] sm:$0xff]
        %v3576 = vld [vmem:[%s3066 + $0x6d] sm:$0xff]
        %v3577 = vld [vmem:[%s3066 + $0x7d] sm:$0xff]
        %v3578 = vld [vmem:[%s3066 + $0x85] sm:$0xff]
        %v3579 = vld [vmem:[%s3066 + $0x95] sm:$0xff]
        %v3580 = vld [vmem:[%s3066 + $0x9d] sm:$0xff]
        %v3581 = vld [vmem:[%s3066 + $0xad] sm:$0xff]
        %v3582 = vld [vmem:[%s3066 + $0xb5] sm:$0xff]
        %v3583 = vld [vmem:[%s3066 + $0xc5] sm:$0xff]
        %v3584 = vld [vmem:[%s3066 + $0xcd] sm:$0xff]
        %v3585 = vld [vmem:[%s3066 + $0xdd] sm:$0xff]
        %v3586 = vld [vmem:[%s3066 + $0xe5] sm:$0xff]
        %v3587 = vld [vmem:[%s3066 + $0xf5] sm:$0xff]
        %v3588 = vld [vmem:[%s3066 + $0xfd] sm:$0xff]
        %v3589 = vld [vmem:[%s3066 + $0x10d] sm:$0xff]
        %v3590 = vld [vmem:[%s3066 + $0x115] sm:$0xff]
        %v3591 = vld [vmem:[%s3066 + $0x125] sm:$0xff]
        %v3592 = vld [vmem:[%s3066 + $0x12d] sm:$0xff]
        %v3593 = vld [vmem:[%s3066 + $0x13d] sm:$0xff]
        %v3594 = vld [vmem:[%s3066 + $0x145] sm:$0xff]
        %v3595 = vld [vmem:[%s3066 + $0x155] sm:$0xff]
        %v3596 = vld [vmem:[%s3066 + $0x15d] sm:$0xff]
        %v3597 = vld [vmem:[%s3066 + $0x16d] sm:$0xff]
        %v3598 = vld [vmem:[%s3066 + $0x175] sm:$0xff]
        %v3599 = vlaneseq
        %v3600 = vshrl.u32 %v3599, 7
        %v3601 = vsub.s32 1, %v3600
        %v3602 = vrot.slane %v256, %v3601
        %v3603 = vmul.f32 %v3567, %v3602
        %v3604 = vmul.f32 %v3568, %v3602
        %v3605 = vmul.f32 %v3569, %v3602
        %v3606 = vmul.f32 %v3570, %v3602
        %v3607 = vmul.f32 %v3571, %v3602
        %v3608 = vmul.f32 %v3572, %v3602
        %v3609 = vmul.f32 %v3573, %v3602
        %v3610 = vmul.f32 %v3574, %v3602
        %v3611 = vmul.f32 %v3575, %v3602
        %v3612 = vmul.f32 %v3576, %v3602
        %v3613 = vmul.f32 %v3577, %v3602
        %v3614 = vmul.f32 %v3578, %v3602
        %v3615 = vmul.f32 %v3579, %v3602
        %v3616 = vmul.f32 %v3580, %v3602
        %v3617 = vmul.f32 %v3581, %v3602
        %v3618 = vmul.f32 %v3582, %v3602
        %v3619 = vmul.f32 %v3583, %v3602
        %v3620 = vmul.f32 %v3584, %v3602
        %v3621 = vmul.f32 %v3585, %v3602
        %v3622 = vmul.f32 %v3586, %v3602
        %v3623 = vmul.f32 %v3587, %v3602
        %v3624 = vmul.f32 %v3588, %v3602
        %v3625 = vmul.f32 %v3589, %v3602
        %v3626 = vmul.f32 %v3590, %v3602
        %v3627 = vmul.f32 %v3591, %v3602
        %v3628 = vmul.f32 %v3592, %v3602
        %v3629 = vmul.f32 %v3593, %v3602
        %v3630 = vmul.f32 %v3594, %v3602
        %v3631 = vmul.f32 %v3595, %v3602
        %v3632 = vmul.f32 %v3596, %v3602
        %v3633 = vmul.f32 %v3597, %v3602
        %v3634 = vmul.f32 %v3598, %v3602
        %v3635 = vadd.f32 %v3535, %v3603
        %v3636 = vadd.f32 %v3536, %v3604
        %v3637 = vadd.f32 %v3537, %v3605
        %v3638 = vadd.f32 %v3538, %v3606
        %v3639 = vadd.f32 %v3539, %v3607
        %v3640 = vadd.f32 %v3540, %v3608
        %v3641 = vadd.f32 %v3541, %v3609
        %v3642 = vadd.f32 %v3542, %v3610
        %v3643 = vadd.f32 %v3543, %v3611
        %v3644 = vadd.f32 %v3544, %v3612
        %v3645 = vadd.f32 %v3545, %v3613
        %v3646 = vadd.f32 %v3546, %v3614
        %v3647 = vadd.f32 %v3547, %v3615
        %v3648 = vadd.f32 %v3548, %v3616
        %v3649 = vadd.f32 %v3549, %v3617
        %v3650 = vadd.f32 %v3550, %v3618
        %v3651 = vadd.f32 %v3551, %v3619
        %v3652 = vadd.f32 %v3552, %v3620
        %v3653 = vadd.f32 %v3553, %v3621
        %v3654 = vadd.f32 %v3554, %v3622
        %v3655 = vadd.f32 %v3555, %v3623
        %v3656 = vadd.f32 %v3556, %v3624
        %v3657 = vadd.f32 %v3557, %v3625
        %v3658 = vadd.f32 %v3558, %v3626
        %v3659 = vadd.f32 %v3559, %v3627
        %v3660 = vadd.f32 %v3560, %v3628
        %v3661 = vadd.f32 %v3561, %v3629
        %v3662 = vadd.f32 %v3562, %v3630
        %v3663 = vadd.f32 %v3563, %v3631
        %v3664 = vadd.f32 %v3564, %v3632
        %v3665 = vadd.f32 %v3565, %v3633
        %v3666 = vadd.f32 %v3566, %v3634
        %v3667 = vld [vmem:[%s3066 + $0x6] sm:$0xff]
        %v3668 = vld [vmem:[%s3066 + $0xe] sm:$0xff]
        %v3669 = vld [vmem:[%s3066 + $0x1e] sm:$0xff]
        %v3670 = vld [vmem:[%s3066 + $0x26] sm:$0xff]
        %v3671 = vld [vmem:[%s3066 + $0x36] sm:$0xff]
        %v3672 = vld [vmem:[%s3066 + $0x3e] sm:$0xff]
        %v3673 = vld [vmem:[%s3066 + $0x4e] sm:$0xff]
        %v3674 = vld [vmem:[%s3066 + $0x56] sm:$0xff]
        %v3675 = vld [vmem:[%s3066 + $0x66] sm:$0xff]
        %v3676 = vld [vmem:[%s3066 + $0x6e] sm:$0xff]
        %v3677 = vld [vmem:[%s3066 + $0x7e] sm:$0xff]
        %v3678 = vld [vmem:[%s3066 + $0x86] sm:$0xff]
        %v3679 = vld [vmem:[%s3066 + $0x96] sm:$0xff]
        %v3680 = vld [vmem:[%s3066 + $0x9e] sm:$0xff]
        %v3681 = vld [vmem:[%s3066 + $0xae] sm:$0xff]
        %v3682 = vld [vmem:[%s3066 + $0xb6] sm:$0xff]
        %v3683 = vld [vmem:[%s3066 + $0xc6] sm:$0xff]
        %v3684 = vld [vmem:[%s3066 + $0xce] sm:$0xff]
        %v3685 = vld [vmem:[%s3066 + $0xde] sm:$0xff]
        %v3686 = vld [vmem:[%s3066 + $0xe6] sm:$0xff]
        %v3687 = vld [vmem:[%s3066 + $0xf6] sm:$0xff]
        %v3688 = vld [vmem:[%s3066 + $0xfe] sm:$0xff]
        %v3689 = vld [vmem:[%s3066 + $0x10e] sm:$0xff]
        %v3690 = vld [vmem:[%s3066 + $0x116] sm:$0xff]
        %v3691 = vld [vmem:[%s3066 + $0x126] sm:$0xff]
        %v3692 = vld [vmem:[%s3066 + $0x12e] sm:$0xff]
        %v3693 = vld [vmem:[%s3066 + $0x13e] sm:$0xff]
        %v3694 = vld [vmem:[%s3066 + $0x146] sm:$0xff]
        %v3695 = vld [vmem:[%s3066 + $0x156] sm:$0xff]
        %v3696 = vld [vmem:[%s3066 + $0x15e] sm:$0xff]
        %v3697 = vld [vmem:[%s3066 + $0x16e] sm:$0xff]
        %v3698 = vld [vmem:[%s3066 + $0x176] sm:$0xff]
        %v3699 = vlaneseq
        %v3700 = vshrl.u32 %v3699, 7
        %v3701 = vsub.s32 2, %v3700
        %v3702 = vrot.slane %v256, %v3701
        %v3703 = vmul.f32 %v3667, %v3702
        %v3704 = vmul.f32 %v3668, %v3702
        %v3705 = vmul.f32 %v3669, %v3702
        %v3706 = vmul.f32 %v3670, %v3702
        %v3707 = vmul.f32 %v3671, %v3702
        %v3708 = vmul.f32 %v3672, %v3702
        %v3709 = vmul.f32 %v3673, %v3702
        %v3710 = vmul.f32 %v3674, %v3702
        %v3711 = vmul.f32 %v3675, %v3702
        %v3712 = vmul.f32 %v3676, %v3702
        %v3713 = vmul.f32 %v3677, %v3702
        %v3714 = vmul.f32 %v3678, %v3702
        %v3715 = vmul.f32 %v3679, %v3702
        %v3716 = vmul.f32 %v3680, %v3702
        %v3717 = vmul.f32 %v3681, %v3702
        %v3718 = vmul.f32 %v3682, %v3702
        %v3719 = vmul.f32 %v3683, %v3702
        %v3720 = vmul.f32 %v3684, %v3702
        %v3721 = vmul.f32 %v3685, %v3702
        %v3722 = vmul.f32 %v3686, %v3702
        %v3723 = vmul.f32 %v3687, %v3702
        %v3724 = vmul.f32 %v3688, %v3702
        %v3725 = vmul.f32 %v3689, %v3702
        %v3726 = vmul.f32 %v3690, %v3702
        %v3727 = vmul.f32 %v3691, %v3702
        %v3728 = vmul.f32 %v3692, %v3702
        %v3729 = vmul.f32 %v3693, %v3702
        %v3730 = vmul.f32 %v3694, %v3702
        %v3731 = vmul.f32 %v3695, %v3702
        %v3732 = vmul.f32 %v3696, %v3702
        %v3733 = vmul.f32 %v3697, %v3702
        %v3734 = vmul.f32 %v3698, %v3702
        %v3735 = vadd.f32 %v3635, %v3703
        %v3736 = vadd.f32 %v3636, %v3704
        %v3737 = vadd.f32 %v3637, %v3705
        %v3738 = vadd.f32 %v3638, %v3706
        %v3739 = vadd.f32 %v3639, %v3707
        %v3740 = vadd.f32 %v3640, %v3708
        %v3741 = vadd.f32 %v3641, %v3709
        %v3742 = vadd.f32 %v3642, %v3710
        %v3743 = vadd.f32 %v3643, %v3711
        %v3744 = vadd.f32 %v3644, %v3712
        %v3745 = vadd.f32 %v3645, %v3713
        %v3746 = vadd.f32 %v3646, %v3714
        %v3747 = vadd.f32 %v3647, %v3715
        %v3748 = vadd.f32 %v3648, %v3716
        %v3749 = vadd.f32 %v3649, %v3717
        %v3750 = vadd.f32 %v3650, %v3718
        %v3751 = vadd.f32 %v3651, %v3719
        %v3752 = vadd.f32 %v3652, %v3720
        %v3753 = vadd.f32 %v3653, %v3721
        %v3754 = vadd.f32 %v3654, %v3722
        %v3755 = vadd.f32 %v3655, %v3723
        %v3756 = vadd.f32 %v3656, %v3724
        %v3757 = vadd.f32 %v3657, %v3725
        %v3758 = vadd.f32 %v3658, %v3726
        %v3759 = vadd.f32 %v3659, %v3727
        %v3760 = vadd.f32 %v3660, %v3728
        %v3761 = vadd.f32 %v3661, %v3729
        %v3762 = vadd.f32 %v3662, %v3730
        %v3763 = vadd.f32 %v3663, %v3731
        %v3764 = vadd.f32 %v3664, %v3732
        %v3765 = vadd.f32 %v3665, %v3733
        %v3766 = vadd.f32 %v3666, %v3734
        %s3767 = scalar_lea.vmem %s249, 120
        %v3768 = vld [vmem:[%s3767] sm:$0xff]
        %v3769 = vld [vmem:[%s3767 + $0x8] sm:$0xff]
        %v3770 = vld [vmem:[%s3767 + $0x18] sm:$0xff]
        %v3771 = vld [vmem:[%s3767 + $0x20] sm:$0xff]
        %v3772 = vld [vmem:[%s3767 + $0x30] sm:$0xff]
        %v3773 = vld [vmem:[%s3767 + $0x38] sm:$0xff]
        %v3774 = vld [vmem:[%s3767 + $0x48] sm:$0xff]
        %v3775 = vld [vmem:[%s3767 + $0x50] sm:$0xff]
        %v3776 = vld [vmem:[%s3767 + $0x60] sm:$0xff]
        %v3777 = vld [vmem:[%s3767 + $0x68] sm:$0xff]
        %v3778 = vld [vmem:[%s3767 + $0x78] sm:$0xff]
        %v3779 = vld [vmem:[%s3767 + $0x80] sm:$0xff]
        %v3780 = vld [vmem:[%s3767 + $0x90] sm:$0xff]
        %v3781 = vld [vmem:[%s3767 + $0x98] sm:$0xff]
        %v3782 = vld [vmem:[%s3767 + $0xa8] sm:$0xff]
        %v3783 = vld [vmem:[%s3767 + $0xb0] sm:$0xff]
        %v3784 = vld [vmem:[%s3767 + $0xc0] sm:$0xff]
        %v3785 = vld [vmem:[%s3767 + $0xc8] sm:$0xff]
        %v3786 = vld [vmem:[%s3767 + $0xd8] sm:$0xff]
        %v3787 = vld [vmem:[%s3767 + $0xe0] sm:$0xff]
        %v3788 = vld [vmem:[%s3767 + $0xf0] sm:$0xff]
        %v3789 = vld [vmem:[%s3767 + $0xf8] sm:$0xff]
        %v3790 = vld [vmem:[%s3767 + $0x108] sm:$0xff]
        %v3791 = vld [vmem:[%s3767 + $0x110] sm:$0xff]
        %v3792 = vld [vmem:[%s3767 + $0x120] sm:$0xff]
        %v3793 = vld [vmem:[%s3767 + $0x128] sm:$0xff]
        %v3794 = vld [vmem:[%s3767 + $0x138] sm:$0xff]
        %v3795 = vld [vmem:[%s3767 + $0x140] sm:$0xff]
        %v3796 = vld [vmem:[%s3767 + $0x150] sm:$0xff]
        %v3797 = vld [vmem:[%s3767 + $0x158] sm:$0xff]
        %v3798 = vld [vmem:[%s3767 + $0x168] sm:$0xff]
        %v3799 = vld [vmem:[%s3767 + $0x170] sm:$0xff]
        %v3800 = vlaneseq
        %v3801 = vshrl.u32 %v3800, 7
        %v3802 = vsub.s32 3, %v3801
        %v3803 = vrot.slane %v256, %v3802
        %v3804 = vmul.f32 %v3768, %v3803
        %v3805 = vmul.f32 %v3769, %v3803
        %v3806 = vmul.f32 %v3770, %v3803
        %v3807 = vmul.f32 %v3771, %v3803
        %v3808 = vmul.f32 %v3772, %v3803
        %v3809 = vmul.f32 %v3773, %v3803
        %v3810 = vmul.f32 %v3774, %v3803
        %v3811 = vmul.f32 %v3775, %v3803
        %v3812 = vmul.f32 %v3776, %v3803
        %v3813 = vmul.f32 %v3777, %v3803
        %v3814 = vmul.f32 %v3778, %v3803
        %v3815 = vmul.f32 %v3779, %v3803
        %v3816 = vmul.f32 %v3780, %v3803
        %v3817 = vmul.f32 %v3781, %v3803
        %v3818 = vmul.f32 %v3782, %v3803
        %v3819 = vmul.f32 %v3783, %v3803
        %v3820 = vmul.f32 %v3784, %v3803
        %v3821 = vmul.f32 %v3785, %v3803
        %v3822 = vmul.f32 %v3786, %v3803
        %v3823 = vmul.f32 %v3787, %v3803
        %v3824 = vmul.f32 %v3788, %v3803
        %v3825 = vmul.f32 %v3789, %v3803
        %v3826 = vmul.f32 %v3790, %v3803
        %v3827 = vmul.f32 %v3791, %v3803
        %v3828 = vmul.f32 %v3792, %v3803
        %v3829 = vmul.f32 %v3793, %v3803
        %v3830 = vmul.f32 %v3794, %v3803
        %v3831 = vmul.f32 %v3795, %v3803
        %v3832 = vmul.f32 %v3796, %v3803
        %v3833 = vmul.f32 %v3797, %v3803
        %v3834 = vmul.f32 %v3798, %v3803
        %v3835 = vmul.f32 %v3799, %v3803
        %v3836 = vadd.f32 %v3735, %v3804
        %v3837 = vadd.f32 %v3736, %v3805
        %v3838 = vadd.f32 %v3737, %v3806
        %v3839 = vadd.f32 %v3738, %v3807
        %v3840 = vadd.f32 %v3739, %v3808
        %v3841 = vadd.f32 %v3740, %v3809
        %v3842 = vadd.f32 %v3741, %v3810
        %v3843 = vadd.f32 %v3742, %v3811
        %v3844 = vadd.f32 %v3743, %v3812
        %v3845 = vadd.f32 %v3744, %v3813
        %v3846 = vadd.f32 %v3745, %v3814
        %v3847 = vadd.f32 %v3746, %v3815
        %v3848 = vadd.f32 %v3747, %v3816
        %v3849 = vadd.f32 %v3748, %v3817
        %v3850 = vadd.f32 %v3749, %v3818
        %v3851 = vadd.f32 %v3750, %v3819
        %v3852 = vadd.f32 %v3751, %v3820
        %v3853 = vadd.f32 %v3752, %v3821
        %v3854 = vadd.f32 %v3753, %v3822
        %v3855 = vadd.f32 %v3754, %v3823
        %v3856 = vadd.f32 %v3755, %v3824
        %v3857 = vadd.f32 %v3756, %v3825
        %v3858 = vadd.f32 %v3757, %v3826
        %v3859 = vadd.f32 %v3758, %v3827
        %v3860 = vadd.f32 %v3759, %v3828
        %v3861 = vadd.f32 %v3760, %v3829
        %v3862 = vadd.f32 %v3761, %v3830
        %v3863 = vadd.f32 %v3762, %v3831
        %v3864 = vadd.f32 %v3763, %v3832
        %v3865 = vadd.f32 %v3764, %v3833
        %v3866 = vadd.f32 %v3765, %v3834
        %v3867 = vadd.f32 %v3766, %v3835
        %v3868 = vld [vmem:[%s3767 + $0x1] sm:$0xff]
        %v3869 = vld [vmem:[%s3767 + $0x9] sm:$0xff]
        %v3870 = vld [vmem:[%s3767 + $0x19] sm:$0xff]
        %v3871 = vld [vmem:[%s3767 + $0x21] sm:$0xff]
        %v3872 = vld [vmem:[%s3767 + $0x31] sm:$0xff]
        %v3873 = vld [vmem:[%s3767 + $0x39] sm:$0xff]
        %v3874 = vld [vmem:[%s3767 + $0x49] sm:$0xff]
        %v3875 = vld [vmem:[%s3767 + $0x51] sm:$0xff]
        %v3876 = vld [vmem:[%s3767 + $0x61] sm:$0xff]
        %v3877 = vld [vmem:[%s3767 + $0x69] sm:$0xff]
        %v3878 = vld [vmem:[%s3767 + $0x79] sm:$0xff]
        %v3879 = vld [vmem:[%s3767 + $0x81] sm:$0xff]
        %v3880 = vld [vmem:[%s3767 + $0x91] sm:$0xff]
        %v3881 = vld [vmem:[%s3767 + $0x99] sm:$0xff]
        %v3882 = vld [vmem:[%s3767 + $0xa9] sm:$0xff]
        %v3883 = vld [vmem:[%s3767 + $0xb1] sm:$0xff]
        %v3884 = vld [vmem:[%s3767 + $0xc1] sm:$0xff]
        %v3885 = vld [vmem:[%s3767 + $0xc9] sm:$0xff]
        %v3886 = vld [vmem:[%s3767 + $0xd9] sm:$0xff]
        %v3887 = vld [vmem:[%s3767 + $0xe1] sm:$0xff]
        %v3888 = vld [vmem:[%s3767 + $0xf1] sm:$0xff]
        %v3889 = vld [vmem:[%s3767 + $0xf9] sm:$0xff]
        %v3890 = vld [vmem:[%s3767 + $0x109] sm:$0xff]
        %v3891 = vld [vmem:[%s3767 + $0x111] sm:$0xff]
        %v3892 = vld [vmem:[%s3767 + $0x121] sm:$0xff]
        %v3893 = vld [vmem:[%s3767 + $0x129] sm:$0xff]
        %v3894 = vld [vmem:[%s3767 + $0x139] sm:$0xff]
        %v3895 = vld [vmem:[%s3767 + $0x141] sm:$0xff]
        %v3896 = vld [vmem:[%s3767 + $0x151] sm:$0xff]
        %v3897 = vld [vmem:[%s3767 + $0x159] sm:$0xff]
        %v3898 = vld [vmem:[%s3767 + $0x169] sm:$0xff]
        %v3899 = vld [vmem:[%s3767 + $0x171] sm:$0xff]
        %v3900 = vlaneseq
        %v3901 = vshrl.u32 %v3900, 7
        %v3902 = vsub.s32 4, %v3901
        %v3903 = vrot.slane %v256, %v3902
        %v3904 = vmul.f32 %v3868, %v3903
        %v3905 = vmul.f32 %v3869, %v3903
        %v3906 = vmul.f32 %v3870, %v3903
        %v3907 = vmul.f32 %v3871, %v3903
        %v3908 = vmul.f32 %v3872, %v3903
        %v3909 = vmul.f32 %v3873, %v3903
        %v3910 = vmul.f32 %v3874, %v3903
        %v3911 = vmul.f32 %v3875, %v3903
        %v3912 = vmul.f32 %v3876, %v3903
        %v3913 = vmul.f32 %v3877, %v3903
        %v3914 = vmul.f32 %v3878, %v3903
        %v3915 = vmul.f32 %v3879, %v3903
        %v3916 = vmul.f32 %v3880, %v3903
        %v3917 = vmul.f32 %v3881, %v3903
        %v3918 = vmul.f32 %v3882, %v3903
        %v3919 = vmul.f32 %v3883, %v3903
        %v3920 = vmul.f32 %v3884, %v3903
        %v3921 = vmul.f32 %v3885, %v3903
        %v3922 = vmul.f32 %v3886, %v3903
        %v3923 = vmul.f32 %v3887, %v3903
        %v3924 = vmul.f32 %v3888, %v3903
        %v3925 = vmul.f32 %v3889, %v3903
        %v3926 = vmul.f32 %v3890, %v3903
        %v3927 = vmul.f32 %v3891, %v3903
        %v3928 = vmul.f32 %v3892, %v3903
        %v3929 = vmul.f32 %v3893, %v3903
        %v3930 = vmul.f32 %v3894, %v3903
        %v3931 = vmul.f32 %v3895, %v3903
        %v3932 = vmul.f32 %v3896, %v3903
        %v3933 = vmul.f32 %v3897, %v3903
        %v3934 = vmul.f32 %v3898, %v3903
        %v3935 = vmul.f32 %v3899, %v3903
        %v3936 = vadd.f32 %v3836, %v3904
        %v3937 = vadd.f32 %v3837, %v3905
        %v3938 = vadd.f32 %v3838, %v3906
        %v3939 = vadd.f32 %v3839, %v3907
        %v3940 = vadd.f32 %v3840, %v3908
        %v3941 = vadd.f32 %v3841, %v3909
        %v3942 = vadd.f32 %v3842, %v3910
        %v3943 = vadd.f32 %v3843, %v3911
        %v3944 = vadd.f32 %v3844, %v3912
        %v3945 = vadd.f32 %v3845, %v3913
        %v3946 = vadd.f32 %v3846, %v3914
        %v3947 = vadd.f32 %v3847, %v3915
        %v3948 = vadd.f32 %v3848, %v3916
        %v3949 = vadd.f32 %v3849, %v3917
        %v3950 = vadd.f32 %v3850, %v3918
        %v3951 = vadd.f32 %v3851, %v3919
        %v3952 = vadd.f32 %v3852, %v3920
        %v3953 = vadd.f32 %v3853, %v3921
        %v3954 = vadd.f32 %v3854, %v3922
        %v3955 = vadd.f32 %v3855, %v3923
        %v3956 = vadd.f32 %v3856, %v3924
        %v3957 = vadd.f32 %v3857, %v3925
        %v3958 = vadd.f32 %v3858, %v3926
        %v3959 = vadd.f32 %v3859, %v3927
        %v3960 = vadd.f32 %v3860, %v3928
        %v3961 = vadd.f32 %v3861, %v3929
        %v3962 = vadd.f32 %v3862, %v3930
        %v3963 = vadd.f32 %v3863, %v3931
        %v3964 = vadd.f32 %v3864, %v3932
        %v3965 = vadd.f32 %v3865, %v3933
        %v3966 = vadd.f32 %v3866, %v3934
        %v3967 = vadd.f32 %v3867, %v3935
        %v3968 = vld [vmem:[%s3767 + $0x2] sm:$0xff]
        %v3969 = vld [vmem:[%s3767 + $0xa] sm:$0xff]
        %v3970 = vld [vmem:[%s3767 + $0x1a] sm:$0xff]
        %v3971 = vld [vmem:[%s3767 + $0x22] sm:$0xff]
        %v3972 = vld [vmem:[%s3767 + $0x32] sm:$0xff]
        %v3973 = vld [vmem:[%s3767 + $0x3a] sm:$0xff]
        %v3974 = vld [vmem:[%s3767 + $0x4a] sm:$0xff]
        %v3975 = vld [vmem:[%s3767 + $0x52] sm:$0xff]
        %v3976 = vld [vmem:[%s3767 + $0x62] sm:$0xff]
        %v3977 = vld [vmem:[%s3767 + $0x6a] sm:$0xff]
        %v3978 = vld [vmem:[%s3767 + $0x7a] sm:$0xff]
        %v3979 = vld [vmem:[%s3767 + $0x82] sm:$0xff]
        %v3980 = vld [vmem:[%s3767 + $0x92] sm:$0xff]
        %v3981 = vld [vmem:[%s3767 + $0x9a] sm:$0xff]
        %v3982 = vld [vmem:[%s3767 + $0xaa] sm:$0xff]
        %v3983 = vld [vmem:[%s3767 + $0xb2] sm:$0xff]
        %v3984 = vld [vmem:[%s3767 + $0xc2] sm:$0xff]
        %v3985 = vld [vmem:[%s3767 + $0xca] sm:$0xff]
        %v3986 = vld [vmem:[%s3767 + $0xda] sm:$0xff]
        %v3987 = vld [vmem:[%s3767 + $0xe2] sm:$0xff]
        %v3988 = vld [vmem:[%s3767 + $0xf2] sm:$0xff]
        %v3989 = vld [vmem:[%s3767 + $0xfa] sm:$0xff]
        %v3990 = vld [vmem:[%s3767 + $0x10a] sm:$0xff]
        %v3991 = vld [vmem:[%s3767 + $0x112] sm:$0xff]
        %v3992 = vld [vmem:[%s3767 + $0x122] sm:$0xff]
        %v3993 = vld [vmem:[%s3767 + $0x12a] sm:$0xff]
        %v3994 = vld [vmem:[%s3767 + $0x13a] sm:$0xff]
        %v3995 = vld [vmem:[%s3767 + $0x142] sm:$0xff]
        %v3996 = vld [vmem:[%s3767 + $0x152] sm:$0xff]
        %v3997 = vld [vmem:[%s3767 + $0x15a] sm:$0xff]
        %v3998 = vld [vmem:[%s3767 + $0x16a] sm:$0xff]
        %v3999 = vld [vmem:[%s3767 + $0x172] sm:$0xff]
        %v4000 = vlaneseq
        %v4001 = vshrl.u32 %v4000, 7
        %v4002 = vsub.s32 5, %v4001
        %v4003 = vrot.slane %v256, %v4002
        %v4004 = vmul.f32 %v3968, %v4003
        %v4005 = vmul.f32 %v3969, %v4003
        %v4006 = vmul.f32 %v3970, %v4003
        %v4007 = vmul.f32 %v3971, %v4003
        %v4008 = vmul.f32 %v3972, %v4003
        %v4009 = vmul.f32 %v3973, %v4003
        %v4010 = vmul.f32 %v3974, %v4003
        %v4011 = vmul.f32 %v3975, %v4003
        %v4012 = vmul.f32 %v3976, %v4003
        %v4013 = vmul.f32 %v3977, %v4003
        %v4014 = vmul.f32 %v3978, %v4003
        %v4015 = vmul.f32 %v3979, %v4003
        %v4016 = vmul.f32 %v3980, %v4003
        %v4017 = vmul.f32 %v3981, %v4003
        %v4018 = vmul.f32 %v3982, %v4003
        %v4019 = vmul.f32 %v3983, %v4003
        %v4020 = vmul.f32 %v3984, %v4003
        %v4021 = vmul.f32 %v3985, %v4003
        %v4022 = vmul.f32 %v3986, %v4003
        %v4023 = vmul.f32 %v3987, %v4003
        %v4024 = vmul.f32 %v3988, %v4003
        %v4025 = vmul.f32 %v3989, %v4003
        %v4026 = vmul.f32 %v3990, %v4003
        %v4027 = vmul.f32 %v3991, %v4003
        %v4028 = vmul.f32 %v3992, %v4003
        %v4029 = vmul.f32 %v3993, %v4003
        %v4030 = vmul.f32 %v3994, %v4003
        %v4031 = vmul.f32 %v3995, %v4003
        %v4032 = vmul.f32 %v3996, %v4003
        %v4033 = vmul.f32 %v3997, %v4003
        %v4034 = vmul.f32 %v3998, %v4003
        %v4035 = vmul.f32 %v3999, %v4003
        %v4036 = vadd.f32 %v3936, %v4004
        %v4037 = vadd.f32 %v3937, %v4005
        %v4038 = vadd.f32 %v3938, %v4006
        %v4039 = vadd.f32 %v3939, %v4007
        %v4040 = vadd.f32 %v3940, %v4008
        %v4041 = vadd.f32 %v3941, %v4009
        %v4042 = vadd.f32 %v3942, %v4010
        %v4043 = vadd.f32 %v3943, %v4011
        %v4044 = vadd.f32 %v3944, %v4012
        %v4045 = vadd.f32 %v3945, %v4013
        %v4046 = vadd.f32 %v3946, %v4014
        %v4047 = vadd.f32 %v3947, %v4015
        %v4048 = vadd.f32 %v3948, %v4016
        %v4049 = vadd.f32 %v3949, %v4017
        %v4050 = vadd.f32 %v3950, %v4018
        %v4051 = vadd.f32 %v3951, %v4019
        %v4052 = vadd.f32 %v3952, %v4020
        %v4053 = vadd.f32 %v3953, %v4021
        %v4054 = vadd.f32 %v3954, %v4022
        %v4055 = vadd.f32 %v3955, %v4023
        %v4056 = vadd.f32 %v3956, %v4024
        %v4057 = vadd.f32 %v3957, %v4025
        %v4058 = vadd.f32 %v3958, %v4026
        %v4059 = vadd.f32 %v3959, %v4027
        %v4060 = vadd.f32 %v3960, %v4028
        %v4061 = vadd.f32 %v3961, %v4029
        %v4062 = vadd.f32 %v3962, %v4030
        %v4063 = vadd.f32 %v3963, %v4031
        %v4064 = vadd.f32 %v3964, %v4032
        %v4065 = vadd.f32 %v3965, %v4033
        %v4066 = vadd.f32 %v3966, %v4034
        %v4067 = vadd.f32 %v3967, %v4035
        %v4068 = vld [vmem:[%s3767 + $0x3] sm:$0xff]
        %v4069 = vld [vmem:[%s3767 + $0xb] sm:$0xff]
        %v4070 = vld [vmem:[%s3767 + $0x1b] sm:$0xff]
        %v4071 = vld [vmem:[%s3767 + $0x23] sm:$0xff]
        %v4072 = vld [vmem:[%s3767 + $0x33] sm:$0xff]
        %v4073 = vld [vmem:[%s3767 + $0x3b] sm:$0xff]
        %v4074 = vld [vmem:[%s3767 + $0x4b] sm:$0xff]
        %v4075 = vld [vmem:[%s3767 + $0x53] sm:$0xff]
        %v4076 = vld [vmem:[%s3767 + $0x63] sm:$0xff]
        %v4077 = vld [vmem:[%s3767 + $0x6b] sm:$0xff]
        %v4078 = vld [vmem:[%s3767 + $0x7b] sm:$0xff]
        %v4079 = vld [vmem:[%s3767 + $0x83] sm:$0xff]
        %v4080 = vld [vmem:[%s3767 + $0x93] sm:$0xff]
        %v4081 = vld [vmem:[%s3767 + $0x9b] sm:$0xff]
        %v4082 = vld [vmem:[%s3767 + $0xab] sm:$0xff]
        %v4083 = vld [vmem:[%s3767 + $0xb3] sm:$0xff]
        %v4084 = vld [vmem:[%s3767 + $0xc3] sm:$0xff]
        %v4085 = vld [vmem:[%s3767 + $0xcb] sm:$0xff]
        %v4086 = vld [vmem:[%s3767 + $0xdb] sm:$0xff]
        %v4087 = vld [vmem:[%s3767 + $0xe3] sm:$0xff]
        %v4088 = vld [vmem:[%s3767 + $0xf3] sm:$0xff]
        %v4089 = vld [vmem:[%s3767 + $0xfb] sm:$0xff]
        %v4090 = vld [vmem:[%s3767 + $0x10b] sm:$0xff]
        %v4091 = vld [vmem:[%s3767 + $0x113] sm:$0xff]
        %v4092 = vld [vmem:[%s3767 + $0x123] sm:$0xff]
        %v4093 = vld [vmem:[%s3767 + $0x12b] sm:$0xff]
        %v4094 = vld [vmem:[%s3767 + $0x13b] sm:$0xff]
        %v4095 = vld [vmem:[%s3767 + $0x143] sm:$0xff]
        %v4096 = vld [vmem:[%s3767 + $0x153] sm:$0xff]
        %v4097 = vld [vmem:[%s3767 + $0x15b] sm:$0xff]
        %v4098 = vld [vmem:[%s3767 + $0x16b] sm:$0xff]
        %v4099 = vld [vmem:[%s3767 + $0x173] sm:$0xff]
        %v4100 = vlaneseq
        %v4101 = vshrl.u32 %v4100, 7
        %v4102 = vsub.s32 6, %v4101
        %v4103 = vrot.slane %v256, %v4102
        %v4104 = vmul.f32 %v4068, %v4103
        %v4105 = vmul.f32 %v4069, %v4103
        %v4106 = vmul.f32 %v4070, %v4103
        %v4107 = vmul.f32 %v4071, %v4103
        %v4108 = vmul.f32 %v4072, %v4103
        %v4109 = vmul.f32 %v4073, %v4103
        %v4110 = vmul.f32 %v4074, %v4103
        %v4111 = vmul.f32 %v4075, %v4103
        %v4112 = vmul.f32 %v4076, %v4103
        %v4113 = vmul.f32 %v4077, %v4103
        %v4114 = vmul.f32 %v4078, %v4103
        %v4115 = vmul.f32 %v4079, %v4103
        %v4116 = vmul.f32 %v4080, %v4103
        %v4117 = vmul.f32 %v4081, %v4103
        %v4118 = vmul.f32 %v4082, %v4103
        %v4119 = vmul.f32 %v4083, %v4103
        %v4120 = vmul.f32 %v4084, %v4103
        %v4121 = vmul.f32 %v4085, %v4103
        %v4122 = vmul.f32 %v4086, %v4103
        %v4123 = vmul.f32 %v4087, %v4103
        %v4124 = vmul.f32 %v4088, %v4103
        %v4125 = vmul.f32 %v4089, %v4103
        %v4126 = vmul.f32 %v4090, %v4103
        %v4127 = vmul.f32 %v4091, %v4103
        %v4128 = vmul.f32 %v4092, %v4103
        %v4129 = vmul.f32 %v4093, %v4103
        %v4130 = vmul.f32 %v4094, %v4103
        %v4131 = vmul.f32 %v4095, %v4103
        %v4132 = vmul.f32 %v4096, %v4103
        %v4133 = vmul.f32 %v4097, %v4103
        %v4134 = vmul.f32 %v4098, %v4103
        %v4135 = vmul.f32 %v4099, %v4103
        %v4136 = vadd.f32 %v4036, %v4104
        %v4137 = vadd.f32 %v4037, %v4105
        %v4138 = vadd.f32 %v4038, %v4106
        %v4139 = vadd.f32 %v4039, %v4107
        %v4140 = vadd.f32 %v4040, %v4108
        %v4141 = vadd.f32 %v4041, %v4109
        %v4142 = vadd.f32 %v4042, %v4110
        %v4143 = vadd.f32 %v4043, %v4111
        %v4144 = vadd.f32 %v4044, %v4112
        %v4145 = vadd.f32 %v4045, %v4113
        %v4146 = vadd.f32 %v4046, %v4114
        %v4147 = vadd.f32 %v4047, %v4115
        %v4148 = vadd.f32 %v4048, %v4116
        %v4149 = vadd.f32 %v4049, %v4117
        %v4150 = vadd.f32 %v4050, %v4118
        %v4151 = vadd.f32 %v4051, %v4119
        %v4152 = vadd.f32 %v4052, %v4120
        %v4153 = vadd.f32 %v4053, %v4121
        %v4154 = vadd.f32 %v4054, %v4122
        %v4155 = vadd.f32 %v4055, %v4123
        %v4156 = vadd.f32 %v4056, %v4124
        %v4157 = vadd.f32 %v4057, %v4125
        %v4158 = vadd.f32 %v4058, %v4126
        %v4159 = vadd.f32 %v4059, %v4127
        %v4160 = vadd.f32 %v4060, %v4128
        %v4161 = vadd.f32 %v4061, %v4129
        %v4162 = vadd.f32 %v4062, %v4130
        %v4163 = vadd.f32 %v4063, %v4131
        %v4164 = vadd.f32 %v4064, %v4132
        %v4165 = vadd.f32 %v4065, %v4133
        %v4166 = vadd.f32 %v4066, %v4134
        %v4167 = vadd.f32 %v4067, %v4135
        %v4168 = vld [vmem:[%s3767 + $0x4] sm:$0xff]
        %v4169 = vld [vmem:[%s3767 + $0xc] sm:$0xff]
        %v4170 = vld [vmem:[%s3767 + $0x1c] sm:$0xff]
        %v4171 = vld [vmem:[%s3767 + $0x24] sm:$0xff]
        %v4172 = vld [vmem:[%s3767 + $0x34] sm:$0xff]
        %v4173 = vld [vmem:[%s3767 + $0x3c] sm:$0xff]
        %v4174 = vld [vmem:[%s3767 + $0x4c] sm:$0xff]
        %v4175 = vld [vmem:[%s3767 + $0x54] sm:$0xff]
        %v4176 = vld [vmem:[%s3767 + $0x64] sm:$0xff]
        %v4177 = vld [vmem:[%s3767 + $0x6c] sm:$0xff]
        %v4178 = vld [vmem:[%s3767 + $0x7c] sm:$0xff]
        %v4179 = vld [vmem:[%s3767 + $0x84] sm:$0xff]
        %v4180 = vld [vmem:[%s3767 + $0x94] sm:$0xff]
        %v4181 = vld [vmem:[%s3767 + $0x9c] sm:$0xff]
        %v4182 = vld [vmem:[%s3767 + $0xac] sm:$0xff]
        %v4183 = vld [vmem:[%s3767 + $0xb4] sm:$0xff]
        %v4184 = vld [vmem:[%s3767 + $0xc4] sm:$0xff]
        %v4185 = vld [vmem:[%s3767 + $0xcc] sm:$0xff]
        %v4186 = vld [vmem:[%s3767 + $0xdc] sm:$0xff]
        %v4187 = vld [vmem:[%s3767 + $0xe4] sm:$0xff]
        %v4188 = vld [vmem:[%s3767 + $0xf4] sm:$0xff]
        %v4189 = vld [vmem:[%s3767 + $0xfc] sm:$0xff]
        %v4190 = vld [vmem:[%s3767 + $0x10c] sm:$0xff]
        %v4191 = vld [vmem:[%s3767 + $0x114] sm:$0xff]
        %v4192 = vld [vmem:[%s3767 + $0x124] sm:$0xff]
        %v4193 = vld [vmem:[%s3767 + $0x12c] sm:$0xff]
        %v4194 = vld [vmem:[%s3767 + $0x13c] sm:$0xff]
        %v4195 = vld [vmem:[%s3767 + $0x144] sm:$0xff]
        %v4196 = vld [vmem:[%s3767 + $0x154] sm:$0xff]
        %v4197 = vld [vmem:[%s3767 + $0x15c] sm:$0xff]
        %v4198 = vld [vmem:[%s3767 + $0x16c] sm:$0xff]
        %v4199 = vld [vmem:[%s3767 + $0x174] sm:$0xff]
        %v4200 = vlaneseq
        %v4201 = vshrl.u32 %v4200, 7
        %v4202 = vsub.s32 7, %v4201
        %v4203 = vrot.slane %v256, %v4202
        %v4204 = vmul.f32 %v4168, %v4203
        %v4205 = vmul.f32 %v4169, %v4203
        %v4206 = vmul.f32 %v4170, %v4203
        %v4207 = vmul.f32 %v4171, %v4203
        %v4208 = vmul.f32 %v4172, %v4203
        %v4209 = vmul.f32 %v4173, %v4203
        %v4210 = vmul.f32 %v4174, %v4203
        %v4211 = vmul.f32 %v4175, %v4203
        %v4212 = vmul.f32 %v4176, %v4203
        %v4213 = vmul.f32 %v4177, %v4203
        %v4214 = vmul.f32 %v4178, %v4203
        %v4215 = vmul.f32 %v4179, %v4203
        %v4216 = vmul.f32 %v4180, %v4203
        %v4217 = vmul.f32 %v4181, %v4203
        %v4218 = vmul.f32 %v4182, %v4203
        %v4219 = vmul.f32 %v4183, %v4203
        %v4220 = vmul.f32 %v4184, %v4203
        %v4221 = vmul.f32 %v4185, %v4203
        %v4222 = vmul.f32 %v4186, %v4203
        %v4223 = vmul.f32 %v4187, %v4203
        %v4224 = vmul.f32 %v4188, %v4203
        %v4225 = vmul.f32 %v4189, %v4203
        %v4226 = vmul.f32 %v4190, %v4203
        %v4227 = vmul.f32 %v4191, %v4203
        %v4228 = vmul.f32 %v4192, %v4203
        %v4229 = vmul.f32 %v4193, %v4203
        %v4230 = vmul.f32 %v4194, %v4203
        %v4231 = vmul.f32 %v4195, %v4203
        %v4232 = vmul.f32 %v4196, %v4203
        %v4233 = vmul.f32 %v4197, %v4203
        %v4234 = vmul.f32 %v4198, %v4203
        %v4235 = vmul.f32 %v4199, %v4203
        %v4236 = vadd.f32 %v4136, %v4204
        %v4237 = vadd.f32 %v4137, %v4205
        %v4238 = vadd.f32 %v4138, %v4206
        %v4239 = vadd.f32 %v4139, %v4207
        %v4240 = vadd.f32 %v4140, %v4208
        %v4241 = vadd.f32 %v4141, %v4209
        %v4242 = vadd.f32 %v4142, %v4210
        %v4243 = vadd.f32 %v4143, %v4211
        %v4244 = vadd.f32 %v4144, %v4212
        %v4245 = vadd.f32 %v4145, %v4213
        %v4246 = vadd.f32 %v4146, %v4214
        %v4247 = vadd.f32 %v4147, %v4215
        %v4248 = vadd.f32 %v4148, %v4216
        %v4249 = vadd.f32 %v4149, %v4217
        %v4250 = vadd.f32 %v4150, %v4218
        %v4251 = vadd.f32 %v4151, %v4219
        %v4252 = vadd.f32 %v4152, %v4220
        %v4253 = vadd.f32 %v4153, %v4221
        %v4254 = vadd.f32 %v4154, %v4222
        %v4255 = vadd.f32 %v4155, %v4223
        %v4256 = vadd.f32 %v4156, %v4224
        %v4257 = vadd.f32 %v4157, %v4225
        %v4258 = vadd.f32 %v4158, %v4226
        %v4259 = vadd.f32 %v4159, %v4227
        %v4260 = vadd.f32 %v4160, %v4228
        %v4261 = vadd.f32 %v4161, %v4229
        %v4262 = vadd.f32 %v4162, %v4230
        %v4263 = vadd.f32 %v4163, %v4231
        %v4264 = vadd.f32 %v4164, %v4232
        %v4265 = vadd.f32 %v4165, %v4233
        %v4266 = vadd.f32 %v4166, %v4234
        %v4267 = vadd.f32 %v4167, %v4235
        %v4268 = vld [vmem:[%s3767 + $0x5] sm:$0xff]
        %v4269 = vld [vmem:[%s3767 + $0xd] sm:$0xff]
        %v4270 = vld [vmem:[%s3767 + $0x1d] sm:$0xff]
        %v4271 = vld [vmem:[%s3767 + $0x25] sm:$0xff]
        %v4272 = vld [vmem:[%s3767 + $0x35] sm:$0xff]
        %v4273 = vld [vmem:[%s3767 + $0x3d] sm:$0xff]
        %v4274 = vld [vmem:[%s3767 + $0x4d] sm:$0xff]
        %v4275 = vld [vmem:[%s3767 + $0x55] sm:$0xff]
        %v4276 = vld [vmem:[%s3767 + $0x65] sm:$0xff]
        %v4277 = vld [vmem:[%s3767 + $0x6d] sm:$0xff]
        %v4278 = vld [vmem:[%s3767 + $0x7d] sm:$0xff]
        %v4279 = vld [vmem:[%s3767 + $0x85] sm:$0xff]
        %v4280 = vld [vmem:[%s3767 + $0x95] sm:$0xff]
        %v4281 = vld [vmem:[%s3767 + $0x9d] sm:$0xff]
        %v4282 = vld [vmem:[%s3767 + $0xad] sm:$0xff]
        %v4283 = vld [vmem:[%s3767 + $0xb5] sm:$0xff]
        %v4284 = vld [vmem:[%s3767 + $0xc5] sm:$0xff]
        %v4285 = vld [vmem:[%s3767 + $0xcd] sm:$0xff]
        %v4286 = vld [vmem:[%s3767 + $0xdd] sm:$0xff]
        %v4287 = vld [vmem:[%s3767 + $0xe5] sm:$0xff]
        %v4288 = vld [vmem:[%s3767 + $0xf5] sm:$0xff]
        %v4289 = vld [vmem:[%s3767 + $0xfd] sm:$0xff]
        %v4290 = vld [vmem:[%s3767 + $0x10d] sm:$0xff]
        %v4291 = vld [vmem:[%s3767 + $0x115] sm:$0xff]
        %v4292 = vld [vmem:[%s3767 + $0x125] sm:$0xff]
        %v4293 = vld [vmem:[%s3767 + $0x12d] sm:$0xff]
        %v4294 = vld [vmem:[%s3767 + $0x13d] sm:$0xff]
        %v4295 = vld [vmem:[%s3767 + $0x145] sm:$0xff]
        %v4296 = vld [vmem:[%s3767 + $0x155] sm:$0xff]
        %v4297 = vld [vmem:[%s3767 + $0x15d] sm:$0xff]
        %v4298 = vld [vmem:[%s3767 + $0x16d] sm:$0xff]
        %v4299 = vld [vmem:[%s3767 + $0x175] sm:$0xff]
        %v4300 = vlaneseq
        %v4301 = vshrl.u32 %v4300, 7
        %v4302 = vsub.s32 0, %v4301
        %v4303 = vrot.slane %v257, %v4302
        %v4304 = vmul.f32 %v4268, %v4303
        %v4305 = vmul.f32 %v4269, %v4303
        %v4306 = vmul.f32 %v4270, %v4303
        %v4307 = vmul.f32 %v4271, %v4303
        %v4308 = vmul.f32 %v4272, %v4303
        %v4309 = vmul.f32 %v4273, %v4303
        %v4310 = vmul.f32 %v4274, %v4303
        %v4311 = vmul.f32 %v4275, %v4303
        %v4312 = vmul.f32 %v4276, %v4303
        %v4313 = vmul.f32 %v4277, %v4303
        %v4314 = vmul.f32 %v4278, %v4303
        %v4315 = vmul.f32 %v4279, %v4303
        %v4316 = vmul.f32 %v4280, %v4303
        %v4317 = vmul.f32 %v4281, %v4303
        %v4318 = vmul.f32 %v4282, %v4303
        %v4319 = vmul.f32 %v4283, %v4303
        %v4320 = vmul.f32 %v4284, %v4303
        %v4321 = vmul.f32 %v4285, %v4303
        %v4322 = vmul.f32 %v4286, %v4303
        %v4323 = vmul.f32 %v4287, %v4303
        %v4324 = vmul.f32 %v4288, %v4303
        %v4325 = vmul.f32 %v4289, %v4303
        %v4326 = vmul.f32 %v4290, %v4303
        %v4327 = vmul.f32 %v4291, %v4303
        %v4328 = vmul.f32 %v4292, %v4303
        %v4329 = vmul.f32 %v4293, %v4303
        %v4330 = vmul.f32 %v4294, %v4303
        %v4331 = vmul.f32 %v4295, %v4303
        %v4332 = vmul.f32 %v4296, %v4303
        %v4333 = vmul.f32 %v4297, %v4303
        %v4334 = vmul.f32 %v4298, %v4303
        %v4335 = vmul.f32 %v4299, %v4303
        %v4336 = vadd.f32 %v4236, %v4304
        %v4337 = vadd.f32 %v4237, %v4305
        %v4338 = vadd.f32 %v4238, %v4306
        %v4339 = vadd.f32 %v4239, %v4307
        %v4340 = vadd.f32 %v4240, %v4308
        %v4341 = vadd.f32 %v4241, %v4309
        %v4342 = vadd.f32 %v4242, %v4310
        %v4343 = vadd.f32 %v4243, %v4311
        %v4344 = vadd.f32 %v4244, %v4312
        %v4345 = vadd.f32 %v4245, %v4313
        %v4346 = vadd.f32 %v4246, %v4314
        %v4347 = vadd.f32 %v4247, %v4315
        %v4348 = vadd.f32 %v4248, %v4316
        %v4349 = vadd.f32 %v4249, %v4317
        %v4350 = vadd.f32 %v4250, %v4318
        %v4351 = vadd.f32 %v4251, %v4319
        %v4352 = vadd.f32 %v4252, %v4320
        %v4353 = vadd.f32 %v4253, %v4321
        %v4354 = vadd.f32 %v4254, %v4322
        %v4355 = vadd.f32 %v4255, %v4323
        %v4356 = vadd.f32 %v4256, %v4324
        %v4357 = vadd.f32 %v4257, %v4325
        %v4358 = vadd.f32 %v4258, %v4326
        %v4359 = vadd.f32 %v4259, %v4327
        %v4360 = vadd.f32 %v4260, %v4328
        %v4361 = vadd.f32 %v4261, %v4329
        %v4362 = vadd.f32 %v4262, %v4330
        %v4363 = vadd.f32 %v4263, %v4331
        %v4364 = vadd.f32 %v4264, %v4332
        %v4365 = vadd.f32 %v4265, %v4333
        %v4366 = vadd.f32 %v4266, %v4334
        %v4367 = vadd.f32 %v4267, %v4335
        %v4368 = vld [vmem:[%s3767 + $0x6] sm:$0xff]
        %v4369 = vld [vmem:[%s3767 + $0xe] sm:$0xff]
        %v4370 = vld [vmem:[%s3767 + $0x1e] sm:$0xff]
        %v4371 = vld [vmem:[%s3767 + $0x26] sm:$0xff]
        %v4372 = vld [vmem:[%s3767 + $0x36] sm:$0xff]
        %v4373 = vld [vmem:[%s3767 + $0x3e] sm:$0xff]
        %v4374 = vld [vmem:[%s3767 + $0x4e] sm:$0xff]
        %v4375 = vld [vmem:[%s3767 + $0x56] sm:$0xff]
        %v4376 = vld [vmem:[%s3767 + $0x66] sm:$0xff]
        %v4377 = vld [vmem:[%s3767 + $0x6e] sm:$0xff]
        %v4378 = vld [vmem:[%s3767 + $0x7e] sm:$0xff]
        %v4379 = vld [vmem:[%s3767 + $0x86] sm:$0xff]
        %v4380 = vld [vmem:[%s3767 + $0x96] sm:$0xff]
        %v4381 = vld [vmem:[%s3767 + $0x9e] sm:$0xff]
        %v4382 = vld [vmem:[%s3767 + $0xae] sm:$0xff]
        %v4383 = vld [vmem:[%s3767 + $0xb6] sm:$0xff]
        %v4384 = vld [vmem:[%s3767 + $0xc6] sm:$0xff]
        %v4385 = vld [vmem:[%s3767 + $0xce] sm:$0xff]
        %v4386 = vld [vmem:[%s3767 + $0xde] sm:$0xff]
        %v4387 = vld [vmem:[%s3767 + $0xe6] sm:$0xff]
        %v4388 = vld [vmem:[%s3767 + $0xf6] sm:$0xff]
        %v4389 = vld [vmem:[%s3767 + $0xfe] sm:$0xff]
        %v4390 = vld [vmem:[%s3767 + $0x10e] sm:$0xff]
        %v4391 = vld [vmem:[%s3767 + $0x116] sm:$0xff]
        %v4392 = vld [vmem:[%s3767 + $0x126] sm:$0xff]
        %v4393 = vld [vmem:[%s3767 + $0x12e] sm:$0xff]
        %v4394 = vld [vmem:[%s3767 + $0x13e] sm:$0xff]
        %v4395 = vld [vmem:[%s3767 + $0x146] sm:$0xff]
        %v4396 = vld [vmem:[%s3767 + $0x156] sm:$0xff]
        %v4397 = vld [vmem:[%s3767 + $0x15e] sm:$0xff]
        %v4398 = vld [vmem:[%s3767 + $0x16e] sm:$0xff]
        %v4399 = vld [vmem:[%s3767 + $0x176] sm:$0xff]
        %v4400 = vlaneseq
        %v4401 = vshrl.u32 %v4400, 7
        %v4402 = vsub.s32 1, %v4401
        %v4403 = vrot.slane %v257, %v4402
        %v4404 = vmul.f32 %v4368, %v4403
        %v4405 = vmul.f32 %v4369, %v4403
        %v4406 = vmul.f32 %v4370, %v4403
        %v4407 = vmul.f32 %v4371, %v4403
        %v4408 = vmul.f32 %v4372, %v4403
        %v4409 = vmul.f32 %v4373, %v4403
        %v4410 = vmul.f32 %v4374, %v4403
        %v4411 = vmul.f32 %v4375, %v4403
        %v4412 = vmul.f32 %v4376, %v4403
        %v4413 = vmul.f32 %v4377, %v4403
        %v4414 = vmul.f32 %v4378, %v4403
        %v4415 = vmul.f32 %v4379, %v4403
        %v4416 = vmul.f32 %v4380, %v4403
        %v4417 = vmul.f32 %v4381, %v4403
        %v4418 = vmul.f32 %v4382, %v4403
        %v4419 = vmul.f32 %v4383, %v4403
        %v4420 = vmul.f32 %v4384, %v4403
        %v4421 = vmul.f32 %v4385, %v4403
        %v4422 = vmul.f32 %v4386, %v4403
        %v4423 = vmul.f32 %v4387, %v4403
        %v4424 = vmul.f32 %v4388, %v4403
        %v4425 = vmul.f32 %v4389, %v4403
        %v4426 = vmul.f32 %v4390, %v4403
        %v4427 = vmul.f32 %v4391, %v4403
        %v4428 = vmul.f32 %v4392, %v4403
        %v4429 = vmul.f32 %v4393, %v4403
        %v4430 = vmul.f32 %v4394, %v4403
        %v4431 = vmul.f32 %v4395, %v4403
        %v4432 = vmul.f32 %v4396, %v4403
        %v4433 = vmul.f32 %v4397, %v4403
        %v4434 = vmul.f32 %v4398, %v4403
        %v4435 = vmul.f32 %v4399, %v4403
        %v4436 = vadd.f32 %v4336, %v4404
        %v4437 = vadd.f32 %v4337, %v4405
        %v4438 = vadd.f32 %v4338, %v4406
        %v4439 = vadd.f32 %v4339, %v4407
        %v4440 = vadd.f32 %v4340, %v4408
        %v4441 = vadd.f32 %v4341, %v4409
        %v4442 = vadd.f32 %v4342, %v4410
        %v4443 = vadd.f32 %v4343, %v4411
        %v4444 = vadd.f32 %v4344, %v4412
        %v4445 = vadd.f32 %v4345, %v4413
        %v4446 = vadd.f32 %v4346, %v4414
        %v4447 = vadd.f32 %v4347, %v4415
        %v4448 = vadd.f32 %v4348, %v4416
        %v4449 = vadd.f32 %v4349, %v4417
        %v4450 = vadd.f32 %v4350, %v4418
        %v4451 = vadd.f32 %v4351, %v4419
        %v4452 = vadd.f32 %v4352, %v4420
        %v4453 = vadd.f32 %v4353, %v4421
        %v4454 = vadd.f32 %v4354, %v4422
        %v4455 = vadd.f32 %v4355, %v4423
        %v4456 = vadd.f32 %v4356, %v4424
        %v4457 = vadd.f32 %v4357, %v4425
        %v4458 = vadd.f32 %v4358, %v4426
        %v4459 = vadd.f32 %v4359, %v4427
        %v4460 = vadd.f32 %v4360, %v4428
        %v4461 = vadd.f32 %v4361, %v4429
        %v4462 = vadd.f32 %v4362, %v4430
        %v4463 = vadd.f32 %v4363, %v4431
        %v4464 = vadd.f32 %v4364, %v4432
        %v4465 = vadd.f32 %v4365, %v4433
        %v4466 = vadd.f32 %v4366, %v4434
        %v4467 = vadd.f32 %v4367, %v4435
        %s4468 = scalar_lea.vmem %s249, 144
        %v4469 = vld [vmem:[%s4468] sm:$0xff]
        %v4470 = vld [vmem:[%s4468 + $0x8] sm:$0xff]
        %v4471 = vld [vmem:[%s4468 + $0x18] sm:$0xff]
        %v4472 = vld [vmem:[%s4468 + $0x20] sm:$0xff]
        %v4473 = vld [vmem:[%s4468 + $0x30] sm:$0xff]
        %v4474 = vld [vmem:[%s4468 + $0x38] sm:$0xff]
        %v4475 = vld [vmem:[%s4468 + $0x48] sm:$0xff]
        %v4476 = vld [vmem:[%s4468 + $0x50] sm:$0xff]
        %v4477 = vld [vmem:[%s4468 + $0x60] sm:$0xff]
        %v4478 = vld [vmem:[%s4468 + $0x68] sm:$0xff]
        %v4479 = vld [vmem:[%s4468 + $0x78] sm:$0xff]
        %v4480 = vld [vmem:[%s4468 + $0x80] sm:$0xff]
        %v4481 = vld [vmem:[%s4468 + $0x90] sm:$0xff]
        %v4482 = vld [vmem:[%s4468 + $0x98] sm:$0xff]
        %v4483 = vld [vmem:[%s4468 + $0xa8] sm:$0xff]
        %v4484 = vld [vmem:[%s4468 + $0xb0] sm:$0xff]
        %v4485 = vld [vmem:[%s4468 + $0xc0] sm:$0xff]
        %v4486 = vld [vmem:[%s4468 + $0xc8] sm:$0xff]
        %v4487 = vld [vmem:[%s4468 + $0xd8] sm:$0xff]
        %v4488 = vld [vmem:[%s4468 + $0xe0] sm:$0xff]
        %v4489 = vld [vmem:[%s4468 + $0xf0] sm:$0xff]
        %v4490 = vld [vmem:[%s4468 + $0xf8] sm:$0xff]
        %v4491 = vld [vmem:[%s4468 + $0x108] sm:$0xff]
        %v4492 = vld [vmem:[%s4468 + $0x110] sm:$0xff]
        %v4493 = vld [vmem:[%s4468 + $0x120] sm:$0xff]
        %v4494 = vld [vmem:[%s4468 + $0x128] sm:$0xff]
        %v4495 = vld [vmem:[%s4468 + $0x138] sm:$0xff]
        %v4496 = vld [vmem:[%s4468 + $0x140] sm:$0xff]
        %v4497 = vld [vmem:[%s4468 + $0x150] sm:$0xff]
        %v4498 = vld [vmem:[%s4468 + $0x158] sm:$0xff]
        %v4499 = vld [vmem:[%s4468 + $0x168] sm:$0xff]
        %v4500 = vld [vmem:[%s4468 + $0x170] sm:$0xff]
        %v4501 = vlaneseq
        %v4502 = vshrl.u32 %v4501, 7
        %v4503 = vsub.s32 2, %v4502
        %v4504 = vrot.slane %v257, %v4503
        %v4505 = vmul.f32 %v4469, %v4504
        %v4506 = vmul.f32 %v4470, %v4504
        %v4507 = vmul.f32 %v4471, %v4504
        %v4508 = vmul.f32 %v4472, %v4504
        %v4509 = vmul.f32 %v4473, %v4504
        %v4510 = vmul.f32 %v4474, %v4504
        %v4511 = vmul.f32 %v4475, %v4504
        %v4512 = vmul.f32 %v4476, %v4504
        %v4513 = vmul.f32 %v4477, %v4504
        %v4514 = vmul.f32 %v4478, %v4504
        %v4515 = vmul.f32 %v4479, %v4504
        %v4516 = vmul.f32 %v4480, %v4504
        %v4517 = vmul.f32 %v4481, %v4504
        %v4518 = vmul.f32 %v4482, %v4504
        %v4519 = vmul.f32 %v4483, %v4504
        %v4520 = vmul.f32 %v4484, %v4504
        %v4521 = vmul.f32 %v4485, %v4504
        %v4522 = vmul.f32 %v4486, %v4504
        %v4523 = vmul.f32 %v4487, %v4504
        %v4524 = vmul.f32 %v4488, %v4504
        %v4525 = vmul.f32 %v4489, %v4504
        %v4526 = vmul.f32 %v4490, %v4504
        %v4527 = vmul.f32 %v4491, %v4504
        %v4528 = vmul.f32 %v4492, %v4504
        %v4529 = vmul.f32 %v4493, %v4504
        %v4530 = vmul.f32 %v4494, %v4504
        %v4531 = vmul.f32 %v4495, %v4504
        %v4532 = vmul.f32 %v4496, %v4504
        %v4533 = vmul.f32 %v4497, %v4504
        %v4534 = vmul.f32 %v4498, %v4504
        %v4535 = vmul.f32 %v4499, %v4504
        %v4536 = vmul.f32 %v4500, %v4504
        %v4537 = vadd.f32 %v4436, %v4505
        %v4538 = vadd.f32 %v4437, %v4506
        %v4539 = vadd.f32 %v4438, %v4507
        %v4540 = vadd.f32 %v4439, %v4508
        %v4541 = vadd.f32 %v4440, %v4509
        %v4542 = vadd.f32 %v4441, %v4510
        %v4543 = vadd.f32 %v4442, %v4511
        %v4544 = vadd.f32 %v4443, %v4512
        %v4545 = vadd.f32 %v4444, %v4513
        %v4546 = vadd.f32 %v4445, %v4514
        %v4547 = vadd.f32 %v4446, %v4515
        %v4548 = vadd.f32 %v4447, %v4516
        %v4549 = vadd.f32 %v4448, %v4517
        %v4550 = vadd.f32 %v4449, %v4518
        %v4551 = vadd.f32 %v4450, %v4519
        %v4552 = vadd.f32 %v4451, %v4520
        %v4553 = vadd.f32 %v4452, %v4521
        %v4554 = vadd.f32 %v4453, %v4522
        %v4555 = vadd.f32 %v4454, %v4523
        %v4556 = vadd.f32 %v4455, %v4524
        %v4557 = vadd.f32 %v4456, %v4525
        %v4558 = vadd.f32 %v4457, %v4526
        %v4559 = vadd.f32 %v4458, %v4527
        %v4560 = vadd.f32 %v4459, %v4528
        %v4561 = vadd.f32 %v4460, %v4529
        %v4562 = vadd.f32 %v4461, %v4530
        %v4563 = vadd.f32 %v4462, %v4531
        %v4564 = vadd.f32 %v4463, %v4532
        %v4565 = vadd.f32 %v4464, %v4533
        %v4566 = vadd.f32 %v4465, %v4534
        %v4567 = vadd.f32 %v4466, %v4535
        %v4568 = vadd.f32 %v4467, %v4536
        %v4569 = vld [vmem:[%s4468 + $0x1] sm:$0xff]
        %v4570 = vld [vmem:[%s4468 + $0x9] sm:$0xff]
        %v4571 = vld [vmem:[%s4468 + $0x19] sm:$0xff]
        %v4572 = vld [vmem:[%s4468 + $0x21] sm:$0xff]
        %v4573 = vld [vmem:[%s4468 + $0x31] sm:$0xff]
        %v4574 = vld [vmem:[%s4468 + $0x39] sm:$0xff]
        %v4575 = vld [vmem:[%s4468 + $0x49] sm:$0xff]
        %v4576 = vld [vmem:[%s4468 + $0x51] sm:$0xff]
        %v4577 = vld [vmem:[%s4468 + $0x61] sm:$0xff]
        %v4578 = vld [vmem:[%s4468 + $0x69] sm:$0xff]
        %v4579 = vld [vmem:[%s4468 + $0x79] sm:$0xff]
        %v4580 = vld [vmem:[%s4468 + $0x81] sm:$0xff]
        %v4581 = vld [vmem:[%s4468 + $0x91] sm:$0xff]
        %v4582 = vld [vmem:[%s4468 + $0x99] sm:$0xff]
        %v4583 = vld [vmem:[%s4468 + $0xa9] sm:$0xff]
        %v4584 = vld [vmem:[%s4468 + $0xb1] sm:$0xff]
        %v4585 = vld [vmem:[%s4468 + $0xc1] sm:$0xff]
        %v4586 = vld [vmem:[%s4468 + $0xc9] sm:$0xff]
        %v4587 = vld [vmem:[%s4468 + $0xd9] sm:$0xff]
        %v4588 = vld [vmem:[%s4468 + $0xe1] sm:$0xff]
        %v4589 = vld [vmem:[%s4468 + $0xf1] sm:$0xff]
        %v4590 = vld [vmem:[%s4468 + $0xf9] sm:$0xff]
        %v4591 = vld [vmem:[%s4468 + $0x109] sm:$0xff]
        %v4592 = vld [vmem:[%s4468 + $0x111] sm:$0xff]
        %v4593 = vld [vmem:[%s4468 + $0x121] sm:$0xff]
        %v4594 = vld [vmem:[%s4468 + $0x129] sm:$0xff]
        %v4595 = vld [vmem:[%s4468 + $0x139] sm:$0xff]
        %v4596 = vld [vmem:[%s4468 + $0x141] sm:$0xff]
        %v4597 = vld [vmem:[%s4468 + $0x151] sm:$0xff]
        %v4598 = vld [vmem:[%s4468 + $0x159] sm:$0xff]
        %v4599 = vld [vmem:[%s4468 + $0x169] sm:$0xff]
        %v4600 = vld [vmem:[%s4468 + $0x171] sm:$0xff]
        %v4601 = vlaneseq
        %v4602 = vshrl.u32 %v4601, 7
        %v4603 = vsub.s32 3, %v4602
        %v4604 = vrot.slane %v257, %v4603
        %v4605 = vmul.f32 %v4569, %v4604
        %v4606 = vmul.f32 %v4570, %v4604
        %v4607 = vmul.f32 %v4571, %v4604
        %v4608 = vmul.f32 %v4572, %v4604
        %v4609 = vmul.f32 %v4573, %v4604
        %v4610 = vmul.f32 %v4574, %v4604
        %v4611 = vmul.f32 %v4575, %v4604
        %v4612 = vmul.f32 %v4576, %v4604
        %v4613 = vmul.f32 %v4577, %v4604
        %v4614 = vmul.f32 %v4578, %v4604
        %v4615 = vmul.f32 %v4579, %v4604
        %v4616 = vmul.f32 %v4580, %v4604
        %v4617 = vmul.f32 %v4581, %v4604
        %v4618 = vmul.f32 %v4582, %v4604
        %v4619 = vmul.f32 %v4583, %v4604
        %v4620 = vmul.f32 %v4584, %v4604
        %v4621 = vmul.f32 %v4585, %v4604
        %v4622 = vmul.f32 %v4586, %v4604
        %v4623 = vmul.f32 %v4587, %v4604
        %v4624 = vmul.f32 %v4588, %v4604
        %v4625 = vmul.f32 %v4589, %v4604
        %v4626 = vmul.f32 %v4590, %v4604
        %v4627 = vmul.f32 %v4591, %v4604
        %v4628 = vmul.f32 %v4592, %v4604
        %v4629 = vmul.f32 %v4593, %v4604
        %v4630 = vmul.f32 %v4594, %v4604
        %v4631 = vmul.f32 %v4595, %v4604
        %v4632 = vmul.f32 %v4596, %v4604
        %v4633 = vmul.f32 %v4597, %v4604
        %v4634 = vmul.f32 %v4598, %v4604
        %v4635 = vmul.f32 %v4599, %v4604
        %v4636 = vmul.f32 %v4600, %v4604
        %v4637 = vadd.f32 %v4537, %v4605
        %v4638 = vadd.f32 %v4538, %v4606
        %v4639 = vadd.f32 %v4539, %v4607
        %v4640 = vadd.f32 %v4540, %v4608
        %v4641 = vadd.f32 %v4541, %v4609
        %v4642 = vadd.f32 %v4542, %v4610
        %v4643 = vadd.f32 %v4543, %v4611
        %v4644 = vadd.f32 %v4544, %v4612
        %v4645 = vadd.f32 %v4545, %v4613
        %v4646 = vadd.f32 %v4546, %v4614
        %v4647 = vadd.f32 %v4547, %v4615
        %v4648 = vadd.f32 %v4548, %v4616
        %v4649 = vadd.f32 %v4549, %v4617
        %v4650 = vadd.f32 %v4550, %v4618
        %v4651 = vadd.f32 %v4551, %v4619
        %v4652 = vadd.f32 %v4552, %v4620
        %v4653 = vadd.f32 %v4553, %v4621
        %v4654 = vadd.f32 %v4554, %v4622
        %v4655 = vadd.f32 %v4555, %v4623
        %v4656 = vadd.f32 %v4556, %v4624
        %v4657 = vadd.f32 %v4557, %v4625
        %v4658 = vadd.f32 %v4558, %v4626
        %v4659 = vadd.f32 %v4559, %v4627
        %v4660 = vadd.f32 %v4560, %v4628
        %v4661 = vadd.f32 %v4561, %v4629
        %v4662 = vadd.f32 %v4562, %v4630
        %v4663 = vadd.f32 %v4563, %v4631
        %v4664 = vadd.f32 %v4564, %v4632
        %v4665 = vadd.f32 %v4565, %v4633
        %v4666 = vadd.f32 %v4566, %v4634
        %v4667 = vadd.f32 %v4567, %v4635
        %v4668 = vadd.f32 %v4568, %v4636
        %v4669 = vld [vmem:[%s4468 + $0x2] sm:$0xff]
        %v4670 = vld [vmem:[%s4468 + $0xa] sm:$0xff]
        %v4671 = vld [vmem:[%s4468 + $0x1a] sm:$0xff]
        %v4672 = vld [vmem:[%s4468 + $0x22] sm:$0xff]
        %v4673 = vld [vmem:[%s4468 + $0x32] sm:$0xff]
        %v4674 = vld [vmem:[%s4468 + $0x3a] sm:$0xff]
        %v4675 = vld [vmem:[%s4468 + $0x4a] sm:$0xff]
        %v4676 = vld [vmem:[%s4468 + $0x52] sm:$0xff]
        %v4677 = vld [vmem:[%s4468 + $0x62] sm:$0xff]
        %v4678 = vld [vmem:[%s4468 + $0x6a] sm:$0xff]
        %v4679 = vld [vmem:[%s4468 + $0x7a] sm:$0xff]
        %v4680 = vld [vmem:[%s4468 + $0x82] sm:$0xff]
        %v4681 = vld [vmem:[%s4468 + $0x92] sm:$0xff]
        %v4682 = vld [vmem:[%s4468 + $0x9a] sm:$0xff]
        %v4683 = vld [vmem:[%s4468 + $0xaa] sm:$0xff]
        %v4684 = vld [vmem:[%s4468 + $0xb2] sm:$0xff]
        %v4685 = vld [vmem:[%s4468 + $0xc2] sm:$0xff]
        %v4686 = vld [vmem:[%s4468 + $0xca] sm:$0xff]
        %v4687 = vld [vmem:[%s4468 + $0xda] sm:$0xff]
        %v4688 = vld [vmem:[%s4468 + $0xe2] sm:$0xff]
        %v4689 = vld [vmem:[%s4468 + $0xf2] sm:$0xff]
        %v4690 = vld [vmem:[%s4468 + $0xfa] sm:$0xff]
        %v4691 = vld [vmem:[%s4468 + $0x10a] sm:$0xff]
        %v4692 = vld [vmem:[%s4468 + $0x112] sm:$0xff]
        %v4693 = vld [vmem:[%s4468 + $0x122] sm:$0xff]
        %v4694 = vld [vmem:[%s4468 + $0x12a] sm:$0xff]
        %v4695 = vld [vmem:[%s4468 + $0x13a] sm:$0xff]
        %v4696 = vld [vmem:[%s4468 + $0x142] sm:$0xff]
        %v4697 = vld [vmem:[%s4468 + $0x152] sm:$0xff]
        %v4698 = vld [vmem:[%s4468 + $0x15a] sm:$0xff]
        %v4699 = vld [vmem:[%s4468 + $0x16a] sm:$0xff]
        %v4700 = vld [vmem:[%s4468 + $0x172] sm:$0xff]
        %v4701 = vlaneseq
        %v4702 = vshrl.u32 %v4701, 7
        %v4703 = vsub.s32 4, %v4702
        %v4704 = vrot.slane %v257, %v4703
        %v4705 = vmul.f32 %v4669, %v4704
        %v4706 = vmul.f32 %v4670, %v4704
        %v4707 = vmul.f32 %v4671, %v4704
        %v4708 = vmul.f32 %v4672, %v4704
        %v4709 = vmul.f32 %v4673, %v4704
        %v4710 = vmul.f32 %v4674, %v4704
        %v4711 = vmul.f32 %v4675, %v4704
        %v4712 = vmul.f32 %v4676, %v4704
        %v4713 = vmul.f32 %v4677, %v4704
        %v4714 = vmul.f32 %v4678, %v4704
        %v4715 = vmul.f32 %v4679, %v4704
        %v4716 = vmul.f32 %v4680, %v4704
        %v4717 = vmul.f32 %v4681, %v4704
        %v4718 = vmul.f32 %v4682, %v4704
        %v4719 = vmul.f32 %v4683, %v4704
        %v4720 = vmul.f32 %v4684, %v4704
        %v4721 = vmul.f32 %v4685, %v4704
        %v4722 = vmul.f32 %v4686, %v4704
        %v4723 = vmul.f32 %v4687, %v4704
        %v4724 = vmul.f32 %v4688, %v4704
        %v4725 = vmul.f32 %v4689, %v4704
        %v4726 = vmul.f32 %v4690, %v4704
        %v4727 = vmul.f32 %v4691, %v4704
        %v4728 = vmul.f32 %v4692, %v4704
        %v4729 = vmul.f32 %v4693, %v4704
        %v4730 = vmul.f32 %v4694, %v4704
        %v4731 = vmul.f32 %v4695, %v4704
        %v4732 = vmul.f32 %v4696, %v4704
        %v4733 = vmul.f32 %v4697, %v4704
        %v4734 = vmul.f32 %v4698, %v4704
        %v4735 = vmul.f32 %v4699, %v4704
        %v4736 = vmul.f32 %v4700, %v4704
        %v4737 = vadd.f32 %v4637, %v4705
        %v4738 = vadd.f32 %v4638, %v4706
        %v4739 = vadd.f32 %v4639, %v4707
        %v4740 = vadd.f32 %v4640, %v4708
        %v4741 = vadd.f32 %v4641, %v4709
        %v4742 = vadd.f32 %v4642, %v4710
        %v4743 = vadd.f32 %v4643, %v4711
        %v4744 = vadd.f32 %v4644, %v4712
        %v4745 = vadd.f32 %v4645, %v4713
        %v4746 = vadd.f32 %v4646, %v4714
        %v4747 = vadd.f32 %v4647, %v4715
        %v4748 = vadd.f32 %v4648, %v4716
        %v4749 = vadd.f32 %v4649, %v4717
        %v4750 = vadd.f32 %v4650, %v4718
        %v4751 = vadd.f32 %v4651, %v4719
        %v4752 = vadd.f32 %v4652, %v4720
        %v4753 = vadd.f32 %v4653, %v4721
        %v4754 = vadd.f32 %v4654, %v4722
        %v4755 = vadd.f32 %v4655, %v4723
        %v4756 = vadd.f32 %v4656, %v4724
        %v4757 = vadd.f32 %v4657, %v4725
        %v4758 = vadd.f32 %v4658, %v4726
        %v4759 = vadd.f32 %v4659, %v4727
        %v4760 = vadd.f32 %v4660, %v4728
        %v4761 = vadd.f32 %v4661, %v4729
        %v4762 = vadd.f32 %v4662, %v4730
        %v4763 = vadd.f32 %v4663, %v4731
        %v4764 = vadd.f32 %v4664, %v4732
        %v4765 = vadd.f32 %v4665, %v4733
        %v4766 = vadd.f32 %v4666, %v4734
        %v4767 = vadd.f32 %v4667, %v4735
        %v4768 = vadd.f32 %v4668, %v4736
        %v4769 = vld [vmem:[%s4468 + $0x3] sm:$0xff]
        %v4770 = vld [vmem:[%s4468 + $0xb] sm:$0xff]
        %v4771 = vld [vmem:[%s4468 + $0x1b] sm:$0xff]
        %v4772 = vld [vmem:[%s4468 + $0x23] sm:$0xff]
        %v4773 = vld [vmem:[%s4468 + $0x33] sm:$0xff]
        %v4774 = vld [vmem:[%s4468 + $0x3b] sm:$0xff]
        %v4775 = vld [vmem:[%s4468 + $0x4b] sm:$0xff]
        %v4776 = vld [vmem:[%s4468 + $0x53] sm:$0xff]
        %v4777 = vld [vmem:[%s4468 + $0x63] sm:$0xff]
        %v4778 = vld [vmem:[%s4468 + $0x6b] sm:$0xff]
        %v4779 = vld [vmem:[%s4468 + $0x7b] sm:$0xff]
        %v4780 = vld [vmem:[%s4468 + $0x83] sm:$0xff]
        %v4781 = vld [vmem:[%s4468 + $0x93] sm:$0xff]
        %v4782 = vld [vmem:[%s4468 + $0x9b] sm:$0xff]
        %v4783 = vld [vmem:[%s4468 + $0xab] sm:$0xff]
        %v4784 = vld [vmem:[%s4468 + $0xb3] sm:$0xff]
        %v4785 = vld [vmem:[%s4468 + $0xc3] sm:$0xff]
        %v4786 = vld [vmem:[%s4468 + $0xcb] sm:$0xff]
        %v4787 = vld [vmem:[%s4468 + $0xdb] sm:$0xff]
        %v4788 = vld [vmem:[%s4468 + $0xe3] sm:$0xff]
        %v4789 = vld [vmem:[%s4468 + $0xf3] sm:$0xff]
        %v4790 = vld [vmem:[%s4468 + $0xfb] sm:$0xff]
        %v4791 = vld [vmem:[%s4468 + $0x10b] sm:$0xff]
        %v4792 = vld [vmem:[%s4468 + $0x113] sm:$0xff]
        %v4793 = vld [vmem:[%s4468 + $0x123] sm:$0xff]
        %v4794 = vld [vmem:[%s4468 + $0x12b] sm:$0xff]
        %v4795 = vld [vmem:[%s4468 + $0x13b] sm:$0xff]
        %v4796 = vld [vmem:[%s4468 + $0x143] sm:$0xff]
        %v4797 = vld [vmem:[%s4468 + $0x153] sm:$0xff]
        %v4798 = vld [vmem:[%s4468 + $0x15b] sm:$0xff]
        %v4799 = vld [vmem:[%s4468 + $0x16b] sm:$0xff]
        %v4800 = vld [vmem:[%s4468 + $0x173] sm:$0xff]
        %v4801 = vlaneseq
        %v4802 = vshrl.u32 %v4801, 7
        %v4803 = vsub.s32 5, %v4802
        %v4804 = vrot.slane %v257, %v4803
        %v4805 = vmul.f32 %v4769, %v4804
        %v4806 = vmul.f32 %v4770, %v4804
        %v4807 = vmul.f32 %v4771, %v4804
        %v4808 = vmul.f32 %v4772, %v4804
        %v4809 = vmul.f32 %v4773, %v4804
        %v4810 = vmul.f32 %v4774, %v4804
        %v4811 = vmul.f32 %v4775, %v4804
        %v4812 = vmul.f32 %v4776, %v4804
        %v4813 = vmul.f32 %v4777, %v4804
        %v4814 = vmul.f32 %v4778, %v4804
        %v4815 = vmul.f32 %v4779, %v4804
        %v4816 = vmul.f32 %v4780, %v4804
        %v4817 = vmul.f32 %v4781, %v4804
        %v4818 = vmul.f32 %v4782, %v4804
        %v4819 = vmul.f32 %v4783, %v4804
        %v4820 = vmul.f32 %v4784, %v4804
        %v4821 = vmul.f32 %v4785, %v4804
        %v4822 = vmul.f32 %v4786, %v4804
        %v4823 = vmul.f32 %v4787, %v4804
        %v4824 = vmul.f32 %v4788, %v4804
        %v4825 = vmul.f32 %v4789, %v4804
        %v4826 = vmul.f32 %v4790, %v4804
        %v4827 = vmul.f32 %v4791, %v4804
        %v4828 = vmul.f32 %v4792, %v4804
        %v4829 = vmul.f32 %v4793, %v4804
        %v4830 = vmul.f32 %v4794, %v4804
        %v4831 = vmul.f32 %v4795, %v4804
        %v4832 = vmul.f32 %v4796, %v4804
        %v4833 = vmul.f32 %v4797, %v4804
        %v4834 = vmul.f32 %v4798, %v4804
        %v4835 = vmul.f32 %v4799, %v4804
        %v4836 = vmul.f32 %v4800, %v4804
        %v4837 = vadd.f32 %v4737, %v4805
        %v4838 = vadd.f32 %v4738, %v4806
        %v4839 = vadd.f32 %v4739, %v4807
        %v4840 = vadd.f32 %v4740, %v4808
        %v4841 = vadd.f32 %v4741, %v4809
        %v4842 = vadd.f32 %v4742, %v4810
        %v4843 = vadd.f32 %v4743, %v4811
        %v4844 = vadd.f32 %v4744, %v4812
        %v4845 = vadd.f32 %v4745, %v4813
        %v4846 = vadd.f32 %v4746, %v4814
        %v4847 = vadd.f32 %v4747, %v4815
        %v4848 = vadd.f32 %v4748, %v4816
        %v4849 = vadd.f32 %v4749, %v4817
        %v4850 = vadd.f32 %v4750, %v4818
        %v4851 = vadd.f32 %v4751, %v4819
        %v4852 = vadd.f32 %v4752, %v4820
        %v4853 = vadd.f32 %v4753, %v4821
        %v4854 = vadd.f32 %v4754, %v4822
        %v4855 = vadd.f32 %v4755, %v4823
        %v4856 = vadd.f32 %v4756, %v4824
        %v4857 = vadd.f32 %v4757, %v4825
        %v4858 = vadd.f32 %v4758, %v4826
        %v4859 = vadd.f32 %v4759, %v4827
        %v4860 = vadd.f32 %v4760, %v4828
        %v4861 = vadd.f32 %v4761, %v4829
        %v4862 = vadd.f32 %v4762, %v4830
        %v4863 = vadd.f32 %v4763, %v4831
        %v4864 = vadd.f32 %v4764, %v4832
        %v4865 = vadd.f32 %v4765, %v4833
        %v4866 = vadd.f32 %v4766, %v4834
        %v4867 = vadd.f32 %v4767, %v4835
        %v4868 = vadd.f32 %v4768, %v4836
        %v4869 = vld [vmem:[%s4468 + $0x4] sm:$0xff]
        %v4870 = vld [vmem:[%s4468 + $0xc] sm:$0xff]
        %v4871 = vld [vmem:[%s4468 + $0x1c] sm:$0xff]
        %v4872 = vld [vmem:[%s4468 + $0x24] sm:$0xff]
        %v4873 = vld [vmem:[%s4468 + $0x34] sm:$0xff]
        %v4874 = vld [vmem:[%s4468 + $0x3c] sm:$0xff]
        %v4875 = vld [vmem:[%s4468 + $0x4c] sm:$0xff]
        %v4876 = vld [vmem:[%s4468 + $0x54] sm:$0xff]
        %v4877 = vld [vmem:[%s4468 + $0x64] sm:$0xff]
        %v4878 = vld [vmem:[%s4468 + $0x6c] sm:$0xff]
        %v4879 = vld [vmem:[%s4468 + $0x7c] sm:$0xff]
        %v4880 = vld [vmem:[%s4468 + $0x84] sm:$0xff]
        %v4881 = vld [vmem:[%s4468 + $0x94] sm:$0xff]
        %v4882 = vld [vmem:[%s4468 + $0x9c] sm:$0xff]
        %v4883 = vld [vmem:[%s4468 + $0xac] sm:$0xff]
        %v4884 = vld [vmem:[%s4468 + $0xb4] sm:$0xff]
        %v4885 = vld [vmem:[%s4468 + $0xc4] sm:$0xff]
        %v4886 = vld [vmem:[%s4468 + $0xcc] sm:$0xff]
        %v4887 = vld [vmem:[%s4468 + $0xdc] sm:$0xff]
        %v4888 = vld [vmem:[%s4468 + $0xe4] sm:$0xff]
        %v4889 = vld [vmem:[%s4468 + $0xf4] sm:$0xff]
        %v4890 = vld [vmem:[%s4468 + $0xfc] sm:$0xff]
        %v4891 = vld [vmem:[%s4468 + $0x10c] sm:$0xff]
        %v4892 = vld [vmem:[%s4468 + $0x114] sm:$0xff]
        %v4893 = vld [vmem:[%s4468 + $0x124] sm:$0xff]
        %v4894 = vld [vmem:[%s4468 + $0x12c] sm:$0xff]
        %v4895 = vld [vmem:[%s4468 + $0x13c] sm:$0xff]
        %v4896 = vld [vmem:[%s4468 + $0x144] sm:$0xff]
        %v4897 = vld [vmem:[%s4468 + $0x154] sm:$0xff]
        %v4898 = vld [vmem:[%s4468 + $0x15c] sm:$0xff]
        %v4899 = vld [vmem:[%s4468 + $0x16c] sm:$0xff]
        %v4900 = vld [vmem:[%s4468 + $0x174] sm:$0xff]
        %v4901 = vlaneseq
        %v4902 = vshrl.u32 %v4901, 7
        %v4903 = vsub.s32 6, %v4902
        %v4904 = vrot.slane %v257, %v4903
        %v4905 = vmul.f32 %v4869, %v4904
        %v4906 = vmul.f32 %v4870, %v4904
        %v4907 = vmul.f32 %v4871, %v4904
        %v4908 = vmul.f32 %v4872, %v4904
        %v4909 = vmul.f32 %v4873, %v4904
        %v4910 = vmul.f32 %v4874, %v4904
        %v4911 = vmul.f32 %v4875, %v4904
        %v4912 = vmul.f32 %v4876, %v4904
        %v4913 = vmul.f32 %v4877, %v4904
        %v4914 = vmul.f32 %v4878, %v4904
        %v4915 = vmul.f32 %v4879, %v4904
        %v4916 = vmul.f32 %v4880, %v4904
        %v4917 = vmul.f32 %v4881, %v4904
        %v4918 = vmul.f32 %v4882, %v4904
        %v4919 = vmul.f32 %v4883, %v4904
        %v4920 = vmul.f32 %v4884, %v4904
        %v4921 = vmul.f32 %v4885, %v4904
        %v4922 = vmul.f32 %v4886, %v4904
        %v4923 = vmul.f32 %v4887, %v4904
        %v4924 = vmul.f32 %v4888, %v4904
        %v4925 = vmul.f32 %v4889, %v4904
        %v4926 = vmul.f32 %v4890, %v4904
        %v4927 = vmul.f32 %v4891, %v4904
        %v4928 = vmul.f32 %v4892, %v4904
        %v4929 = vmul.f32 %v4893, %v4904
        %v4930 = vmul.f32 %v4894, %v4904
        %v4931 = vmul.f32 %v4895, %v4904
        %v4932 = vmul.f32 %v4896, %v4904
        %v4933 = vmul.f32 %v4897, %v4904
        %v4934 = vmul.f32 %v4898, %v4904
        %v4935 = vmul.f32 %v4899, %v4904
        %v4936 = vmul.f32 %v4900, %v4904
        %v4937 = vadd.f32 %v4837, %v4905
        %v4938 = vadd.f32 %v4838, %v4906
        %v4939 = vadd.f32 %v4839, %v4907
        %v4940 = vadd.f32 %v4840, %v4908
        %v4941 = vadd.f32 %v4841, %v4909
        %v4942 = vadd.f32 %v4842, %v4910
        %v4943 = vadd.f32 %v4843, %v4911
        %v4944 = vadd.f32 %v4844, %v4912
        %v4945 = vadd.f32 %v4845, %v4913
        %v4946 = vadd.f32 %v4846, %v4914
        %v4947 = vadd.f32 %v4847, %v4915
        %v4948 = vadd.f32 %v4848, %v4916
        %v4949 = vadd.f32 %v4849, %v4917
        %v4950 = vadd.f32 %v4850, %v4918
        %v4951 = vadd.f32 %v4851, %v4919
        %v4952 = vadd.f32 %v4852, %v4920
        %v4953 = vadd.f32 %v4853, %v4921
        %v4954 = vadd.f32 %v4854, %v4922
        %v4955 = vadd.f32 %v4855, %v4923
        %v4956 = vadd.f32 %v4856, %v4924
        %v4957 = vadd.f32 %v4857, %v4925
        %v4958 = vadd.f32 %v4858, %v4926
        %v4959 = vadd.f32 %v4859, %v4927
        %v4960 = vadd.f32 %v4860, %v4928
        %v4961 = vadd.f32 %v4861, %v4929
        %v4962 = vadd.f32 %v4862, %v4930
        %v4963 = vadd.f32 %v4863, %v4931
        %v4964 = vadd.f32 %v4864, %v4932
        %v4965 = vadd.f32 %v4865, %v4933
        %v4966 = vadd.f32 %v4866, %v4934
        %v4967 = vadd.f32 %v4867, %v4935
        %v4968 = vadd.f32 %v4868, %v4936
        %v4969 = vld [vmem:[%s4468 + $0x5] sm:$0xff]
        %v4970 = vld [vmem:[%s4468 + $0xd] sm:$0xff]
        %v4971 = vld [vmem:[%s4468 + $0x1d] sm:$0xff]
        %v4972 = vld [vmem:[%s4468 + $0x25] sm:$0xff]
        %v4973 = vld [vmem:[%s4468 + $0x35] sm:$0xff]
        %v4974 = vld [vmem:[%s4468 + $0x3d] sm:$0xff]
        %v4975 = vld [vmem:[%s4468 + $0x4d] sm:$0xff]
        %v4976 = vld [vmem:[%s4468 + $0x55] sm:$0xff]
        %v4977 = vld [vmem:[%s4468 + $0x65] sm:$0xff]
        %v4978 = vld [vmem:[%s4468 + $0x6d] sm:$0xff]
        %v4979 = vld [vmem:[%s4468 + $0x7d] sm:$0xff]
        %v4980 = vld [vmem:[%s4468 + $0x85] sm:$0xff]
        %v4981 = vld [vmem:[%s4468 + $0x95] sm:$0xff]
        %v4982 = vld [vmem:[%s4468 + $0x9d] sm:$0xff]
        %v4983 = vld [vmem:[%s4468 + $0xad] sm:$0xff]
        %v4984 = vld [vmem:[%s4468 + $0xb5] sm:$0xff]
        %v4985 = vld [vmem:[%s4468 + $0xc5] sm:$0xff]
        %v4986 = vld [vmem:[%s4468 + $0xcd] sm:$0xff]
        %v4987 = vld [vmem:[%s4468 + $0xdd] sm:$0xff]
        %v4988 = vld [vmem:[%s4468 + $0xe5] sm:$0xff]
        %v4989 = vld [vmem:[%s4468 + $0xf5] sm:$0xff]
        %v4990 = vld [vmem:[%s4468 + $0xfd] sm:$0xff]
        %v4991 = vld [vmem:[%s4468 + $0x10d] sm:$0xff]
        %v4992 = vld [vmem:[%s4468 + $0x115] sm:$0xff]
        %v4993 = vld [vmem:[%s4468 + $0x125] sm:$0xff]
        %v4994 = vld [vmem:[%s4468 + $0x12d] sm:$0xff]
        %v4995 = vld [vmem:[%s4468 + $0x13d] sm:$0xff]
        %v4996 = vld [vmem:[%s4468 + $0x145] sm:$0xff]
        %v4997 = vld [vmem:[%s4468 + $0x155] sm:$0xff]
        %v4998 = vld [vmem:[%s4468 + $0x15d] sm:$0xff]
        %v4999 = vld [vmem:[%s4468 + $0x16d] sm:$0xff]
        %v5000 = vld [vmem:[%s4468 + $0x175] sm:$0xff]
        %v5001 = vlaneseq
        %v5002 = vshrl.u32 %v5001, 7
        %v5003 = vsub.s32 7, %v5002
        %v5004 = vrot.slane %v257, %v5003
        %v5005 = vmul.f32 %v4969, %v5004
        %v5006 = vmul.f32 %v4970, %v5004
        %v5007 = vmul.f32 %v4971, %v5004
        %v5008 = vmul.f32 %v4972, %v5004
        %v5009 = vmul.f32 %v4973, %v5004
        %v5010 = vmul.f32 %v4974, %v5004
        %v5011 = vmul.f32 %v4975, %v5004
        %v5012 = vmul.f32 %v4976, %v5004
        %v5013 = vmul.f32 %v4977, %v5004
        %v5014 = vmul.f32 %v4978, %v5004
        %v5015 = vmul.f32 %v4979, %v5004
        %v5016 = vmul.f32 %v4980, %v5004
        %v5017 = vmul.f32 %v4981, %v5004
        %v5018 = vmul.f32 %v4982, %v5004
        %v5019 = vmul.f32 %v4983, %v5004
        %v5020 = vmul.f32 %v4984, %v5004
        %v5021 = vmul.f32 %v4985, %v5004
        %v5022 = vmul.f32 %v4986, %v5004
        %v5023 = vmul.f32 %v4987, %v5004
        %v5024 = vmul.f32 %v4988, %v5004
        %v5025 = vmul.f32 %v4989, %v5004
        %v5026 = vmul.f32 %v4990, %v5004
        %v5027 = vmul.f32 %v4991, %v5004
        %v5028 = vmul.f32 %v4992, %v5004
        %v5029 = vmul.f32 %v4993, %v5004
        %v5030 = vmul.f32 %v4994, %v5004
        %v5031 = vmul.f32 %v4995, %v5004
        %v5032 = vmul.f32 %v4996, %v5004
        %v5033 = vmul.f32 %v4997, %v5004
        %v5034 = vmul.f32 %v4998, %v5004
        %v5035 = vmul.f32 %v4999, %v5004
        %v5036 = vmul.f32 %v5000, %v5004
        %v5037 = vadd.f32 %v4937, %v5005
        %v5038 = vadd.f32 %v4938, %v5006
        %v5039 = vadd.f32 %v4939, %v5007
        %v5040 = vadd.f32 %v4940, %v5008
        %v5041 = vadd.f32 %v4941, %v5009
        %v5042 = vadd.f32 %v4942, %v5010
        %v5043 = vadd.f32 %v4943, %v5011
        %v5044 = vadd.f32 %v4944, %v5012
        %v5045 = vadd.f32 %v4945, %v5013
        %v5046 = vadd.f32 %v4946, %v5014
        %v5047 = vadd.f32 %v4947, %v5015
        %v5048 = vadd.f32 %v4948, %v5016
        %v5049 = vadd.f32 %v4949, %v5017
        %v5050 = vadd.f32 %v4950, %v5018
        %v5051 = vadd.f32 %v4951, %v5019
        %v5052 = vadd.f32 %v4952, %v5020
        %v5053 = vadd.f32 %v4953, %v5021
        %v5054 = vadd.f32 %v4954, %v5022
        %v5055 = vadd.f32 %v4955, %v5023
        %v5056 = vadd.f32 %v4956, %v5024
        %v5057 = vadd.f32 %v4957, %v5025
        %v5058 = vadd.f32 %v4958, %v5026
        %v5059 = vadd.f32 %v4959, %v5027
        %v5060 = vadd.f32 %v4960, %v5028
        %v5061 = vadd.f32 %v4961, %v5029
        %v5062 = vadd.f32 %v4962, %v5030
        %v5063 = vadd.f32 %v4963, %v5031
        %v5064 = vadd.f32 %v4964, %v5032
        %v5065 = vadd.f32 %v4965, %v5033
        %v5066 = vadd.f32 %v4966, %v5034
        %v5067 = vadd.f32 %v4967, %v5035
        %v5068 = vadd.f32 %v4968, %v5036
        %v5069 = vld [vmem:[%s4468 + $0x6] sm:$0xff]
        %v5070 = vld [vmem:[%s4468 + $0xe] sm:$0xff]
        %v5071 = vld [vmem:[%s4468 + $0x1e] sm:$0xff]
        %v5072 = vld [vmem:[%s4468 + $0x26] sm:$0xff]
        %v5073 = vld [vmem:[%s4468 + $0x36] sm:$0xff]
        %v5074 = vld [vmem:[%s4468 + $0x3e] sm:$0xff]
        %v5075 = vld [vmem:[%s4468 + $0x4e] sm:$0xff]
        %v5076 = vld [vmem:[%s4468 + $0x56] sm:$0xff]
        %v5077 = vld [vmem:[%s4468 + $0x66] sm:$0xff]
        %v5078 = vld [vmem:[%s4468 + $0x6e] sm:$0xff]
        %v5079 = vld [vmem:[%s4468 + $0x7e] sm:$0xff]
        %v5080 = vld [vmem:[%s4468 + $0x86] sm:$0xff]
        %v5081 = vld [vmem:[%s4468 + $0x96] sm:$0xff]
        %v5082 = vld [vmem:[%s4468 + $0x9e] sm:$0xff]
        %v5083 = vld [vmem:[%s4468 + $0xae] sm:$0xff]
        %v5084 = vld [vmem:[%s4468 + $0xb6] sm:$0xff]
        %v5085 = vld [vmem:[%s4468 + $0xc6] sm:$0xff]
        %v5086 = vld [vmem:[%s4468 + $0xce] sm:$0xff]
        %v5087 = vld [vmem:[%s4468 + $0xde] sm:$0xff]
        %v5088 = vld [vmem:[%s4468 + $0xe6] sm:$0xff]
        %v5089 = vld [vmem:[%s4468 + $0xf6] sm:$0xff]
        %v5090 = vld [vmem:[%s4468 + $0xfe] sm:$0xff]
        %v5091 = vld [vmem:[%s4468 + $0x10e] sm:$0xff]
        %v5092 = vld [vmem:[%s4468 + $0x116] sm:$0xff]
        %v5093 = vld [vmem:[%s4468 + $0x126] sm:$0xff]
        %v5094 = vld [vmem:[%s4468 + $0x12e] sm:$0xff]
        %v5095 = vld [vmem:[%s4468 + $0x13e] sm:$0xff]
        %v5096 = vld [vmem:[%s4468 + $0x146] sm:$0xff]
        %v5097 = vld [vmem:[%s4468 + $0x156] sm:$0xff]
        %v5098 = vld [vmem:[%s4468 + $0x15e] sm:$0xff]
        %v5099 = vld [vmem:[%s4468 + $0x16e] sm:$0xff]
        %v5100 = vld [vmem:[%s4468 + $0x176] sm:$0xff]
        %v5101 = vlaneseq
        %v5102 = vshrl.u32 %v5101, 7
        %v5103 = vsub.s32 0, %v5102
        %v5104 = vrot.slane %v258, %v5103
        %v5105 = vmul.f32 %v5069, %v5104
        %v5106 = vmul.f32 %v5070, %v5104
        %v5107 = vmul.f32 %v5071, %v5104
        %v5108 = vmul.f32 %v5072, %v5104
        %v5109 = vmul.f32 %v5073, %v5104
        %v5110 = vmul.f32 %v5074, %v5104
        %v5111 = vmul.f32 %v5075, %v5104
        %v5112 = vmul.f32 %v5076, %v5104
        %v5113 = vmul.f32 %v5077, %v5104
        %v5114 = vmul.f32 %v5078, %v5104
        %v5115 = vmul.f32 %v5079, %v5104
        %v5116 = vmul.f32 %v5080, %v5104
        %v5117 = vmul.f32 %v5081, %v5104
        %v5118 = vmul.f32 %v5082, %v5104
        %v5119 = vmul.f32 %v5083, %v5104
        %v5120 = vmul.f32 %v5084, %v5104
        %v5121 = vmul.f32 %v5085, %v5104
        %v5122 = vmul.f32 %v5086, %v5104
        %v5123 = vmul.f32 %v5087, %v5104
        %v5124 = vmul.f32 %v5088, %v5104
        %v5125 = vmul.f32 %v5089, %v5104
        %v5126 = vmul.f32 %v5090, %v5104
        %v5127 = vmul.f32 %v5091, %v5104
        %v5128 = vmul.f32 %v5092, %v5104
        %v5129 = vmul.f32 %v5093, %v5104
        %v5130 = vmul.f32 %v5094, %v5104
        %v5131 = vmul.f32 %v5095, %v5104
        %v5132 = vmul.f32 %v5096, %v5104
        %v5133 = vmul.f32 %v5097, %v5104
        %v5134 = vmul.f32 %v5098, %v5104
        %v5135 = vmul.f32 %v5099, %v5104
        %v5136 = vmul.f32 %v5100, %v5104
        %v5137 = vadd.f32 %v5037, %v5105
        %v5138 = vadd.f32 %v5038, %v5106
        %v5139 = vadd.f32 %v5039, %v5107
        %v5140 = vadd.f32 %v5040, %v5108
        %v5141 = vadd.f32 %v5041, %v5109
        %v5142 = vadd.f32 %v5042, %v5110
        %v5143 = vadd.f32 %v5043, %v5111
        %v5144 = vadd.f32 %v5044, %v5112
        %v5145 = vadd.f32 %v5045, %v5113
        %v5146 = vadd.f32 %v5046, %v5114
        %v5147 = vadd.f32 %v5047, %v5115
        %v5148 = vadd.f32 %v5048, %v5116
        %v5149 = vadd.f32 %v5049, %v5117
        %v5150 = vadd.f32 %v5050, %v5118
        %v5151 = vadd.f32 %v5051, %v5119
        %v5152 = vadd.f32 %v5052, %v5120
        %v5153 = vadd.f32 %v5053, %v5121
        %v5154 = vadd.f32 %v5054, %v5122
        %v5155 = vadd.f32 %v5055, %v5123
        %v5156 = vadd.f32 %v5056, %v5124
        %v5157 = vadd.f32 %v5057, %v5125
        %v5158 = vadd.f32 %v5058, %v5126
        %v5159 = vadd.f32 %v5059, %v5127
        %v5160 = vadd.f32 %v5060, %v5128
        %v5161 = vadd.f32 %v5061, %v5129
        %v5162 = vadd.f32 %v5062, %v5130
        %v5163 = vadd.f32 %v5063, %v5131
        %v5164 = vadd.f32 %v5064, %v5132
        %v5165 = vadd.f32 %v5065, %v5133
        %v5166 = vadd.f32 %v5066, %v5134
        %v5167 = vadd.f32 %v5067, %v5135
        %v5168 = vadd.f32 %v5068, %v5136
        %5169 = vadd.xlane.f32.xlu0 %v5137
        %v5170 = vpop.xlane.xlu0 %5169
        %5171 = vadd.xlane.f32.xlu0 %v5138
        %v5172 = vpop.xlane.xlu0 %5171
        %5173 = vadd.xlane.f32.xlu0 %v5139
        %v5174 = vpop.xlane.xlu0 %5173
        %5175 = vadd.xlane.f32.xlu0 %v5140
        %v5176 = vpop.xlane.xlu0 %5175
        %5177 = vadd.xlane.f32.xlu0 %v5141
        %v5178 = vpop.xlane.xlu0 %5177
        %5179 = vadd.xlane.f32.xlu0 %v5142
        %v5180 = vpop.xlane.xlu0 %5179
        %5181 = vadd.xlane.f32.xlu0 %v5143
        %v5182 = vpop.xlane.xlu0 %5181
        %5183 = vadd.xlane.f32.xlu0 %v5144
        %v5184 = vpop.xlane.xlu0 %5183
        %5185 = vadd.xlane.f32.xlu0 %v5145
        %v5186 = vpop.xlane.xlu0 %5185
        %5187 = vadd.xlane.f32.xlu0 %v5146
        %v5188 = vpop.xlane.xlu0 %5187
        %5189 = vadd.xlane.f32.xlu0 %v5147
        %v5190 = vpop.xlane.xlu0 %5189
        %5191 = vadd.xlane.f32.xlu0 %v5148
        %v5192 = vpop.xlane.xlu0 %5191
        %5193 = vadd.xlane.f32.xlu0 %v5149
        %v5194 = vpop.xlane.xlu0 %5193
        %5195 = vadd.xlane.f32.xlu0 %v5150
        %v5196 = vpop.xlane.xlu0 %5195
        %5197 = vadd.xlane.f32.xlu0 %v5151
        %v5198 = vpop.xlane.xlu0 %5197
        %5199 = vadd.xlane.f32.xlu0 %v5152
        %v5200 = vpop.xlane.xlu0 %5199
        %5201 = vadd.xlane.f32.xlu0 %v5153
        %v5202 = vpop.xlane.xlu0 %5201
        %5203 = vadd.xlane.f32.xlu0 %v5154
        %v5204 = vpop.xlane.xlu0 %5203
        %5205 = vadd.xlane.f32.xlu0 %v5155
        %v5206 = vpop.xlane.xlu0 %5205
        %5207 = vadd.xlane.f32.xlu0 %v5156
        %v5208 = vpop.xlane.xlu0 %5207
        %5209 = vadd.xlane.f32.xlu0 %v5157
        %v5210 = vpop.xlane.xlu0 %5209
        %5211 = vadd.xlane.f32.xlu0 %v5158
        %v5212 = vpop.xlane.xlu0 %5211
        %5213 = vadd.xlane.f32.xlu0 %v5159
        %v5214 = vpop.xlane.xlu0 %5213
        %5215 = vadd.xlane.f32.xlu0 %v5160
        %v5216 = vpop.xlane.xlu0 %5215
        %5217 = vadd.xlane.f32.xlu0 %v5161
        %v5218 = vpop.xlane.xlu0 %5217
        %5219 = vadd.xlane.f32.xlu0 %v5162
        %v5220 = vpop.xlane.xlu0 %5219
        %5221 = vadd.xlane.f32.xlu0 %v5163
        %v5222 = vpop.xlane.xlu0 %5221
        %5223 = vadd.xlane.f32.xlu0 %v5164
        %v5224 = vpop.xlane.xlu0 %5223
        %5225 = vadd.xlane.f32.xlu0 %v5165
        %v5226 = vpop.xlane.xlu0 %5225
        %5227 = vadd.xlane.f32.xlu0 %v5166
        %v5228 = vpop.xlane.xlu0 %5227
        %5229 = vadd.xlane.f32.xlu0 %v5167
        %v5230 = vpop.xlane.xlu0 %5229
        %5231 = vadd.xlane.f32.xlu0 %v5168
        %v5232 = vpop.xlane.xlu0 %5231
        %v5233 = vrcp.pop 128.0
        %v5234 = vmul.f32 %v5170, %v5233
        %v5235 = vmul.f32 %v5172, %v5233
        %v5236 = vmul.f32 %v5174, %v5233
        %v5237 = vmul.f32 %v5176, %v5233
        %v5238 = vmul.f32 %v5178, %v5233
        %v5239 = vmul.f32 %v5180, %v5233
        %v5240 = vmul.f32 %v5182, %v5233
        %v5241 = vmul.f32 %v5184, %v5233
        %v5242 = vmul.f32 %v5186, %v5233
        %v5243 = vmul.f32 %v5188, %v5233
        %v5244 = vmul.f32 %v5190, %v5233
        %v5245 = vmul.f32 %v5192, %v5233
        %v5246 = vmul.f32 %v5194, %v5233
        %v5247 = vmul.f32 %v5196, %v5233
        %v5248 = vmul.f32 %v5198, %v5233
        %v5249 = vmul.f32 %v5200, %v5233
        %v5250 = vmul.f32 %v5202, %v5233
        %v5251 = vmul.f32 %v5204, %v5233
        %v5252 = vmul.f32 %v5206, %v5233
        %v5253 = vmul.f32 %v5208, %v5233
        %v5254 = vmul.f32 %v5210, %v5233
        %v5255 = vmul.f32 %v5212, %v5233
        %v5256 = vmul.f32 %v5214, %v5233
        %v5257 = vmul.f32 %v5216, %v5233
        %v5258 = vmul.f32 %v5218, %v5233
        %v5259 = vmul.f32 %v5220, %v5233
        %v5260 = vmul.f32 %v5222, %v5233
        %v5261 = vmul.f32 %v5224, %v5233
        %v5262 = vmul.f32 %v5226, %v5233
        %v5263 = vmul.f32 %v5228, %v5233
        %v5264 = vmul.f32 %v5230, %v5233
        %v5265 = vmul.f32 %v5232, %v5233
        %v5266 = vsub.f32 %v5137, %v5234
        %v5267 = vsub.f32 %v5138, %v5235
        %v5268 = vsub.f32 %v5139, %v5236
        %v5269 = vsub.f32 %v5140, %v5237
        %v5270 = vsub.f32 %v5141, %v5238
        %v5271 = vsub.f32 %v5142, %v5239
        %v5272 = vsub.f32 %v5143, %v5240
        %v5273 = vsub.f32 %v5144, %v5241
        %v5274 = vsub.f32 %v5145, %v5242
        %v5275 = vsub.f32 %v5146, %v5243
        %v5276 = vsub.f32 %v5147, %v5244
        %v5277 = vsub.f32 %v5148, %v5245
        %v5278 = vsub.f32 %v5149, %v5246
        %v5279 = vsub.f32 %v5150, %v5247
        %v5280 = vsub.f32 %v5151, %v5248
        %v5281 = vsub.f32 %v5152, %v5249
        %v5282 = vsub.f32 %v5153, %v5250
        %v5283 = vsub.f32 %v5154, %v5251
        %v5284 = vsub.f32 %v5155, %v5252
        %v5285 = vsub.f32 %v5156, %v5253
        %v5286 = vsub.f32 %v5157, %v5254
        %v5287 = vsub.f32 %v5158, %v5255
        %v5288 = vsub.f32 %v5159, %v5256
        %v5289 = vsub.f32 %v5160, %v5257
        %v5290 = vsub.f32 %v5161, %v5258
        %v5291 = vsub.f32 %v5162, %v5259
        %v5292 = vsub.f32 %v5163, %v5260
        %v5293 = vsub.f32 %v5164, %v5261
        %v5294 = vsub.f32 %v5165, %v5262
        %v5295 = vsub.f32 %v5166, %v5263
        %v5296 = vsub.f32 %v5167, %v5264
        %v5297 = vsub.f32 %v5168, %v5265
        %v5298 = vmul.f32 %v5266, %v5266
        %v5299 = vmul.f32 %v5267, %v5267
        %v5300 = vmul.f32 %v5268, %v5268
        %v5301 = vmul.f32 %v5269, %v5269
        %v5302 = vmul.f32 %v5270, %v5270
        %v5303 = vmul.f32 %v5271, %v5271
        %v5304 = vmul.f32 %v5272, %v5272
        %v5305 = vmul.f32 %v5273, %v5273
        %v5306 = vmul.f32 %v5274, %v5274
        %v5307 = vmul.f32 %v5275, %v5275
        %v5308 = vmul.f32 %v5276, %v5276
        %v5309 = vmul.f32 %v5277, %v5277
        %v5310 = vmul.f32 %v5278, %v5278
        %v5311 = vmul.f32 %v5279, %v5279
        %v5312 = vmul.f32 %v5280, %v5280
        %v5313 = vmul.f32 %v5281, %v5281
        %v5314 = vmul.f32 %v5282, %v5282
        %v5315 = vmul.f32 %v5283, %v5283
        %v5316 = vmul.f32 %v5284, %v5284
        %v5317 = vmul.f32 %v5285, %v5285
        %v5318 = vmul.f32 %v5286, %v5286
        %v5319 = vmul.f32 %v5287, %v5287
        %v5320 = vmul.f32 %v5288, %v5288
        %v5321 = vmul.f32 %v5289, %v5289
        %v5322 = vmul.f32 %v5290, %v5290
        %v5323 = vmul.f32 %v5291, %v5291
        %v5324 = vmul.f32 %v5292, %v5292
        %v5325 = vmul.f32 %v5293, %v5293
        %v5326 = vmul.f32 %v5294, %v5294
        %v5327 = vmul.f32 %v5295, %v5295
        %v5328 = vmul.f32 %v5296, %v5296
        %v5329 = vmul.f32 %v5297, %v5297
        %5330 = vadd.xlane.f32.xlu0 %v5298
        %v5331 = vpop.xlane.xlu0 %5330
        %5332 = vadd.xlane.f32.xlu0 %v5299
        %v5333 = vpop.xlane.xlu0 %5332
        %5334 = vadd.xlane.f32.xlu0 %v5300
        %v5335 = vpop.xlane.xlu0 %5334
        %5336 = vadd.xlane.f32.xlu0 %v5301
        %v5337 = vpop.xlane.xlu0 %5336
        %5338 = vadd.xlane.f32.xlu0 %v5302
        %v5339 = vpop.xlane.xlu0 %5338
        %5340 = vadd.xlane.f32.xlu0 %v5303
        %v5341 = vpop.xlane.xlu0 %5340
        %5342 = vadd.xlane.f32.xlu0 %v5304
        %v5343 = vpop.xlane.xlu0 %5342
        %5344 = vadd.xlane.f32.xlu0 %v5305
        %v5345 = vpop.xlane.xlu0 %5344
        %5346 = vadd.xlane.f32.xlu0 %v5306
        %v5347 = vpop.xlane.xlu0 %5346
        %5348 = vadd.xlane.f32.xlu0 %v5307
        %v5349 = vpop.xlane.xlu0 %5348
        %5350 = vadd.xlane.f32.xlu0 %v5308
        %v5351 = vpop.xlane.xlu0 %5350
        %5352 = vadd.xlane.f32.xlu0 %v5309
        %v5353 = vpop.xlane.xlu0 %5352
        %5354 = vadd.xlane.f32.xlu0 %v5310
        %v5355 = vpop.xlane.xlu0 %5354
        %5356 = vadd.xlane.f32.xlu0 %v5311
        %v5357 = vpop.xlane.xlu0 %5356
        %5358 = vadd.xlane.f32.xlu0 %v5312
        %v5359 = vpop.xlane.xlu0 %5358
        %5360 = vadd.xlane.f32.xlu0 %v5313
        %v5361 = vpop.xlane.xlu0 %5360
        %5362 = vadd.xlane.f32.xlu0 %v5314
        %v5363 = vpop.xlane.xlu0 %5362
        %5364 = vadd.xlane.f32.xlu0 %v5315
        %v5365 = vpop.xlane.xlu0 %5364
        %5366 = vadd.xlane.f32.xlu0 %v5316
        %v5367 = vpop.xlane.xlu0 %5366
        %5368 = vadd.xlane.f32.xlu0 %v5317
        %v5369 = vpop.xlane.xlu0 %5368
        %5370 = vadd.xlane.f32.xlu0 %v5318
        %v5371 = vpop.xlane.xlu0 %5370
        %5372 = vadd.xlane.f32.xlu0 %v5319
        %v5373 = vpop.xlane.xlu0 %5372
        %5374 = vadd.xlane.f32.xlu0 %v5320
        %v5375 = vpop.xlane.xlu0 %5374
        %5376 = vadd.xlane.f32.xlu0 %v5321
        %v5377 = vpop.xlane.xlu0 %5376
        %5378 = vadd.xlane.f32.xlu0 %v5322
        %v5379 = vpop.xlane.xlu0 %5378
        %5380 = vadd.xlane.f32.xlu0 %v5323
        %v5381 = vpop.xlane.xlu0 %5380
        %5382 = vadd.xlane.f32.xlu0 %v5324
        %v5383 = vpop.xlane.xlu0 %5382
        %5384 = vadd.xlane.f32.xlu0 %v5325
        %v5385 = vpop.xlane.xlu0 %5384
        %5386 = vadd.xlane.f32.xlu0 %v5326
        %v5387 = vpop.xlane.xlu0 %5386
        %5388 = vadd.xlane.f32.xlu0 %v5327
        %v5389 = vpop.xlane.xlu0 %5388
        %5390 = vadd.xlane.f32.xlu0 %v5328
        %v5391 = vpop.xlane.xlu0 %5390
        %5392 = vadd.xlane.f32.xlu0 %v5329
        %v5393 = vpop.xlane.xlu0 %5392
        %v5394 = vmul.f32 %v5331, %v5233
        %v5395 = vmul.f32 %v5333, %v5233
        %v5396 = vmul.f32 %v5335, %v5233
        %v5397 = vmul.f32 %v5337, %v5233
        %v5398 = vmul.f32 %v5339, %v5233
        %v5399 = vmul.f32 %v5341, %v5233
        %v5400 = vmul.f32 %v5343, %v5233
        %v5401 = vmul.f32 %v5345, %v5233
        %v5402 = vmul.f32 %v5347, %v5233
        %v5403 = vmul.f32 %v5349, %v5233
        %v5404 = vmul.f32 %v5351, %v5233
        %v5405 = vmul.f32 %v5353, %v5233
        %v5406 = vmul.f32 %v5355, %v5233
        %v5407 = vmul.f32 %v5357, %v5233
        %v5408 = vmul.f32 %v5359, %v5233
        %v5409 = vmul.f32 %v5361, %v5233
        %v5410 = vmul.f32 %v5363, %v5233
        %v5411 = vmul.f32 %v5365, %v5233
        %v5412 = vmul.f32 %v5367, %v5233
        %v5413 = vmul.f32 %v5369, %v5233
        %v5414 = vmul.f32 %v5371, %v5233
        %v5415 = vmul.f32 %v5373, %v5233
        %v5416 = vmul.f32 %v5375, %v5233
        %v5417 = vmul.f32 %v5377, %v5233
        %v5418 = vmul.f32 %v5379, %v5233
        %v5419 = vmul.f32 %v5381, %v5233
        %v5420 = vmul.f32 %v5383, %v5233
        %v5421 = vmul.f32 %v5385, %v5233
        %v5422 = vmul.f32 %v5387, %v5233
        %v5423 = vmul.f32 %v5389, %v5233
        %v5424 = vmul.f32 %v5391, %v5233
        %v5425 = vmul.f32 %v5393, %v5233
        %v5426 = vadd.f32 %v5394, 1e-06
        %v5427 = vadd.f32 %v5395, 1e-06
        %v5428 = vadd.f32 %v5396, 1e-06
        %v5429 = vadd.f32 %v5397, 1e-06
        %v5430 = vadd.f32 %v5398, 1e-06
        %v5431 = vadd.f32 %v5399, 1e-06
        %v5432 = vadd.f32 %v5400, 1e-06
        %v5433 = vadd.f32 %v5401, 1e-06
        %v5434 = vadd.f32 %v5402, 1e-06
        %v5435 = vadd.f32 %v5403, 1e-06
        %v5436 = vadd.f32 %v5404, 1e-06
        %v5437 = vadd.f32 %v5405, 1e-06
        %v5438 = vadd.f32 %v5406, 1e-06
        %v5439 = vadd.f32 %v5407, 1e-06
        %v5440 = vadd.f32 %v5408, 1e-06
        %v5441 = vadd.f32 %v5409, 1e-06
        %v5442 = vadd.f32 %v5410, 1e-06
        %v5443 = vadd.f32 %v5411, 1e-06
        %v5444 = vadd.f32 %v5412, 1e-06
        %v5445 = vadd.f32 %v5413, 1e-06
        %v5446 = vadd.f32 %v5414, 1e-06
        %v5447 = vadd.f32 %v5415, 1e-06
        %v5448 = vadd.f32 %v5416, 1e-06
        %v5449 = vadd.f32 %v5417, 1e-06
        %v5450 = vadd.f32 %v5418, 1e-06
        %v5451 = vadd.f32 %v5419, 1e-06
        %v5452 = vadd.f32 %v5420, 1e-06
        %v5453 = vadd.f32 %v5421, 1e-06
        %v5454 = vadd.f32 %v5422, 1e-06
        %v5455 = vadd.f32 %v5423, 1e-06
        %v5456 = vadd.f32 %v5424, 1e-06
        %v5457 = vadd.f32 %v5425, 1e-06
        %v5458 = vrsqrt.pop %v5426
        %v5459 = vrsqrt.pop %v5427
        %v5460 = vrsqrt.pop %v5428
        %v5461 = vrsqrt.pop %v5429
        %v5462 = vrsqrt.pop %v5430
        %v5463 = vrsqrt.pop %v5431
        %v5464 = vrsqrt.pop %v5432
        %v5465 = vrsqrt.pop %v5433
        %v5466 = vrsqrt.pop %v5434
        %v5467 = vrsqrt.pop %v5435
        %v5468 = vrsqrt.pop %v5436
        %v5469 = vrsqrt.pop %v5437
        %v5470 = vrsqrt.pop %v5438
        %v5471 = vrsqrt.pop %v5439
        %v5472 = vrsqrt.pop %v5440
        %v5473 = vrsqrt.pop %v5441
        %v5474 = vrsqrt.pop %v5442
        %v5475 = vrsqrt.pop %v5443
        %v5476 = vrsqrt.pop %v5444
        %v5477 = vrsqrt.pop %v5445
        %v5478 = vrsqrt.pop %v5446
        %v5479 = vrsqrt.pop %v5447
        %v5480 = vrsqrt.pop %v5448
        %v5481 = vrsqrt.pop %v5449
        %v5482 = vrsqrt.pop %v5450
        %v5483 = vrsqrt.pop %v5451
        %v5484 = vrsqrt.pop %v5452
        %v5485 = vrsqrt.pop %v5453
        %v5486 = vrsqrt.pop %v5454
        %v5487 = vrsqrt.pop %v5455
        %v5488 = vrsqrt.pop %v5456
        %v5489 = vrsqrt.pop %v5457
        %v5490 = vmul.f32 %v5266, %v5458
        %v5491 = vmul.f32 %v5267, %v5459
        %v5492 = vmul.f32 %v5268, %v5460
        %v5493 = vmul.f32 %v5269, %v5461
        %v5494 = vmul.f32 %v5270, %v5462
        %v5495 = vmul.f32 %v5271, %v5463
        %v5496 = vmul.f32 %v5272, %v5464
        %v5497 = vmul.f32 %v5273, %v5465
        %v5498 = vmul.f32 %v5274, %v5466
        %v5499 = vmul.f32 %v5275, %v5467
        %v5500 = vmul.f32 %v5276, %v5468
        %v5501 = vmul.f32 %v5277, %v5469
        %v5502 = vmul.f32 %v5278, %v5470
        %v5503 = vmul.f32 %v5279, %v5471
        %v5504 = vmul.f32 %v5280, %v5472
        %v5505 = vmul.f32 %v5281, %v5473
        %v5506 = vmul.f32 %v5282, %v5474
        %v5507 = vmul.f32 %v5283, %v5475
        %v5508 = vmul.f32 %v5284, %v5476
        %v5509 = vmul.f32 %v5285, %v5477
        %v5510 = vmul.f32 %v5286, %v5478
        %v5511 = vmul.f32 %v5287, %v5479
        %v5512 = vmul.f32 %v5288, %v5480
        %v5513 = vmul.f32 %v5289, %v5481
        %v5514 = vmul.f32 %v5290, %v5482
        %v5515 = vmul.f32 %v5291, %v5483
        %v5516 = vmul.f32 %v5292, %v5484
        %v5517 = vmul.f32 %v5293, %v5485
        %v5518 = vmul.f32 %v5294, %v5486
        %v5519 = vmul.f32 %v5295, %v5487
        %v5520 = vmul.f32 %v5296, %v5488
        %v5521 = vmul.f32 %v5297, %v5489
        %v5522 = vlaneseq
        %v5523 = vshrl.u32 %v5522, 7
        %v5524 = vsub.s32 1, %v5523
        %v5525 = vrot.slane %v251, %v5524
        %v5526 = vmul.f32 %v5490, %v5525
        %v5527 = vmul.f32 %v5491, %v5525
        %v5528 = vmul.f32 %v5492, %v5525
        %v5529 = vmul.f32 %v5493, %v5525
        %v5530 = vmul.f32 %v5494, %v5525
        %v5531 = vmul.f32 %v5495, %v5525
        %v5532 = vmul.f32 %v5496, %v5525
        %v5533 = vmul.f32 %v5497, %v5525
        %v5534 = vmul.f32 %v5498, %v5525
        %v5535 = vmul.f32 %v5499, %v5525
        %v5536 = vmul.f32 %v5500, %v5525
        %v5537 = vmul.f32 %v5501, %v5525
        %v5538 = vmul.f32 %v5502, %v5525
        %v5539 = vmul.f32 %v5503, %v5525
        %v5540 = vmul.f32 %v5504, %v5525
        %v5541 = vmul.f32 %v5505, %v5525
        %v5542 = vmul.f32 %v5506, %v5525
        %v5543 = vmul.f32 %v5507, %v5525
        %v5544 = vmul.f32 %v5508, %v5525
        %v5545 = vmul.f32 %v5509, %v5525
        %v5546 = vmul.f32 %v5510, %v5525
        %v5547 = vmul.f32 %v5511, %v5525
        %v5548 = vmul.f32 %v5512, %v5525
        %v5549 = vmul.f32 %v5513, %v5525
        %v5550 = vmul.f32 %v5514, %v5525
        %v5551 = vmul.f32 %v5515, %v5525
        %v5552 = vmul.f32 %v5516, %v5525
        %v5553 = vmul.f32 %v5517, %v5525
        %v5554 = vmul.f32 %v5518, %v5525
        %v5555 = vmul.f32 %v5519, %v5525
        %v5556 = vmul.f32 %v5520, %v5525
        %v5557 = vmul.f32 %v5521, %v5525
        %v5558 = vlaneseq
        %v5559 = vshrl.u32 %v5558, 7
        %v5560 = vsub.s32 2, %v5559
        %v5561 = vrot.slane %v251, %v5560
        %v5562 = vadd.f32 %v5526, %v5561
        %v5563 = vadd.f32 %v5527, %v5561
        %v5564 = vadd.f32 %v5528, %v5561
        %v5565 = vadd.f32 %v5529, %v5561
        %v5566 = vadd.f32 %v5530, %v5561
        %v5567 = vadd.f32 %v5531, %v5561
        %v5568 = vadd.f32 %v5532, %v5561
        %v5569 = vadd.f32 %v5533, %v5561
        %v5570 = vadd.f32 %v5534, %v5561
        %v5571 = vadd.f32 %v5535, %v5561
        %v5572 = vadd.f32 %v5536, %v5561
        %v5573 = vadd.f32 %v5537, %v5561
        %v5574 = vadd.f32 %v5538, %v5561
        %v5575 = vadd.f32 %v5539, %v5561
        %v5576 = vadd.f32 %v5540, %v5561
        %v5577 = vadd.f32 %v5541, %v5561
        %v5578 = vadd.f32 %v5542, %v5561
        %v5579 = vadd.f32 %v5543, %v5561
        %v5580 = vadd.f32 %v5544, %v5561
        %v5581 = vadd.f32 %v5545, %v5561
        %v5582 = vadd.f32 %v5546, %v5561
        %v5583 = vadd.f32 %v5547, %v5561
        %v5584 = vadd.f32 %v5548, %v5561
        %v5585 = vadd.f32 %v5549, %v5561
        %v5586 = vadd.f32 %v5550, %v5561
        %v5587 = vadd.f32 %v5551, %v5561
        %v5588 = vadd.f32 %v5552, %v5561
        %v5589 = vadd.f32 %v5553, %v5561
        %v5590 = vadd.f32 %v5554, %v5561
        %v5591 = vadd.f32 %v5555, %v5561
        %v5592 = vadd.f32 %v5556, %v5561
        %v5593 = vadd.f32 %v5557, %v5561
        %v5594 = vpack.c.bf16 %v5563, %v5562
        %v5595 = vpack.c.bf16 %v5565, %v5564
        %v5596 = vpack.c.bf16 %v5567, %v5566
        %v5597 = vpack.c.bf16 %v5569, %v5568
        %v5598 = vpack.c.bf16 %v5571, %v5570
        %v5599 = vpack.c.bf16 %v5573, %v5572
        %v5600 = vpack.c.bf16 %v5575, %v5574
        %v5601 = vpack.c.bf16 %v5577, %v5576
        %v5602 = vpack.c.bf16 %v5579, %v5578
        %v5603 = vpack.c.bf16 %v5581, %v5580
        %v5604 = vpack.c.bf16 %v5583, %v5582
        %v5605 = vpack.c.bf16 %v5585, %v5584
        %v5606 = vpack.c.bf16 %v5587, %v5586
        %v5607 = vpack.c.bf16 %v5589, %v5588
        %v5608 = vpack.c.bf16 %v5591, %v5590
        %v5609 = vpack.c.bf16 %v5593, %v5592
        %v5610 = vld [vmem:[%s3] sm:$0xff]
        %v5611 = vld [vmem:[%s3 + $0x8] sm:$0xff]
        %v5612 = vld [vmem:[%s3 + $0x10] sm:$0xff]
        %v5613 = vld [vmem:[%s3 + $0x18] sm:$0xff]
        %v5614 = vld [vmem:[%s3 + $0x20] sm:$0xff]
        %v5615 = vld [vmem:[%s3 + $0x28] sm:$0xff]
        %v5616 = vld [vmem:[%s3 + $0x30] sm:$0xff]
        %v5617 = vld [vmem:[%s3 + $0x38] sm:$0xff]
        %v5618 = vld [vmem:[%s3 + $0x40] sm:$0xff]
        %v5619 = vld [vmem:[%s3 + $0x48] sm:$0xff]
        %v5620 = vld [vmem:[%s3 + $0x50] sm:$0xff]
        %v5621 = vld [vmem:[%s3 + $0x58] sm:$0xff]
        %v5622 = vld [vmem:[%s3 + $0x60] sm:$0xff]
        %v5623 = vld [vmem:[%s3 + $0x68] sm:$0xff]
        %v5624 = vld [vmem:[%s3 + $0x70] sm:$0xff]
        %v5625 = vld [vmem:[%s3 + $0x78] sm:$0xff]
        %v5626 = vld [vmem:[%s3 + $0x80] sm:$0xff]
        %v5627 = vld [vmem:[%s3 + $0x88] sm:$0xff]
        %v5628 = vld [vmem:[%s3 + $0x90] sm:$0xff]
        %v5629 = vld [vmem:[%s3 + $0x98] sm:$0xff]
        %v5630 = vld [vmem:[%s3 + $0xa0] sm:$0xff]
        %v5631 = vld [vmem:[%s3 + $0xa8] sm:$0xff]
        %v5632 = vld [vmem:[%s3 + $0xb0] sm:$0xff]
        %v5633 = vld [vmem:[%s3 + $0xb8] sm:$0xff]
        %v5634 = vld [vmem:[%s3 + $0xc0] sm:$0xff]
        %v5635 = vld [vmem:[%s3 + $0xc8] sm:$0xff]
        %v5636 = vld [vmem:[%s3 + $0xd0] sm:$0xff]
        %v5637 = vld [vmem:[%s3 + $0xd8] sm:$0xff]
        %v5638 = vld [vmem:[%s3 + $0xe0] sm:$0xff]
        %v5639 = vld [vmem:[%s3 + $0xe8] sm:$0xff]
        %v5640 = vld [vmem:[%s3 + $0xf0] sm:$0xff]
        %v5641 = vld [vmem:[%s3 + $0xf8] sm:$0xff]
        %v5642 = vld [vmem:[%s4] sm:$0xf]
        %v5644 = vlaneseq
        %v5645 = vshrl.u32 %v5644, 7
        %v5646 = vsub.s32 0, %v5645
        %v5647 = vrot.slane %v5642, %v5646
        %v5648 = vlaneseq
        %v5649 = vshrl.u32 %v5648, 7
        %v5650 = vsub.s32 1, %v5649
        %v5651 = vrot.slane %v5642, %v5650
        %v5652 = vlaneseq
        %v5653 = vshrl.u32 %v5652, 7
        %v5654 = vsub.s32 2, %v5653
        %v5655 = vrot.slane %v5642, %v5654
        %v5656 = vlaneseq
        %v5657 = vshrl.u32 %v5656, 7
        %v5658 = vsub.s32 3, %v5657
        %v5659 = vrot.slane %v5642, %v5658
        %v5696 = vunpack.c.l.b16 %v5610
        %v5697 = vunpack.c.h.b16 %v5610
        %v5698 = vunpack.c.l.b16 %v5611
        %v5699 = vunpack.c.h.b16 %v5611
        %v5700 = vunpack.c.l.b16 %v5612
        %v5701 = vunpack.c.h.b16 %v5612
        %v5702 = vunpack.c.l.b16 %v5613
        %v5703 = vunpack.c.h.b16 %v5613
        %v5704 = vunpack.c.l.b16 %v5614
        %v5705 = vunpack.c.h.b16 %v5614
        %v5706 = vunpack.c.l.b16 %v5615
        %v5707 = vunpack.c.h.b16 %v5615
        %v5708 = vunpack.c.l.b16 %v5616
        %v5709 = vunpack.c.h.b16 %v5616
        %v5710 = vunpack.c.l.b16 %v5617
        %v5711 = vunpack.c.h.b16 %v5617
        %v5712 = vunpack.c.l.b16 %v5618
        %v5713 = vunpack.c.h.b16 %v5618
        %v5714 = vunpack.c.l.b16 %v5619
        %v5715 = vunpack.c.h.b16 %v5619
        %v5716 = vunpack.c.l.b16 %v5620
        %v5717 = vunpack.c.h.b16 %v5620
        %v5718 = vunpack.c.l.b16 %v5621
        %v5719 = vunpack.c.h.b16 %v5621
        %v5720 = vunpack.c.l.b16 %v5622
        %v5721 = vunpack.c.h.b16 %v5622
        %v5722 = vunpack.c.l.b16 %v5623
        %v5723 = vunpack.c.h.b16 %v5623
        %v5724 = vunpack.c.l.b16 %v5624
        %v5725 = vunpack.c.h.b16 %v5624
        %v5726 = vunpack.c.l.b16 %v5625
        %v5727 = vunpack.c.h.b16 %v5625
        %v5728 = vunpack.c.l.b16 %v5626
        %v5729 = vunpack.c.h.b16 %v5626
        %v5730 = vunpack.c.l.b16 %v5627
        %v5731 = vunpack.c.h.b16 %v5627
        %v5732 = vunpack.c.l.b16 %v5628
        %v5733 = vunpack.c.h.b16 %v5628
        %v5734 = vunpack.c.l.b16 %v5629
        %v5735 = vunpack.c.h.b16 %v5629
        %v5736 = vunpack.c.l.b16 %v5630
        %v5737 = vunpack.c.h.b16 %v5630
        %v5738 = vunpack.c.l.b16 %v5631
        %v5739 = vunpack.c.h.b16 %v5631
        %v5740 = vunpack.c.l.b16 %v5632
        %v5741 = vunpack.c.h.b16 %v5632
        %v5742 = vunpack.c.l.b16 %v5633
        %v5743 = vunpack.c.h.b16 %v5633
        %v5744 = vunpack.c.l.b16 %v5634
        %v5745 = vunpack.c.h.b16 %v5634
        %v5746 = vunpack.c.l.b16 %v5635
        %v5747 = vunpack.c.h.b16 %v5635
        %v5748 = vunpack.c.l.b16 %v5636
        %v5749 = vunpack.c.h.b16 %v5636
        %v5750 = vunpack.c.l.b16 %v5637
        %v5751 = vunpack.c.h.b16 %v5637
        %v5752 = vunpack.c.l.b16 %v5638
        %v5753 = vunpack.c.h.b16 %v5638
        %v5754 = vunpack.c.l.b16 %v5639
        %v5755 = vunpack.c.h.b16 %v5639
        %v5756 = vunpack.c.l.b16 %v5640
        %v5757 = vunpack.c.h.b16 %v5640
        %v5758 = vunpack.c.l.b16 %v5641
        %v5759 = vunpack.c.h.b16 %v5641
        %v5760 = vpack.c.b16 %v5700, %v5696
        %v5761 = vpack.c.b16 %v5701, %v5697
        %v5762 = vpack.c.b16 %v5702, %v5698
        %v5763 = vpack.c.b16 %v5703, %v5699
        %v5764 = vpack.c.b16 %v5708, %v5704
        %v5765 = vpack.c.b16 %v5709, %v5705
        %v5766 = vpack.c.b16 %v5710, %v5706
        %v5767 = vpack.c.b16 %v5711, %v5707
        %v5768 = vpack.c.b16 %v5716, %v5712
        %v5769 = vpack.c.b16 %v5717, %v5713
        %v5770 = vpack.c.b16 %v5718, %v5714
        %v5771 = vpack.c.b16 %v5719, %v5715
        %v5772 = vpack.c.b16 %v5724, %v5720
        %v5773 = vpack.c.b16 %v5725, %v5721
        %v5774 = vpack.c.b16 %v5726, %v5722
        %v5775 = vpack.c.b16 %v5727, %v5723
        %v5776 = vpack.c.b16 %v5732, %v5728
        %v5777 = vpack.c.b16 %v5733, %v5729
        %v5778 = vpack.c.b16 %v5734, %v5730
        %v5779 = vpack.c.b16 %v5735, %v5731
        %v5780 = vpack.c.b16 %v5740, %v5736
        %v5781 = vpack.c.b16 %v5741, %v5737
        %v5782 = vpack.c.b16 %v5742, %v5738
        %v5783 = vpack.c.b16 %v5743, %v5739
        %v5784 = vpack.c.b16 %v5748, %v5744
        %v5785 = vpack.c.b16 %v5749, %v5745
        %v5786 = vpack.c.b16 %v5750, %v5746
        %v5787 = vpack.c.b16 %v5751, %v5747
        %v5788 = vpack.c.b16 %v5756, %v5752
        %v5789 = vpack.c.b16 %v5757, %v5753
        %v5790 = vpack.c.b16 %v5758, %v5754
        %v5791 = vpack.c.b16 %v5759, %v5755
        %5824 = vmatprep.subr.bf16.mxu0 %v5761
        %5825 = vmatpush1.bf16.msra.mxu0 %v5760
        %5826 = vmatprep.subr.bf16.mxu0 %v5765
        %5827 = vmatpush1.bf16.msra.mxu0 %v5764
        %5828 = vmatprep.subr.bf16.mxu0 %v5769
        %5829 = vmatpush1.bf16.msra.mxu0 %v5768
        %5830 = vmatprep.subr.bf16.mxu0 %v5773
        %5831 = vmatpush1.bf16.msra.mxu0 %v5772
        %5832 = vmatprep.subr.bf16.mxu0 %v5777
        %5833 = vmatpush1.bf16.msra.mxu0 %v5776
        %5834 = vmatprep.subr.bf16.mxu0 %v5781
        %5835 = vmatpush1.bf16.msra.mxu0 %v5780
        %5836 = vmatprep.subr.bf16.mxu0 %v5785
        %5837 = vmatpush1.bf16.msra.mxu0 %v5784
        %5838 = vmatprep.subr.bf16.mxu0 %v5789
        %5839 = vmatpush1.bf16.msra.mxu0 %v5788
        %5840 = vmatprep.subr.bf16.mxu0 0
        %5841 = vmatpush1.bf16.msra.mxu0 0
        %5842 = vmatprep.subr.bf16.mxu0 0
        %5843 = vmatpush1.bf16.msra.mxu0 0
        %5844 = vmatprep.subr.bf16.mxu0 0
        %5845 = vmatpush1.bf16.msra.mxu0 0
        %5846 = vmatprep.subr.bf16.mxu0 0
        %5847 = vmatpush1.bf16.msra.mxu0 0
        %5848 = vmatprep.subr.bf16.mxu0 0
        %5849 = vmatpush1.bf16.msra.mxu0 0
        %5850 = vmatprep.subr.bf16.mxu0 0
        %5851 = vmatpush1.bf16.msra.mxu0 0
        %5852 = vmatprep.subr.bf16.mxu0 0
        %5853 = vmatpush1.bf16.msra.mxu0 0
        %5854 = vmatprep.subr.bf16.mxu0 0
        %5855 = vmatpush1.bf16.msra.mxu0 0
        %5856 = vmatprep.mubr.bf16.mxu0 0
        %5857 = vmatmul.mubr.bf16.gmra.mrb[0].mxu0 %v5594
        %v5858 = vpop.f32.mrb[0].mxu0
        %v5859 = vadd.f32 %v5647, %v5858
        %v5860 = vpop.f32.mrb[0].mxu0
        %v5861 = vadd.f32 %v5651, %v5860
        %v5862 = vpop.f32.mrb[0].mxu0
        %v5863 = vadd.f32 %v5647, %v5862
        %v5864 = vpop.f32.mrb[0].mxu0
        %v5865 = vadd.f32 %v5651, %v5864
        %5866 = vmatprep.mubr.bf16.mxu0 0
        %5867 = vmatmul.mubr.bf16.gmra.mrb[0].mxu0 %v5595
        %v5868 = vpop.f32.mrb[0].mxu0
        %v5869 = vadd.f32 %v5647, %v5868
        %v5870 = vpop.f32.mrb[0].mxu0
        %v5871 = vadd.f32 %v5651, %v5870
        %v5872 = vpop.f32.mrb[0].mxu0
        %v5873 = vadd.f32 %v5647, %v5872
        %v5874 = vpop.f32.mrb[0].mxu0
        %v5875 = vadd.f32 %v5651, %v5874
        %5876 = vmatprep.mubr.bf16.mxu0 0
        %5877 = vmatmul.mubr.bf16.gmra.mrb[0].mxu0 %v5596
        %v5878 = vpop.f32.mrb[0].mxu0
        %v5879 = vadd.f32 %v5647, %v5878
        %v5880 = vpop.f32.mrb[0].mxu0
        %v5881 = vadd.f32 %v5651, %v5880
        %v5882 = vpop.f32.mrb[0].mxu0
        %v5883 = vadd.f32 %v5647, %v5882
        %v5884 = vpop.f32.mrb[0].mxu0
        %v5885 = vadd.f32 %v5651, %v5884
        %5886 = vmatprep.mubr.bf16.mxu0 0
        %5887 = vmatmul.mubr.bf16.gmra.mrb[0].mxu0 %v5597
        %v5888 = vpop.f32.mrb[0].mxu0
        %v5889 = vadd.f32 %v5647, %v5888
        %v5890 = vpop.f32.mrb[0].mxu0
        %v5891 = vadd.f32 %v5651, %v5890
        %v5892 = vpop.f32.mrb[0].mxu0
        %v5893 = vadd.f32 %v5647, %v5892
        %v5894 = vpop.f32.mrb[0].mxu0
        %v5895 = vadd.f32 %v5651, %v5894
        %5896 = vmatprep.mubr.bf16.mxu0 0
        %5897 = vmatmul.mubr.bf16.gmra.mrb[0].mxu0 %v5598
        %v5898 = vpop.f32.mrb[0].mxu0
        %v5899 = vadd.f32 %v5647, %v5898
        %v5900 = vpop.f32.mrb[0].mxu0
        %v5901 = vadd.f32 %v5651, %v5900
        %v5902 = vpop.f32.mrb[0].mxu0
        %v5903 = vadd.f32 %v5647, %v5902
        %v5904 = vpop.f32.mrb[0].mxu0
        %v5905 = vadd.f32 %v5651, %v5904
        %5906 = vmatprep.mubr.bf16.mxu0 0
        %5907 = vmatmul.mubr.bf16.gmra.mrb[0].mxu0 %v5599
        %v5908 = vpop.f32.mrb[0].mxu0
        %v5909 = vadd.f32 %v5647, %v5908
        %v5910 = vpop.f32.mrb[0].mxu0
        %v5911 = vadd.f32 %v5651, %v5910
        %v5912 = vpop.f32.mrb[0].mxu0
        %v5913 = vadd.f32 %v5647, %v5912
        %v5914 = vpop.f32.mrb[0].mxu0
        %v5915 = vadd.f32 %v5651, %v5914
        %5916 = vmatprep.mubr.bf16.mxu0 0
        %5917 = vmatmul.mubr.bf16.gmra.mrb[0].mxu0 %v5600
        %v5918 = vpop.f32.mrb[0].mxu0
        %v5919 = vadd.f32 %v5647, %v5918
        %v5920 = vpop.f32.mrb[0].mxu0
        %v5921 = vadd.f32 %v5651, %v5920
        %v5922 = vpop.f32.mrb[0].mxu0
        %v5923 = vadd.f32 %v5647, %v5922
        %v5924 = vpop.f32.mrb[0].mxu0
        %v5925 = vadd.f32 %v5651, %v5924
        %5926 = vmatprep.mubr.bf16.mxu0 0
        %5927 = vmatmul.mubr.bf16.gmra.mrb[0].mxu0 %v5601
        %v5928 = vpop.f32.mrb[0].mxu0
        %v5929 = vadd.f32 %v5647, %v5928
        %v5930 = vpop.f32.mrb[0].mxu0
        %v5931 = vadd.f32 %v5651, %v5930
        %v5932 = vpop.f32.mrb[0].mxu0
        %v5933 = vadd.f32 %v5647, %v5932
        %v5934 = vpop.f32.mrb[0].mxu0
        %v5935 = vadd.f32 %v5651, %v5934
        %5936 = vmatprep.mubr.bf16.mxu0 0
        %5937 = vmatmul.mubr.bf16.gmra.mrb[0].mxu0 %v5602
        %v5938 = vpop.f32.mrb[0].mxu0
        %v5939 = vadd.f32 %v5647, %v5938
        %v5940 = vpop.f32.mrb[0].mxu0
        %v5941 = vadd.f32 %v5651, %v5940
        %v5942 = vpop.f32.mrb[0].mxu0
        %v5943 = vadd.f32 %v5647, %v5942
        %v5944 = vpop.f32.mrb[0].mxu0
        %v5945 = vadd.f32 %v5651, %v5944
        %5946 = vmatprep.mubr.bf16.mxu0 0
        %5947 = vmatmul.mubr.bf16.gmra.mrb[0].mxu0 %v5603
        %v5948 = vpop.f32.mrb[0].mxu0
        %v5949 = vadd.f32 %v5647, %v5948
        %v5950 = vpop.f32.mrb[0].mxu0
        %v5951 = vadd.f32 %v5651, %v5950
        %v5952 = vpop.f32.mrb[0].mxu0
        %v5953 = vadd.f32 %v5647, %v5952
        %v5954 = vpop.f32.mrb[0].mxu0
        %v5955 = vadd.f32 %v5651, %v5954
        %5956 = vmatprep.mubr.bf16.mxu0 0
        %5957 = vmatmul.mubr.bf16.gmra.mrb[0].mxu0 %v5604
        %v5958 = vpop.f32.mrb[0].mxu0
        %v5959 = vadd.f32 %v5647, %v5958
        %v5960 = vpop.f32.mrb[0].mxu0
        %v5961 = vadd.f32 %v5651, %v5960
        %v5962 = vpop.f32.mrb[0].mxu0
        %v5963 = vadd.f32 %v5647, %v5962
        %v5964 = vpop.f32.mrb[0].mxu0
        %v5965 = vadd.f32 %v5651, %v5964
        %5966 = vmatprep.mubr.bf16.mxu0 0
        %5967 = vmatmul.mubr.bf16.gmra.mrb[0].mxu0 %v5605
        %v5968 = vpop.f32.mrb[0].mxu0
        %v5969 = vadd.f32 %v5647, %v5968
        %v5970 = vpop.f32.mrb[0].mxu0
        %v5971 = vadd.f32 %v5651, %v5970
        %v5972 = vpop.f32.mrb[0].mxu0
        %v5973 = vadd.f32 %v5647, %v5972
        %v5974 = vpop.f32.mrb[0].mxu0
        %v5975 = vadd.f32 %v5651, %v5974
        %5976 = vmatprep.mubr.bf16.mxu0 0
        %5977 = vmatmul.mubr.bf16.gmra.mrb[0].mxu0 %v5606
        %v5978 = vpop.f32.mrb[0].mxu0
        %v5979 = vadd.f32 %v5647, %v5978
        %v5980 = vpop.f32.mrb[0].mxu0
        %v5981 = vadd.f32 %v5651, %v5980
        %v5982 = vpop.f32.mrb[0].mxu0
        %v5983 = vadd.f32 %v5647, %v5982
        %v5984 = vpop.f32.mrb[0].mxu0
        %v5985 = vadd.f32 %v5651, %v5984
        %5986 = vmatprep.mubr.bf16.mxu0 0
        %5987 = vmatmul.mubr.bf16.gmra.mrb[0].mxu0 %v5607
        %v5988 = vpop.f32.mrb[0].mxu0
        %v5989 = vadd.f32 %v5647, %v5988
        %v5990 = vpop.f32.mrb[0].mxu0
        %v5991 = vadd.f32 %v5651, %v5990
        %v5992 = vpop.f32.mrb[0].mxu0
        %v5993 = vadd.f32 %v5647, %v5992
        %v5994 = vpop.f32.mrb[0].mxu0
        %v5995 = vadd.f32 %v5651, %v5994
        %5996 = vmatprep.mubr.bf16.mxu0 0
        %5997 = vmatmul.mubr.bf16.gmra.mrb[0].mxu0 %v5608
        %v5998 = vpop.f32.mrb[0].mxu0
        %v5999 = vadd.f32 %v5647, %v5998
        %v6000 = vpop.f32.mrb[0].mxu0
        %v6001 = vadd.f32 %v5651, %v6000
        %v6002 = vpop.f32.mrb[0].mxu0
        %v6003 = vadd.f32 %v5647, %v6002
        %v6004 = vpop.f32.mrb[0].mxu0
        %v6005 = vadd.f32 %v5651, %v6004
        %6006 = vmatprep.mubr.bf16.mxu0 0
        %6007 = vmatmul.mubr.bf16.gmra.mrb[0].mxu0 %v5609
        %v6008 = vpop.f32.mrb[0].mxu0
        %v6009 = vadd.f32 %v5647, %v6008
        %v6010 = vpop.f32.mrb[0].mxu0
        %v6011 = vadd.f32 %v5651, %v6010
        %v6012 = vpop.f32.mrb[0].mxu0
        %v6013 = vadd.f32 %v5647, %v6012
        %v6014 = vpop.f32.mrb[0].mxu0
        %v6015 = vadd.f32 %v5651, %v6014
        %6016 = vdwg.mxu0
        %6017 = vmatprep.subr.bf16.mxu0 %v5763
        %6018 = vmatpush1.bf16.msra.mxu0 %v5762
        %6019 = vmatprep.subr.bf16.mxu0 %v5767
        %6020 = vmatpush1.bf16.msra.mxu0 %v5766
        %6021 = vmatprep.subr.bf16.mxu0 %v5771
        %6022 = vmatpush1.bf16.msra.mxu0 %v5770
        %6023 = vmatprep.subr.bf16.mxu0 %v5775
        %6024 = vmatpush1.bf16.msra.mxu0 %v5774
        %6025 = vmatprep.subr.bf16.mxu0 %v5779
        %6026 = vmatpush1.bf16.msra.mxu0 %v5778
        %6027 = vmatprep.subr.bf16.mxu0 %v5783
        %6028 = vmatpush1.bf16.msra.mxu0 %v5782
        %6029 = vmatprep.subr.bf16.mxu0 %v5787
        %6030 = vmatpush1.bf16.msra.mxu0 %v5786
        %6031 = vmatprep.subr.bf16.mxu0 %v5791
        %6032 = vmatpush1.bf16.msra.mxu0 %v5790
        %6033 = vmatprep.subr.bf16.mxu0 0
        %6034 = vmatpush1.bf16.msra.mxu0 0
        %6035 = vmatprep.subr.bf16.mxu0 0
        %6036 = vmatpush1.bf16.msra.mxu0 0
        %6037 = vmatprep.subr.bf16.mxu0 0
        %6038 = vmatpush1.bf16.msra.mxu0 0
        %6039 = vmatprep.subr.bf16.mxu0 0
        %6040 = vmatpush1.bf16.msra.mxu0 0
        %6041 = vmatprep.subr.bf16.mxu0 0
        %6042 = vmatpush1.bf16.msra.mxu0 0
        %6043 = vmatprep.subr.bf16.mxu0 0
        %6044 = vmatpush1.bf16.msra.mxu0 0
        %6045 = vmatprep.subr.bf16.mxu0 0
        %6046 = vmatpush1.bf16.msra.mxu0 0
        %6047 = vmatprep.subr.bf16.mxu0 0
        %6048 = vmatpush1.bf16.msra.mxu0 0
        %6049 = vmatprep.mubr.bf16.mxu0 0
        %6050 = vmatmul.mubr.bf16.gmra.mrb[0].mxu0 %v5594
        %v6051 = vpop.f32.mrb[0].mxu0
        %v6052 = vadd.f32 %v5655, %v6051
        %v6053 = vpop.f32.mrb[0].mxu0
        %v6054 = vadd.f32 %v5659, %v6053
        %v6055 = vpop.f32.mrb[0].mxu0
        %v6056 = vadd.f32 %v5655, %v6055
        %v6057 = vpop.f32.mrb[0].mxu0
        %v6058 = vadd.f32 %v5659, %v6057
        %6059 = vmatprep.mubr.bf16.mxu0 0
        %6060 = vmatmul.mubr.bf16.gmra.mrb[0].mxu0 %v5595
        %v6061 = vpop.f32.mrb[0].mxu0
        %v6062 = vadd.f32 %v5655, %v6061
        %v6063 = vpop.f32.mrb[0].mxu0
        %v6064 = vadd.f32 %v5659, %v6063
        %v6065 = vpop.f32.mrb[0].mxu0
        %v6066 = vadd.f32 %v5655, %v6065
        %v6067 = vpop.f32.mrb[0].mxu0
        %v6068 = vadd.f32 %v5659, %v6067
        %6069 = vmatprep.mubr.bf16.mxu0 0
        %6070 = vmatmul.mubr.bf16.gmra.mrb[0].mxu0 %v5596
        %v6071 = vpop.f32.mrb[0].mxu0
        %v6072 = vadd.f32 %v5655, %v6071
        %v6073 = vpop.f32.mrb[0].mxu0
        %v6074 = vadd.f32 %v5659, %v6073
        %v6075 = vpop.f32.mrb[0].mxu0
        %v6076 = vadd.f32 %v5655, %v6075
        %v6077 = vpop.f32.mrb[0].mxu0
        %v6078 = vadd.f32 %v5659, %v6077
        %6079 = vmatprep.mubr.bf16.mxu0 0
        %6080 = vmatmul.mubr.bf16.gmra.mrb[0].mxu0 %v5597
        %v6081 = vpop.f32.mrb[0].mxu0
        %v6082 = vadd.f32 %v5655, %v6081
        %v6083 = vpop.f32.mrb[0].mxu0
        %v6084 = vadd.f32 %v5659, %v6083
        %v6085 = vpop.f32.mrb[0].mxu0
        %v6086 = vadd.f32 %v5655, %v6085
        %v6087 = vpop.f32.mrb[0].mxu0
        %v6088 = vadd.f32 %v5659, %v6087
        %6089 = vmatprep.mubr.bf16.mxu0 0
        %6090 = vmatmul.mubr.bf16.gmra.mrb[0].mxu0 %v5598
        %v6091 = vpop.f32.mrb[0].mxu0
        %v6092 = vadd.f32 %v5655, %v6091
        %v6093 = vpop.f32.mrb[0].mxu0
        %v6094 = vadd.f32 %v5659, %v6093
        %v6095 = vpop.f32.mrb[0].mxu0
        %v6096 = vadd.f32 %v5655, %v6095
        %v6097 = vpop.f32.mrb[0].mxu0
        %v6098 = vadd.f32 %v5659, %v6097
        %6099 = vmatprep.mubr.bf16.mxu0 0
        %6100 = vmatmul.mubr.bf16.gmra.mrb[0].mxu0 %v5599
        %v6101 = vpop.f32.mrb[0].mxu0
        %v6102 = vadd.f32 %v5655, %v6101
        %v6103 = vpop.f32.mrb[0].mxu0
        %v6104 = vadd.f32 %v5659, %v6103
        %v6105 = vpop.f32.mrb[0].mxu0
        %v6106 = vadd.f32 %v5655, %v6105
        %v6107 = vpop.f32.mrb[0].mxu0
        %v6108 = vadd.f32 %v5659, %v6107
        %6109 = vmatprep.mubr.bf16.mxu0 0
        %6110 = vmatmul.mubr.bf16.gmra.mrb[0].mxu0 %v5600
        %v6111 = vpop.f32.mrb[0].mxu0
        %v6112 = vadd.f32 %v5655, %v6111
        %v6113 = vpop.f32.mrb[0].mxu0
        %v6114 = vadd.f32 %v5659, %v6113
        %v6115 = vpop.f32.mrb[0].mxu0
        %v6116 = vadd.f32 %v5655, %v6115
        %v6117 = vpop.f32.mrb[0].mxu0
        %v6118 = vadd.f32 %v5659, %v6117
        %6119 = vmatprep.mubr.bf16.mxu0 0
        %6120 = vmatmul.mubr.bf16.gmra.mrb[0].mxu0 %v5601
        %v6121 = vpop.f32.mrb[0].mxu0
        %v6122 = vadd.f32 %v5655, %v6121
        %v6123 = vpop.f32.mrb[0].mxu0
        %v6124 = vadd.f32 %v5659, %v6123
        %v6125 = vpop.f32.mrb[0].mxu0
        %v6126 = vadd.f32 %v5655, %v6125
        %v6127 = vpop.f32.mrb[0].mxu0
        %v6128 = vadd.f32 %v5659, %v6127
        %6129 = vmatprep.mubr.bf16.mxu0 0
        %6130 = vmatmul.mubr.bf16.gmra.mrb[0].mxu0 %v5602
        %v6131 = vpop.f32.mrb[0].mxu0
        %v6132 = vadd.f32 %v5655, %v6131
        %v6133 = vpop.f32.mrb[0].mxu0
        %v6134 = vadd.f32 %v5659, %v6133
        %v6135 = vpop.f32.mrb[0].mxu0
        %v6136 = vadd.f32 %v5655, %v6135
        %v6137 = vpop.f32.mrb[0].mxu0
        %v6138 = vadd.f32 %v5659, %v6137
        %6139 = vmatprep.mubr.bf16.mxu0 0
        %6140 = vmatmul.mubr.bf16.gmra.mrb[0].mxu0 %v5603
        %v6141 = vpop.f32.mrb[0].mxu0
        %v6142 = vadd.f32 %v5655, %v6141
        %v6143 = vpop.f32.mrb[0].mxu0
        %v6144 = vadd.f32 %v5659, %v6143
        %v6145 = vpop.f32.mrb[0].mxu0
        %v6146 = vadd.f32 %v5655, %v6145
        %v6147 = vpop.f32.mrb[0].mxu0
        %v6148 = vadd.f32 %v5659, %v6147
        %6149 = vmatprep.mubr.bf16.mxu0 0
        %6150 = vmatmul.mubr.bf16.gmra.mrb[0].mxu0 %v5604
        %v6151 = vpop.f32.mrb[0].mxu0
        %v6152 = vadd.f32 %v5655, %v6151
        %v6153 = vpop.f32.mrb[0].mxu0
        %v6154 = vadd.f32 %v5659, %v6153
        %v6155 = vpop.f32.mrb[0].mxu0
        %v6156 = vadd.f32 %v5655, %v6155
        %v6157 = vpop.f32.mrb[0].mxu0
        %v6158 = vadd.f32 %v5659, %v6157
        %6159 = vmatprep.mubr.bf16.mxu0 0
        %6160 = vmatmul.mubr.bf16.gmra.mrb[0].mxu0 %v5605
        %v6161 = vpop.f32.mrb[0].mxu0
        %v6162 = vadd.f32 %v5655, %v6161
        %v6163 = vpop.f32.mrb[0].mxu0
        %v6164 = vadd.f32 %v5659, %v6163
        %v6165 = vpop.f32.mrb[0].mxu0
        %v6166 = vadd.f32 %v5655, %v6165
        %v6167 = vpop.f32.mrb[0].mxu0
        %v6168 = vadd.f32 %v5659, %v6167
        %6169 = vmatprep.mubr.bf16.mxu0 0
        %6170 = vmatmul.mubr.bf16.gmra.mrb[0].mxu0 %v5606
        %v6171 = vpop.f32.mrb[0].mxu0
        %v6172 = vadd.f32 %v5655, %v6171
        %v6173 = vpop.f32.mrb[0].mxu0
        %v6174 = vadd.f32 %v5659, %v6173
        %v6175 = vpop.f32.mrb[0].mxu0
        %v6176 = vadd.f32 %v5655, %v6175
        %v6177 = vpop.f32.mrb[0].mxu0
        %v6178 = vadd.f32 %v5659, %v6177
        %6179 = vmatprep.mubr.bf16.mxu0 0
        %6180 = vmatmul.mubr.bf16.gmra.mrb[0].mxu0 %v5607
        %v6181 = vpop.f32.mrb[0].mxu0
        %v6182 = vadd.f32 %v5655, %v6181
        %v6183 = vpop.f32.mrb[0].mxu0
        %v6184 = vadd.f32 %v5659, %v6183
        %v6185 = vpop.f32.mrb[0].mxu0
        %v6186 = vadd.f32 %v5655, %v6185
        %v6187 = vpop.f32.mrb[0].mxu0
        %v6188 = vadd.f32 %v5659, %v6187
        %6189 = vmatprep.mubr.bf16.mxu0 0
        %6190 = vmatmul.mubr.bf16.gmra.mrb[0].mxu0 %v5608
        %v6191 = vpop.f32.mrb[0].mxu0
        %v6192 = vadd.f32 %v5655, %v6191
        %v6193 = vpop.f32.mrb[0].mxu0
        %v6194 = vadd.f32 %v5659, %v6193
        %v6195 = vpop.f32.mrb[0].mxu0
        %v6196 = vadd.f32 %v5655, %v6195
        %v6197 = vpop.f32.mrb[0].mxu0
        %v6198 = vadd.f32 %v5659, %v6197
        %6199 = vmatprep.mubr.bf16.mxu0 0
        %6200 = vmatmul.mubr.bf16.gmra.mrb[0].mxu0 %v5609
        %v6201 = vpop.f32.mrb[0].mxu0
        %v6202 = vadd.f32 %v5655, %v6201
        %v6203 = vpop.f32.mrb[0].mxu0
        %v6204 = vadd.f32 %v5659, %v6203
        %v6205 = vpop.f32.mrb[0].mxu0
        %v6206 = vadd.f32 %v5655, %v6205
        %v6207 = vpop.f32.mrb[0].mxu0
        %v6208 = vadd.f32 %v5659, %v6207
        %6209 = vdwg.mxu0
        %v6210 = vmul.f32 %v5859, %v5859
        %v6211 = vmul.f32 %v5861, %v5861
        %v6212 = vmul.f32 %v6052, %v6052
        %v6213 = vmul.f32 %v6054, %v6054
        %v6214 = vmul.f32 %v5863, %v5863
        %v6215 = vmul.f32 %v5865, %v5865
        %v6216 = vmul.f32 %v6056, %v6056
        %v6217 = vmul.f32 %v6058, %v6058
        %v6218 = vmul.f32 %v5869, %v5869
        %v6219 = vmul.f32 %v5871, %v5871
        %v6220 = vmul.f32 %v6062, %v6062
        %v6221 = vmul.f32 %v6064, %v6064
        %v6222 = vmul.f32 %v5873, %v5873
        %v6223 = vmul.f32 %v5875, %v5875
        %v6224 = vmul.f32 %v6066, %v6066
        %v6225 = vmul.f32 %v6068, %v6068
        %v6226 = vmul.f32 %v5879, %v5879
        %v6227 = vmul.f32 %v5881, %v5881
        %v6228 = vmul.f32 %v6072, %v6072
        %v6229 = vmul.f32 %v6074, %v6074
        %v6230 = vmul.f32 %v5883, %v5883
        %v6231 = vmul.f32 %v5885, %v5885
        %v6232 = vmul.f32 %v6076, %v6076
        %v6233 = vmul.f32 %v6078, %v6078
        %v6234 = vmul.f32 %v5889, %v5889
        %v6235 = vmul.f32 %v5891, %v5891
        %v6236 = vmul.f32 %v6082, %v6082
        %v6237 = vmul.f32 %v6084, %v6084
        %v6238 = vmul.f32 %v5893, %v5893
        %v6239 = vmul.f32 %v5895, %v5895
        %v6240 = vmul.f32 %v6086, %v6086
        %v6241 = vmul.f32 %v6088, %v6088
        %v6242 = vmul.f32 %v5899, %v5899
        %v6243 = vmul.f32 %v5901, %v5901
        %v6244 = vmul.f32 %v6092, %v6092
        %v6245 = vmul.f32 %v6094, %v6094
        %v6246 = vmul.f32 %v5903, %v5903
        %v6247 = vmul.f32 %v5905, %v5905
        %v6248 = vmul.f32 %v6096, %v6096
        %v6249 = vmul.f32 %v6098, %v6098
        %v6250 = vmul.f32 %v5909, %v5909
        %v6251 = vmul.f32 %v5911, %v5911
        %v6252 = vmul.f32 %v6102, %v6102
        %v6253 = vmul.f32 %v6104, %v6104
        %v6254 = vmul.f32 %v5913, %v5913
        %v6255 = vmul.f32 %v5915, %v5915
        %v6256 = vmul.f32 %v6106, %v6106
        %v6257 = vmul.f32 %v6108, %v6108
        %v6258 = vmul.f32 %v5919, %v5919
        %v6259 = vmul.f32 %v5921, %v5921
        %v6260 = vmul.f32 %v6112, %v6112
        %v6261 = vmul.f32 %v6114, %v6114
        %v6262 = vmul.f32 %v5923, %v5923
        %v6263 = vmul.f32 %v5925, %v5925
        %v6264 = vmul.f32 %v6116, %v6116
        %v6265 = vmul.f32 %v6118, %v6118
        %v6266 = vmul.f32 %v5929, %v5929
        %v6267 = vmul.f32 %v5931, %v5931
        %v6268 = vmul.f32 %v6122, %v6122
        %v6269 = vmul.f32 %v6124, %v6124
        %v6270 = vmul.f32 %v5933, %v5933
        %v6271 = vmul.f32 %v5935, %v5935
        %v6272 = vmul.f32 %v6126, %v6126
        %v6273 = vmul.f32 %v6128, %v6128
        %v6274 = vmul.f32 %v5939, %v5939
        %v6275 = vmul.f32 %v5941, %v5941
        %v6276 = vmul.f32 %v6132, %v6132
        %v6277 = vmul.f32 %v6134, %v6134
        %v6278 = vmul.f32 %v5943, %v5943
        %v6279 = vmul.f32 %v5945, %v5945
        %v6280 = vmul.f32 %v6136, %v6136
        %v6281 = vmul.f32 %v6138, %v6138
        %v6282 = vmul.f32 %v5949, %v5949
        %v6283 = vmul.f32 %v5951, %v5951
        %v6284 = vmul.f32 %v6142, %v6142
        %v6285 = vmul.f32 %v6144, %v6144
        %v6286 = vmul.f32 %v5953, %v5953
        %v6287 = vmul.f32 %v5955, %v5955
        %v6288 = vmul.f32 %v6146, %v6146
        %v6289 = vmul.f32 %v6148, %v6148
        %v6290 = vmul.f32 %v5959, %v5959
        %v6291 = vmul.f32 %v5961, %v5961
        %v6292 = vmul.f32 %v6152, %v6152
        %v6293 = vmul.f32 %v6154, %v6154
        %v6294 = vmul.f32 %v5963, %v5963
        %v6295 = vmul.f32 %v5965, %v5965
        %v6296 = vmul.f32 %v6156, %v6156
        %v6297 = vmul.f32 %v6158, %v6158
        %v6298 = vmul.f32 %v5969, %v5969
        %v6299 = vmul.f32 %v5971, %v5971
        %v6300 = vmul.f32 %v6162, %v6162
        %v6301 = vmul.f32 %v6164, %v6164
        %v6302 = vmul.f32 %v5973, %v5973
        %v6303 = vmul.f32 %v5975, %v5975
        %v6304 = vmul.f32 %v6166, %v6166
        %v6305 = vmul.f32 %v6168, %v6168
        %v6306 = vmul.f32 %v5979, %v5979
        %v6307 = vmul.f32 %v5981, %v5981
        %v6308 = vmul.f32 %v6172, %v6172
        %v6309 = vmul.f32 %v6174, %v6174
        %v6310 = vmul.f32 %v5983, %v5983
        %v6311 = vmul.f32 %v5985, %v5985
        %v6312 = vmul.f32 %v6176, %v6176
        %v6313 = vmul.f32 %v6178, %v6178
        %v6314 = vmul.f32 %v5989, %v5989
        %v6315 = vmul.f32 %v5991, %v5991
        %v6316 = vmul.f32 %v6182, %v6182
        %v6317 = vmul.f32 %v6184, %v6184
        %v6318 = vmul.f32 %v5993, %v5993
        %v6319 = vmul.f32 %v5995, %v5995
        %v6320 = vmul.f32 %v6186, %v6186
        %v6321 = vmul.f32 %v6188, %v6188
        %v6322 = vmul.f32 %v5999, %v5999
        %v6323 = vmul.f32 %v6001, %v6001
        %v6324 = vmul.f32 %v6192, %v6192
        %v6325 = vmul.f32 %v6194, %v6194
        %v6326 = vmul.f32 %v6003, %v6003
        %v6327 = vmul.f32 %v6005, %v6005
        %v6328 = vmul.f32 %v6196, %v6196
        %v6329 = vmul.f32 %v6198, %v6198
        %v6330 = vmul.f32 %v6009, %v6009
        %v6331 = vmul.f32 %v6011, %v6011
        %v6332 = vmul.f32 %v6202, %v6202
        %v6333 = vmul.f32 %v6204, %v6204
        %v6334 = vmul.f32 %v6013, %v6013
        %v6335 = vmul.f32 %v6015, %v6015
        %v6336 = vmul.f32 %v6206, %v6206
        %v6337 = vmul.f32 %v6208, %v6208
        %v6338 = vmul.f32 %v5859, %v6210
        %v6339 = vmul.f32 %v5861, %v6211
        %v6340 = vmul.f32 %v6052, %v6212
        %v6341 = vmul.f32 %v6054, %v6213
        %v6342 = vmul.f32 %v5863, %v6214
        %v6343 = vmul.f32 %v5865, %v6215
        %v6344 = vmul.f32 %v6056, %v6216
        %v6345 = vmul.f32 %v6058, %v6217
        %v6346 = vmul.f32 %v5869, %v6218
        %v6347 = vmul.f32 %v5871, %v6219
        %v6348 = vmul.f32 %v6062, %v6220
        %v6349 = vmul.f32 %v6064, %v6221
        %v6350 = vmul.f32 %v5873, %v6222
        %v6351 = vmul.f32 %v5875, %v6223
        %v6352 = vmul.f32 %v6066, %v6224
        %v6353 = vmul.f32 %v6068, %v6225
        %v6354 = vmul.f32 %v5879, %v6226
        %v6355 = vmul.f32 %v5881, %v6227
        %v6356 = vmul.f32 %v6072, %v6228
        %v6357 = vmul.f32 %v6074, %v6229
        %v6358 = vmul.f32 %v5883, %v6230
        %v6359 = vmul.f32 %v5885, %v6231
        %v6360 = vmul.f32 %v6076, %v6232
        %v6361 = vmul.f32 %v6078, %v6233
        %v6362 = vmul.f32 %v5889, %v6234
        %v6363 = vmul.f32 %v5891, %v6235
        %v6364 = vmul.f32 %v6082, %v6236
        %v6365 = vmul.f32 %v6084, %v6237
        %v6366 = vmul.f32 %v5893, %v6238
        %v6367 = vmul.f32 %v5895, %v6239
        %v6368 = vmul.f32 %v6086, %v6240
        %v6369 = vmul.f32 %v6088, %v6241
        %v6370 = vmul.f32 %v5899, %v6242
        %v6371 = vmul.f32 %v5901, %v6243
        %v6372 = vmul.f32 %v6092, %v6244
        %v6373 = vmul.f32 %v6094, %v6245
        %v6374 = vmul.f32 %v5903, %v6246
        %v6375 = vmul.f32 %v5905, %v6247
        %v6376 = vmul.f32 %v6096, %v6248
        %v6377 = vmul.f32 %v6098, %v6249
        %v6378 = vmul.f32 %v5909, %v6250
        %v6379 = vmul.f32 %v5911, %v6251
        %v6380 = vmul.f32 %v6102, %v6252
        %v6381 = vmul.f32 %v6104, %v6253
        %v6382 = vmul.f32 %v5913, %v6254
        %v6383 = vmul.f32 %v5915, %v6255
        %v6384 = vmul.f32 %v6106, %v6256
        %v6385 = vmul.f32 %v6108, %v6257
        %v6386 = vmul.f32 %v5919, %v6258
        %v6387 = vmul.f32 %v5921, %v6259
        %v6388 = vmul.f32 %v6112, %v6260
        %v6389 = vmul.f32 %v6114, %v6261
        %v6390 = vmul.f32 %v5923, %v6262
        %v6391 = vmul.f32 %v5925, %v6263
        %v6392 = vmul.f32 %v6116, %v6264
        %v6393 = vmul.f32 %v6118, %v6265
        %v6394 = vmul.f32 %v5929, %v6266
        %v6395 = vmul.f32 %v5931, %v6267
        %v6396 = vmul.f32 %v6122, %v6268
        %v6397 = vmul.f32 %v6124, %v6269
        %v6398 = vmul.f32 %v5933, %v6270
        %v6399 = vmul.f32 %v5935, %v6271
        %v6400 = vmul.f32 %v6126, %v6272
        %v6401 = vmul.f32 %v6128, %v6273
        %v6402 = vmul.f32 %v5939, %v6274
        %v6403 = vmul.f32 %v5941, %v6275
        %v6404 = vmul.f32 %v6132, %v6276
        %v6405 = vmul.f32 %v6134, %v6277
        %v6406 = vmul.f32 %v5943, %v6278
        %v6407 = vmul.f32 %v5945, %v6279
        %v6408 = vmul.f32 %v6136, %v6280
        %v6409 = vmul.f32 %v6138, %v6281
        %v6410 = vmul.f32 %v5949, %v6282
        %v6411 = vmul.f32 %v5951, %v6283
        %v6412 = vmul.f32 %v6142, %v6284
        %v6413 = vmul.f32 %v6144, %v6285
        %v6414 = vmul.f32 %v5953, %v6286
        %v6415 = vmul.f32 %v5955, %v6287
        %v6416 = vmul.f32 %v6146, %v6288
        %v6417 = vmul.f32 %v6148, %v6289
        %v6418 = vmul.f32 %v5959, %v6290
        %v6419 = vmul.f32 %v5961, %v6291
        %v6420 = vmul.f32 %v6152, %v6292
        %v6421 = vmul.f32 %v6154, %v6293
        %v6422 = vmul.f32 %v5963, %v6294
        %v6423 = vmul.f32 %v5965, %v6295
        %v6424 = vmul.f32 %v6156, %v6296
        %v6425 = vmul.f32 %v6158, %v6297
        %v6426 = vmul.f32 %v5969, %v6298
        %v6427 = vmul.f32 %v5971, %v6299
        %v6428 = vmul.f32 %v6162, %v6300
        %v6429 = vmul.f32 %v6164, %v6301
        %v6430 = vmul.f32 %v5973, %v6302
        %v6431 = vmul.f32 %v5975, %v6303
        %v6432 = vmul.f32 %v6166, %v6304
        %v6433 = vmul.f32 %v6168, %v6305
        %v6434 = vmul.f32 %v5979, %v6306
        %v6435 = vmul.f32 %v5981, %v6307
        %v6436 = vmul.f32 %v6172, %v6308
        %v6437 = vmul.f32 %v6174, %v6309
        %v6438 = vmul.f32 %v5983, %v6310
        %v6439 = vmul.f32 %v5985, %v6311
        %v6440 = vmul.f32 %v6176, %v6312
        %v6441 = vmul.f32 %v6178, %v6313
        %v6442 = vmul.f32 %v5989, %v6314
        %v6443 = vmul.f32 %v5991, %v6315
        %v6444 = vmul.f32 %v6182, %v6316
        %v6445 = vmul.f32 %v6184, %v6317
        %v6446 = vmul.f32 %v5993, %v6318
        %v6447 = vmul.f32 %v5995, %v6319
        %v6448 = vmul.f32 %v6186, %v6320
        %v6449 = vmul.f32 %v6188, %v6321
        %v6450 = vmul.f32 %v5999, %v6322
        %v6451 = vmul.f32 %v6001, %v6323
        %v6452 = vmul.f32 %v6192, %v6324
        %v6453 = vmul.f32 %v6194, %v6325
        %v6454 = vmul.f32 %v6003, %v6326
        %v6455 = vmul.f32 %v6005, %v6327
        %v6456 = vmul.f32 %v6196, %v6328
        %v6457 = vmul.f32 %v6198, %v6329
        %v6458 = vmul.f32 %v6009, %v6330
        %v6459 = vmul.f32 %v6011, %v6331
        %v6460 = vmul.f32 %v6202, %v6332
        %v6461 = vmul.f32 %v6204, %v6333
        %v6462 = vmul.f32 %v6013, %v6334
        %v6463 = vmul.f32 %v6015, %v6335
        %v6464 = vmul.f32 %v6206, %v6336
        %v6465 = vmul.f32 %v6208, %v6337
        %v6466 = vmul.f32 %v6338, 0.044715
        %v6467 = vmul.f32 %v6339, 0.044715
        %v6468 = vmul.f32 %v6340, 0.044715
        %v6469 = vmul.f32 %v6341, 0.044715
        %v6470 = vmul.f32 %v6342, 0.044715
        %v6471 = vmul.f32 %v6343, 0.044715
        %v6472 = vmul.f32 %v6344, 0.044715
        %v6473 = vmul.f32 %v6345, 0.044715
        %v6474 = vmul.f32 %v6346, 0.044715
        %v6475 = vmul.f32 %v6347, 0.044715
        %v6476 = vmul.f32 %v6348, 0.044715
        %v6477 = vmul.f32 %v6349, 0.044715
        %v6478 = vmul.f32 %v6350, 0.044715
        %v6479 = vmul.f32 %v6351, 0.044715
        %v6480 = vmul.f32 %v6352, 0.044715
        %v6481 = vmul.f32 %v6353, 0.044715
        %v6482 = vmul.f32 %v6354, 0.044715
        %v6483 = vmul.f32 %v6355, 0.044715
        %v6484 = vmul.f32 %v6356, 0.044715
        %v6485 = vmul.f32 %v6357, 0.044715
        %v6486 = vmul.f32 %v6358, 0.044715
        %v6487 = vmul.f32 %v6359, 0.044715
        %v6488 = vmul.f32 %v6360, 0.044715
        %v6489 = vmul.f32 %v6361, 0.044715
        %v6490 = vmul.f32 %v6362, 0.044715
        %v6491 = vmul.f32 %v6363, 0.044715
        %v6492 = vmul.f32 %v6364, 0.044715
        %v6493 = vmul.f32 %v6365, 0.044715
        %v6494 = vmul.f32 %v6366, 0.044715
        %v6495 = vmul.f32 %v6367, 0.044715
        %v6496 = vmul.f32 %v6368, 0.044715
        %v6497 = vmul.f32 %v6369, 0.044715
        %v6498 = vmul.f32 %v6370, 0.044715
        %v6499 = vmul.f32 %v6371, 0.044715
        %v6500 = vmul.f32 %v6372, 0.044715
        %v6501 = vmul.f32 %v6373, 0.044715
        %v6502 = vmul.f32 %v6374, 0.044715
        %v6503 = vmul.f32 %v6375, 0.044715
        %v6504 = vmul.f32 %v6376, 0.044715
        %v6505 = vmul.f32 %v6377, 0.044715
        %v6506 = vmul.f32 %v6378, 0.044715
        %v6507 = vmul.f32 %v6379, 0.044715
        %v6508 = vmul.f32 %v6380, 0.044715
        %v6509 = vmul.f32 %v6381, 0.044715
        %v6510 = vmul.f32 %v6382, 0.044715
        %v6511 = vmul.f32 %v6383, 0.044715
        %v6512 = vmul.f32 %v6384, 0.044715
        %v6513 = vmul.f32 %v6385, 0.044715
        %v6514 = vmul.f32 %v6386, 0.044715
        %v6515 = vmul.f32 %v6387, 0.044715
        %v6516 = vmul.f32 %v6388, 0.044715
        %v6517 = vmul.f32 %v6389, 0.044715
        %v6518 = vmul.f32 %v6390, 0.044715
        %v6519 = vmul.f32 %v6391, 0.044715
        %v6520 = vmul.f32 %v6392, 0.044715
        %v6521 = vmul.f32 %v6393, 0.044715
        %v6522 = vmul.f32 %v6394, 0.044715
        %v6523 = vmul.f32 %v6395, 0.044715
        %v6524 = vmul.f32 %v6396, 0.044715
        %v6525 = vmul.f32 %v6397, 0.044715
        %v6526 = vmul.f32 %v6398, 0.044715
        %v6527 = vmul.f32 %v6399, 0.044715
        %v6528 = vmul.f32 %v6400, 0.044715
        %v6529 = vmul.f32 %v6401, 0.044715
        %v6530 = vmul.f32 %v6402, 0.044715
        %v6531 = vmul.f32 %v6403, 0.044715
        %v6532 = vmul.f32 %v6404, 0.044715
        %v6533 = vmul.f32 %v6405, 0.044715
        %v6534 = vmul.f32 %v6406, 0.044715
        %v6535 = vmul.f32 %v6407, 0.044715
        %v6536 = vmul.f32 %v6408, 0.044715
        %v6537 = vmul.f32 %v6409, 0.044715
        %v6538 = vmul.f32 %v6410, 0.044715
        %v6539 = vmul.f32 %v6411, 0.044715
        %v6540 = vmul.f32 %v6412, 0.044715
        %v6541 = vmul.f32 %v6413, 0.044715
        %v6542 = vmul.f32 %v6414, 0.044715
        %v6543 = vmul.f32 %v6415, 0.044715
        %v6544 = vmul.f32 %v6416, 0.044715
        %v6545 = vmul.f32 %v6417, 0.044715
        %v6546 = vmul.f32 %v6418, 0.044715
        %v6547 = vmul.f32 %v6419, 0.044715
        %v6548 = vmul.f32 %v6420, 0.044715
        %v6549 = vmul.f32 %v6421, 0.044715
        %v6550 = vmul.f32 %v6422, 0.044715
        %v6551 = vmul.f32 %v6423, 0.044715
        %v6552 = vmul.f32 %v6424, 0.044715
        %v6553 = vmul.f32 %v6425, 0.044715
        %v6554 = vmul.f32 %v6426, 0.044715
        %v6555 = vmul.f32 %v6427, 0.044715
        %v6556 = vmul.f32 %v6428, 0.044715
        %v6557 = vmul.f32 %v6429, 0.044715
        %v6558 = vmul.f32 %v6430, 0.044715
        %v6559 = vmul.f32 %v6431, 0.044715
        %v6560 = vmul.f32 %v6432, 0.044715
        %v6561 = vmul.f32 %v6433, 0.044715
        %v6562 = vmul.f32 %v6434, 0.044715
        %v6563 = vmul.f32 %v6435, 0.044715
        %v6564 = vmul.f32 %v6436, 0.044715
        %v6565 = vmul.f32 %v6437, 0.044715
        %v6566 = vmul.f32 %v6438, 0.044715
        %v6567 = vmul.f32 %v6439, 0.044715
        %v6568 = vmul.f32 %v6440, 0.044715
        %v6569 = vmul.f32 %v6441, 0.044715
        %v6570 = vmul.f32 %v6442, 0.044715
        %v6571 = vmul.f32 %v6443, 0.044715
        %v6572 = vmul.f32 %v6444, 0.044715
        %v6573 = vmul.f32 %v6445, 0.044715
        %v6574 = vmul.f32 %v6446, 0.044715
        %v6575 = vmul.f32 %v6447, 0.044715
        %v6576 = vmul.f32 %v6448, 0.044715
        %v6577 = vmul.f32 %v6449, 0.044715
        %v6578 = vmul.f32 %v6450, 0.044715
        %v6579 = vmul.f32 %v6451, 0.044715
        %v6580 = vmul.f32 %v6452, 0.044715
        %v6581 = vmul.f32 %v6453, 0.044715
        %v6582 = vmul.f32 %v6454, 0.044715
        %v6583 = vmul.f32 %v6455, 0.044715
        %v6584 = vmul.f32 %v6456, 0.044715
        %v6585 = vmul.f32 %v6457, 0.044715
        %v6586 = vmul.f32 %v6458, 0.044715
        %v6587 = vmul.f32 %v6459, 0.044715
        %v6588 = vmul.f32 %v6460, 0.044715
        %v6589 = vmul.f32 %v6461, 0.044715
        %v6590 = vmul.f32 %v6462, 0.044715
        %v6591 = vmul.f32 %v6463, 0.044715
        %v6592 = vmul.f32 %v6464, 0.044715
        %v6593 = vmul.f32 %v6465, 0.044715
        %v6594 = vadd.f32 %v5859, %v6466
        %v6595 = vadd.f32 %v5861, %v6467
        %v6596 = vadd.f32 %v6052, %v6468
        %v6597 = vadd.f32 %v6054, %v6469
        %v6598 = vadd.f32 %v5863, %v6470
        %v6599 = vadd.f32 %v5865, %v6471
        %v6600 = vadd.f32 %v6056, %v6472
        %v6601 = vadd.f32 %v6058, %v6473
        %v6602 = vadd.f32 %v5869, %v6474
        %v6603 = vadd.f32 %v5871, %v6475
        %v6604 = vadd.f32 %v6062, %v6476
        %v6605 = vadd.f32 %v6064, %v6477
        %v6606 = vadd.f32 %v5873, %v6478
        %v6607 = vadd.f32 %v5875, %v6479
        %v6608 = vadd.f32 %v6066, %v6480
        %v6609 = vadd.f32 %v6068, %v6481
        %v6610 = vadd.f32 %v5879, %v6482
        %v6611 = vadd.f32 %v5881, %v6483
        %v6612 = vadd.f32 %v6072, %v6484
        %v6613 = vadd.f32 %v6074, %v6485
        %v6614 = vadd.f32 %v5883, %v6486
        %v6615 = vadd.f32 %v5885, %v6487
        %v6616 = vadd.f32 %v6076, %v6488
        %v6617 = vadd.f32 %v6078, %v6489
        %v6618 = vadd.f32 %v5889, %v6490
        %v6619 = vadd.f32 %v5891, %v6491
        %v6620 = vadd.f32 %v6082, %v6492
        %v6621 = vadd.f32 %v6084, %v6493
        %v6622 = vadd.f32 %v5893, %v6494
        %v6623 = vadd.f32 %v5895, %v6495
        %v6624 = vadd.f32 %v6086, %v6496
        %v6625 = vadd.f32 %v6088, %v6497
        %v6626 = vadd.f32 %v5899, %v6498
        %v6627 = vadd.f32 %v5901, %v6499
        %v6628 = vadd.f32 %v6092, %v6500
        %v6629 = vadd.f32 %v6094, %v6501
        %v6630 = vadd.f32 %v5903, %v6502
        %v6631 = vadd.f32 %v5905, %v6503
        %v6632 = vadd.f32 %v6096, %v6504
        %v6633 = vadd.f32 %v6098, %v6505
        %v6634 = vadd.f32 %v5909, %v6506
        %v6635 = vadd.f32 %v5911, %v6507
        %v6636 = vadd.f32 %v6102, %v6508
        %v6637 = vadd.f32 %v6104, %v6509
        %v6638 = vadd.f32 %v5913, %v6510
        %v6639 = vadd.f32 %v5915, %v6511
        %v6640 = vadd.f32 %v6106, %v6512
        %v6641 = vadd.f32 %v6108, %v6513
        %v6642 = vadd.f32 %v5919, %v6514
        %v6643 = vadd.f32 %v5921, %v6515
        %v6644 = vadd.f32 %v6112, %v6516
        %v6645 = vadd.f32 %v6114, %v6517
        %v6646 = vadd.f32 %v5923, %v6518
        %v6647 = vadd.f32 %v5925, %v6519
        %v6648 = vadd.f32 %v6116, %v6520
        %v6649 = vadd.f32 %v6118, %v6521
        %v6650 = vadd.f32 %v5929, %v6522
        %v6651 = vadd.f32 %v5931, %v6523
        %v6652 = vadd.f32 %v6122, %v6524
        %v6653 = vadd.f32 %v6124, %v6525
        %v6654 = vadd.f32 %v5933, %v6526
        %v6655 = vadd.f32 %v5935, %v6527
        %v6656 = vadd.f32 %v6126, %v6528
        %v6657 = vadd.f32 %v6128, %v6529
        %v6658 = vadd.f32 %v5939, %v6530
        %v6659 = vadd.f32 %v5941, %v6531
        %v6660 = vadd.f32 %v6132, %v6532
        %v6661 = vadd.f32 %v6134, %v6533
        %v6662 = vadd.f32 %v5943, %v6534
        %v6663 = vadd.f32 %v5945, %v6535
        %v6664 = vadd.f32 %v6136, %v6536
        %v6665 = vadd.f32 %v6138, %v6537
        %v6666 = vadd.f32 %v5949, %v6538
        %v6667 = vadd.f32 %v5951, %v6539
        %v6668 = vadd.f32 %v6142, %v6540
        %v6669 = vadd.f32 %v6144, %v6541
        %v6670 = vadd.f32 %v5953, %v6542
        %v6671 = vadd.f32 %v5955, %v6543
        %v6672 = vadd.f32 %v6146, %v6544
        %v6673 = vadd.f32 %v6148, %v6545
        %v6674 = vadd.f32 %v5959, %v6546
        %v6675 = vadd.f32 %v5961, %v6547
        %v6676 = vadd.f32 %v6152, %v6548
        %v6677 = vadd.f32 %v6154, %v6549
        %v6678 = vadd.f32 %v5963, %v6550
        %v6679 = vadd.f32 %v5965, %v6551
        %v6680 = vadd.f32 %v6156, %v6552
        %v6681 = vadd.f32 %v6158, %v6553
        %v6682 = vadd.f32 %v5969, %v6554
        %v6683 = vadd.f32 %v5971, %v6555
        %v6684 = vadd.f32 %v6162, %v6556
        %v6685 = vadd.f32 %v6164, %v6557
        %v6686 = vadd.f32 %v5973, %v6558
        %v6687 = vadd.f32 %v5975, %v6559
        %v6688 = vadd.f32 %v6166, %v6560
        %v6689 = vadd.f32 %v6168, %v6561
        %v6690 = vadd.f32 %v5979, %v6562
        %v6691 = vadd.f32 %v5981, %v6563
        %v6692 = vadd.f32 %v6172, %v6564
        %v6693 = vadd.f32 %v6174, %v6565
        %v6694 = vadd.f32 %v5983, %v6566
        %v6695 = vadd.f32 %v5985, %v6567
        %v6696 = vadd.f32 %v6176, %v6568
        %v6697 = vadd.f32 %v6178, %v6569
        %v6698 = vadd.f32 %v5989, %v6570
        %v6699 = vadd.f32 %v5991, %v6571
        %v6700 = vadd.f32 %v6182, %v6572
        %v6701 = vadd.f32 %v6184, %v6573
        %v6702 = vadd.f32 %v5993, %v6574
        %v6703 = vadd.f32 %v5995, %v6575
        %v6704 = vadd.f32 %v6186, %v6576
        %v6705 = vadd.f32 %v6188, %v6577
        %v6706 = vadd.f32 %v5999, %v6578
        %v6707 = vadd.f32 %v6001, %v6579
        %v6708 = vadd.f32 %v6192, %v6580
        %v6709 = vadd.f32 %v6194, %v6581
        %v6710 = vadd.f32 %v6003, %v6582
        %v6711 = vadd.f32 %v6005, %v6583
        %v6712 = vadd.f32 %v6196, %v6584
        %v6713 = vadd.f32 %v6198, %v6585
        %v6714 = vadd.f32 %v6009, %v6586
        %v6715 = vadd.f32 %v6011, %v6587
        %v6716 = vadd.f32 %v6202, %v6588
        %v6717 = vadd.f32 %v6204, %v6589
        %v6718 = vadd.f32 %v6013, %v6590
        %v6719 = vadd.f32 %v6015, %v6591
        %v6720 = vadd.f32 %v6206, %v6592
        %v6721 = vadd.f32 %v6208, %v6593
        %v6722 = vmul.f32 %v6594, 0.7978846
        %v6723 = vmul.f32 %v6595, 0.7978846
        %v6724 = vmul.f32 %v6596, 0.7978846
        %v6725 = vmul.f32 %v6597, 0.7978846
        %v6726 = vmul.f32 %v6598, 0.7978846
        %v6727 = vmul.f32 %v6599, 0.7978846
        %v6728 = vmul.f32 %v6600, 0.7978846
        %v6729 = vmul.f32 %v6601, 0.7978846
        %v6730 = vmul.f32 %v6602, 0.7978846
        %v6731 = vmul.f32 %v6603, 0.7978846
        %v6732 = vmul.f32 %v6604, 0.7978846
        %v6733 = vmul.f32 %v6605, 0.7978846
        %v6734 = vmul.f32 %v6606, 0.7978846
        %v6735 = vmul.f32 %v6607, 0.7978846
        %v6736 = vmul.f32 %v6608, 0.7978846
        %v6737 = vmul.f32 %v6609, 0.7978846
        %v6738 = vmul.f32 %v6610, 0.7978846
        %v6739 = vmul.f32 %v6611, 0.7978846
        %v6740 = vmul.f32 %v6612, 0.7978846
        %v6741 = vmul.f32 %v6613, 0.7978846
        %v6742 = vmul.f32 %v6614, 0.7978846
        %v6743 = vmul.f32 %v6615, 0.7978846
        %v6744 = vmul.f32 %v6616, 0.7978846
        %v6745 = vmul.f32 %v6617, 0.7978846
        %v6746 = vmul.f32 %v6618, 0.7978846
        %v6747 = vmul.f32 %v6619, 0.7978846
        %v6748 = vmul.f32 %v6620, 0.7978846
        %v6749 = vmul.f32 %v6621, 0.7978846
        %v6750 = vmul.f32 %v6622, 0.7978846
        %v6751 = vmul.f32 %v6623, 0.7978846
        %v6752 = vmul.f32 %v6624, 0.7978846
        %v6753 = vmul.f32 %v6625, 0.7978846
        %v6754 = vmul.f32 %v6626, 0.7978846
        %v6755 = vmul.f32 %v6627, 0.7978846
        %v6756 = vmul.f32 %v6628, 0.7978846
        %v6757 = vmul.f32 %v6629, 0.7978846
        %v6758 = vmul.f32 %v6630, 0.7978846
        %v6759 = vmul.f32 %v6631, 0.7978846
        %v6760 = vmul.f32 %v6632, 0.7978846
        %v6761 = vmul.f32 %v6633, 0.7978846
        %v6762 = vmul.f32 %v6634, 0.7978846
        %v6763 = vmul.f32 %v6635, 0.7978846
        %v6764 = vmul.f32 %v6636, 0.7978846
        %v6765 = vmul.f32 %v6637, 0.7978846
        %v6766 = vmul.f32 %v6638, 0.7978846
        %v6767 = vmul.f32 %v6639, 0.7978846
        %v6768 = vmul.f32 %v6640, 0.7978846
        %v6769 = vmul.f32 %v6641, 0.7978846
        %v6770 = vmul.f32 %v6642, 0.7978846
        %v6771 = vmul.f32 %v6643, 0.7978846
        %v6772 = vmul.f32 %v6644, 0.7978846
        %v6773 = vmul.f32 %v6645, 0.7978846
        %v6774 = vmul.f32 %v6646, 0.7978846
        %v6775 = vmul.f32 %v6647, 0.7978846
        %v6776 = vmul.f32 %v6648, 0.7978846
        %v6777 = vmul.f32 %v6649, 0.7978846
        %v6778 = vmul.f32 %v6650, 0.7978846
        %v6779 = vmul.f32 %v6651, 0.7978846
        %v6780 = vmul.f32 %v6652, 0.7978846
        %v6781 = vmul.f32 %v6653, 0.7978846
        %v6782 = vmul.f32 %v6654, 0.7978846
        %v6783 = vmul.f32 %v6655, 0.7978846
        %v6784 = vmul.f32 %v6656, 0.7978846
        %v6785 = vmul.f32 %v6657, 0.7978846
        %v6786 = vmul.f32 %v6658, 0.7978846
        %v6787 = vmul.f32 %v6659, 0.7978846
        %v6788 = vmul.f32 %v6660, 0.7978846
        %v6789 = vmul.f32 %v6661, 0.7978846
        %v6790 = vmul.f32 %v6662, 0.7978846
        %v6791 = vmul.f32 %v6663, 0.7978846
        %v6792 = vmul.f32 %v6664, 0.7978846
        %v6793 = vmul.f32 %v6665, 0.7978846
        %v6794 = vmul.f32 %v6666, 0.7978846
        %v6795 = vmul.f32 %v6667, 0.7978846
        %v6796 = vmul.f32 %v6668, 0.7978846
        %v6797 = vmul.f32 %v6669, 0.7978846
        %v6798 = vmul.f32 %v6670, 0.7978846
        %v6799 = vmul.f32 %v6671, 0.7978846
        %v6800 = vmul.f32 %v6672, 0.7978846
        %v6801 = vmul.f32 %v6673, 0.7978846
        %v6802 = vmul.f32 %v6674, 0.7978846
        %v6803 = vmul.f32 %v6675, 0.7978846
        %v6804 = vmul.f32 %v6676, 0.7978846
        %v6805 = vmul.f32 %v6677, 0.7978846
        %v6806 = vmul.f32 %v6678, 0.7978846
        %v6807 = vmul.f32 %v6679, 0.7978846
        %v6808 = vmul.f32 %v6680, 0.7978846
        %v6809 = vmul.f32 %v6681, 0.7978846
        %v6810 = vmul.f32 %v6682, 0.7978846
        %v6811 = vmul.f32 %v6683, 0.7978846
        %v6812 = vmul.f32 %v6684, 0.7978846
        %v6813 = vmul.f32 %v6685, 0.7978846
        %v6814 = vmul.f32 %v6686, 0.7978846
        %v6815 = vmul.f32 %v6687, 0.7978846
        %v6816 = vmul.f32 %v6688, 0.7978846
        %v6817 = vmul.f32 %v6689, 0.7978846
        %v6818 = vmul.f32 %v6690, 0.7978846
        %v6819 = vmul.f32 %v6691, 0.7978846
        %v6820 = vmul.f32 %v6692, 0.7978846
        %v6821 = vmul.f32 %v6693, 0.7978846
        %v6822 = vmul.f32 %v6694, 0.7978846
        %v6823 = vmul.f32 %v6695, 0.7978846
        %v6824 = vmul.f32 %v6696, 0.7978846
        %v6825 = vmul.f32 %v6697, 0.7978846
        %v6826 = vmul.f32 %v6698, 0.7978846
        %v6827 = vmul.f32 %v6699, 0.7978846
        %v6828 = vmul.f32 %v6700, 0.7978846
        %v6829 = vmul.f32 %v6701, 0.7978846
        %v6830 = vmul.f32 %v6702, 0.7978846
        %v6831 = vmul.f32 %v6703, 0.7978846
        %v6832 = vmul.f32 %v6704, 0.7978846
        %v6833 = vmul.f32 %v6705, 0.7978846
        %v6834 = vmul.f32 %v6706, 0.7978846
        %v6835 = vmul.f32 %v6707, 0.7978846
        %v6836 = vmul.f32 %v6708, 0.7978846
        %v6837 = vmul.f32 %v6709, 0.7978846
        %v6838 = vmul.f32 %v6710, 0.7978846
        %v6839 = vmul.f32 %v6711, 0.7978846
        %v6840 = vmul.f32 %v6712, 0.7978846
        %v6841 = vmul.f32 %v6713, 0.7978846
        %v6842 = vmul.f32 %v6714, 0.7978846
        %v6843 = vmul.f32 %v6715, 0.7978846
        %v6844 = vmul.f32 %v6716, 0.7978846
        %v6845 = vmul.f32 %v6717, 0.7978846
        %v6846 = vmul.f32 %v6718, 0.7978846
        %v6847 = vmul.f32 %v6719, 0.7978846
        %v6848 = vmul.f32 %v6720, 0.7978846
        %v6849 = vmul.f32 %v6721, 0.7978846
        %v6850 = vtanh.pop %v6722
        %v6851 = vtanh.pop %v6723
        %v6852 = vtanh.pop %v6724
        %v6853 = vtanh.pop %v6725
        %v6854 = vtanh.pop %v6726
        %v6855 = vtanh.pop %v6727
        %v6856 = vtanh.pop %v6728
        %v6857 = vtanh.pop %v6729
        %v6858 = vtanh.pop %v6730
        %v6859 = vtanh.pop %v6731
        %v6860 = vtanh.pop %v6732
        %v6861 = vtanh.pop %v6733
        %v6862 = vtanh.pop %v6734
        %v6863 = vtanh.pop %v6735
        %v6864 = vtanh.pop %v6736
        %v6865 = vtanh.pop %v6737
        %v6866 = vtanh.pop %v6738
        %v6867 = vtanh.pop %v6739
        %v6868 = vtanh.pop %v6740
        %v6869 = vtanh.pop %v6741
        %v6870 = vtanh.pop %v6742
        %v6871 = vtanh.pop %v6743
        %v6872 = vtanh.pop %v6744
        %v6873 = vtanh.pop %v6745
        %v6874 = vtanh.pop %v6746
        %v6875 = vtanh.pop %v6747
        %v6876 = vtanh.pop %v6748
        %v6877 = vtanh.pop %v6749
        %v6878 = vtanh.pop %v6750
        %v6879 = vtanh.pop %v6751
        %v6880 = vtanh.pop %v6752
        %v6881 = vtanh.pop %v6753
        %v6882 = vtanh.pop %v6754
        %v6883 = vtanh.pop %v6755
        %v6884 = vtanh.pop %v6756
        %v6885 = vtanh.pop %v6757
        %v6886 = vtanh.pop %v6758
        %v6887 = vtanh.pop %v6759
        %v6888 = vtanh.pop %v6760
        %v6889 = vtanh.pop %v6761
        %v6890 = vtanh.pop %v6762
        %v6891 = vtanh.pop %v6763
        %v6892 = vtanh.pop %v6764
        %v6893 = vtanh.pop %v6765
        %v6894 = vtanh.pop %v6766
        %v6895 = vtanh.pop %v6767
        %v6896 = vtanh.pop %v6768
        %v6897 = vtanh.pop %v6769
        %v6898 = vtanh.pop %v6770
        %v6899 = vtanh.pop %v6771
        %v6900 = vtanh.pop %v6772
        %v6901 = vtanh.pop %v6773
        %v6902 = vtanh.pop %v6774
        %v6903 = vtanh.pop %v6775
        %v6904 = vtanh.pop %v6776
        %v6905 = vtanh.pop %v6777
        %v6906 = vtanh.pop %v6778
        %v6907 = vtanh.pop %v6779
        %v6908 = vtanh.pop %v6780
        %v6909 = vtanh.pop %v6781
        %v6910 = vtanh.pop %v6782
        %v6911 = vtanh.pop %v6783
        %v6912 = vtanh.pop %v6784
        %v6913 = vtanh.pop %v6785
        %v6914 = vtanh.pop %v6786
        %v6915 = vtanh.pop %v6787
        %v6916 = vtanh.pop %v6788
        %v6917 = vtanh.pop %v6789
        %v6918 = vtanh.pop %v6790
        %v6919 = vtanh.pop %v6791
        %v6920 = vtanh.pop %v6792
        %v6921 = vtanh.pop %v6793
        %v6922 = vtanh.pop %v6794
        %v6923 = vtanh.pop %v6795
        %v6924 = vtanh.pop %v6796
        %v6925 = vtanh.pop %v6797
        %v6926 = vtanh.pop %v6798
        %v6927 = vtanh.pop %v6799
        %v6928 = vtanh.pop %v6800
        %v6929 = vtanh.pop %v6801
        %v6930 = vtanh.pop %v6802
        %v6931 = vtanh.pop %v6803
        %v6932 = vtanh.pop %v6804
        %v6933 = vtanh.pop %v6805
        %v6934 = vtanh.pop %v6806
        %v6935 = vtanh.pop %v6807
        %v6936 = vtanh.pop %v6808
        %v6937 = vtanh.pop %v6809
        %v6938 = vtanh.pop %v6810
        %v6939 = vtanh.pop %v6811
        %v6940 = vtanh.pop %v6812
        %v6941 = vtanh.pop %v6813
        %v6942 = vtanh.pop %v6814
        %v6943 = vtanh.pop %v6815
        %v6944 = vtanh.pop %v6816
        %v6945 = vtanh.pop %v6817
        %v6946 = vtanh.pop %v6818
        %v6947 = vtanh.pop %v6819
        %v6948 = vtanh.pop %v6820
        %v6949 = vtanh.pop %v6821
        %v6950 = vtanh.pop %v6822
        %v6951 = vtanh.pop %v6823
        %v6952 = vtanh.pop %v6824
        %v6953 = vtanh.pop %v6825
        %v6954 = vtanh.pop %v6826
        %v6955 = vtanh.pop %v6827
        %v6956 = vtanh.pop %v6828
        %v6957 = vtanh.pop %v6829
        %v6958 = vtanh.pop %v6830
        %v6959 = vtanh.pop %v6831
        %v6960 = vtanh.pop %v6832
        %v6961 = vtanh.pop %v6833
        %v6962 = vtanh.pop %v6834
        %v6963 = vtanh.pop %v6835
        %v6964 = vtanh.pop %v6836
        %v6965 = vtanh.pop %v6837
        %v6966 = vtanh.pop %v6838
        %v6967 = vtanh.pop %v6839
        %v6968 = vtanh.pop %v6840
        %v6969 = vtanh.pop %v6841
        %v6970 = vtanh.pop %v6842
        %v6971 = vtanh.pop %v6843
        %v6972 = vtanh.pop %v6844
        %v6973 = vtanh.pop %v6845
        %v6974 = vtanh.pop %v6846
        %v6975 = vtanh.pop %v6847
        %v6976 = vtanh.pop %v6848
        %v6977 = vtanh.pop %v6849
        %v6978 = vadd.f32 %v6850, 1.0
        %v6979 = vadd.f32 %v6851, 1.0
        %v6980 = vadd.f32 %v6852, 1.0
        %v6981 = vadd.f32 %v6853, 1.0
        %v6982 = vadd.f32 %v6854, 1.0
        %v6983 = vadd.f32 %v6855, 1.0
        %v6984 = vadd.f32 %v6856, 1.0
        %v6985 = vadd.f32 %v6857, 1.0
        %v6986 = vadd.f32 %v6858, 1.0
        %v6987 = vadd.f32 %v6859, 1.0
        %v6988 = vadd.f32 %v6860, 1.0
        %v6989 = vadd.f32 %v6861, 1.0
        %v6990 = vadd.f32 %v6862, 1.0
        %v6991 = vadd.f32 %v6863, 1.0
        %v6992 = vadd.f32 %v6864, 1.0
        %v6993 = vadd.f32 %v6865, 1.0
        %v6994 = vadd.f32 %v6866, 1.0
        %v6995 = vadd.f32 %v6867, 1.0
        %v6996 = vadd.f32 %v6868, 1.0
        %v6997 = vadd.f32 %v6869, 1.0
        %v6998 = vadd.f32 %v6870, 1.0
        %v6999 = vadd.f32 %v6871, 1.0
        %v7000 = vadd.f32 %v6872, 1.0
        %v7001 = vadd.f32 %v6873, 1.0
        %v7002 = vadd.f32 %v6874, 1.0
        %v7003 = vadd.f32 %v6875, 1.0
        %v7004 = vadd.f32 %v6876, 1.0
        %v7005 = vadd.f32 %v6877, 1.0
        %v7006 = vadd.f32 %v6878, 1.0
        %v7007 = vadd.f32 %v6879, 1.0
        %v7008 = vadd.f32 %v6880, 1.0
        %v7009 = vadd.f32 %v6881, 1.0
        %v7010 = vadd.f32 %v6882, 1.0
        %v7011 = vadd.f32 %v6883, 1.0
        %v7012 = vadd.f32 %v6884, 1.0
        %v7013 = vadd.f32 %v6885, 1.0
        %v7014 = vadd.f32 %v6886, 1.0
        %v7015 = vadd.f32 %v6887, 1.0
        %v7016 = vadd.f32 %v6888, 1.0
        %v7017 = vadd.f32 %v6889, 1.0
        %v7018 = vadd.f32 %v6890, 1.0
        %v7019 = vadd.f32 %v6891, 1.0
        %v7020 = vadd.f32 %v6892, 1.0
        %v7021 = vadd.f32 %v6893, 1.0
        %v7022 = vadd.f32 %v6894, 1.0
        %v7023 = vadd.f32 %v6895, 1.0
        %v7024 = vadd.f32 %v6896, 1.0
        %v7025 = vadd.f32 %v6897, 1.0
        %v7026 = vadd.f32 %v6898, 1.0
        %v7027 = vadd.f32 %v6899, 1.0
        %v7028 = vadd.f32 %v6900, 1.0
        %v7029 = vadd.f32 %v6901, 1.0
        %v7030 = vadd.f32 %v6902, 1.0
        %v7031 = vadd.f32 %v6903, 1.0
        %v7032 = vadd.f32 %v6904, 1.0
        %v7033 = vadd.f32 %v6905, 1.0
        %v7034 = vadd.f32 %v6906, 1.0
        %v7035 = vadd.f32 %v6907, 1.0
        %v7036 = vadd.f32 %v6908, 1.0
        %v7037 = vadd.f32 %v6909, 1.0
        %v7038 = vadd.f32 %v6910, 1.0
        %v7039 = vadd.f32 %v6911, 1.0
        %v7040 = vadd.f32 %v6912, 1.0
        %v7041 = vadd.f32 %v6913, 1.0
        %v7042 = vadd.f32 %v6914, 1.0
        %v7043 = vadd.f32 %v6915, 1.0
        %v7044 = vadd.f32 %v6916, 1.0
        %v7045 = vadd.f32 %v6917, 1.0
        %v7046 = vadd.f32 %v6918, 1.0
        %v7047 = vadd.f32 %v6919, 1.0
        %v7048 = vadd.f32 %v6920, 1.0
        %v7049 = vadd.f32 %v6921, 1.0
        %v7050 = vadd.f32 %v6922, 1.0
        %v7051 = vadd.f32 %v6923, 1.0
        %v7052 = vadd.f32 %v6924, 1.0
        %v7053 = vadd.f32 %v6925, 1.0
        %v7054 = vadd.f32 %v6926, 1.0
        %v7055 = vadd.f32 %v6927, 1.0
        %v7056 = vadd.f32 %v6928, 1.0
        %v7057 = vadd.f32 %v6929, 1.0
        %v7058 = vadd.f32 %v6930, 1.0
        %v7059 = vadd.f32 %v6931, 1.0
        %v7060 = vadd.f32 %v6932, 1.0
        %v7061 = vadd.f32 %v6933, 1.0
        %v7062 = vadd.f32 %v6934, 1.0
        %v7063 = vadd.f32 %v6935, 1.0
        %v7064 = vadd.f32 %v6936, 1.0
        %v7065 = vadd.f32 %v6937, 1.0
        %v7066 = vadd.f32 %v6938, 1.0
        %v7067 = vadd.f32 %v6939, 1.0
        %v7068 = vadd.f32 %v6940, 1.0
        %v7069 = vadd.f32 %v6941, 1.0
        %v7070 = vadd.f32 %v6942, 1.0
        %v7071 = vadd.f32 %v6943, 1.0
        %v7072 = vadd.f32 %v6944, 1.0
        %v7073 = vadd.f32 %v6945, 1.0
        %v7074 = vadd.f32 %v6946, 1.0
        %v7075 = vadd.f32 %v6947, 1.0
        %v7076 = vadd.f32 %v6948, 1.0
        %v7077 = vadd.f32 %v6949, 1.0
        %v7078 = vadd.f32 %v6950, 1.0
        %v7079 = vadd.f32 %v6951, 1.0
        %v7080 = vadd.f32 %v6952, 1.0
        %v7081 = vadd.f32 %v6953, 1.0
        %v7082 = vadd.f32 %v6954, 1.0
        %v7083 = vadd.f32 %v6955, 1.0
        %v7084 = vadd.f32 %v6956, 1.0
        %v7085 = vadd.f32 %v6957, 1.0
        %v7086 = vadd.f32 %v6958, 1.0
        %v7087 = vadd.f32 %v6959, 1.0
        %v7088 = vadd.f32 %v6960, 1.0
        %v7089 = vadd.f32 %v6961, 1.0
        %v7090 = vadd.f32 %v6962, 1.0
        %v7091 = vadd.f32 %v6963, 1.0
        %v7092 = vadd.f32 %v6964, 1.0
        %v7093 = vadd.f32 %v6965, 1.0
        %v7094 = vadd.f32 %v6966, 1.0
        %v7095 = vadd.f32 %v6967, 1.0
        %v7096 = vadd.f32 %v6968, 1.0
        %v7097 = vadd.f32 %v6969, 1.0
        %v7098 = vadd.f32 %v6970, 1.0
        %v7099 = vadd.f32 %v6971, 1.0
        %v7100 = vadd.f32 %v6972, 1.0
        %v7101 = vadd.f32 %v6973, 1.0
        %v7102 = vadd.f32 %v6974, 1.0
        %v7103 = vadd.f32 %v6975, 1.0
        %v7104 = vadd.f32 %v6976, 1.0
        %v7105 = vadd.f32 %v6977, 1.0
        %v7106 = vmul.f32 %v6978, 0.5
        %v7107 = vmul.f32 %v6979, 0.5
        %v7108 = vmul.f32 %v6980, 0.5
        %v7109 = vmul.f32 %v6981, 0.5
        %v7110 = vmul.f32 %v6982, 0.5
        %v7111 = vmul.f32 %v6983, 0.5
        %v7112 = vmul.f32 %v6984, 0.5
        %v7113 = vmul.f32 %v6985, 0.5
        %v7114 = vmul.f32 %v6986, 0.5
        %v7115 = vmul.f32 %v6987, 0.5
        %v7116 = vmul.f32 %v6988, 0.5
        %v7117 = vmul.f32 %v6989, 0.5
        %v7118 = vmul.f32 %v6990, 0.5
        %v7119 = vmul.f32 %v6991, 0.5
        %v7120 = vmul.f32 %v6992, 0.5
        %v7121 = vmul.f32 %v6993, 0.5
        %v7122 = vmul.f32 %v6994, 0.5
        %v7123 = vmul.f32 %v6995, 0.5
        %v7124 = vmul.f32 %v6996, 0.5
        %v7125 = vmul.f32 %v6997, 0.5
        %v7126 = vmul.f32 %v6998, 0.5
        %v7127 = vmul.f32 %v6999, 0.5
        %v7128 = vmul.f32 %v7000, 0.5
        %v7129 = vmul.f32 %v7001, 0.5
        %v7130 = vmul.f32 %v7002, 0.5
        %v7131 = vmul.f32 %v7003, 0.5
        %v7132 = vmul.f32 %v7004, 0.5
        %v7133 = vmul.f32 %v7005, 0.5
        %v7134 = vmul.f32 %v7006, 0.5
        %v7135 = vmul.f32 %v7007, 0.5
        %v7136 = vmul.f32 %v7008, 0.5
        %v7137 = vmul.f32 %v7009, 0.5
        %v7138 = vmul.f32 %v7010, 0.5
        %v7139 = vmul.f32 %v7011, 0.5
        %v7140 = vmul.f32 %v7012, 0.5
        %v7141 = vmul.f32 %v7013, 0.5
        %v7142 = vmul.f32 %v7014, 0.5
        %v7143 = vmul.f32 %v7015, 0.5
        %v7144 = vmul.f32 %v7016, 0.5
        %v7145 = vmul.f32 %v7017, 0.5
        %v7146 = vmul.f32 %v7018, 0.5
        %v7147 = vmul.f32 %v7019, 0.5
        %v7148 = vmul.f32 %v7020, 0.5
        %v7149 = vmul.f32 %v7021, 0.5
        %v7150 = vmul.f32 %v7022, 0.5
        %v7151 = vmul.f32 %v7023, 0.5
        %v7152 = vmul.f32 %v7024, 0.5
        %v7153 = vmul.f32 %v7025, 0.5
        %v7154 = vmul.f32 %v7026, 0.5
        %v7155 = vmul.f32 %v7027, 0.5
        %v7156 = vmul.f32 %v7028, 0.5
        %v7157 = vmul.f32 %v7029, 0.5
        %v7158 = vmul.f32 %v7030, 0.5
        %v7159 = vmul.f32 %v7031, 0.5
        %v7160 = vmul.f32 %v7032, 0.5
        %v7161 = vmul.f32 %v7033, 0.5
        %v7162 = vmul.f32 %v7034, 0.5
        %v7163 = vmul.f32 %v7035, 0.5
        %v7164 = vmul.f32 %v7036, 0.5
        %v7165 = vmul.f32 %v7037, 0.5
        %v7166 = vmul.f32 %v7038, 0.5
        %v7167 = vmul.f32 %v7039, 0.5
        %v7168 = vmul.f32 %v7040, 0.5
        %v7169 = vmul.f32 %v7041, 0.5
        %v7170 = vmul.f32 %v7042, 0.5
        %v7171 = vmul.f32 %v7043, 0.5
        %v7172 = vmul.f32 %v7044, 0.5
        %v7173 = vmul.f32 %v7045, 0.5
        %v7174 = vmul.f32 %v7046, 0.5
        %v7175 = vmul.f32 %v7047, 0.5
        %v7176 = vmul.f32 %v7048, 0.5
        %v7177 = vmul.f32 %v7049, 0.5
        %v7178 = vmul.f32 %v7050, 0.5
        %v7179 = vmul.f32 %v7051, 0.5
        %v7180 = vmul.f32 %v7052, 0.5
        %v7181 = vmul.f32 %v7053, 0.5
        %v7182 = vmul.f32 %v7054, 0.5
        %v7183 = vmul.f32 %v7055, 0.5
        %v7184 = vmul.f32 %v7056, 0.5
        %v7185 = vmul.f32 %v7057, 0.5
        %v7186 = vmul.f32 %v7058, 0.5
        %v7187 = vmul.f32 %v7059, 0.5
        %v7188 = vmul.f32 %v7060, 0.5
        %v7189 = vmul.f32 %v7061, 0.5
        %v7190 = vmul.f32 %v7062, 0.5
        %v7191 = vmul.f32 %v7063, 0.5
        %v7192 = vmul.f32 %v7064, 0.5
        %v7193 = vmul.f32 %v7065, 0.5
        %v7194 = vmul.f32 %v7066, 0.5
        %v7195 = vmul.f32 %v7067, 0.5
        %v7196 = vmul.f32 %v7068, 0.5
        %v7197 = vmul.f32 %v7069, 0.5
        %v7198 = vmul.f32 %v7070, 0.5
        %v7199 = vmul.f32 %v7071, 0.5
        %v7200 = vmul.f32 %v7072, 0.5
        %v7201 = vmul.f32 %v7073, 0.5
        %v7202 = vmul.f32 %v7074, 0.5
        %v7203 = vmul.f32 %v7075, 0.5
        %v7204 = vmul.f32 %v7076, 0.5
        %v7205 = vmul.f32 %v7077, 0.5
        %v7206 = vmul.f32 %v7078, 0.5
        %v7207 = vmul.f32 %v7079, 0.5
        %v7208 = vmul.f32 %v7080, 0.5
        %v7209 = vmul.f32 %v7081, 0.5
        %v7210 = vmul.f32 %v7082, 0.5
        %v7211 = vmul.f32 %v7083, 0.5
        %v7212 = vmul.f32 %v7084, 0.5
        %v7213 = vmul.f32 %v7085, 0.5
        %v7214 = vmul.f32 %v7086, 0.5
        %v7215 = vmul.f32 %v7087, 0.5
        %v7216 = vmul.f32 %v7088, 0.5
        %v7217 = vmul.f32 %v7089, 0.5
        %v7218 = vmul.f32 %v7090, 0.5
        %v7219 = vmul.f32 %v7091, 0.5
        %v7220 = vmul.f32 %v7092, 0.5
        %v7221 = vmul.f32 %v7093, 0.5
        %v7222 = vmul.f32 %v7094, 0.5
        %v7223 = vmul.f32 %v7095, 0.5
        %v7224 = vmul.f32 %v7096, 0.5
        %v7225 = vmul.f32 %v7097, 0.5
        %v7226 = vmul.f32 %v7098, 0.5
        %v7227 = vmul.f32 %v7099, 0.5
        %v7228 = vmul.f32 %v7100, 0.5
        %v7229 = vmul.f32 %v7101, 0.5
        %v7230 = vmul.f32 %v7102, 0.5
        %v7231 = vmul.f32 %v7103, 0.5
        %v7232 = vmul.f32 %v7104, 0.5
        %v7233 = vmul.f32 %v7105, 0.5
        %v7234 = vmul.f32 %v5859, %v7106
        %v7235 = vmul.f32 %v5861, %v7107
        %v7236 = vmul.f32 %v6052, %v7108
        %v7237 = vmul.f32 %v6054, %v7109
        %v7238 = vmul.f32 %v5863, %v7110
        %v7239 = vmul.f32 %v5865, %v7111
        %v7240 = vmul.f32 %v6056, %v7112
        %v7241 = vmul.f32 %v6058, %v7113
        %v7242 = vmul.f32 %v5869, %v7114
        %v7243 = vmul.f32 %v5871, %v7115
        %v7244 = vmul.f32 %v6062, %v7116
        %v7245 = vmul.f32 %v6064, %v7117
        %v7246 = vmul.f32 %v5873, %v7118
        %v7247 = vmul.f32 %v5875, %v7119
        %v7248 = vmul.f32 %v6066, %v7120
        %v7249 = vmul.f32 %v6068, %v7121
        %v7250 = vmul.f32 %v5879, %v7122
        %v7251 = vmul.f32 %v5881, %v7123
        %v7252 = vmul.f32 %v6072, %v7124
        %v7253 = vmul.f32 %v6074, %v7125
        %v7254 = vmul.f32 %v5883, %v7126
        %v7255 = vmul.f32 %v5885, %v7127
        %v7256 = vmul.f32 %v6076, %v7128
        %v7257 = vmul.f32 %v6078, %v7129
        %v7258 = vmul.f32 %v5889, %v7130
        %v7259 = vmul.f32 %v5891, %v7131
        %v7260 = vmul.f32 %v6082, %v7132
        %v7261 = vmul.f32 %v6084, %v7133
        %v7262 = vmul.f32 %v5893, %v7134
        %v7263 = vmul.f32 %v5895, %v7135
        %v7264 = vmul.f32 %v6086, %v7136
        %v7265 = vmul.f32 %v6088, %v7137
        %v7266 = vmul.f32 %v5899, %v7138
        %v7267 = vmul.f32 %v5901, %v7139
        %v7268 = vmul.f32 %v6092, %v7140
        %v7269 = vmul.f32 %v6094, %v7141
        %v7270 = vmul.f32 %v5903, %v7142
        %v7271 = vmul.f32 %v5905, %v7143
        %v7272 = vmul.f32 %v6096, %v7144
        %v7273 = vmul.f32 %v6098, %v7145
        %v7274 = vmul.f32 %v5909, %v7146
        %v7275 = vmul.f32 %v5911, %v7147
        %v7276 = vmul.f32 %v6102, %v7148
        %v7277 = vmul.f32 %v6104, %v7149
        %v7278 = vmul.f32 %v5913, %v7150
        %v7279 = vmul.f32 %v5915, %v7151
        %v7280 = vmul.f32 %v6106, %v7152
        %v7281 = vmul.f32 %v6108, %v7153
        %v7282 = vmul.f32 %v5919, %v7154
        %v7283 = vmul.f32 %v5921, %v7155
        %v7284 = vmul.f32 %v6112, %v7156
        %v7285 = vmul.f32 %v6114, %v7157
        %v7286 = vmul.f32 %v5923, %v7158
        %v7287 = vmul.f32 %v5925, %v7159
        %v7288 = vmul.f32 %v6116, %v7160
        %v7289 = vmul.f32 %v6118, %v7161
        %v7290 = vmul.f32 %v5929, %v7162
        %v7291 = vmul.f32 %v5931, %v7163
        %v7292 = vmul.f32 %v6122, %v7164
        %v7293 = vmul.f32 %v6124, %v7165
        %v7294 = vmul.f32 %v5933, %v7166
        %v7295 = vmul.f32 %v5935, %v7167
        %v7296 = vmul.f32 %v6126, %v7168
        %v7297 = vmul.f32 %v6128, %v7169
        %v7298 = vmul.f32 %v5939, %v7170
        %v7299 = vmul.f32 %v5941, %v7171
        %v7300 = vmul.f32 %v6132, %v7172
        %v7301 = vmul.f32 %v6134, %v7173
        %v7302 = vmul.f32 %v5943, %v7174
        %v7303 = vmul.f32 %v5945, %v7175
        %v7304 = vmul.f32 %v6136, %v7176
        %v7305 = vmul.f32 %v6138, %v7177
        %v7306 = vmul.f32 %v5949, %v7178
        %v7307 = vmul.f32 %v5951, %v7179
        %v7308 = vmul.f32 %v6142, %v7180
        %v7309 = vmul.f32 %v6144, %v7181
        %v7310 = vmul.f32 %v5953, %v7182
        %v7311 = vmul.f32 %v5955, %v7183
        %v7312 = vmul.f32 %v6146, %v7184
        %v7313 = vmul.f32 %v6148, %v7185
        %v7314 = vmul.f32 %v5959, %v7186
        %v7315 = vmul.f32 %v5961, %v7187
        %v7316 = vmul.f32 %v6152, %v7188
        %v7317 = vmul.f32 %v6154, %v7189
        %v7318 = vmul.f32 %v5963, %v7190
        %v7319 = vmul.f32 %v5965, %v7191
        %v7320 = vmul.f32 %v6156, %v7192
        %v7321 = vmul.f32 %v6158, %v7193
        %v7322 = vmul.f32 %v5969, %v7194
        %v7323 = vmul.f32 %v5971, %v7195
        %v7324 = vmul.f32 %v6162, %v7196
        %v7325 = vmul.f32 %v6164, %v7197
        %v7326 = vmul.f32 %v5973, %v7198
        %v7327 = vmul.f32 %v5975, %v7199
        %v7328 = vmul.f32 %v6166, %v7200
        %v7329 = vmul.f32 %v6168, %v7201
        %v7330 = vmul.f32 %v5979, %v7202
        %v7331 = vmul.f32 %v5981, %v7203
        %v7332 = vmul.f32 %v6172, %v7204
        %v7333 = vmul.f32 %v6174, %v7205
        %v7334 = vmul.f32 %v5983, %v7206
        %v7335 = vmul.f32 %v5985, %v7207
        %v7336 = vmul.f32 %v6176, %v7208
        %v7337 = vmul.f32 %v6178, %v7209
        %v7338 = vmul.f32 %v5989, %v7210
        %v7339 = vmul.f32 %v5991, %v7211
        %v7340 = vmul.f32 %v6182, %v7212
        %v7341 = vmul.f32 %v6184, %v7213
        %v7342 = vmul.f32 %v5993, %v7214
        %v7343 = vmul.f32 %v5995, %v7215
        %v7344 = vmul.f32 %v6186, %v7216
        %v7345 = vmul.f32 %v6188, %v7217
        %v7346 = vmul.f32 %v5999, %v7218
        %v7347 = vmul.f32 %v6001, %v7219
        %v7348 = vmul.f32 %v6192, %v7220
        %v7349 = vmul.f32 %v6194, %v7221
        %v7350 = vmul.f32 %v6003, %v7222
        %v7351 = vmul.f32 %v6005, %v7223
        %v7352 = vmul.f32 %v6196, %v7224
        %v7353 = vmul.f32 %v6198, %v7225
        %v7354 = vmul.f32 %v6009, %v7226
        %v7355 = vmul.f32 %v6011, %v7227
        %v7356 = vmul.f32 %v6202, %v7228
        %v7357 = vmul.f32 %v6204, %v7229
        %v7358 = vmul.f32 %v6013, %v7230
        %v7359 = vmul.f32 %v6015, %v7231
        %v7360 = vmul.f32 %v6206, %v7232
        %v7361 = vmul.f32 %v6208, %v7233
        %v7362 = vpack.c.bf16 %v7238, %v7234
        %v7363 = vpack.c.bf16 %v7239, %v7235
        %v7364 = vpack.c.bf16 %v7240, %v7236
        %v7365 = vpack.c.bf16 %v7241, %v7237
        %v7366 = vpack.c.bf16 %v7246, %v7242
        %v7367 = vpack.c.bf16 %v7247, %v7243
        %v7368 = vpack.c.bf16 %v7248, %v7244
        %v7369 = vpack.c.bf16 %v7249, %v7245
        %v7370 = vpack.c.bf16 %v7254, %v7250
        %v7371 = vpack.c.bf16 %v7255, %v7251
        %v7372 = vpack.c.bf16 %v7256, %v7252
        %v7373 = vpack.c.bf16 %v7257, %v7253
        %v7374 = vpack.c.bf16 %v7262, %v7258
        %v7375 = vpack.c.bf16 %v7263, %v7259
        %v7376 = vpack.c.bf16 %v7264, %v7260
        %v7377 = vpack.c.bf16 %v7265, %v7261
        %v7378 = vpack.c.bf16 %v7270, %v7266
        %v7379 = vpack.c.bf16 %v7271, %v7267
        %v7380 = vpack.c.bf16 %v7272, %v7268
        %v7381 = vpack.c.bf16 %v7273, %v7269
        %v7382 = vpack.c.bf16 %v7278, %v7274
        %v7383 = vpack.c.bf16 %v7279, %v7275
        %v7384 = vpack.c.bf16 %v7280, %v7276
        %v7385 = vpack.c.bf16 %v7281, %v7277
        %v7386 = vpack.c.bf16 %v7286, %v7282
        %v7387 = vpack.c.bf16 %v7287, %v7283
        %v7388 = vpack.c.bf16 %v7288, %v7284
        %v7389 = vpack.c.bf16 %v7289, %v7285
        %v7390 = vpack.c.bf16 %v7294, %v7290
        %v7391 = vpack.c.bf16 %v7295, %v7291
        %v7392 = vpack.c.bf16 %v7296, %v7292
        %v7393 = vpack.c.bf16 %v7297, %v7293
        %v7394 = vpack.c.bf16 %v7302, %v7298
        %v7395 = vpack.c.bf16 %v7303, %v7299
        %v7396 = vpack.c.bf16 %v7304, %v7300
        %v7397 = vpack.c.bf16 %v7305, %v7301
        %v7398 = vpack.c.bf16 %v7310, %v7306
        %v7399 = vpack.c.bf16 %v7311, %v7307
        %v7400 = vpack.c.bf16 %v7312, %v7308
        %v7401 = vpack.c.bf16 %v7313, %v7309
        %v7402 = vpack.c.bf16 %v7318, %v7314
        %v7403 = vpack.c.bf16 %v7319, %v7315
        %v7404 = vpack.c.bf16 %v7320, %v7316
        %v7405 = vpack.c.bf16 %v7321, %v7317
        %v7406 = vpack.c.bf16 %v7326, %v7322
        %v7407 = vpack.c.bf16 %v7327, %v7323
        %v7408 = vpack.c.bf16 %v7328, %v7324
        %v7409 = vpack.c.bf16 %v7329, %v7325
        %v7410 = vpack.c.bf16 %v7334, %v7330
        %v7411 = vpack.c.bf16 %v7335, %v7331
        %v7412 = vpack.c.bf16 %v7336, %v7332
        %v7413 = vpack.c.bf16 %v7337, %v7333
        %v7414 = vpack.c.bf16 %v7342, %v7338
        %v7415 = vpack.c.bf16 %v7343, %v7339
        %v7416 = vpack.c.bf16 %v7344, %v7340
        %v7417 = vpack.c.bf16 %v7345, %v7341
        %v7418 = vpack.c.bf16 %v7350, %v7346
        %v7419 = vpack.c.bf16 %v7351, %v7347
        %v7420 = vpack.c.bf16 %v7352, %v7348
        %v7421 = vpack.c.bf16 %v7353, %v7349
        %v7422 = vpack.c.bf16 %v7358, %v7354
        %v7423 = vpack.c.bf16 %v7359, %v7355
        %v7424 = vpack.c.bf16 %v7360, %v7356
        %v7425 = vpack.c.bf16 %v7361, %v7357
        %v7426 = vld [vmem:[%s5] sm:$0xf]
        %v7427 = vld [vmem:[%s5 + $0x4] sm:$0xf]
        %v7428 = vld [vmem:[%s5 + $0x8] sm:$0xf]
        %v7429 = vld [vmem:[%s5 + $0xc] sm:$0xf]
        %v7430 = vld [vmem:[%s5 + $0x10] sm:$0xf]
        %v7431 = vld [vmem:[%s5 + $0x14] sm:$0xf]
        %v7432 = vld [vmem:[%s5 + $0x18] sm:$0xf]
        %v7433 = vld [vmem:[%s5 + $0x1c] sm:$0xf]
        %v7434 = vld [vmem:[%s5 + $0x20] sm:$0xf]
        %v7435 = vld [vmem:[%s5 + $0x24] sm:$0xf]
        %v7436 = vld [vmem:[%s5 + $0x28] sm:$0xf]
        %v7437 = vld [vmem:[%s5 + $0x2c] sm:$0xf]
        %v7438 = vld [vmem:[%s5 + $0x30] sm:$0xf]
        %v7439 = vld [vmem:[%s5 + $0x34] sm:$0xf]
        %v7440 = vld [vmem:[%s5 + $0x38] sm:$0xf]
        %v7441 = vld [vmem:[%s5 + $0x3c] sm:$0xf]
        %v7442 = vld [vmem:[%s5 + $0x40] sm:$0xf]
        %v7443 = vld [vmem:[%s5 + $0x44] sm:$0xf]
        %v7444 = vld [vmem:[%s5 + $0x48] sm:$0xf]
        %v7445 = vld [vmem:[%s5 + $0x4c] sm:$0xf]
        %v7446 = vld [vmem:[%s5 + $0x50] sm:$0xf]
        %v7447 = vld [vmem:[%s5 + $0x54] sm:$0xf]
        %v7448 = vld [vmem:[%s5 + $0x58] sm:$0xf]
        %v7449 = vld [vmem:[%s5 + $0x5c] sm:$0xf]
        %v7450 = vld [vmem:[%s5 + $0x60] sm:$0xf]
        %v7451 = vld [vmem:[%s5 + $0x64] sm:$0xf]
        %v7452 = vld [vmem:[%s5 + $0x68] sm:$0xf]
        %v7453 = vld [vmem:[%s5 + $0x6c] sm:$0xf]
        %v7454 = vld [vmem:[%s5 + $0x70] sm:$0xf]
        %v7455 = vld [vmem:[%s5 + $0x74] sm:$0xf]
        %v7456 = vld [vmem:[%s5 + $0x78] sm:$0xf]
        %v7457 = vld [vmem:[%s5 + $0x7c] sm:$0xf]
        %v7458 = vld [vmem:[%s5 + $0x80] sm:$0xf]
        %v7459 = vld [vmem:[%s5 + $0x84] sm:$0xf]
        %v7460 = vld [vmem:[%s5 + $0x88] sm:$0xf]
        %v7461 = vld [vmem:[%s5 + $0x8c] sm:$0xf]
        %v7462 = vld [vmem:[%s5 + $0x90] sm:$0xf]
        %v7463 = vld [vmem:[%s5 + $0x94] sm:$0xf]
        %v7464 = vld [vmem:[%s5 + $0x98] sm:$0xf]
        %v7465 = vld [vmem:[%s5 + $0x9c] sm:$0xf]
        %v7466 = vld [vmem:[%s5 + $0xa0] sm:$0xf]
        %v7467 = vld [vmem:[%s5 + $0xa4] sm:$0xf]
        %v7468 = vld [vmem:[%s5 + $0xa8] sm:$0xf]
        %v7469 = vld [vmem:[%s5 + $0xac] sm:$0xf]
        %v7470 = vld [vmem:[%s5 + $0xb0] sm:$0xf]
        %v7471 = vld [vmem:[%s5 + $0xb4] sm:$0xf]
        %v7472 = vld [vmem:[%s5 + $0xb8] sm:$0xf]
        %v7473 = vld [vmem:[%s5 + $0xbc] sm:$0xf]
        %v7474 = vld [vmem:[%s5 + $0xc0] sm:$0xf]
        %v7475 = vld [vmem:[%s5 + $0xc4] sm:$0xf]
        %v7476 = vld [vmem:[%s5 + $0xc8] sm:$0xf]
        %v7477 = vld [vmem:[%s5 + $0xcc] sm:$0xf]
        %v7478 = vld [vmem:[%s5 + $0xd0] sm:$0xf]
        %v7479 = vld [vmem:[%s5 + $0xd4] sm:$0xf]
        %v7480 = vld [vmem:[%s5 + $0xd8] sm:$0xf]
        %v7481 = vld [vmem:[%s5 + $0xdc] sm:$0xf]
        %v7482 = vld [vmem:[%s5 + $0xe0] sm:$0xf]
        %v7483 = vld [vmem:[%s5 + $0xe4] sm:$0xf]
        %v7484 = vld [vmem:[%s5 + $0xe8] sm:$0xf]
        %v7485 = vld [vmem:[%s5 + $0xec] sm:$0xf]
        %v7486 = vld [vmem:[%s5 + $0xf0] sm:$0xf]
        %v7487 = vld [vmem:[%s5 + $0xf4] sm:$0xf]
        %v7488 = vld [vmem:[%s5 + $0xf8] sm:$0xf]
        %v7489 = vld [vmem:[%s5 + $0xfc] sm:$0xf]
        %v7490 = vlaneseq
        %v7491 = vshrl.u32 %v7490, 7
        %v7492 = vsub.s32 3, %v7491
        %v7493 = vrot.slane %v251, %v7492
        %v7558 = vunpack.c.l.b16 %v7426
        %v7559 = vunpack.c.l.b16 %v7427
        %v7560 = vunpack.c.l.b16 %v7428
        %v7561 = vunpack.c.l.b16 %v7429
        %v7562 = vunpack.c.l.b16 %v7430
        %v7563 = vunpack.c.l.b16 %v7431
        %v7564 = vunpack.c.l.b16 %v7432
        %v7565 = vunpack.c.l.b16 %v7433
        %v7566 = vunpack.c.l.b16 %v7434
        %v7567 = vunpack.c.l.b16 %v7435
        %v7568 = vunpack.c.l.b16 %v7436
        %v7569 = vunpack.c.l.b16 %v7437
        %v7570 = vunpack.c.l.b16 %v7438
        %v7571 = vunpack.c.l.b16 %v7439
        %v7572 = vunpack.c.l.b16 %v7440
        %v7573 = vunpack.c.l.b16 %v7441
        %v7574 = vunpack.c.l.b16 %v7442
        %v7575 = vunpack.c.l.b16 %v7443
        %v7576 = vunpack.c.l.b16 %v7444
        %v7577 = vunpack.c.l.b16 %v7445
        %v7578 = vunpack.c.l.b16 %v7446
        %v7579 = vunpack.c.l.b16 %v7447
        %v7580 = vunpack.c.l.b16 %v7448
        %v7581 = vunpack.c.l.b16 %v7449
        %v7582 = vunpack.c.l.b16 %v7450
        %v7583 = vunpack.c.l.b16 %v7451
        %v7584 = vunpack.c.l.b16 %v7452
        %v7585 = vunpack.c.l.b16 %v7453
        %v7586 = vunpack.c.l.b16 %v7454
        %v7587 = vunpack.c.l.b16 %v7455
        %v7588 = vunpack.c.l.b16 %v7456
        %v7589 = vunpack.c.l.b16 %v7457
        %v7590 = vunpack.c.l.b16 %v7458
        %v7591 = vunpack.c.l.b16 %v7459
        %v7592 = vunpack.c.l.b16 %v7460
        %v7593 = vunpack.c.l.b16 %v7461
        %v7594 = vunpack.c.l.b16 %v7462
        %v7595 = vunpack.c.l.b16 %v7463
        %v7596 = vunpack.c.l.b16 %v7464
        %v7597 = vunpack.c.l.b16 %v7465
        %v7598 = vunpack.c.l.b16 %v7466
        %v7599 = vunpack.c.l.b16 %v7467
        %v7600 = vunpack.c.l.b16 %v7468
        %v7601 = vunpack.c.l.b16 %v7469
        %v7602 = vunpack.c.l.b16 %v7470
        %v7603 = vunpack.c.l.b16 %v7471
        %v7604 = vunpack.c.l.b16 %v7472
        %v7605 = vunpack.c.l.b16 %v7473
        %v7606 = vunpack.c.l.b16 %v7474
        %v7607 = vunpack.c.l.b16 %v7475
        %v7608 = vunpack.c.l.b16 %v7476
        %v7609 = vunpack.c.l.b16 %v7477
        %v7610 = vunpack.c.l.b16 %v7478
        %v7611 = vunpack.c.l.b16 %v7479
        %v7612 = vunpack.c.l.b16 %v7480
        %v7613 = vunpack.c.l.b16 %v7481
        %v7614 = vunpack.c.l.b16 %v7482
        %v7615 = vunpack.c.l.b16 %v7483
        %v7616 = vunpack.c.l.b16 %v7484
        %v7617 = vunpack.c.l.b16 %v7485
        %v7618 = vunpack.c.l.b16 %v7486
        %v7619 = vunpack.c.l.b16 %v7487
        %v7620 = vunpack.c.l.b16 %v7488
        %v7621 = vunpack.c.l.b16 %v7489
        %v7622 = vpack.c.b16 %v7559, %v7558
        %v7623 = vpack.c.b16 %v7561, %v7560
        %v7624 = vpack.c.b16 %v7563, %v7562
        %v7625 = vpack.c.b16 %v7565, %v7564
        %v7626 = vpack.c.b16 %v7567, %v7566
        %v7627 = vpack.c.b16 %v7569, %v7568
        %v7628 = vpack.c.b16 %v7571, %v7570
        %v7629 = vpack.c.b16 %v7573, %v7572
        %v7630 = vpack.c.b16 %v7575, %v7574
        %v7631 = vpack.c.b16 %v7577, %v7576
        %v7632 = vpack.c.b16 %v7579, %v7578
        %v7633 = vpack.c.b16 %v7581, %v7580
        %v7634 = vpack.c.b16 %v7583, %v7582
        %v7635 = vpack.c.b16 %v7585, %v7584
        %v7636 = vpack.c.b16 %v7587, %v7586
        %v7637 = vpack.c.b16 %v7589, %v7588
        %v7638 = vpack.c.b16 %v7591, %v7590
        %v7639 = vpack.c.b16 %v7593, %v7592
        %v7640 = vpack.c.b16 %v7595, %v7594
        %v7641 = vpack.c.b16 %v7597, %v7596
        %v7642 = vpack.c.b16 %v7599, %v7598
        %v7643 = vpack.c.b16 %v7601, %v7600
        %v7644 = vpack.c.b16 %v7603, %v7602
        %v7645 = vpack.c.b16 %v7605, %v7604
        %v7646 = vpack.c.b16 %v7607, %v7606
        %v7647 = vpack.c.b16 %v7609, %v7608
        %v7648 = vpack.c.b16 %v7611, %v7610
        %v7649 = vpack.c.b16 %v7613, %v7612
        %v7650 = vpack.c.b16 %v7615, %v7614
        %v7651 = vpack.c.b16 %v7617, %v7616
        %v7652 = vpack.c.b16 %v7619, %v7618
        %v7653 = vpack.c.b16 %v7621, %v7620
        %7686 = vmatprep.subr.bf16.mxu0 0
        %7687 = vmatpush1.bf16.msra.mxu0 %v7622
        %7688 = vmatprep.subr.bf16.mxu0 0
        %7689 = vmatpush1.bf16.msra.mxu0 %v7623
        %7690 = vmatprep.subr.bf16.mxu0 0
        %7691 = vmatpush1.bf16.msra.mxu0 %v7624
        %7692 = vmatprep.subr.bf16.mxu0 0
        %7693 = vmatpush1.bf16.msra.mxu0 %v7625
        %7694 = vmatprep.subr.bf16.mxu0 0
        %7695 = vmatpush1.bf16.msra.mxu0 %v7626
        %7696 = vmatprep.subr.bf16.mxu0 0
        %7697 = vmatpush1.bf16.msra.mxu0 %v7627
        %7698 = vmatprep.subr.bf16.mxu0 0
        %7699 = vmatpush1.bf16.msra.mxu0 %v7628
        %7700 = vmatprep.subr.bf16.mxu0 0
        %7701 = vmatpush1.bf16.msra.mxu0 %v7629
        %7702 = vmatprep.subr.bf16.mxu0 0
        %7703 = vmatpush1.bf16.msra.mxu0 %v7630
        %7704 = vmatprep.subr.bf16.mxu0 0
        %7705 = vmatpush1.bf16.msra.mxu0 %v7631
        %7706 = vmatprep.subr.bf16.mxu0 0
        %7707 = vmatpush1.bf16.msra.mxu0 %v7632
        %7708 = vmatprep.subr.bf16.mxu0 0
        %7709 = vmatpush1.bf16.msra.mxu0 %v7633
        %7710 = vmatprep.subr.bf16.mxu0 0
        %7711 = vmatpush1.bf16.msra.mxu0 %v7634
        %7712 = vmatprep.subr.bf16.mxu0 0
        %7713 = vmatpush1.bf16.msra.mxu0 %v7635
        %7714 = vmatprep.subr.bf16.mxu0 0
        %7715 = vmatpush1.bf16.msra.mxu0 %v7636
        %7716 = vmatprep.subr.bf16.mxu0 0
        %7717 = vmatpush1.bf16.msra.mxu0 %v7637
        %7718 = vmatprep.mubr.bf16.mxu0 %v7363
        %7719 = vmatmul.mubr.bf16.gmra.mrb[0].mxu0 %v7362
        %v7720 = vpop.f32.mrb[0].mxu0
        %v7721 = vadd.f32 %v7493, %v7720
        %v7722 = vpop.f32.mrb[0].mxu0
        %v7723 = vpop.f32.mrb[0].mxu0
        %v7724 = vadd.f32 %v7493, %v7723
        %v7725 = vpop.f32.mrb[0].mxu0
        %7726 = vmatprep.mubr.bf16.mxu0 %v7367
        %7727 = vmatmul.mubr.bf16.gmra.mrb[0].mxu0 %v7366
        %v7728 = vpop.f32.mrb[0].mxu0
        %v7729 = vadd.f32 %v7493, %v7728
        %v7730 = vpop.f32.mrb[0].mxu0
        %v7731 = vpop.f32.mrb[0].mxu0
        %v7732 = vadd.f32 %v7493, %v7731
        %v7733 = vpop.f32.mrb[0].mxu0
        %7734 = vmatprep.mubr.bf16.mxu0 %v7371
        %7735 = vmatmul.mubr.bf16.gmra.mrb[0].mxu0 %v7370
        %v7736 = vpop.f32.mrb[0].mxu0
        %v7737 = vadd.f32 %v7493, %v7736
        %v7738 = vpop.f32.mrb[0].mxu0
        %v7739 = vpop.f32.mrb[0].mxu0
        %v7740 = vadd.f32 %v7493, %v7739
        %v7741 = vpop.f32.mrb[0].mxu0
        %7742 = vmatprep.mubr.bf16.mxu0 %v7375
        %7743 = vmatmul.mubr.bf16.gmra.mrb[0].mxu0 %v7374
        %v7744 = vpop.f32.mrb[0].mxu0
        %v7745 = vadd.f32 %v7493, %v7744
        %v7746 = vpop.f32.mrb[0].mxu0
        %v7747 = vpop.f32.mrb[0].mxu0
        %v7748 = vadd.f32 %v7493, %v7747
        %v7749 = vpop.f32.mrb[0].mxu0
        %7750 = vmatprep.mubr.bf16.mxu0 %v7379
        %7751 = vmatmul.mubr.bf16.gmra.mrb[0].mxu0 %v7378
        %v7752 = vpop.f32.mrb[0].mxu0
        %v7753 = vadd.f32 %v7493, %v7752
        %v7754 = vpop.f32.mrb[0].mxu0
        %v7755 = vpop.f32.mrb[0].mxu0
        %v7756 = vadd.f32 %v7493, %v7755
        %v7757 = vpop.f32.mrb[0].mxu0
        %7758 = vmatprep.mubr.bf16.mxu0 %v7383
        %7759 = vmatmul.mubr.bf16.gmra.mrb[0].mxu0 %v7382
        %v7760 = vpop.f32.mrb[0].mxu0
        %v7761 = vadd.f32 %v7493, %v7760
        %v7762 = vpop.f32.mrb[0].mxu0
        %v7763 = vpop.f32.mrb[0].mxu0
        %v7764 = vadd.f32 %v7493, %v7763
        %v7765 = vpop.f32.mrb[0].mxu0
        %7766 = vmatprep.mubr.bf16.mxu0 %v7387
        %7767 = vmatmul.mubr.bf16.gmra.mrb[0].mxu0 %v7386
        %v7768 = vpop.f32.mrb[0].mxu0
        %v7769 = vadd.f32 %v7493, %v7768
        %v7770 = vpop.f32.mrb[0].mxu0
        %v7771 = vpop.f32.mrb[0].mxu0
        %v7772 = vadd.f32 %v7493, %v7771
        %v7773 = vpop.f32.mrb[0].mxu0
        %7774 = vmatprep.mubr.bf16.mxu0 %v7391
        %7775 = vmatmul.mubr.bf16.gmra.mrb[0].mxu0 %v7390
        %v7776 = vpop.f32.mrb[0].mxu0
        %v7777 = vadd.f32 %v7493, %v7776
        %v7778 = vpop.f32.mrb[0].mxu0
        %v7779 = vpop.f32.mrb[0].mxu0
        %v7780 = vadd.f32 %v7493, %v7779
        %v7781 = vpop.f32.mrb[0].mxu0
        %7782 = vmatprep.mubr.bf16.mxu0 %v7395
        %7783 = vmatmul.mubr.bf16.gmra.mrb[0].mxu0 %v7394
        %v7784 = vpop.f32.mrb[0].mxu0
        %v7785 = vadd.f32 %v7493, %v7784
        %v7786 = vpop.f32.mrb[0].mxu0
        %v7787 = vpop.f32.mrb[0].mxu0
        %v7788 = vadd.f32 %v7493, %v7787
        %v7789 = vpop.f32.mrb[0].mxu0
        %7790 = vmatprep.mubr.bf16.mxu0 %v7399
        %7791 = vmatmul.mubr.bf16.gmra.mrb[0].mxu0 %v7398
        %v7792 = vpop.f32.mrb[0].mxu0
        %v7793 = vadd.f32 %v7493, %v7792
        %v7794 = vpop.f32.mrb[0].mxu0
        %v7795 = vpop.f32.mrb[0].mxu0
        %v7796 = vadd.f32 %v7493, %v7795
        %v7797 = vpop.f32.mrb[0].mxu0
        %7798 = vmatprep.mubr.bf16.mxu0 %v7403
        %7799 = vmatmul.mubr.bf16.gmra.mrb[0].mxu0 %v7402
        %v7800 = vpop.f32.mrb[0].mxu0
        %v7801 = vadd.f32 %v7493, %v7800
        %v7802 = vpop.f32.mrb[0].mxu0
        %v7803 = vpop.f32.mrb[0].mxu0
        %v7804 = vadd.f32 %v7493, %v7803
        %v7805 = vpop.f32.mrb[0].mxu0
        %7806 = vmatprep.mubr.bf16.mxu0 %v7407
        %7807 = vmatmul.mubr.bf16.gmra.mrb[0].mxu0 %v7406
        %v7808 = vpop.f32.mrb[0].mxu0
        %v7809 = vadd.f32 %v7493, %v7808
        %v7810 = vpop.f32.mrb[0].mxu0
        %v7811 = vpop.f32.mrb[0].mxu0
        %v7812 = vadd.f32 %v7493, %v7811
        %v7813 = vpop.f32.mrb[0].mxu0
        %7814 = vmatprep.mubr.bf16.mxu0 %v7411
        %7815 = vmatmul.mubr.bf16.gmra.mrb[0].mxu0 %v7410
        %v7816 = vpop.f32.mrb[0].mxu0
        %v7817 = vadd.f32 %v7493, %v7816
        %v7818 = vpop.f32.mrb[0].mxu0
        %v7819 = vpop.f32.mrb[0].mxu0
        %v7820 = vadd.f32 %v7493, %v7819
        %v7821 = vpop.f32.mrb[0].mxu0
        %7822 = vmatprep.mubr.bf16.mxu0 %v7415
        %7823 = vmatmul.mubr.bf16.gmra.mrb[0].mxu0 %v7414
        %v7824 = vpop.f32.mrb[0].mxu0
        %v7825 = vadd.f32 %v7493, %v7824
        %v7826 = vpop.f32.mrb[0].mxu0
        %v7827 = vpop.f32.mrb[0].mxu0
        %v7828 = vadd.f32 %v7493, %v7827
        %v7829 = vpop.f32.mrb[0].mxu0
        %7830 = vmatprep.mubr.bf16.mxu0 %v7419
        %7831 = vmatmul.mubr.bf16.gmra.mrb[0].mxu0 %v7418
        %v7832 = vpop.f32.mrb[0].mxu0
        %v7833 = vadd.f32 %v7493, %v7832
        %v7834 = vpop.f32.mrb[0].mxu0
        %v7835 = vpop.f32.mrb[0].mxu0
        %v7836 = vadd.f32 %v7493, %v7835
        %v7837 = vpop.f32.mrb[0].mxu0
        %7838 = vmatprep.mubr.bf16.mxu0 %v7423
        %7839 = vmatmul.mubr.bf16.gmra.mrb[0].mxu0 %v7422
        %v7840 = vpop.f32.mrb[0].mxu0
        %v7841 = vadd.f32 %v7493, %v7840
        %v7842 = vpop.f32.mrb[0].mxu0
        %v7843 = vpop.f32.mrb[0].mxu0
        %v7844 = vadd.f32 %v7493, %v7843
        %v7845 = vpop.f32.mrb[0].mxu0
        %7846 = vdwg.mxu0
        %7847 = vmatprep.subr.bf16.mxu0 0
        %7848 = vmatpush1.bf16.msra.mxu0 %v7638
        %7849 = vmatprep.subr.bf16.mxu0 0
        %7850 = vmatpush1.bf16.msra.mxu0 %v7639
        %7851 = vmatprep.subr.bf16.mxu0 0
        %7852 = vmatpush1.bf16.msra.mxu0 %v7640
        %7853 = vmatprep.subr.bf16.mxu0 0
        %7854 = vmatpush1.bf16.msra.mxu0 %v7641
        %7855 = vmatprep.subr.bf16.mxu0 0
        %7856 = vmatpush1.bf16.msra.mxu0 %v7642
        %7857 = vmatprep.subr.bf16.mxu0 0
        %7858 = vmatpush1.bf16.msra.mxu0 %v7643
        %7859 = vmatprep.subr.bf16.mxu0 0
        %7860 = vmatpush1.bf16.msra.mxu0 %v7644
        %7861 = vmatprep.subr.bf16.mxu0 0
        %7862 = vmatpush1.bf16.msra.mxu0 %v7645
        %7863 = vmatprep.subr.bf16.mxu0 0
        %7864 = vmatpush1.bf16.msra.mxu0 %v7646
        %7865 = vmatprep.subr.bf16.mxu0 0
        %7866 = vmatpush1.bf16.msra.mxu0 %v7647
        %7867 = vmatprep.subr.bf16.mxu0 0
        %7868 = vmatpush1.bf16.msra.mxu0 %v7648
        %7869 = vmatprep.subr.bf16.mxu0 0
        %7870 = vmatpush1.bf16.msra.mxu0 %v7649
        %7871 = vmatprep.subr.bf16.mxu0 0
        %7872 = vmatpush1.bf16.msra.mxu0 %v7650
        %7873 = vmatprep.subr.bf16.mxu0 0
        %7874 = vmatpush1.bf16.msra.mxu0 %v7651
        %7875 = vmatprep.subr.bf16.mxu0 0
        %7876 = vmatpush1.bf16.msra.mxu0 %v7652
        %7877 = vmatprep.subr.bf16.mxu0 0
        %7878 = vmatpush1.bf16.msra.mxu0 %v7653
        %7879 = vmatprep.mubr.bf16.mxu0 %v7365
        %7880 = vmatmul.mubr.bf16.gmra.mrb[0].mxu0 %v7364
        %v7881 = vpop.f32.mrb[0].mxu0
        %v7882 = vadd.f32 %v7721, %v7881
        %v7883 = vpop.f32.mrb[0].mxu0
        %v7884 = vpop.f32.mrb[0].mxu0
        %v7885 = vadd.f32 %v7724, %v7884
        %v7886 = vpop.f32.mrb[0].mxu0
        %7887 = vmatprep.mubr.bf16.mxu0 %v7369
        %7888 = vmatmul.mubr.bf16.gmra.mrb[0].mxu0 %v7368
        %v7889 = vpop.f32.mrb[0].mxu0
        %v7890 = vadd.f32 %v7729, %v7889
        %v7891 = vpop.f32.mrb[0].mxu0
        %v7892 = vpop.f32.mrb[0].mxu0
        %v7893 = vadd.f32 %v7732, %v7892
        %v7894 = vpop.f32.mrb[0].mxu0
        %7895 = vmatprep.mubr.bf16.mxu0 %v7373
        %7896 = vmatmul.mubr.bf16.gmra.mrb[0].mxu0 %v7372
        %v7897 = vpop.f32.mrb[0].mxu0
        %v7898 = vadd.f32 %v7737, %v7897
        %v7899 = vpop.f32.mrb[0].mxu0
        %v7900 = vpop.f32.mrb[0].mxu0
        %v7901 = vadd.f32 %v7740, %v7900
        %v7902 = vpop.f32.mrb[0].mxu0
        %7903 = vmatprep.mubr.bf16.mxu0 %v7377
        %7904 = vmatmul.mubr.bf16.gmra.mrb[0].mxu0 %v7376
        %v7905 = vpop.f32.mrb[0].mxu0
        %v7906 = vadd.f32 %v7745, %v7905
        %v7907 = vpop.f32.mrb[0].mxu0
        %v7908 = vpop.f32.mrb[0].mxu0
        %v7909 = vadd.f32 %v7748, %v7908
        %v7910 = vpop.f32.mrb[0].mxu0
        %7911 = vmatprep.mubr.bf16.mxu0 %v7381
        %7912 = vmatmul.mubr.bf16.gmra.mrb[0].mxu0 %v7380
        %v7913 = vpop.f32.mrb[0].mxu0
        %v7914 = vadd.f32 %v7753, %v7913
        %v7915 = vpop.f32.mrb[0].mxu0
        %v7916 = vpop.f32.mrb[0].mxu0
        %v7917 = vadd.f32 %v7756, %v7916
        %v7918 = vpop.f32.mrb[0].mxu0
        %7919 = vmatprep.mubr.bf16.mxu0 %v7385
        %7920 = vmatmul.mubr.bf16.gmra.mrb[0].mxu0 %v7384
        %v7921 = vpop.f32.mrb[0].mxu0
        %v7922 = vadd.f32 %v7761, %v7921
        %v7923 = vpop.f32.mrb[0].mxu0
        %v7924 = vpop.f32.mrb[0].mxu0
        %v7925 = vadd.f32 %v7764, %v7924
        %v7926 = vpop.f32.mrb[0].mxu0
        %7927 = vmatprep.mubr.bf16.mxu0 %v7389
        %7928 = vmatmul.mubr.bf16.gmra.mrb[0].mxu0 %v7388
        %v7929 = vpop.f32.mrb[0].mxu0
        %v7930 = vadd.f32 %v7769, %v7929
        %v7931 = vpop.f32.mrb[0].mxu0
        %v7932 = vpop.f32.mrb[0].mxu0
        %v7933 = vadd.f32 %v7772, %v7932
        %v7934 = vpop.f32.mrb[0].mxu0
        %7935 = vmatprep.mubr.bf16.mxu0 %v7393
        %7936 = vmatmul.mubr.bf16.gmra.mrb[0].mxu0 %v7392
        %v7937 = vpop.f32.mrb[0].mxu0
        %v7938 = vadd.f32 %v7777, %v7937
        %v7939 = vpop.f32.mrb[0].mxu0
        %v7940 = vpop.f32.mrb[0].mxu0
        %v7941 = vadd.f32 %v7780, %v7940
        %v7942 = vpop.f32.mrb[0].mxu0
        %7943 = vmatprep.mubr.bf16.mxu0 %v7397
        %7944 = vmatmul.mubr.bf16.gmra.mrb[0].mxu0 %v7396
        %v7945 = vpop.f32.mrb[0].mxu0
        %v7946 = vadd.f32 %v7785, %v7945
        %v7947 = vpop.f32.mrb[0].mxu0
        %v7948 = vpop.f32.mrb[0].mxu0
        %v7949 = vadd.f32 %v7788, %v7948
        %v7950 = vpop.f32.mrb[0].mxu0
        %7951 = vmatprep.mubr.bf16.mxu0 %v7401
        %7952 = vmatmul.mubr.bf16.gmra.mrb[0].mxu0 %v7400
        %v7953 = vpop.f32.mrb[0].mxu0
        %v7954 = vadd.f32 %v7793, %v7953
        %v7955 = vpop.f32.mrb[0].mxu0
        %v7956 = vpop.f32.mrb[0].mxu0
        %v7957 = vadd.f32 %v7796, %v7956
        %v7958 = vpop.f32.mrb[0].mxu0
        %7959 = vmatprep.mubr.bf16.mxu0 %v7405
        %7960 = vmatmul.mubr.bf16.gmra.mrb[0].mxu0 %v7404
        %v7961 = vpop.f32.mrb[0].mxu0
        %v7962 = vadd.f32 %v7801, %v7961
        %v7963 = vpop.f32.mrb[0].mxu0
        %v7964 = vpop.f32.mrb[0].mxu0
        %v7965 = vadd.f32 %v7804, %v7964
        %v7966 = vpop.f32.mrb[0].mxu0
        %7967 = vmatprep.mubr.bf16.mxu0 %v7409
        %7968 = vmatmul.mubr.bf16.gmra.mrb[0].mxu0 %v7408
        %v7969 = vpop.f32.mrb[0].mxu0
        %v7970 = vadd.f32 %v7809, %v7969
        %v7971 = vpop.f32.mrb[0].mxu0
        %v7972 = vpop.f32.mrb[0].mxu0
        %v7973 = vadd.f32 %v7812, %v7972
        %v7974 = vpop.f32.mrb[0].mxu0
        %7975 = vmatprep.mubr.bf16.mxu0 %v7413
        %7976 = vmatmul.mubr.bf16.gmra.mrb[0].mxu0 %v7412
        %v7977 = vpop.f32.mrb[0].mxu0
        %v7978 = vadd.f32 %v7817, %v7977
        %v7979 = vpop.f32.mrb[0].mxu0
        %v7980 = vpop.f32.mrb[0].mxu0
        %v7981 = vadd.f32 %v7820, %v7980
        %v7982 = vpop.f32.mrb[0].mxu0
        %7983 = vmatprep.mubr.bf16.mxu0 %v7417
        %7984 = vmatmul.mubr.bf16.gmra.mrb[0].mxu0 %v7416
        %v7985 = vpop.f32.mrb[0].mxu0
        %v7986 = vadd.f32 %v7825, %v7985
        %v7987 = vpop.f32.mrb[0].mxu0
        %v7988 = vpop.f32.mrb[0].mxu0
        %v7989 = vadd.f32 %v7828, %v7988
        %v7990 = vpop.f32.mrb[0].mxu0
        %7991 = vmatprep.mubr.bf16.mxu0 %v7421
        %7992 = vmatmul.mubr.bf16.gmra.mrb[0].mxu0 %v7420
        %v7993 = vpop.f32.mrb[0].mxu0
        %v7994 = vadd.f32 %v7833, %v7993
        %v7995 = vpop.f32.mrb[0].mxu0
        %v7996 = vpop.f32.mrb[0].mxu0
        %v7997 = vadd.f32 %v7836, %v7996
        %v7998 = vpop.f32.mrb[0].mxu0
        %7999 = vmatprep.mubr.bf16.mxu0 %v7425
        %8000 = vmatmul.mubr.bf16.gmra.mrb[0].mxu0 %v7424
        %v8001 = vpop.f32.mrb[0].mxu0
        %v8002 = vadd.f32 %v7841, %v8001
        %v8003 = vpop.f32.mrb[0].mxu0
        %v8004 = vpop.f32.mrb[0].mxu0
        %v8005 = vadd.f32 %v7844, %v8004
        %v8006 = vpop.f32.mrb[0].mxu0
        %8007 = vdwg.mxu0
        %v8008 = vlaneseq
        %v8009 = vshrl.u32 %v8008, 7
        %v8010 = vsub.s32 4, %v8009
        %v8011 = vrot.slane %v251, %v8010
        %v8012 = vmul.f32 %v7882, %v8011
        %v8013 = vmul.f32 %v7885, %v8011
        %v8014 = vmul.f32 %v7890, %v8011
        %v8015 = vmul.f32 %v7893, %v8011
        %v8016 = vmul.f32 %v7898, %v8011
        %v8017 = vmul.f32 %v7901, %v8011
        %v8018 = vmul.f32 %v7906, %v8011
        %v8019 = vmul.f32 %v7909, %v8011
        %v8020 = vmul.f32 %v7914, %v8011
        %v8021 = vmul.f32 %v7917, %v8011
        %v8022 = vmul.f32 %v7922, %v8011
        %v8023 = vmul.f32 %v7925, %v8011
        %v8024 = vmul.f32 %v7930, %v8011
        %v8025 = vmul.f32 %v7933, %v8011
        %v8026 = vmul.f32 %v7938, %v8011
        %v8027 = vmul.f32 %v7941, %v8011
        %v8028 = vmul.f32 %v7946, %v8011
        %v8029 = vmul.f32 %v7949, %v8011
        %v8030 = vmul.f32 %v7954, %v8011
        %v8031 = vmul.f32 %v7957, %v8011
        %v8032 = vmul.f32 %v7962, %v8011
        %v8033 = vmul.f32 %v7965, %v8011
        %v8034 = vmul.f32 %v7970, %v8011
        %v8035 = vmul.f32 %v7973, %v8011
        %v8036 = vmul.f32 %v7978, %v8011
        %v8037 = vmul.f32 %v7981, %v8011
        %v8038 = vmul.f32 %v7986, %v8011
        %v8039 = vmul.f32 %v7989, %v8011
        %v8040 = vmul.f32 %v7994, %v8011
        %v8041 = vmul.f32 %v7997, %v8011
        %v8042 = vmul.f32 %v8002, %v8011
        %v8043 = vmul.f32 %v8005, %v8011
        %v8044 = vadd.f32 %v2666, %v8012
        %v8045 = vadd.f32 %v2667, %v8013
        %v8046 = vadd.f32 %v2668, %v8014
        %v8047 = vadd.f32 %v2669, %v8015
        %v8048 = vadd.f32 %v2670, %v8016
        %v8049 = vadd.f32 %v2671, %v8017
        %v8050 = vadd.f32 %v2672, %v8018
        %v8051 = vadd.f32 %v2673, %v8019
        %v8052 = vadd.f32 %v2674, %v8020
        %v8053 = vadd.f32 %v2675, %v8021
        %v8054 = vadd.f32 %v2676, %v8022
        %v8055 = vadd.f32 %v2677, %v8023
        %v8056 = vadd.f32 %v2678, %v8024
        %v8057 = vadd.f32 %v2679, %v8025
        %v8058 = vadd.f32 %v2680, %v8026
        %v8059 = vadd.f32 %v2681, %v8027
        %v8060 = vadd.f32 %v2682, %v8028
        %v8061 = vadd.f32 %v2683, %v8029
        %v8062 = vadd.f32 %v2684, %v8030
        %v8063 = vadd.f32 %v2685, %v8031
        %v8064 = vadd.f32 %v2686, %v8032
        %v8065 = vadd.f32 %v2687, %v8033
        %v8066 = vadd.f32 %v2688, %v8034
        %v8067 = vadd.f32 %v2689, %v8035
        %v8068 = vadd.f32 %v2690, %v8036
        %v8069 = vadd.f32 %v2691, %v8037
        %v8070 = vadd.f32 %v2692, %v8038
        %v8071 = vadd.f32 %v2693, %v8039
        %v8072 = vadd.f32 %v2694, %v8040
        %v8073 = vadd.f32 %v2695, %v8041
        %v8074 = vadd.f32 %v2696, %v8042
        %v8075 = vadd.f32 %v2697, %v8043
        %8076 = vst [vmem:[%s244] sm:$0xff] %v8044
        %8077 = vst [vmem:[%s244 + $0x8] sm:$0xff] %v8045
        %8078 = vst [vmem:[%s244 + $0x10] sm:$0xff] %v8046
        %8079 = vst [vmem:[%s244 + $0x18] sm:$0xff] %v8047
        %8080 = vst [vmem:[%s244 + $0x20] sm:$0xff] %v8048
        %8081 = vst [vmem:[%s244 + $0x28] sm:$0xff] %v8049
        %8082 = vst [vmem:[%s244 + $0x30] sm:$0xff] %v8050
        %8083 = vst [vmem:[%s244 + $0x38] sm:$0xff] %v8051
        %8084 = vst [vmem:[%s244 + $0x40] sm:$0xff] %v8052
        %8085 = vst [vmem:[%s244 + $0x48] sm:$0xff] %v8053
        %8086 = vst [vmem:[%s244 + $0x50] sm:$0xff] %v8054
        %8087 = vst [vmem:[%s244 + $0x58] sm:$0xff] %v8055
        %8088 = vst [vmem:[%s244 + $0x60] sm:$0xff] %v8056
        %8089 = vst [vmem:[%s244 + $0x68] sm:$0xff] %v8057
        %8090 = vst [vmem:[%s244 + $0x70] sm:$0xff] %v8058
        %8091 = vst [vmem:[%s244 + $0x78] sm:$0xff] %v8059
        %8092 = vst [vmem:[%s244 + $0x80] sm:$0xff] %v8060
        %8093 = vst [vmem:[%s244 + $0x88] sm:$0xff] %v8061
        %8094 = vst [vmem:[%s244 + $0x90] sm:$0xff] %v8062
        %8095 = vst [vmem:[%s244 + $0x98] sm:$0xff] %v8063
        %8096 = vst [vmem:[%s244 + $0xa0] sm:$0xff] %v8064
        %8097 = vst [vmem:[%s244 + $0xa8] sm:$0xff] %v8065
        %8098 = vst [vmem:[%s244 + $0xb0] sm:$0xff] %v8066
        %8099 = vst [vmem:[%s244 + $0xb8] sm:$0xff] %v8067
        %8100 = vst [vmem:[%s244 + $0xc0] sm:$0xff] %v8068
        %8101 = vst [vmem:[%s244 + $0xc8] sm:$0xff] %v8069
        %8102 = vst [vmem:[%s244 + $0xd0] sm:$0xff] %v8070
        %8103 = vst [vmem:[%s244 + $0xd8] sm:$0xff] %v8071
        %8104 = vst [vmem:[%s244 + $0xe0] sm:$0xff] %v8072
        %8105 = vst [vmem:[%s244 + $0xe8] sm:$0xff] %v8073
        %8106 = vst [vmem:[%s244 + $0xf0] sm:$0xff] %v8074
        %8107 = vst [vmem:[%s244 + $0xf8] sm:$0xff] %v8075
        %s8108 = sand.u32 %s159, 1
        %s8109 = scalar_lea.sflag [#allocation3], %s8108
        %s8110 = sand.u32 %s159, 1
        %s8111 = smul.addr %s8110, 256
        %s8112 = scalar_lea.vmem [#allocation2], %s8111
        // Predicated region
        $region45: #{tpu_custom_call.1} parent=43 // pred_check
          %p8113 = pneg %p169
        $region46: #{tpu_custom_call.1} parent=43 // pred_check_branch
          %8115 = sbr.rel (%p8113) target = $region48
        $region47: #{tpu_custom_call.1} parent=43 // pred_region
          %s8117 = ssub.s32 4096, 4096
          %8118 = vsyncadd %s8109, %s8117
          %s8119 = smul.addr %s20, 32
          %s8120 = smul.addr %s8119, 128
          %s8121 = scalar_lea.hbm %s6, %s8120
          %s8122 = sshll.u32 %s8112, 4
          %s8123 = int_to_ptr.vmem [resolvable:$true] %s8122
          %8128 = dma.vmem_to_hbm [thread:$0]  %s8123, 4096, %s8121, %s8109, 128, 128, 8
        $region48: #{tpu_custom_call.1} parent=43 // pred_fallthru
          _
      $region44: #{tpu_custom_call.1} parent=5 // pred_fallthru
        _
      %p8129 = scmp.le.s32.totalorder 2, %s15
      // Predicated region
      $region49: #{tpu_custom_call.1} parent=5 // pred_check
        %p8130 = pneg %p8129
      $region50: #{tpu_custom_call.1} parent=5 // pred_check_branch
        %8132 = sbr.rel (%p8130) target = $region52
      $region51: #{tpu_custom_call.1} parent=5 // pred_region
        %s8133 = ssub.s32 %s15, 2
        // Predicated region
        $region53: #{tpu_custom_call.1} parent=51 // pred_check
          %p8134 = pneg %p175
        $region54: #{tpu_custom_call.1} parent=51 // pred_check_branch
          %8136 = sbr.rel (%p8134) target = $region56
        $region55: #{tpu_custom_call.1} parent=51 // pred_region
          %s8137 = sand.u32 %s160, 1
          %s8138 = scalar_lea.sflag [#allocation3], %s8137
          %s8139 = sand.u32 %s160, 1
          %s8140 = smul.addr %s8139, 256
          %s8141 = scalar_lea.vmem [#allocation2], %s8140
          %8142 = dma.done %s8138, 4096
        $region56: #{tpu_custom_call.1} parent=51 // pred_fallthru
          _
      $region52: #{tpu_custom_call.1} parent=5 // pred_fallthru
        _
    $region6: #{tpu_custom_call.1} parent=1 // loop_footer
      %s19 = sadd.s32 1, %s15
    $region7: #{tpu_custom_call.1} parent=1 // loop_footer_branch
      %14 = sbr.rel target = $region3
    $region8: #{tpu_custom_call.1} parent=1 // loop_exit
      _
    %8143 = vsyncpa [#allocation3], 1
    %s8144 = scalar_lea.sflag [#allocation3], 1
    %8145 = vsyncpa %s8144, 1

</llo_original>
